<compile_context>
chip_gen: v7x
topology: tpu7x:2x2x1
jax: 0.10.0
libtpu: 0.0.40
codegen_flags: <defaults>
</compile_context>

<pallas_src>
import functools

import jax
import jax.numpy as jnp
from jax.experimental import pallas as pl
from jax.experimental.pallas import tpu as pltpu


# ----------------------------------------------------------------- Pallas kernel --

def _conv_kernel(a_ref, w_ref, bias_ref, o_ref, *stats, act_slope, post_relu, want_stats):
    """Fused conv-as-matmul tile:

       prologue : optional LeakyReLU/ReLU on the (bf16) patch tile
       body     : bf16 x bf16 -> f32 MXU matmul
       epilogue : + bias, optional ReLU, optional per-channel sum/sumsq accumulation
    """
    a = a_ref[...]                                           # (BM, K) bf16
    if act_slope is not None:
        a32 = a.astype(jnp.float32)
        a = jnp.where(a32 > 0, a32, act_slope * a32).astype(jnp.bfloat16)
    y = jnp.dot(a, w_ref[...], preferred_element_type=jnp.float32)   # (BM, Nc) f32
    y = y + bias_ref[...]
    if post_relu:
        y = jnp.maximum(y, 0.0)
    o_ref[...] = y
    if want_stats:
        sum_ref, ssq_ref = stats

        @pl.when(pl.program_id(0) == 0)
        def _init():
            sum_ref[...] = jnp.zeros_like(sum_ref)
            ssq_ref[...] = jnp.zeros_like(ssq_ref)

        sum_ref[...] += jnp.sum(y, axis=0, keepdims=True)
        ssq_ref[...] += jnp.sum(y * y, axis=0, keepdims=True)


def _pick_bm(m):
    """Row block: full extent when small (no pad/slice), else the largest exact divisor."""
    if m <= 512:
        return m
    for bm in (512, 256, 128, 64, 32, 16, 8):
        if m % bm == 0:
            return bm
    return m


def fused_conv_matmul(patches, w_mat, bias, *, act_slope, post_relu, want_stats):
    """patches (M, K) bf16, w_mat (K, Nc) bf16, bias (Nc,) f32.
       Returns y (M, Nc) f32 [, sum (1, Nc), sumsq (1, Nc)]."""
    M, K = patches.shape
    Nc = w_mat.shape[1]
    BM = _pick_bm(M)
    grid = (M // BM,)
    bias2d = bias.reshape(1, Nc).astype(jnp.float32)

    kern = functools.partial(_conv_kernel, act_slope=act_slope,
                             post_relu=post_relu, want_stats=want_stats)
    in_specs = [pl.BlockSpec((BM, K), lambda i: (i, 0)),
                pl.BlockSpec((K, Nc), lambda i: (0, 0)),
                pl.BlockSpec((1, Nc), lambda i: (0, 0))]
    if want_stats:
        out_shape = (jax.ShapeDtypeStruct((M, Nc), jnp.float32),
                     jax.ShapeDtypeStruct((1, Nc), jnp.float32),
                     jax.ShapeDtypeStruct((1, Nc), jnp.float32))
        out_specs = (pl.BlockSpec((BM, Nc), lambda i: (i, 0)),
                     pl.BlockSpec((1, Nc), lambda i: (0, 0)),
                     pl.BlockSpec((1, Nc), lambda i: (0, 0)))
        dims = ("arbitrary",)       # stats blocks are accumulated across the M axis
    else:
        out_shape = jax.ShapeDtypeStruct((M, Nc), jnp.float32)
        out_specs = pl.BlockSpec((BM, Nc), lambda i: (i, 0))
        dims = ("parallel",)

    return pl.pallas_call(
        kern,
        out_shape=out_shape,
        grid=grid,
        in_specs=in_specs,
        out_specs=out_specs,
        compiler_params=pltpu.CompilerParams(dimension_semantics=dims),
    )(patches, w_mat, bias2d)


# ----------------------------------------------------- deferred-affine tensor glue --
# A tensor is carried as (values_NHWC_f32, scale_C or None, shift_C or None); the
# pending per-channel affine is the not-yet-applied BatchNorm normalization.

def _resolve(t):
    x, s, b = t
    return x if s is None else x * s + b


def _cat(t1, t2):
    x1, s1, b1 = t1
    x2, s2, b2 = t2
    x = jnp.concatenate([x1, x2], axis=-1)
    if s1 is None and s2 is None:
        return (x, None, None)
    c1, c2 = x1.shape[-1], x2.shape[-1]
    s1 = jnp.ones((c1,), jnp.float32) if s1 is None else s1
    b1 = jnp.zeros((c1,), jnp.float32) if b1 is None else b1
    s2 = jnp.ones((c2,), jnp.float32) if s2 is None else s2
    b2 = jnp.zeros((c2,), jnp.float32) if b2 is None else b2
    return (x, jnp.concatenate([s1, s2]), jnp.concatenate([b1, b2]))


def _bn_affine(sum_c, ssq_c, count, gamma, beta, eps=1e-5):
    """Fold training-mode BatchNorm2d (batch statistics) into per-channel scale/shift."""
    mean = sum_c / count
    var = jnp.maximum(ssq_c / count - mean * mean, 0.0)
    scale = gamma * jax.lax.rsqrt(var + eps)
    shift = beta - mean * scale
    return scale, shift


# ----------------------------------------------------------------- conv wrappers --

def conv4x4_s2(t, w, *, act_slope, post_relu=False, bn=None):
    """nn.Conv2d(k=4, s=2, p=1, bias=False).  w: (Cout, Cin, 4, 4) PyTorch layout."""
    x = _resolve(t)                                 # pending BN affine applied pre-pad
    N, H, W, Cin = x.shape
    Cout = w.shape[0]
    Ho, Wo = H // 2, W // 2
    xp = jnp.pad(x, ((0, 0), (1, 1), (1, 1), (0, 0)))
    cols = [xp[:, dh:dh + 2 * Ho - 1:2, dw:dw + 2 * Wo - 1:2, :]
            for dh in range(4) for dw in range(4)]
    patches = jnp.stack(cols, axis=3).reshape(N * Ho * Wo, 16 * Cin).astype(jnp.bfloat16)
    w_mat = jnp.transpose(w, (2, 3, 1, 0)).reshape(16 * Cin, Cout).astype(jnp.bfloat16)
    zero_bias = jnp.zeros((Cout,), jnp.float32)

    res = fused_conv_matmul(patches, w_mat, zero_bias, act_slope=act_slope,
                            post_relu=post_relu, want_stats=bn is not None)
    if bn is None:
        y = res.reshape(N, Ho, Wo, Cout)
        return (y, None, None)
    y2d, s_, ss = res
    y = y2d.reshape(N, Ho, Wo, Cout)
    scale, shift = _bn_affine(s_[0], ss[0], N * Ho * Wo, *bn)
    return (y, scale, shift)


def _convT_weight_matrix(w):
    """ConvTranspose2d(k=4,s=2,p=1) weight (Cin, Cout, 4, 4) -> polyphase (9*Cin, 4*Cout).

    Output pixel (2m+a, 2j+b) only sees the 2x2 kernel sub-grid selected by the
    parities (a, b) and the 3x3 input neighbourhood of (m, j)."""
    Cin, Cout = w.shape[0], w.shape[1]
    zero = jnp.zeros((Cin, Cout), w.dtype)
    km = {(0, 0): 3, (0, 1): 1, (1, 1): 2, (1, 2): 0}   # (output parity, patch offset) -> k
    rows = []
    for dy in range(3):
        for dx in range(3):
            cols = []
            for a in range(2):
                for b in range(2):
                    ky = km.get((a, dy))
                    kx = km.get((b, dx))
                    cols.append(zero if ky is None or kx is None else w[:, :, ky, kx])
            rows.append(jnp.concatenate(cols, axis=1))        # (Cin, 4*Cout)
    return jnp.concatenate(rows, axis=0)                      # (9*Cin, 4*Cout)


def convT4x4_s2(t, w, bias, *, act_slope, bn=None):
    """nn.ConvTranspose2d(k=4, s=2, p=1) as a single polyphase matmul + depth-to-space."""
    x = _resolve(t)
    N, H, W, Cin = x.shape
    Cout = w.shape[1]
    xp = jnp.pad(x, ((0, 0), (1, 1), (1, 1), (0, 0)))
    cols = [xp[:, dy:dy + H, dx:dx + W, :] for dy in range(3) for dx in range(3)]
    patches = jnp.stack(cols, axis=3).reshape(N * H * W, 9 * Cin).astype(jnp.bfloat16)
    w_eff = _convT_weight_matrix(w).astype(jnp.bfloat16)
    bias4 = (jnp.zeros((4 * Cout,), jnp.float32) if bias is None
             else jnp.tile(bias.astype(jnp.float32), 4))

    res = fused_conv_matmul(patches, w_eff, bias4, act_slope=act_slope,
                            post_relu=False, want_stats=bn is not None)
    y2d = res[0] if bn is not None else res
    y = (y2d.reshape(N, H, W, 2, 2, Cout)
            .transpose(0, 1, 3, 2, 4, 5)
            .reshape(N, 2 * H, 2 * W, Cout))
    if bn is None:
        return (y, None, None)
    _, s_, ss = res
    s_c = s_.reshape(4, Cout).sum(axis=0)        # fold the 4 phases into per-Cout stats
    ss_c = ss.reshape(4, Cout).sum(axis=0)
    scale, shift = _bn_affine(s_c, ss_c, N * 2 * H * 2 * W, *bn)
    return (y, scale, shift)


# ------------------------------------------------------------------ the U-Net ----

def init_params(key, input_nc, output_nc, num_downs, ngf):
    def conv_w(k, cout, cin):                     # Conv2d weight layout (out, in, kh, kw)
        return 0.02 * jax.random.normal(k, (cout, cin, 4, 4), jnp.float32)

    def convT_w(k, cin, cout):                    # ConvTranspose2d layout (in, out, kh, kw)
        return 0.02 * jax.random.normal(k, (cin, cout, 4, 4), jnp.float32)

    def bn(c):
        return (jnp.ones((c,), jnp.float32), jnp.zeros((c,), jnp.float32))

    def make_block(k, outer_nc, inner_nc, in_nc, submodule, outermost, innermost):
        in_nc = outer_nc if in_nc is None else in_nc
        k1, k2, k3 = jax.random.split(k, 3)
        p = dict(outermost=outermost, innermost=innermost, submodule=submodule,
                 downconv=conv_w(k1, inner_nc, in_nc))
        if outermost:
            p["upconv"] = convT_w(k2, inner_nc * 2, outer_nc)
            p["upbias"] = 0.02 * jax.random.normal(k3, (outer_nc,), jnp.float32)  # bias=True here
        elif innermost:
            p["upconv"] = convT_w(k2, inner_nc, outer_nc)
            p["upnorm"] = bn(outer_nc)
        else:
            p["downnorm"] = bn(inner_nc)
            p["upconv"] = convT_w(k2, inner_nc * 2, outer_nc)
            p["upnorm"] = bn(outer_nc)
        return p

    keys = iter(jax.random.split(key, num_downs))
    blk = make_block(next(keys), ngf * 8, ngf * 8, None, None, False, True)
    for _ in range(num_downs - 5):
        blk = make_block(next(keys), ngf * 8, ngf * 8, None, blk, False, False)
    blk = make_block(next(keys), ngf * 4, ngf * 8, None, blk, False, False)
    blk = make_block(next(keys), ngf * 2, ngf * 4, None, blk, False, False)
    blk = make_block(next(keys), ngf, ngf * 2, None, blk, False, False)
    blk = make_block(next(keys), output_nc, ngf, input_nc, blk, True, False)
    return blk


def block_forward(p, t_in):
    if p["outermost"]:
        # model = [downconv, submodule, uprelu, upconv]
        t_down = conv4x4_s2(t_in, p["downconv"], act_slope=None)
        t_sub, fc = block_forward(p["submodule"], t_down)
        t_up = convT4x4_s2(t_sub, p["upconv"], p["upbias"], act_slope=0.0)   # uprelu fused
        return t_up, fc

    if p["innermost"]:
        # xc_orig = ReLU(downconv(LeakyReLU(x)))  ->  stored as model.fc
        t_fc = conv4x4_s2(t_in, p["downconv"], act_slope=0.2, post_relu=True)
        # x_new = upnorm(upconv(xc_orig))   (ReLU already applied above)
        t_up = convT4x4_s2(t_fc, p["upconv"], None, act_slope=None, bn=p["upnorm"])
        return _cat(t_in, t_up), t_fc[0]          # torch.cat([x, x_new], 1)

    # middle: model = [downrelu, downconv, downnorm, submodule, uprelu, upconv, upnorm]
    t_down = conv4x4_s2(t_in, p["downconv"], act_slope=0.2, bn=p["downnorm"])
    t_sub, fc = block_forward(p["submodule"], t_down)
    t_up = convT4x4_s2(t_sub, p["upconv"], None, act_slope=0.0, bn=p["upnorm"])
    return _cat(t_in, t_up), fc                   # torch.cat([x, model(x)], 1)


def unet_forward(params, x_nchw):
    x = jnp.transpose(x_nchw.astype(jnp.float32), (0, 2, 3, 1))     # NCHW -> NHWC
    t_out, fc = block_forward(params, (x, None, None))
    y = _resolve(t_out)
    return jnp.transpose(y, (0, 3, 1, 2)), jnp.transpose(fc, (0, 3, 1, 2))


# ---------------------------------------------------------------------- main -----

if __name__ == "__main__":
    key = jax.random.PRNGKey(0)
    kx, kp = jax.random.split(key)

    input_nc, output_nc, num_downs, ngf = 3, 3, 5, 8
    batch, spatial = 2, 32                     # spatial divisible by 2**num_downs

    x = jax.random.normal(kx, (batch, input_nc, spatial, spatial), jnp.float32)
    params = init_params(kp, input_nc, output_nc, num_downs, ngf)

    fwd = jax.jit(functools.partial(unet_forward, params))
    y, fc = fwd(x)
    jax.block_until_ready((y, fc))

    assert y.shape == (batch, output_nc, spatial, spatial), y.shape
    assert fc.shape == (batch, ngf * 8, 1, 1), fc.shape
    assert bool(jnp.all(jnp.isfinite(y))) and bool(jnp.all(jnp.isfinite(fc)))
    print("KERNEL_OK")
</pallas_src>

<mosaic_0001>
module attributes {stable_mosaic.version = 11 : i64} {
  func.func @_conv_kernel(%arg0: i32, %arg1: memref<512x48xbf16, #tpu.memory_space<vmem>>, %arg2: memref<48x8xbf16, #tpu.memory_space<vmem>>, %arg3: memref<1x8xf32, #tpu.memory_space<vmem>>, %arg4: memref<512x8xf32, #tpu.memory_space<vmem>>) attributes {dimension_semantics = [#tpu.dimension_semantics<parallel>], iteration_bounds = array<i64: 1>, scalar_prefetch = 0 : i64, scratch_operands = 0 : i64, tpu.core_type = #tpu.core_type<tc>, window_params = [{transform_indices = @transform_0, window_bounds = array<i64: 512, 48>}, {pipeline_mode = #tpu.pipeline_mode<synchronous>, transform_indices = @transform_1, window_bounds = array<i64: 48, 8>}, {pipeline_mode = #tpu.pipeline_mode<synchronous>, transform_indices = @transform_2, window_bounds = array<i64: 1, 8>}, {transform_indices = @transform_3, window_bounds = array<i64: 512, 8>}]} {
    %c0 = arith.constant 0 : index
    %c0_0 = arith.constant 0 : index
    %0 = vector.load %arg1[%c0, %c0_0] : memref<512x48xbf16, #tpu.memory_space<vmem>>, vector<512x48xbf16>
    %c0_1 = arith.constant 0 : index
    %c0_2 = arith.constant 0 : index
    %1 = vector.load %arg2[%c0_1, %c0_2] : memref<48x8xbf16, #tpu.memory_space<vmem>>, vector<48x8xbf16>
    %cst = arith.constant dense<0.000000e+00> : vector<512x8xf32>
    %2 = tpu.matmul %0, %1, %cst {dimension_numbers = #tpu.dot_dimension_numbers<[1], [0], [0], [1], [0, 0, 1, 1], [], []>} : vector<512x48xbf16>, vector<48x8xbf16>, vector<512x8xf32> -> vector<512x8xf32>
    %c0_3 = arith.constant 0 : index
    %c0_4 = arith.constant 0 : index
    %3 = vector.load %arg3[%c0_3, %c0_4] : memref<1x8xf32, #tpu.memory_space<vmem>>, vector<1x8xf32>
    %4 = vector.broadcast %3 : vector<1x8xf32> to vector<512x8xf32>
    %5 = arith.addf %2, %4 : vector<512x8xf32>
    %c0_5 = arith.constant 0 : index
    %c0_6 = arith.constant 0 : index
    %6 = vector.load %arg4[%c0_5, %c0_6] : memref<512x8xf32, #tpu.memory_space<vmem>>, vector<512x8xf32>
    tpu.vector_store %arg4[%c0_5, %c0_6], %5 {strides = array<i32>} : memref<512x8xf32, #tpu.memory_space<vmem>>, vector<512x8xf32>,
    return
  }
  func.func @transform_0(%arg0: i32) -> (i32, i32) {
    %c0_i32 = arith.constant 0 : i32
    %c0_i32_0 = arith.constant 0 : i32
    return %arg0, %c0_i32 : i32, i32
  }
  func.func @transform_1(%arg0: i32) -> (i32, i32) {
    %c0_i32 = arith.constant 0 : i32
    %c0_i32_0 = arith.constant 0 : i32
    %c0_i32_1 = arith.constant 0 : i32
    return %c0_i32, %c0_i32_0 : i32, i32
  }
  func.func @transform_2(%arg0: i32) -> (i32, i32) {
    %c0_i32 = arith.constant 0 : i32
    %c0_i32_0 = arith.constant 0 : i32
    %c0_i32_1 = arith.constant 0 : i32
    return %c0_i32, %c0_i32_0 : i32, i32
  }
  func.func @transform_3(%arg0: i32) -> (i32, i32) {
    %c0_i32 = arith.constant 0 : i32
    %c0_i32_0 = arith.constant 0 : i32
    return %arg0, %c0_i32 : i32, i32
  }
}

module attributes {stable_mosaic.version = 11 : i64} {
  func.func @_conv_kernel(%arg0: i32, %arg1: memref<128x128xbf16, #tpu.memory_space<vmem>>, %arg2: memref<128x16xbf16, #tpu.memory_space<vmem>>, %arg3: memref<1x16xf32, #tpu.memory_space<vmem>>, %arg4: memref<128x16xf32, #tpu.memory_space<vmem>>, %arg5: memref<1x16xf32, #tpu.memory_space<vmem>>, %arg6: memref<1x16xf32, #tpu.memory_space<vmem>>) attributes {dimension_semantics = [#tpu.dimension_semantics<arbitrary>], iteration_bounds = array<i64: 1>, scalar_prefetch = 0 : i64, scratch_operands = 0 : i64, tpu.core_type = #tpu.core_type<tc>, window_params = [{transform_indices = @transform_0, window_bounds = array<i64: 128, 128>}, {pipeline_mode = #tpu.pipeline_mode<synchronous>, transform_indices = @transform_1, window_bounds = array<i64: 128, 16>}, {pipeline_mode = #tpu.pipeline_mode<synchronous>, transform_indices = @transform_2, window_bounds = array<i64: 1, 16>}, {transform_indices = @transform_3, window_bounds = array<i64: 128, 16>}, {pipeline_mode = #tpu.pipeline_mode<synchronous>, transform_indices = @transform_4, window_bounds = array<i64: 1, 16>}, {pipeline_mode = #tpu.pipeline_mode<synchronous>, transform_indices = @transform_5, window_bounds = array<i64: 1, 16>}]} {
    %c0 = arith.constant 0 : index
    %c0_0 = arith.constant 0 : index
    %0 = vector.load %arg1[%c0, %c0_0] : memref<128x128xbf16, #tpu.memory_space<vmem>>, vector<128x128xbf16>
    %1 = arith.extf %0 : vector<128x128xbf16> to vector<128x128xf32>
    %cst = arith.constant 0.000000e+00 : f32
    %2 = vector.broadcast %cst : f32 to vector<128x128xf32>
    %3 = arith.cmpf ogt, %1, %2 : vector<128x128xf32>
    %cst_1 = arith.constant 2.000000e-01 : f32
    %4 = vector.broadcast %cst_1 : f32 to vector<128x128xf32>
    %5 = arith.mulf %4, %1 : vector<128x128xf32>
    %6 = arith.select %3, %1, %5 : vector<128x128xi1>, vector<128x128xf32>
    %7 = arith.truncf %6 : vector<128x128xf32> to vector<128x128xbf16>
    %c0_2 = arith.constant 0 : index
    %c0_3 = arith.constant 0 : index
    %8 = vector.load %arg2[%c0_2, %c0_3] : memref<128x16xbf16, #tpu.memory_space<vmem>>, vector<128x16xbf16>
    %cst_4 = arith.constant dense<0.000000e+00> : vector<128x16xf32>
    %9 = tpu.matmul %7, %8, %cst_4 {dimension_numbers = #tpu.dot_dimension_numbers<[1], [0], [0], [1], [0, 0, 1, 1], [], []>} : vector<128x128xbf16>, vector<128x16xbf16>, vector<128x16xf32> -> vector<128x16xf32>
    %c0_5 = arith.constant 0 : index
    %c0_6 = arith.constant 0 : index
    %10 = vector.load %arg3[%c0_5, %c0_6] : memref<1x16xf32, #tpu.memory_space<vmem>>, vector<1x16xf32>
    %11 = vector.broadcast %10 : vector<1x16xf32> to vector<128x16xf32>
    %12 = arith.addf %9, %11 : vector<128x16xf32>
    %c0_7 = arith.constant 0 : index
    %c0_8 = arith.constant 0 : index
    %13 = vector.load %arg4[%c0_7, %c0_8] : memref<128x16xf32, #tpu.memory_space<vmem>>, vector<128x16xf32>
    tpu.vector_store %arg4[%c0_7, %c0_8], %12 {strides = array<i32>} : memref<128x16xf32, #tpu.memory_space<vmem>>, vector<128x16xf32>,
    %c0_i32 = arith.constant 0 : i32
    %14 = arith.cmpi eq, %arg0, %c0_i32 : i32
    %15 = arith.extui %14 : i1 to i32
    %c0_i32_9 = arith.constant 0 : i32
    %16 = arith.cmpi ne, %15, %c0_i32_9 : i32
    scf.if %16 {
      %cst_20 = arith.constant 0.000000e+00 : f32
      %28 = vector.broadcast %cst_20 : f32 to vector<1x16xf32>
      %c0_21 = arith.constant 0 : index
      %c0_22 = arith.constant 0 : index
      %29 = vector.load %arg5[%c0_21, %c0_22] : memref<1x16xf32, #tpu.memory_space<vmem>>, vector<1x16xf32>
      tpu.vector_store %arg5[%c0_21, %c0_22], %28 {strides = array<i32>} : memref<1x16xf32, #tpu.memory_space<vmem>>, vector<1x16xf32>,
      %cst_23 = arith.constant 0.000000e+00 : f32
      %30 = vector.broadcast %cst_23 : f32 to vector<1x16xf32>
      %c0_24 = arith.constant 0 : index
      %c0_25 = arith.constant 0 : index
      %31 = vector.load %arg6[%c0_24, %c0_25] : memref<1x16xf32, #tpu.memory_space<vmem>>, vector<1x16xf32>
      tpu.vector_store %arg6[%c0_24, %c0_25], %30 {strides = array<i32>} : memref<1x16xf32, #tpu.memory_space<vmem>>, vector<1x16xf32>,
    } else {
    }
    %c0_10 = arith.constant 0 : index
    %c0_11 = arith.constant 0 : index
    %17 = vector.load %arg5[%c0_10, %c0_11] : memref<1x16xf32, #tpu.memory_space<vmem>>, vector<1x16xf32>
    %cst_12 = arith.constant dense<0.000000e+00> : vector<16xf32>
    %18 = vector.multi_reduction <add>, %12, %cst_12 [0] : vector<128x16xf32> to vector<16xf32>
    %19 = vector.shape_cast %18 : vector<16xf32> to vector<1x16xf32>
    %20 = arith.addf %17, %19 : vector<1x16xf32>
    %c0_13 = arith.constant 0 : index
    %c0_14 = arith.constant 0 : index
    %21 = vector.load %arg5[%c0_13, %c0_14] : memref<1x16xf32, #tpu.memory_space<vmem>>, vector<1x16xf32>
    tpu.vector_store %arg5[%c0_13, %c0_14], %20 {strides = array<i32>} : memref<1x16xf32, #tpu.memory_space<vmem>>, vector<1x16xf32>,
    %c0_15 = arith.constant 0 : index
    %c0_16 = arith.constant 0 : index
    %22 = vector.load %arg6[%c0_15, %c0_16] : memref<1x16xf32, #tpu.memory_space<vmem>>, vector<1x16xf32>
    %23 = arith.mulf %12, %12 : vector<128x16xf32>
    %cst_17 = arith.constant dense<0.000000e+00> : vector<16xf32>
    %24 = vector.multi_reduction <add>, %23, %cst_17 [0] : vector<128x16xf32> to vector<16xf32>
    %25 = vector.shape_cast %24 : vector<16xf32> to vector<1x16xf32>
    %26 = arith.addf %22, %25 : vector<1x16xf32>
    %c0_18 = arith.constant 0 : index
    %c0_19 = arith.constant 0 : index
    %27 = vector.load %arg6[%c0_18, %c0_19] : memref<1x16xf32, #tpu.memory_space<vmem>>, vector<1x16xf32>
    tpu.vector_store %arg6[%c0_18, %c0_19], %26 {strides = array<i32>} : memref<1x16xf32, #tpu.memory_space<vmem>>, vector<1x16xf32>,
    return
  }
  func.func @transform_0(%arg0: i32) -> (i32, i32) {
    %c0_i32 = arith.constant 0 : i32
    %c0_i32_0 = arith.constant 0 : i32
    return %arg0, %c0_i32 : i32, i32
  }
  func.func @transform_1(%arg0: i32) -> (i32, i32) {
    %c0_i32 = arith.constant 0 : i32
    %c0_i32_0 = arith.constant 0 : i32
    %c0_i32_1 = arith.constant 0 : i32
    return %c0_i32, %c0_i32_0 : i32, i32
  }
  func.func @transform_2(%arg0: i32) -> (i32, i32) {
    %c0_i32 = arith.constant 0 : i32
    %c0_i32_0 = arith.constant 0 : i32
    %c0_i32_1 = arith.constant 0 : i32
    return %c0_i32, %c0_i32_0 : i32, i32
  }
  func.func @transform_3(%arg0: i32) -> (i32, i32) {
    %c0_i32 = arith.constant 0 : i32
    %c0_i32_0 = arith.constant 0 : i32
    return %arg0, %c0_i32 : i32, i32
  }
  func.func @transform_4(%arg0: i32) -> (i32, i32) {
    %c0_i32 = arith.constant 0 : i32
    %c0_i32_0 = arith.constant 0 : i32
    %c0_i32_1 = arith.constant 0 : i32
    return %c0_i32, %c0_i32_0 : i32, i32
  }
  func.func @transform_5(%arg0: i32) -> (i32, i32) {
    %c0_i32 = arith.constant 0 : i32
    %c0_i32_0 = arith.constant 0 : i32
    %c0_i32_1 = arith.constant 0 : i32
    return %c0_i32, %c0_i32_0 : i32, i32
  }
}

module attributes {stable_mosaic.version = 11 : i64} {
  func.func @_conv_kernel(%arg0: i32, %arg1: memref<32x256xbf16, #tpu.memory_space<vmem>>, %arg2: memref<256x32xbf16, #tpu.memory_space<vmem>>, %arg3: memref<1x32xf32, #tpu.memory_space<vmem>>, %arg4: memref<32x32xf32, #tpu.memory_space<vmem>>, %arg5: memref<1x32xf32, #tpu.memory_space<vmem>>, %arg6: memref<1x32xf32, #tpu.memory_space<vmem>>) attributes {dimension_semantics = [#tpu.dimension_semantics<arbitrary>], iteration_bounds = array<i64: 1>, scalar_prefetch = 0 : i64, scratch_operands = 0 : i64, tpu.core_type = #tpu.core_type<tc>, window_params = [{transform_indices = @transform_0, window_bounds = array<i64: 32, 256>}, {pipeline_mode = #tpu.pipeline_mode<synchronous>, transform_indices = @transform_1, window_bounds = array<i64: 256, 32>}, {pipeline_mode = #tpu.pipeline_mode<synchronous>, transform_indices = @transform_2, window_bounds = array<i64: 1, 32>}, {transform_indices = @transform_3, window_bounds = array<i64: 32, 32>}, {pipeline_mode = #tpu.pipeline_mode<synchronous>, transform_indices = @transform_4, window_bounds = array<i64: 1, 32>}, {pipeline_mode = #tpu.pipeline_mode<synchronous>, transform_indices = @transform_5, window_bounds = array<i64: 1, 32>}]} {
    %c0 = arith.constant 0 : index
    %c0_0 = arith.constant 0 : index
    %0 = vector.load %arg1[%c0, %c0_0] : memref<32x256xbf16, #tpu.memory_space<vmem>>, vector<32x256xbf16>
    %1 = arith.extf %0 : vector<32x256xbf16> to vector<32x256xf32>
    %cst = arith.constant 0.000000e+00 : f32
    %2 = vector.broadcast %cst : f32 to vector<32x256xf32>
    %3 = arith.cmpf ogt, %1, %2 : vector<32x256xf32>
    %cst_1 = arith.constant 2.000000e-01 : f32
    %4 = vector.broadcast %cst_1 : f32 to vector<32x256xf32>
    %5 = arith.mulf %4, %1 : vector<32x256xf32>
    %6 = arith.select %3, %1, %5 : vector<32x256xi1>, vector<32x256xf32>
    %7 = arith.truncf %6 : vector<32x256xf32> to vector<32x256xbf16>
    %c0_2 = arith.constant 0 : index
    %c0_3 = arith.constant 0 : index
    %8 = vector.load %arg2[%c0_2, %c0_3] : memref<256x32xbf16, #tpu.memory_space<vmem>>, vector<256x32xbf16>
    %cst_4 = arith.constant dense<0.000000e+00> : vector<32x32xf32>
    %9 = tpu.matmul %7, %8, %cst_4 {dimension_numbers = #tpu.dot_dimension_numbers<[1], [0], [0], [1], [0, 0, 1, 1], [], []>} : vector<32x256xbf16>, vector<256x32xbf16>, vector<32x32xf32> -> vector<32x32xf32>
    %c0_5 = arith.constant 0 : index
    %c0_6 = arith.constant 0 : index
    %10 = vector.load %arg3[%c0_5, %c0_6] : memref<1x32xf32, #tpu.memory_space<vmem>>, vector<1x32xf32>
    %11 = vector.broadcast %10 : vector<1x32xf32> to vector<32x32xf32>
    %12 = arith.addf %9, %11 : vector<32x32xf32>
    %c0_7 = arith.constant 0 : index
    %c0_8 = arith.constant 0 : index
    %13 = vector.load %arg4[%c0_7, %c0_8] : memref<32x32xf32, #tpu.memory_space<vmem>>, vector<32x32xf32>
    tpu.vector_store %arg4[%c0_7, %c0_8], %12 {strides = array<i32>} : memref<32x32xf32, #tpu.memory_space<vmem>>, vector<32x32xf32>,
    %c0_i32 = arith.constant 0 : i32
    %14 = arith.cmpi eq, %arg0, %c0_i32 : i32
    %15 = arith.extui %14 : i1 to i32
    %c0_i32_9 = arith.constant 0 : i32
    %16 = arith.cmpi ne, %15, %c0_i32_9 : i32
    scf.if %16 {
      %cst_20 = arith.constant 0.000000e+00 : f32
      %28 = vector.broadcast %cst_20 : f32 to vector<1x32xf32>
      %c0_21 = arith.constant 0 : index
      %c0_22 = arith.constant 0 : index
      %29 = vector.load %arg5[%c0_21, %c0_22] : memref<1x32xf32, #tpu.memory_space<vmem>>, vector<1x32xf32>
      tpu.vector_store %arg5[%c0_21, %c0_22], %28 {strides = array<i32>} : memref<1x32xf32, #tpu.memory_space<vmem>>, vector<1x32xf32>,
      %cst_23 = arith.constant 0.000000e+00 : f32
      %30 = vector.broadcast %cst_23 : f32 to vector<1x32xf32>
      %c0_24 = arith.constant 0 : index
      %c0_25 = arith.constant 0 : index
      %31 = vector.load %arg6[%c0_24, %c0_25] : memref<1x32xf32, #tpu.memory_space<vmem>>, vector<1x32xf32>
      tpu.vector_store %arg6[%c0_24, %c0_25], %30 {strides = array<i32>} : memref<1x32xf32, #tpu.memory_space<vmem>>, vector<1x32xf32>,
    } else {
    }
    %c0_10 = arith.constant 0 : index
    %c0_11 = arith.constant 0 : index
    %17 = vector.load %arg5[%c0_10, %c0_11] : memref<1x32xf32, #tpu.memory_space<vmem>>, vector<1x32xf32>
    %cst_12 = arith.constant dense<0.000000e+00> : vector<32xf32>
    %18 = vector.multi_reduction <add>, %12, %cst_12 [0] : vector<32x32xf32> to vector<32xf32>
    %19 = vector.shape_cast %18 : vector<32xf32> to vector<1x32xf32>
    %20 = arith.addf %17, %19 : vector<1x32xf32>
    %c0_13 = arith.constant 0 : index
    %c0_14 = arith.constant 0 : index
    %21 = vector.load %arg5[%c0_13, %c0_14] : memref<1x32xf32, #tpu.memory_space<vmem>>, vector<1x32xf32>
    tpu.vector_store %arg5[%c0_13, %c0_14], %20 {strides = array<i32>} : memref<1x32xf32, #tpu.memory_space<vmem>>, vector<1x32xf32>,
    %c0_15 = arith.constant 0 : index
    %c0_16 = arith.constant 0 : index
    %22 = vector.load %arg6[%c0_15, %c0_16] : memref<1x32xf32, #tpu.memory_space<vmem>>, vector<1x32xf32>
    %23 = arith.mulf %12, %12 : vector<32x32xf32>
    %cst_17 = arith.constant dense<0.000000e+00> : vector<32xf32>
    %24 = vector.multi_reduction <add>, %23, %cst_17 [0] : vector<32x32xf32> to vector<32xf32>
    %25 = vector.shape_cast %24 : vector<32xf32> to vector<1x32xf32>
    %26 = arith.addf %22, %25 : vector<1x32xf32>
    %c0_18 = arith.constant 0 : index
    %c0_19 = arith.constant 0 : index
    %27 = vector.load %arg6[%c0_18, %c0_19] : memref<1x32xf32, #tpu.memory_space<vmem>>, vector<1x32xf32>
    tpu.vector_store %arg6[%c0_18, %c0_19], %26 {strides = array<i32>} : memref<1x32xf32, #tpu.memory_space<vmem>>, vector<1x32xf32>,
    return
  }
  func.func @transform_0(%arg0: i32) -> (i32, i32) {
    %c0_i32 = arith.constant 0 : i32
    %c0_i32_0 = arith.constant 0 : i32
    return %arg0, %c0_i32 : i32, i32
  }
  func.func @transform_1(%arg0: i32) -> (i32, i32) {
    %c0_i32 = arith.constant 0 : i32
    %c0_i32_0 = arith.constant 0 : i32
    %c0_i32_1 = arith.constant 0 : i32
    return %c0_i32, %c0_i32_0 : i32, i32
  }
  func.func @transform_2(%arg0: i32) -> (i32, i32) {
    %c0_i32 = arith.constant 0 : i32
    %c0_i32_0 = arith.constant 0 : i32
    %c0_i32_1 = arith.constant 0 : i32
    return %c0_i32, %c0_i32_0 : i32, i32
  }
  func.func @transform_3(%arg0: i32) -> (i32, i32) {
    %c0_i32 = arith.constant 0 : i32
    %c0_i32_0 = arith.constant 0 : i32
    return %arg0, %c0_i32 : i32, i32
  }
  func.func @transform_4(%arg0: i32) -> (i32, i32) {
    %c0_i32 = arith.constant 0 : i32
    %c0_i32_0 = arith.constant 0 : i32
    %c0_i32_1 = arith.constant 0 : i32
    return %c0_i32, %c0_i32_0 : i32, i32
  }
  func.func @transform_5(%arg0: i32) -> (i32, i32) {
    %c0_i32 = arith.constant 0 : i32
    %c0_i32_0 = arith.constant 0 : i32
    %c0_i32_1 = arith.constant 0 : i32
    return %c0_i32, %c0_i32_0 : i32, i32
  }
}

module attributes {stable_mosaic.version = 11 : i64} {
  func.func @_conv_kernel(%arg0: i32, %arg1: memref<8x512xbf16, #tpu.memory_space<vmem>>, %arg2: memref<512x64xbf16, #tpu.memory_space<vmem>>, %arg3: memref<1x64xf32, #tpu.memory_space<vmem>>, %arg4: memref<8x64xf32, #tpu.memory_space<vmem>>, %arg5: memref<1x64xf32, #tpu.memory_space<vmem>>, %arg6: memref<1x64xf32, #tpu.memory_space<vmem>>) attributes {dimension_semantics = [#tpu.dimension_semantics<arbitrary>], iteration_bounds = array<i64: 1>, scalar_prefetch = 0 : i64, scratch_operands = 0 : i64, tpu.core_type = #tpu.core_type<tc>, window_params = [{transform_indices = @transform_0, window_bounds = array<i64: 8, 512>}, {pipeline_mode = #tpu.pipeline_mode<synchronous>, transform_indices = @transform_1, window_bounds = array<i64: 512, 64>}, {pipeline_mode = #tpu.pipeline_mode<synchronous>, transform_indices = @transform_2, window_bounds = array<i64: 1, 64>}, {transform_indices = @transform_3, window_bounds = array<i64: 8, 64>}, {pipeline_mode = #tpu.pipeline_mode<synchronous>, transform_indices = @transform_4, window_bounds = array<i64: 1, 64>}, {pipeline_mode = #tpu.pipeline_mode<synchronous>, transform_indices = @transform_5, window_bounds = array<i64: 1, 64>}]} {
    %c0 = arith.constant 0 : index
    %c0_0 = arith.constant 0 : index
    %0 = vector.load %arg1[%c0, %c0_0] : memref<8x512xbf16, #tpu.memory_space<vmem>>, vector<8x512xbf16>
    %1 = arith.extf %0 : vector<8x512xbf16> to vector<8x512xf32>
    %cst = arith.constant 0.000000e+00 : f32
    %2 = vector.broadcast %cst : f32 to vector<8x512xf32>
    %3 = arith.cmpf ogt, %1, %2 : vector<8x512xf32>
    %cst_1 = arith.constant 2.000000e-01 : f32
    %4 = vector.broadcast %cst_1 : f32 to vector<8x512xf32>
    %5 = arith.mulf %4, %1 : vector<8x512xf32>
    %6 = arith.select %3, %1, %5 : vector<8x512xi1>, vector<8x512xf32>
    %7 = arith.truncf %6 : vector<8x512xf32> to vector<8x512xbf16>
    %c0_2 = arith.constant 0 : index
    %c0_3 = arith.constant 0 : index
    %8 = vector.load %arg2[%c0_2, %c0_3] : memref<512x64xbf16, #tpu.memory_space<vmem>>, vector<512x64xbf16>
    %cst_4 = arith.constant dense<0.000000e+00> : vector<8x64xf32>
    %9 = tpu.matmul %7, %8, %cst_4 {dimension_numbers = #tpu.dot_dimension_numbers<[1], [0], [0], [1], [0, 0, 1, 1], [], []>} : vector<8x512xbf16>, vector<512x64xbf16>, vector<8x64xf32> -> vector<8x64xf32>
    %c0_5 = arith.constant 0 : index
    %c0_6 = arith.constant 0 : index
    %10 = vector.load %arg3[%c0_5, %c0_6] : memref<1x64xf32, #tpu.memory_space<vmem>>, vector<1x64xf32>
    %11 = vector.broadcast %10 : vector<1x64xf32> to vector<8x64xf32>
    %12 = arith.addf %9, %11 : vector<8x64xf32>
    %c0_7 = arith.constant 0 : index
    %c0_8 = arith.constant 0 : index
    %13 = vector.load %arg4[%c0_7, %c0_8] : memref<8x64xf32, #tpu.memory_space<vmem>>, vector<8x64xf32>
    tpu.vector_store %arg4[%c0_7, %c0_8], %12 {strides = array<i32>} : memref<8x64xf32, #tpu.memory_space<vmem>>, vector<8x64xf32>,
    %c0_i32 = arith.constant 0 : i32
    %14 = arith.cmpi eq, %arg0, %c0_i32 : i32
    %15 = arith.extui %14 : i1 to i32
    %c0_i32_9 = arith.constant 0 : i32
    %16 = arith.cmpi ne, %15, %c0_i32_9 : i32
    scf.if %16 {
      %cst_20 = arith.constant 0.000000e+00 : f32
      %28 = vector.broadcast %cst_20 : f32 to vector<1x64xf32>
      %c0_21 = arith.constant 0 : index
      %c0_22 = arith.constant 0 : index
      %29 = vector.load %arg5[%c0_21, %c0_22] : memref<1x64xf32, #tpu.memory_space<vmem>>, vector<1x64xf32>
      tpu.vector_store %arg5[%c0_21, %c0_22], %28 {strides = array<i32>} : memref<1x64xf32, #tpu.memory_space<vmem>>, vector<1x64xf32>,
      %cst_23 = arith.constant 0.000000e+00 : f32
      %30 = vector.broadcast %cst_23 : f32 to vector<1x64xf32>
      %c0_24 = arith.constant 0 : index
      %c0_25 = arith.constant 0 : index
      %31 = vector.load %arg6[%c0_24, %c0_25] : memref<1x64xf32, #tpu.memory_space<vmem>>, vector<1x64xf32>
      tpu.vector_store %arg6[%c0_24, %c0_25], %30 {strides = array<i32>} : memref<1x64xf32, #tpu.memory_space<vmem>>, vector<1x64xf32>,
    } else {
    }
    %c0_10 = arith.constant 0 : index
    %c0_11 = arith.constant 0 : index
    %17 = vector.load %arg5[%c0_10, %c0_11] : memref<1x64xf32, #tpu.memory_space<vmem>>, vector<1x64xf32>
    %cst_12 = arith.constant dense<0.000000e+00> : vector<64xf32>
    %18 = vector.multi_reduction <add>, %12, %cst_12 [0] : vector<8x64xf32> to vector<64xf32>
    %19 = vector.shape_cast %18 : vector<64xf32> to vector<1x64xf32>
    %20 = arith.addf %17, %19 : vector<1x64xf32>
    %c0_13 = arith.constant 0 : index
    %c0_14 = arith.constant 0 : index
    %21 = vector.load %arg5[%c0_13, %c0_14] : memref<1x64xf32, #tpu.memory_space<vmem>>, vector<1x64xf32>
    tpu.vector_store %arg5[%c0_13, %c0_14], %20 {strides = array<i32>} : memref<1x64xf32, #tpu.memory_space<vmem>>, vector<1x64xf32>,
    %c0_15 = arith.constant 0 : index
    %c0_16 = arith.constant 0 : index
    %22 = vector.load %arg6[%c0_15, %c0_16] : memref<1x64xf32, #tpu.memory_space<vmem>>, vector<1x64xf32>
    %23 = arith.mulf %12, %12 : vector<8x64xf32>
    %cst_17 = arith.constant dense<0.000000e+00> : vector<64xf32>
    %24 = vector.multi_reduction <add>, %23, %cst_17 [0] : vector<8x64xf32> to vector<64xf32>
    %25 = vector.shape_cast %24 : vector<64xf32> to vector<1x64xf32>
    %26 = arith.addf %22, %25 : vector<1x64xf32>
    %c0_18 = arith.constant 0 : index
    %c0_19 = arith.constant 0 : index
    %27 = vector.load %arg6[%c0_18, %c0_19] : memref<1x64xf32, #tpu.memory_space<vmem>>, vector<1x64xf32>
    tpu.vector_store %arg6[%c0_18, %c0_19], %26 {strides = array<i32>} : memref<1x64xf32, #tpu.memory_space<vmem>>, vector<1x64xf32>,
    return
  }
  func.func @transform_0(%arg0: i32) -> (i32, i32) {
    %c0_i32 = arith.constant 0 : i32
    %c0_i32_0 = arith.constant 0 : i32
    return %arg0, %c0_i32 : i32, i32
  }
  func.func @transform_1(%arg0: i32) -> (i32, i32) {
    %c0_i32 = arith.constant 0 : i32
    %c0_i32_0 = arith.constant 0 : i32
    %c0_i32_1 = arith.constant 0 : i32
    return %c0_i32, %c0_i32_0 : i32, i32
  }
  func.func @transform_2(%arg0: i32) -> (i32, i32) {
    %c0_i32 = arith.constant 0 : i32
    %c0_i32_0 = arith.constant 0 : i32
    %c0_i32_1 = arith.constant 0 : i32
    return %c0_i32, %c0_i32_0 : i32, i32
  }
  func.func @transform_3(%arg0: i32) -> (i32, i32) {
    %c0_i32 = arith.constant 0 : i32
    %c0_i32_0 = arith.constant 0 : i32
    return %arg0, %c0_i32 : i32, i32
  }
  func.func @transform_4(%arg0: i32) -> (i32, i32) {
    %c0_i32 = arith.constant 0 : i32
    %c0_i32_0 = arith.constant 0 : i32
    %c0_i32_1 = arith.constant 0 : i32
    return %c0_i32, %c0_i32_0 : i32, i32
  }
  func.func @transform_5(%arg0: i32) -> (i32, i32) {
    %c0_i32 = arith.constant 0 : i32
    %c0_i32_0 = arith.constant 0 : i32
    %c0_i32_1 = arith.constant 0 : i32
    return %c0_i32, %c0_i32_0 : i32, i32
  }
}

module attributes {stable_mosaic.version = 11 : i64} {
  func.func @_conv_kernel(%arg0: i32, %arg1: memref<2x1024xbf16, #tpu.memory_space<vmem>>, %arg2: memref<1024x64xbf16, #tpu.memory_space<vmem>>, %arg3: memref<1x64xf32, #tpu.memory_space<vmem>>, %arg4: memref<2x64xf32, #tpu.memory_space<vmem>>) attributes {dimension_semantics = [#tpu.dimension_semantics<parallel>], iteration_bounds = array<i64: 1>, scalar_prefetch = 0 : i64, scratch_operands = 0 : i64, tpu.core_type = #tpu.core_type<tc>, window_params = [{transform_indices = @transform_0, window_bounds = array<i64: 2, 1024>}, {pipeline_mode = #tpu.pipeline_mode<synchronous>, transform_indices = @transform_1, window_bounds = array<i64: 1024, 64>}, {pipeline_mode = #tpu.pipeline_mode<synchronous>, transform_indices = @transform_2, window_bounds = array<i64: 1, 64>}, {transform_indices = @transform_3, window_bounds = array<i64: 2, 64>}]} {
    %c0 = arith.constant 0 : index
    %c0_0 = arith.constant 0 : index
    %0 = vector.load %arg1[%c0, %c0_0] : memref<2x1024xbf16, #tpu.memory_space<vmem>>, vector<2x1024xbf16>
    %1 = arith.extf %0 : vector<2x1024xbf16> to vector<2x1024xf32>
    %cst = arith.constant 0.000000e+00 : f32
    %2 = vector.broadcast %cst : f32 to vector<2x1024xf32>
    %3 = arith.cmpf ogt, %1, %2 : vector<2x1024xf32>
    %cst_1 = arith.constant 2.000000e-01 : f32
    %4 = vector.broadcast %cst_1 : f32 to vector<2x1024xf32>
    %5 = arith.mulf %4, %1 : vector<2x1024xf32>
    %6 = arith.select %3, %1, %5 : vector<2x1024xi1>, vector<2x1024xf32>
    %7 = arith.truncf %6 : vector<2x1024xf32> to vector<2x1024xbf16>
    %c0_2 = arith.constant 0 : index
    %c0_3 = arith.constant 0 : index
    %8 = vector.load %arg2[%c0_2, %c0_3] : memref<1024x64xbf16, #tpu.memory_space<vmem>>, vector<1024x64xbf16>
    %cst_4 = arith.constant dense<0.000000e+00> : vector<2x64xf32>
    %9 = tpu.matmul %7, %8, %cst_4 {dimension_numbers = #tpu.dot_dimension_numbers<[1], [0], [0], [1], [0, 0, 1, 1], [], []>} : vector<2x1024xbf16>, vector<1024x64xbf16>, vector<2x64xf32> -> vector<2x64xf32>
    %c0_5 = arith.constant 0 : index
    %c0_6 = arith.constant 0 : index
    %10 = vector.load %arg3[%c0_5, %c0_6] : memref<1x64xf32, #tpu.memory_space<vmem>>, vector<1x64xf32>
    %11 = vector.broadcast %10 : vector<1x64xf32> to vector<2x64xf32>
    %12 = arith.addf %9, %11 : vector<2x64xf32>
    %cst_7 = arith.constant 0.000000e+00 : f32
    %13 = vector.broadcast %cst_7 : f32 to vector<2x64xf32>
    %14 = arith.maximumf %12, %13 : vector<2x64xf32>
    %c0_8 = arith.constant 0 : index
    %c0_9 = arith.constant 0 : index
    %15 = vector.load %arg4[%c0_8, %c0_9] : memref<2x64xf32, #tpu.memory_space<vmem>>, vector<2x64xf32>
    tpu.vector_store %arg4[%c0_8, %c0_9], %14 {strides = array<i32>} : memref<2x64xf32, #tpu.memory_space<vmem>>, vector<2x64xf32>,
    return
  }
  func.func @transform_0(%arg0: i32) -> (i32, i32) {
    %c0_i32 = arith.constant 0 : i32
    %c0_i32_0 = arith.constant 0 : i32
    return %arg0, %c0_i32 : i32, i32
  }
  func.func @transform_1(%arg0: i32) -> (i32, i32) {
    %c0_i32 = arith.constant 0 : i32
    %c0_i32_0 = arith.constant 0 : i32
    %c0_i32_1 = arith.constant 0 : i32
    return %c0_i32, %c0_i32_0 : i32, i32
  }
  func.func @transform_2(%arg0: i32) -> (i32, i32) {
    %c0_i32 = arith.constant 0 : i32
    %c0_i32_0 = arith.constant 0 : i32
    %c0_i32_1 = arith.constant 0 : i32
    return %c0_i32, %c0_i32_0 : i32, i32
  }
  func.func @transform_3(%arg0: i32) -> (i32, i32) {
    %c0_i32 = arith.constant 0 : i32
    %c0_i32_0 = arith.constant 0 : i32
    return %arg0, %c0_i32 : i32, i32
  }
}

module attributes {stable_mosaic.version = 11 : i64} {
  func.func @_conv_kernel(%arg0: i32, %arg1: memref<2x576xbf16, #tpu.memory_space<vmem>>, %arg2: memref<576x256xbf16, #tpu.memory_space<vmem>>, %arg3: memref<1x256xf32, #tpu.memory_space<vmem>>, %arg4: memref<2x256xf32, #tpu.memory_space<vmem>>, %arg5: memref<1x256xf32, #tpu.memory_space<vmem>>, %arg6: memref<1x256xf32, #tpu.memory_space<vmem>>) attributes {dimension_semantics = [#tpu.dimension_semantics<arbitrary>], iteration_bounds = array<i64: 1>, scalar_prefetch = 0 : i64, scratch_operands = 0 : i64, tpu.core_type = #tpu.core_type<tc>, window_params = [{transform_indices = @transform_0, window_bounds = array<i64: 2, 576>}, {pipeline_mode = #tpu.pipeline_mode<synchronous>, transform_indices = @transform_1, window_bounds = array<i64: 576, 256>}, {pipeline_mode = #tpu.pipeline_mode<synchronous>, transform_indices = @transform_2, window_bounds = array<i64: 1, 256>}, {transform_indices = @transform_3, window_bounds = array<i64: 2, 256>}, {pipeline_mode = #tpu.pipeline_mode<synchronous>, transform_indices = @transform_4, window_bounds = array<i64: 1, 256>}, {pipeline_mode = #tpu.pipeline_mode<synchronous>, transform_indices = @transform_5, window_bounds = array<i64: 1, 256>}]} {
    %c0 = arith.constant 0 : index
    %c0_0 = arith.constant 0 : index
    %0 = vector.load %arg1[%c0, %c0_0] : memref<2x576xbf16, #tpu.memory_space<vmem>>, vector<2x576xbf16>
    %c0_1 = arith.constant 0 : index
    %c0_2 = arith.constant 0 : index
    %1 = vector.load %arg2[%c0_1, %c0_2] : memref<576x256xbf16, #tpu.memory_space<vmem>>, vector<576x256xbf16>
    %cst = arith.constant dense<0.000000e+00> : vector<2x256xf32>
    %2 = tpu.matmul %0, %1, %cst {dimension_numbers = #tpu.dot_dimension_numbers<[1], [0], [0], [1], [0, 0, 1, 1], [], []>} : vector<2x576xbf16>, vector<576x256xbf16>, vector<2x256xf32> -> vector<2x256xf32>
    %c0_3 = arith.constant 0 : index
    %c0_4 = arith.constant 0 : index
    %3 = vector.load %arg3[%c0_3, %c0_4] : memref<1x256xf32, #tpu.memory_space<vmem>>, vector<1x256xf32>
    %4 = vector.broadcast %3 : vector<1x256xf32> to vector<2x256xf32>
    %5 = arith.addf %2, %4 : vector<2x256xf32>
    %c0_5 = arith.constant 0 : index
    %c0_6 = arith.constant 0 : index
    %6 = vector.load %arg4[%c0_5, %c0_6] : memref<2x256xf32, #tpu.memory_space<vmem>>, vector<2x256xf32>
    tpu.vector_store %arg4[%c0_5, %c0_6], %5 {strides = array<i32>} : memref<2x256xf32, #tpu.memory_space<vmem>>, vector<2x256xf32>,
    %c0_i32 = arith.constant 0 : i32
    %7 = arith.cmpi eq, %arg0, %c0_i32 : i32
    %8 = arith.extui %7 : i1 to i32
    %c0_i32_7 = arith.constant 0 : i32
    %9 = arith.cmpi ne, %8, %c0_i32_7 : i32
    scf.if %9 {
      %cst_18 = arith.constant 0.000000e+00 : f32
      %21 = vector.broadcast %cst_18 : f32 to vector<1x256xf32>
      %c0_19 = arith.constant 0 : index
      %c0_20 = arith.constant 0 : index
      %22 = vector.load %arg5[%c0_19, %c0_20] : memref<1x256xf32, #tpu.memory_space<vmem>>, vector<1x256xf32>
      tpu.vector_store %arg5[%c0_19, %c0_20], %21 {strides = array<i32>} : memref<1x256xf32, #tpu.memory_space<vmem>>, vector<1x256xf32>,
      %cst_21 = arith.constant 0.000000e+00 : f32
      %23 = vector.broadcast %cst_21 : f32 to vector<1x256xf32>
      %c0_22 = arith.constant 0 : index
      %c0_23 = arith.constant 0 : index
      %24 = vector.load %arg6[%c0_22, %c0_23] : memref<1x256xf32, #tpu.memory_space<vmem>>, vector<1x256xf32>
      tpu.vector_store %arg6[%c0_22, %c0_23], %23 {strides = array<i32>} : memref<1x256xf32, #tpu.memory_space<vmem>>, vector<1x256xf32>,
    } else {
    }
    %c0_8 = arith.constant 0 : index
    %c0_9 = arith.constant 0 : index
    %10 = vector.load %arg5[%c0_8, %c0_9] : memref<1x256xf32, #tpu.memory_space<vmem>>, vector<1x256xf32>
    %cst_10 = arith.constant dense<0.000000e+00> : vector<256xf32>
    %11 = vector.multi_reduction <add>, %5, %cst_10 [0] : vector<2x256xf32> to vector<256xf32>
    %12 = vector.shape_cast %11 : vector<256xf32> to vector<1x256xf32>
    %13 = arith.addf %10, %12 : vector<1x256xf32>
    %c0_11 = arith.constant 0 : index
    %c0_12 = arith.constant 0 : index
    %14 = vector.load %arg5[%c0_11, %c0_12] : memref<1x256xf32, #tpu.memory_space<vmem>>, vector<1x256xf32>
    tpu.vector_store %arg5[%c0_11, %c0_12], %13 {strides = array<i32>} : memref<1x256xf32, #tpu.memory_space<vmem>>, vector<1x256xf32>,
    %c0_13 = arith.constant 0 : index
    %c0_14 = arith.constant 0 : index
    %15 = vector.load %arg6[%c0_13, %c0_14] : memref<1x256xf32, #tpu.memory_space<vmem>>, vector<1x256xf32>
    %16 = arith.mulf %5, %5 : vector<2x256xf32>
    %cst_15 = arith.constant dense<0.000000e+00> : vector<256xf32>
    %17 = vector.multi_reduction <add>, %16, %cst_15 [0] : vector<2x256xf32> to vector<256xf32>
    %18 = vector.shape_cast %17 : vector<256xf32> to vector<1x256xf32>
    %19 = arith.addf %15, %18 : vector<1x256xf32>
    %c0_16 = arith.constant 0 : index
    %c0_17 = arith.constant 0 : index
    %20 = vector.load %arg6[%c0_16, %c0_17] : memref<1x256xf32, #tpu.memory_space<vmem>>, vector<1x256xf32>
    tpu.vector_store %arg6[%c0_16, %c0_17], %19 {strides = array<i32>} : memref<1x256xf32, #tpu.memory_space<vmem>>, vector<1x256xf32>,
    return
  }
  func.func @transform_0(%arg0: i32) -> (i32, i32) {
    %c0_i32 = arith.constant 0 : i32
    %c0_i32_0 = arith.constant 0 : i32
    return %arg0, %c0_i32 : i32, i32
  }
  func.func @transform_1(%arg0: i32) -> (i32, i32) {
    %c0_i32 = arith.constant 0 : i32
    %c0_i32_0 = arith.constant 0 : i32
    %c0_i32_1 = arith.constant 0 : i32
    return %c0_i32, %c0_i32_0 : i32, i32
  }
  func.func @transform_2(%arg0: i32) -> (i32, i32) {
    %c0_i32 = arith.constant 0 : i32
    %c0_i32_0 = arith.constant 0 : i32
    %c0_i32_1 = arith.constant 0 : i32
    return %c0_i32, %c0_i32_0 : i32, i32
  }
  func.func @transform_3(%arg0: i32) -> (i32, i32) {
    %c0_i32 = arith.constant 0 : i32
    %c0_i32_0 = arith.constant 0 : i32
    return %arg0, %c0_i32 : i32, i32
  }
  func.func @transform_4(%arg0: i32) -> (i32, i32) {
    %c0_i32 = arith.constant 0 : i32
    %c0_i32_0 = arith.constant 0 : i32
    %c0_i32_1 = arith.constant 0 : i32
    return %c0_i32, %c0_i32_0 : i32, i32
  }
  func.func @transform_5(%arg0: i32) -> (i32, i32) {
    %c0_i32 = arith.constant 0 : i32
    %c0_i32_0 = arith.constant 0 : i32
    %c0_i32_1 = arith.constant 0 : i32
    return %c0_i32, %c0_i32_0 : i32, i32
  }
}

module attributes {stable_mosaic.version = 11 : i64} {
  func.func @_conv_kernel(%arg0: i32, %arg1: memref<8x1152xbf16, #tpu.memory_space<vmem>>, %arg2: memref<1152x128xbf16, #tpu.memory_space<vmem>>, %arg3: memref<1x128xf32, #tpu.memory_space<vmem>>, %arg4: memref<8x128xf32, #tpu.memory_space<vmem>>, %arg5: memref<1x128xf32, #tpu.memory_space<vmem>>, %arg6: memref<1x128xf32, #tpu.memory_space<vmem>>) attributes {dimension_semantics = [#tpu.dimension_semantics<arbitrary>], iteration_bounds = array<i64: 1>, scalar_prefetch = 0 : i64, scratch_operands = 0 : i64, tpu.core_type = #tpu.core_type<tc>, window_params = [{transform_indices = @transform_0, window_bounds = array<i64: 8, 1152>}, {pipeline_mode = #tpu.pipeline_mode<synchronous>, transform_indices = @transform_1, window_bounds = array<i64: 1152, 128>}, {pipeline_mode = #tpu.pipeline_mode<synchronous>, transform_indices = @transform_2, window_bounds = array<i64: 1, 128>}, {transform_indices = @transform_3, window_bounds = array<i64: 8, 128>}, {pipeline_mode = #tpu.pipeline_mode<synchronous>, transform_indices = @transform_4, window_bounds = array<i64: 1, 128>}, {pipeline_mode = #tpu.pipeline_mode<synchronous>, transform_indices = @transform_5, window_bounds = array<i64: 1, 128>}]} {
    %c0 = arith.constant 0 : index
    %c0_0 = arith.constant 0 : index
    %0 = vector.load %arg1[%c0, %c0_0] : memref<8x1152xbf16, #tpu.memory_space<vmem>>, vector<8x1152xbf16>
    %1 = arith.extf %0 : vector<8x1152xbf16> to vector<8x1152xf32>
    %cst = arith.constant 0.000000e+00 : f32
    %2 = vector.broadcast %cst : f32 to vector<8x1152xf32>
    %3 = arith.cmpf ogt, %1, %2 : vector<8x1152xf32>
    %cst_1 = arith.constant 0.000000e+00 : f32
    %4 = vector.broadcast %cst_1 : f32 to vector<8x1152xf32>
    %5 = arith.mulf %4, %1 : vector<8x1152xf32>
    %6 = arith.select %3, %1, %5 : vector<8x1152xi1>, vector<8x1152xf32>
    %7 = arith.truncf %6 : vector<8x1152xf32> to vector<8x1152xbf16>
    %c0_2 = arith.constant 0 : index
    %c0_3 = arith.constant 0 : index
    %8 = vector.load %arg2[%c0_2, %c0_3] : memref<1152x128xbf16, #tpu.memory_space<vmem>>, vector<1152x128xbf16>
    %cst_4 = arith.constant dense<0.000000e+00> : vector<8x128xf32>
    %9 = tpu.matmul %7, %8, %cst_4 {dimension_numbers = #tpu.dot_dimension_numbers<[1], [0], [0], [1], [0, 0, 1, 1], [], []>} : vector<8x1152xbf16>, vector<1152x128xbf16>, vector<8x128xf32> -> vector<8x128xf32>
    %c0_5 = arith.constant 0 : index
    %c0_6 = arith.constant 0 : index
    %10 = vector.load %arg3[%c0_5, %c0_6] : memref<1x128xf32, #tpu.memory_space<vmem>>, vector<1x128xf32>
    %11 = vector.broadcast %10 : vector<1x128xf32> to vector<8x128xf32>
    %12 = arith.addf %9, %11 : vector<8x128xf32>
    %c0_7 = arith.constant 0 : index
    %c0_8 = arith.constant 0 : index
    %13 = vector.load %arg4[%c0_7, %c0_8] : memref<8x128xf32, #tpu.memory_space<vmem>>, vector<8x128xf32>
    tpu.vector_store %arg4[%c0_7, %c0_8], %12 {strides = array<i32>} : memref<8x128xf32, #tpu.memory_space<vmem>>, vector<8x128xf32>,
    %c0_i32 = arith.constant 0 : i32
    %14 = arith.cmpi eq, %arg0, %c0_i32 : i32
    %15 = arith.extui %14 : i1 to i32
    %c0_i32_9 = arith.constant 0 : i32
    %16 = arith.cmpi ne, %15, %c0_i32_9 : i32
    scf.if %16 {
      %cst_20 = arith.constant 0.000000e+00 : f32
      %28 = vector.broadcast %cst_20 : f32 to vector<1x128xf32>
      %c0_21 = arith.constant 0 : index
      %c0_22 = arith.constant 0 : index
      %29 = vector.load %arg5[%c0_21, %c0_22] : memref<1x128xf32, #tpu.memory_space<vmem>>, vector<1x128xf32>
      tpu.vector_store %arg5[%c0_21, %c0_22], %28 {strides = array<i32>} : memref<1x128xf32, #tpu.memory_space<vmem>>, vector<1x128xf32>,
      %cst_23 = arith.constant 0.000000e+00 : f32
      %30 = vector.broadcast %cst_23 : f32 to vector<1x128xf32>
      %c0_24 = arith.constant 0 : index
      %c0_25 = arith.constant 0 : index
      %31 = vector.load %arg6[%c0_24, %c0_25] : memref<1x128xf32, #tpu.memory_space<vmem>>, vector<1x128xf32>
      tpu.vector_store %arg6[%c0_24, %c0_25], %30 {strides = array<i32>} : memref<1x128xf32, #tpu.memory_space<vmem>>, vector<1x128xf32>,
    } else {
    }
    %c0_10 = arith.constant 0 : index
    %c0_11 = arith.constant 0 : index
    %17 = vector.load %arg5[%c0_10, %c0_11] : memref<1x128xf32, #tpu.memory_space<vmem>>, vector<1x128xf32>
    %cst_12 = arith.constant dense<0.000000e+00> : vector<128xf32>
    %18 = vector.multi_reduction <add>, %12, %cst_12 [0] : vector<8x128xf32> to vector<128xf32>
    %19 = vector.shape_cast %18 : vector<128xf32> to vector<1x128xf32>
    %20 = arith.addf %17, %19 : vector<1x128xf32>
    %c0_13 = arith.constant 0 : index
    %c0_14 = arith.constant 0 : index
    %21 = vector.load %arg5[%c0_13, %c0_14] : memref<1x128xf32, #tpu.memory_space<vmem>>, vector<1x128xf32>
    tpu.vector_store %arg5[%c0_13, %c0_14], %20 {strides = array<i32>} : memref<1x128xf32, #tpu.memory_space<vmem>>, vector<1x128xf32>,
    %c0_15 = arith.constant 0 : index
    %c0_16 = arith.constant 0 : index
    %22 = vector.load %arg6[%c0_15, %c0_16] : memref<1x128xf32, #tpu.memory_space<vmem>>, vector<1x128xf32>
    %23 = arith.mulf %12, %12 : vector<8x128xf32>
    %cst_17 = arith.constant dense<0.000000e+00> : vector<128xf32>
    %24 = vector.multi_reduction <add>, %23, %cst_17 [0] : vector<8x128xf32> to vector<128xf32>
    %25 = vector.shape_cast %24 : vector<128xf32> to vector<1x128xf32>
    %26 = arith.addf %22, %25 : vector<1x128xf32>
    %c0_18 = arith.constant 0 : index
    %c0_19 = arith.constant 0 : index
    %27 = vector.load %arg6[%c0_18, %c0_19] : memref<1x128xf32, #tpu.memory_space<vmem>>, vector<1x128xf32>
    tpu.vector_store %arg6[%c0_18, %c0_19], %26 {strides = array<i32>} : memref<1x128xf32, #tpu.memory_space<vmem>>, vector<1x128xf32>,
    return
  }
  func.func @transform_0(%arg0: i32) -> (i32, i32) {
    %c0_i32 = arith.constant 0 : i32
    %c0_i32_0 = arith.constant 0 : i32
    return %arg0, %c0_i32 : i32, i32
  }
  func.func @transform_1(%arg0: i32) -> (i32, i32) {
    %c0_i32 = arith.constant 0 : i32
    %c0_i32_0 = arith.constant 0 : i32
    %c0_i32_1 = arith.constant 0 : i32
    return %c0_i32, %c0_i32_0 : i32, i32
  }
  func.func @transform_2(%arg0: i32) -> (i32, i32) {
    %c0_i32 = arith.constant 0 : i32
    %c0_i32_0 = arith.constant 0 : i32
    %c0_i32_1 = arith.constant 0 : i32
    return %c0_i32, %c0_i32_0 : i32, i32
  }
  func.func @transform_3(%arg0: i32) -> (i32, i32) {
    %c0_i32 = arith.constant 0 : i32
    %c0_i32_0 = arith.constant 0 : i32
    return %arg0, %c0_i32 : i32, i32
  }
  func.func @transform_4(%arg0: i32) -> (i32, i32) {
    %c0_i32 = arith.constant 0 : i32
    %c0_i32_0 = arith.constant 0 : i32
    %c0_i32_1 = arith.constant 0 : i32
    return %c0_i32, %c0_i32_0 : i32, i32
  }
  func.func @transform_5(%arg0: i32) -> (i32, i32) {
    %c0_i32 = arith.constant 0 : i32
    %c0_i32_0 = arith.constant 0 : i32
    %c0_i32_1 = arith.constant 0 : i32
    return %c0_i32, %c0_i32_0 : i32, i32
  }
}

module attributes {stable_mosaic.version = 11 : i64} {
  func.func @_conv_kernel(%arg0: i32, %arg1: memref<32x576xbf16, #tpu.memory_space<vmem>>, %arg2: memref<576x64xbf16, #tpu.memory_space<vmem>>, %arg3: memref<1x64xf32, #tpu.memory_space<vmem>>, %arg4: memref<32x64xf32, #tpu.memory_space<vmem>>, %arg5: memref<1x64xf32, #tpu.memory_space<vmem>>, %arg6: memref<1x64xf32, #tpu.memory_space<vmem>>) attributes {dimension_semantics = [#tpu.dimension_semantics<arbitrary>], iteration_bounds = array<i64: 1>, scalar_prefetch = 0 : i64, scratch_operands = 0 : i64, tpu.core_type = #tpu.core_type<tc>, window_params = [{transform_indices = @transform_0, window_bounds = array<i64: 32, 576>}, {pipeline_mode = #tpu.pipeline_mode<synchronous>, transform_indices = @transform_1, window_bounds = array<i64: 576, 64>}, {pipeline_mode = #tpu.pipeline_mode<synchronous>, transform_indices = @transform_2, window_bounds = array<i64: 1, 64>}, {transform_indices = @transform_3, window_bounds = array<i64: 32, 64>}, {pipeline_mode = #tpu.pipeline_mode<synchronous>, transform_indices = @transform_4, window_bounds = array<i64: 1, 64>}, {pipeline_mode = #tpu.pipeline_mode<synchronous>, transform_indices = @transform_5, window_bounds = array<i64: 1, 64>}]} {
    %c0 = arith.constant 0 : index
    %c0_0 = arith.constant 0 : index
    %0 = vector.load %arg1[%c0, %c0_0] : memref<32x576xbf16, #tpu.memory_space<vmem>>, vector<32x576xbf16>
    %1 = arith.extf %0 : vector<32x576xbf16> to vector<32x576xf32>
    %cst = arith.constant 0.000000e+00 : f32
    %2 = vector.broadcast %cst : f32 to vector<32x576xf32>
    %3 = arith.cmpf ogt, %1, %2 : vector<32x576xf32>
    %cst_1 = arith.constant 0.000000e+00 : f32
    %4 = vector.broadcast %cst_1 : f32 to vector<32x576xf32>
    %5 = arith.mulf %4, %1 : vector<32x576xf32>
    %6 = arith.select %3, %1, %5 : vector<32x576xi1>, vector<32x576xf32>
    %7 = arith.truncf %6 : vector<32x576xf32> to vector<32x576xbf16>
    %c0_2 = arith.constant 0 : index
    %c0_3 = arith.constant 0 : index
    %8 = vector.load %arg2[%c0_2, %c0_3] : memref<576x64xbf16, #tpu.memory_space<vmem>>, vector<576x64xbf16>
    %cst_4 = arith.constant dense<0.000000e+00> : vector<32x64xf32>
    %9 = tpu.matmul %7, %8, %cst_4 {dimension_numbers = #tpu.dot_dimension_numbers<[1], [0], [0], [1], [0, 0, 1, 1], [], []>} : vector<32x576xbf16>, vector<576x64xbf16>, vector<32x64xf32> -> vector<32x64xf32>
    %c0_5 = arith.constant 0 : index
    %c0_6 = arith.constant 0 : index
    %10 = vector.load %arg3[%c0_5, %c0_6] : memref<1x64xf32, #tpu.memory_space<vmem>>, vector<1x64xf32>
    %11 = vector.broadcast %10 : vector<1x64xf32> to vector<32x64xf32>
    %12 = arith.addf %9, %11 : vector<32x64xf32>
    %c0_7 = arith.constant 0 : index
    %c0_8 = arith.constant 0 : index
    %13 = vector.load %arg4[%c0_7, %c0_8] : memref<32x64xf32, #tpu.memory_space<vmem>>, vector<32x64xf32>
    tpu.vector_store %arg4[%c0_7, %c0_8], %12 {strides = array<i32>} : memref<32x64xf32, #tpu.memory_space<vmem>>, vector<32x64xf32>,
    %c0_i32 = arith.constant 0 : i32
    %14 = arith.cmpi eq, %arg0, %c0_i32 : i32
    %15 = arith.extui %14 : i1 to i32
    %c0_i32_9 = arith.constant 0 : i32
    %16 = arith.cmpi ne, %15, %c0_i32_9 : i32
    scf.if %16 {
      %cst_20 = arith.constant 0.000000e+00 : f32
      %28 = vector.broadcast %cst_20 : f32 to vector<1x64xf32>
      %c0_21 = arith.constant 0 : index
      %c0_22 = arith.constant 0 : index
      %29 = vector.load %arg5[%c0_21, %c0_22] : memref<1x64xf32, #tpu.memory_space<vmem>>, vector<1x64xf32>
      tpu.vector_store %arg5[%c0_21, %c0_22], %28 {strides = array<i32>} : memref<1x64xf32, #tpu.memory_space<vmem>>, vector<1x64xf32>,
      %cst_23 = arith.constant 0.000000e+00 : f32
      %30 = vector.broadcast %cst_23 : f32 to vector<1x64xf32>
      %c0_24 = arith.constant 0 : index
      %c0_25 = arith.constant 0 : index
      %31 = vector.load %arg6[%c0_24, %c0_25] : memref<1x64xf32, #tpu.memory_space<vmem>>, vector<1x64xf32>
      tpu.vector_store %arg6[%c0_24, %c0_25], %30 {strides = array<i32>} : memref<1x64xf32, #tpu.memory_space<vmem>>, vector<1x64xf32>,
    } else {
    }
    %c0_10 = arith.constant 0 : index
    %c0_11 = arith.constant 0 : index
    %17 = vector.load %arg5[%c0_10, %c0_11] : memref<1x64xf32, #tpu.memory_space<vmem>>, vector<1x64xf32>
    %cst_12 = arith.constant dense<0.000000e+00> : vector<64xf32>
    %18 = vector.multi_reduction <add>, %12, %cst_12 [0] : vector<32x64xf32> to vector<64xf32>
    %19 = vector.shape_cast %18 : vector<64xf32> to vector<1x64xf32>
    %20 = arith.addf %17, %19 : vector<1x64xf32>
    %c0_13 = arith.constant 0 : index
    %c0_14 = arith.constant 0 : index
    %21 = vector.load %arg5[%c0_13, %c0_14] : memref<1x64xf32, #tpu.memory_space<vmem>>, vector<1x64xf32>
    tpu.vector_store %arg5[%c0_13, %c0_14], %20 {strides = array<i32>} : memref<1x64xf32, #tpu.memory_space<vmem>>, vector<1x64xf32>,
    %c0_15 = arith.constant 0 : index
    %c0_16 = arith.constant 0 : index
    %22 = vector.load %arg6[%c0_15, %c0_16] : memref<1x64xf32, #tpu.memory_space<vmem>>, vector<1x64xf32>
    %23 = arith.mulf %12, %12 : vector<32x64xf32>
    %cst_17 = arith.constant dense<0.000000e+00> : vector<64xf32>
    %24 = vector.multi_reduction <add>, %23, %cst_17 [0] : vector<32x64xf32> to vector<64xf32>
    %25 = vector.shape_cast %24 : vector<64xf32> to vector<1x64xf32>
    %26 = arith.addf %22, %25 : vector<1x64xf32>
    %c0_18 = arith.constant 0 : index
    %c0_19 = arith.constant 0 : index
    %27 = vector.load %arg6[%c0_18, %c0_19] : memref<1x64xf32, #tpu.memory_space<vmem>>, vector<1x64xf32>
    tpu.vector_store %arg6[%c0_18, %c0_19], %26 {strides = array<i32>} : memref<1x64xf32, #tpu.memory_space<vmem>>, vector<1x64xf32>,
    return
  }
  func.func @transform_0(%arg0: i32) -> (i32, i32) {
    %c0_i32 = arith.constant 0 : i32
    %c0_i32_0 = arith.constant 0 : i32
    return %arg0, %c0_i32 : i32, i32
  }
  func.func @transform_1(%arg0: i32) -> (i32, i32) {
    %c0_i32 = arith.constant 0 : i32
    %c0_i32_0 = arith.constant 0 : i32
    %c0_i32_1 = arith.constant 0 : i32
    return %c0_i32, %c0_i32_0 : i32, i32
  }
  func.func @transform_2(%arg0: i32) -> (i32, i32) {
    %c0_i32 = arith.constant 0 : i32
    %c0_i32_0 = arith.constant 0 : i32
    %c0_i32_1 = arith.constant 0 : i32
    return %c0_i32, %c0_i32_0 : i32, i32
  }
  func.func @transform_3(%arg0: i32) -> (i32, i32) {
    %c0_i32 = arith.constant 0 : i32
    %c0_i32_0 = arith.constant 0 : i32
    return %arg0, %c0_i32 : i32, i32
  }
  func.func @transform_4(%arg0: i32) -> (i32, i32) {
    %c0_i32 = arith.constant 0 : i32
    %c0_i32_0 = arith.constant 0 : i32
    %c0_i32_1 = arith.constant 0 : i32
    return %c0_i32, %c0_i32_0 : i32, i32
  }
  func.func @transform_5(%arg0: i32) -> (i32, i32) {
    %c0_i32 = arith.constant 0 : i32
    %c0_i32_0 = arith.constant 0 : i32
    %c0_i32_1 = arith.constant 0 : i32
    return %c0_i32, %c0_i32_0 : i32, i32
  }
}

module attributes {stable_mosaic.version = 11 : i64} {
  func.func @_conv_kernel(%arg0: i32, %arg1: memref<128x288xbf16, #tpu.memory_space<vmem>>, %arg2: memref<288x32xbf16, #tpu.memory_space<vmem>>, %arg3: memref<1x32xf32, #tpu.memory_space<vmem>>, %arg4: memref<128x32xf32, #tpu.memory_space<vmem>>, %arg5: memref<1x32xf32, #tpu.memory_space<vmem>>, %arg6: memref<1x32xf32, #tpu.memory_space<vmem>>) attributes {dimension_semantics = [#tpu.dimension_semantics<arbitrary>], iteration_bounds = array<i64: 1>, scalar_prefetch = 0 : i64, scratch_operands = 0 : i64, tpu.core_type = #tpu.core_type<tc>, window_params = [{transform_indices = @transform_0, window_bounds = array<i64: 128, 288>}, {pipeline_mode = #tpu.pipeline_mode<synchronous>, transform_indices = @transform_1, window_bounds = array<i64: 288, 32>}, {pipeline_mode = #tpu.pipeline_mode<synchronous>, transform_indices = @transform_2, window_bounds = array<i64: 1, 32>}, {transform_indices = @transform_3, window_bounds = array<i64: 128, 32>}, {pipeline_mode = #tpu.pipeline_mode<synchronous>, transform_indices = @transform_4, window_bounds = array<i64: 1, 32>}, {pipeline_mode = #tpu.pipeline_mode<synchronous>, transform_indices = @transform_5, window_bounds = array<i64: 1, 32>}]} {
    %c0 = arith.constant 0 : index
    %c0_0 = arith.constant 0 : index
    %0 = vector.load %arg1[%c0, %c0_0] : memref<128x288xbf16, #tpu.memory_space<vmem>>, vector<128x288xbf16>
    %1 = arith.extf %0 : vector<128x288xbf16> to vector<128x288xf32>
    %cst = arith.constant 0.000000e+00 : f32
    %2 = vector.broadcast %cst : f32 to vector<128x288xf32>
    %3 = arith.cmpf ogt, %1, %2 : vector<128x288xf32>
    %cst_1 = arith.constant 0.000000e+00 : f32
    %4 = vector.broadcast %cst_1 : f32 to vector<128x288xf32>
    %5 = arith.mulf %4, %1 : vector<128x288xf32>
    %6 = arith.select %3, %1, %5 : vector<128x288xi1>, vector<128x288xf32>
    %7 = arith.truncf %6 : vector<128x288xf32> to vector<128x288xbf16>
    %c0_2 = arith.constant 0 : index
    %c0_3 = arith.constant 0 : index
    %8 = vector.load %arg2[%c0_2, %c0_3] : memref<288x32xbf16, #tpu.memory_space<vmem>>, vector<288x32xbf16>
    %cst_4 = arith.constant dense<0.000000e+00> : vector<128x32xf32>
    %9 = tpu.matmul %7, %8, %cst_4 {dimension_numbers = #tpu.dot_dimension_numbers<[1], [0], [0], [1], [0, 0, 1, 1], [], []>} : vector<128x288xbf16>, vector<288x32xbf16>, vector<128x32xf32> -> vector<128x32xf32>
    %c0_5 = arith.constant 0 : index
    %c0_6 = arith.constant 0 : index
    %10 = vector.load %arg3[%c0_5, %c0_6] : memref<1x32xf32, #tpu.memory_space<vmem>>, vector<1x32xf32>
    %11 = vector.broadcast %10 : vector<1x32xf32> to vector<128x32xf32>
    %12 = arith.addf %9, %11 : vector<128x32xf32>
    %c0_7 = arith.constant 0 : index
    %c0_8 = arith.constant 0 : index
    %13 = vector.load %arg4[%c0_7, %c0_8] : memref<128x32xf32, #tpu.memory_space<vmem>>, vector<128x32xf32>
    tpu.vector_store %arg4[%c0_7, %c0_8], %12 {strides = array<i32>} : memref<128x32xf32, #tpu.memory_space<vmem>>, vector<128x32xf32>,
    %c0_i32 = arith.constant 0 : i32
    %14 = arith.cmpi eq, %arg0, %c0_i32 : i32
    %15 = arith.extui %14 : i1 to i32
    %c0_i32_9 = arith.constant 0 : i32
    %16 = arith.cmpi ne, %15, %c0_i32_9 : i32
    scf.if %16 {
      %cst_20 = arith.constant 0.000000e+00 : f32
      %28 = vector.broadcast %cst_20 : f32 to vector<1x32xf32>
      %c0_21 = arith.constant 0 : index
      %c0_22 = arith.constant 0 : index
      %29 = vector.load %arg5[%c0_21, %c0_22] : memref<1x32xf32, #tpu.memory_space<vmem>>, vector<1x32xf32>
      tpu.vector_store %arg5[%c0_21, %c0_22], %28 {strides = array<i32>} : memref<1x32xf32, #tpu.memory_space<vmem>>, vector<1x32xf32>,
      %cst_23 = arith.constant 0.000000e+00 : f32
      %30 = vector.broadcast %cst_23 : f32 to vector<1x32xf32>
      %c0_24 = arith.constant 0 : index
      %c0_25 = arith.constant 0 : index
      %31 = vector.load %arg6[%c0_24, %c0_25] : memref<1x32xf32, #tpu.memory_space<vmem>>, vector<1x32xf32>
      tpu.vector_store %arg6[%c0_24, %c0_25], %30 {strides = array<i32>} : memref<1x32xf32, #tpu.memory_space<vmem>>, vector<1x32xf32>,
    } else {
    }
    %c0_10 = arith.constant 0 : index
    %c0_11 = arith.constant 0 : index
    %17 = vector.load %arg5[%c0_10, %c0_11] : memref<1x32xf32, #tpu.memory_space<vmem>>, vector<1x32xf32>
    %cst_12 = arith.constant dense<0.000000e+00> : vector<32xf32>
    %18 = vector.multi_reduction <add>, %12, %cst_12 [0] : vector<128x32xf32> to vector<32xf32>
    %19 = vector.shape_cast %18 : vector<32xf32> to vector<1x32xf32>
    %20 = arith.addf %17, %19 : vector<1x32xf32>
    %c0_13 = arith.constant 0 : index
    %c0_14 = arith.constant 0 : index
    %21 = vector.load %arg5[%c0_13, %c0_14] : memref<1x32xf32, #tpu.memory_space<vmem>>, vector<1x32xf32>
    tpu.vector_store %arg5[%c0_13, %c0_14], %20 {strides = array<i32>} : memref<1x32xf32, #tpu.memory_space<vmem>>, vector<1x32xf32>,
    %c0_15 = arith.constant 0 : index
    %c0_16 = arith.constant 0 : index
    %22 = vector.load %arg6[%c0_15, %c0_16] : memref<1x32xf32, #tpu.memory_space<vmem>>, vector<1x32xf32>
    %23 = arith.mulf %12, %12 : vector<128x32xf32>
    %cst_17 = arith.constant dense<0.000000e+00> : vector<32xf32>
    %24 = vector.multi_reduction <add>, %23, %cst_17 [0] : vector<128x32xf32> to vector<32xf32>
    %25 = vector.shape_cast %24 : vector<32xf32> to vector<1x32xf32>
    %26 = arith.addf %22, %25 : vector<1x32xf32>
    %c0_18 = arith.constant 0 : index
    %c0_19 = arith.constant 0 : index
    %27 = vector.load %arg6[%c0_18, %c0_19] : memref<1x32xf32, #tpu.memory_space<vmem>>, vector<1x32xf32>
    tpu.vector_store %arg6[%c0_18, %c0_19], %26 {strides = array<i32>} : memref<1x32xf32, #tpu.memory_space<vmem>>, vector<1x32xf32>,
    return
  }
  func.func @transform_0(%arg0: i32) -> (i32, i32) {
    %c0_i32 = arith.constant 0 : i32
    %c0_i32_0 = arith.constant 0 : i32
    return %arg0, %c0_i32 : i32, i32
  }
  func.func @transform_1(%arg0: i32) -> (i32, i32) {
    %c0_i32 = arith.constant 0 : i32
    %c0_i32_0 = arith.constant 0 : i32
    %c0_i32_1 = arith.constant 0 : i32
    return %c0_i32, %c0_i32_0 : i32, i32
  }
  func.func @transform_2(%arg0: i32) -> (i32, i32) {
    %c0_i32 = arith.constant 0 : i32
    %c0_i32_0 = arith.constant 0 : i32
    %c0_i32_1 = arith.constant 0 : i32
    return %c0_i32, %c0_i32_0 : i32, i32
  }
  func.func @transform_3(%arg0: i32) -> (i32, i32) {
    %c0_i32 = arith.constant 0 : i32
    %c0_i32_0 = arith.constant 0 : i32
    return %arg0, %c0_i32 : i32, i32
  }
  func.func @transform_4(%arg0: i32) -> (i32, i32) {
    %c0_i32 = arith.constant 0 : i32
    %c0_i32_0 = arith.constant 0 : i32
    %c0_i32_1 = arith.constant 0 : i32
    return %c0_i32, %c0_i32_0 : i32, i32
  }
  func.func @transform_5(%arg0: i32) -> (i32, i32) {
    %c0_i32 = arith.constant 0 : i32
    %c0_i32_0 = arith.constant 0 : i32
    %c0_i32_1 = arith.constant 0 : i32
    return %c0_i32, %c0_i32_0 : i32, i32
  }
}

module attributes {stable_mosaic.version = 11 : i64} {
  func.func @_conv_kernel(%arg0: i32, %arg1: memref<512x144xbf16, #tpu.memory_space<vmem>>, %arg2: memref<144x12xbf16, #tpu.memory_space<vmem>>, %arg3: memref<1x12xf32, #tpu.memory_space<vmem>>, %arg4: memref<512x12xf32, #tpu.memory_space<vmem>>) attributes {dimension_semantics = [#tpu.dimension_semantics<parallel>], iteration_bounds = array<i64: 1>, scalar_prefetch = 0 : i64, scratch_operands = 0 : i64, tpu.core_type = #tpu.core_type<tc>, window_params = [{transform_indices = @transform_0, window_bounds = array<i64: 512, 144>}, {pipeline_mode = #tpu.pipeline_mode<synchronous>, transform_indices = @transform_1, window_bounds = array<i64: 144, 12>}, {pipeline_mode = #tpu.pipeline_mode<synchronous>, transform_indices = @transform_2, window_bounds = array<i64: 1, 12>}, {transform_indices = @transform_3, window_bounds = array<i64: 512, 12>}]} {
    %c0 = arith.constant 0 : index
    %c0_0 = arith.constant 0 : index
    %0 = vector.load %arg1[%c0, %c0_0] : memref<512x144xbf16, #tpu.memory_space<vmem>>, vector<512x144xbf16>
    %1 = arith.extf %0 : vector<512x144xbf16> to vector<512x144xf32>
    %cst = arith.constant 0.000000e+00 : f32
    %2 = vector.broadcast %cst : f32 to vector<512x144xf32>
    %3 = arith.cmpf ogt, %1, %2 : vector<512x144xf32>
    %cst_1 = arith.constant 0.000000e+00 : f32
    %4 = vector.broadcast %cst_1 : f32 to vector<512x144xf32>
    %5 = arith.mulf %4, %1 : vector<512x144xf32>
    %6 = arith.select %3, %1, %5 : vector<512x144xi1>, vector<512x144xf32>
    %7 = arith.truncf %6 : vector<512x144xf32> to vector<512x144xbf16>
    %c0_2 = arith.constant 0 : index
    %c0_3 = arith.constant 0 : index
    %8 = vector.load %arg2[%c0_2, %c0_3] : memref<144x12xbf16, #tpu.memory_space<vmem>>, vector<144x12xbf16>
    %cst_4 = arith.constant dense<0.000000e+00> : vector<512x12xf32>
    %9 = tpu.matmul %7, %8, %cst_4 {dimension_numbers = #tpu.dot_dimension_numbers<[1], [0], [0], [1], [0, 0, 1, 1], [], []>} : vector<512x144xbf16>, vector<144x12xbf16>, vector<512x12xf32> -> vector<512x12xf32>
    %c0_5 = arith.constant 0 : index
    %c0_6 = arith.constant 0 : index
    %10 = vector.load %arg3[%c0_5, %c0_6] : memref<1x12xf32, #tpu.memory_space<vmem>>, vector<1x12xf32>
    %11 = vector.broadcast %10 : vector<1x12xf32> to vector<512x12xf32>
    %12 = arith.addf %9, %11 : vector<512x12xf32>
    %c0_7 = arith.constant 0 : index
    %c0_8 = arith.constant 0 : index
    %13 = vector.load %arg4[%c0_7, %c0_8] : memref<512x12xf32, #tpu.memory_space<vmem>>, vector<512x12xf32>
    tpu.vector_store %arg4[%c0_7, %c0_8], %12 {strides = array<i32>} : memref<512x12xf32, #tpu.memory_space<vmem>>, vector<512x12xf32>,
    return
  }
  func.func @transform_0(%arg0: i32) -> (i32, i32) {
    %c0_i32 = arith.constant 0 : i32
    %c0_i32_0 = arith.constant 0 : i32
    return %arg0, %c0_i32 : i32, i32
  }
  func.func @transform_1(%arg0: i32) -> (i32, i32) {
    %c0_i32 = arith.constant 0 : i32
    %c0_i32_0 = arith.constant 0 : i32
    %c0_i32_1 = arith.constant 0 : i32
    return %c0_i32, %c0_i32_0 : i32, i32
  }
  func.func @transform_2(%arg0: i32) -> (i32, i32) {
    %c0_i32 = arith.constant 0 : i32
    %c0_i32_0 = arith.constant 0 : i32
    %c0_i32_1 = arith.constant 0 : i32
    return %c0_i32, %c0_i32_0 : i32, i32
  }
  func.func @transform_3(%arg0: i32) -> (i32, i32) {
    %c0_i32 = arith.constant 0 : i32
    %c0_i32_0 = arith.constant 0 : i32
    return %arg0, %c0_i32 : i32, i32
  }
}

</mosaic_0001>

<llo_original>
// kernel: unet_forward.10
$region0: #{unet_forward.10}
  #allocation0 [shape = 'u32[]', space=smem, size = 0x4, offset = 0x4, fixed_abs, tag = 'smem constant byte address 0x4 - core index']
  #allocation1 [shape = 'u32[144,128]{1,0:T(1,128)}', space=vmem, size = 0x12000, scoped, tag = 'internal scratch']
  %s0 = inlined_call_operand.vmem [shape: bf16[512,48], index: 0, kind: input, shape index: {}]
  %s1 = inlined_call_operand.vmem [shape: bf16[48,8], index: 1, kind: input, shape index: {}]
  %s2 = inlined_call_operand.vmem [shape: f32[1,8], index: 2, kind: input, shape index: {}]
  %s3 = inlined_call_operand.vmem [shape: f32[512,8], index: 3, kind: output, shape index: {}]
  %s4 = sld [smem:[#allocation0]]
  $region22: #{unet_forward.10} parent=0
    _
  %s6 = ssub.s32 1, %s4
  %s7 = scalar_select 0, %s6, %s4
  // Predicated region
  $region2: #{unet_forward.10} parent=0 // pred_check
    _
  $region3: #{unet_forward.10} parent=0 // pred_check_branch
    %9 = sbr.rel (0) target = $region5
  $region4: #{unet_forward.10} parent=0 // pred_region
    _
  $region5: #{unet_forward.10} parent=0 // pred_fallthru
    _
  // Predicated region
  $region6: #{unet_forward.10} parent=0 // pred_check
    _
  $region7: #{unet_forward.10} parent=0 // pred_check_branch
    %11 = sbr.rel (0) target = $region9
  $region8: #{unet_forward.10} parent=0 // pred_region
    _
  $region9: #{unet_forward.10} parent=0 // pred_fallthru
    _
  // Predicated region
  $region10: #{unet_forward.10} parent=0 // pred_check
    _
  $region11: #{unet_forward.10} parent=0 // pred_check_branch
    %13 = sbr.rel (0) target = $region13
  $region12: #{unet_forward.10} parent=0 // pred_region
    _
  $region13: #{unet_forward.10} parent=0 // pred_fallthru
    _
  %v15 = vld [vmem:[%s0] sm:$0xf]
  %v16 = vld [vmem:[%s0 + $0x4] sm:$0xf]
  %v17 = vld [vmem:[%s0 + $0x8] sm:$0xf]
  %v18 = vld [vmem:[%s0 + $0xc] sm:$0xf]
  %v19 = vld [vmem:[%s0 + $0x10] sm:$0xf]
  %v20 = vld [vmem:[%s0 + $0x14] sm:$0xf]
  %v21 = vld [vmem:[%s0 + $0x18] sm:$0xf]
  %v22 = vld [vmem:[%s0 + $0x1c] sm:$0xf]
  %v23 = vld [vmem:[%s0 + $0x20] sm:$0xf]
  %v24 = vld [vmem:[%s0 + $0x24] sm:$0xf]
  %v25 = vld [vmem:[%s0 + $0x28] sm:$0xf]
  %v26 = vld [vmem:[%s0 + $0x2c] sm:$0xf]
  %v27 = vld [vmem:[%s0 + $0x30] sm:$0xf]
  %v28 = vld [vmem:[%s0 + $0x34] sm:$0xf]
  %v29 = vld [vmem:[%s0 + $0x38] sm:$0xf]
  %v30 = vld [vmem:[%s0 + $0x3c] sm:$0xf]
  %v31 = vld [vmem:[%s0 + $0x40] sm:$0xf]
  %v32 = vld [vmem:[%s0 + $0x44] sm:$0xf]
  %v33 = vld [vmem:[%s0 + $0x48] sm:$0xf]
  %v34 = vld [vmem:[%s0 + $0x4c] sm:$0xf]
  %v35 = vld [vmem:[%s0 + $0x50] sm:$0xf]
  %v36 = vld [vmem:[%s0 + $0x54] sm:$0xf]
  %v37 = vld [vmem:[%s0 + $0x58] sm:$0xf]
  %v38 = vld [vmem:[%s0 + $0x5c] sm:$0xf]
  %v39 = vld [vmem:[%s0 + $0x60] sm:$0xf]
  %v40 = vld [vmem:[%s0 + $0x64] sm:$0xf]
  %v41 = vld [vmem:[%s0 + $0x68] sm:$0xf]
  %v42 = vld [vmem:[%s0 + $0x6c] sm:$0xf]
  %v43 = vld [vmem:[%s0 + $0x70] sm:$0xf]
  %v44 = vld [vmem:[%s0 + $0x74] sm:$0xf]
  %v45 = vld [vmem:[%s0 + $0x78] sm:$0xf]
  %v46 = vld [vmem:[%s0 + $0x7c] sm:$0xf]
  %v47 = vld [vmem:[%s0 + $0x80] sm:$0xf]
  %v48 = vld [vmem:[%s0 + $0x84] sm:$0xf]
  %v49 = vld [vmem:[%s0 + $0x88] sm:$0xf]
  %v50 = vld [vmem:[%s0 + $0x8c] sm:$0xf]
  %v51 = vld [vmem:[%s0 + $0x90] sm:$0xf]
  %v52 = vld [vmem:[%s0 + $0x94] sm:$0xf]
  %v53 = vld [vmem:[%s0 + $0x98] sm:$0xf]
  %v54 = vld [vmem:[%s0 + $0x9c] sm:$0xf]
  %v55 = vld [vmem:[%s0 + $0xa0] sm:$0xf]
  %v56 = vld [vmem:[%s0 + $0xa4] sm:$0xf]
  %v57 = vld [vmem:[%s0 + $0xa8] sm:$0xf]
  %v58 = vld [vmem:[%s0 + $0xac] sm:$0xf]
  %v59 = vld [vmem:[%s0 + $0xb0] sm:$0xf]
  %v60 = vld [vmem:[%s0 + $0xb4] sm:$0xf]
  %v61 = vld [vmem:[%s0 + $0xb8] sm:$0xf]
  %v62 = vld [vmem:[%s0 + $0xbc] sm:$0xf]
  %v63 = vld [vmem:[%s0 + $0xc0] sm:$0xf]
  %v64 = vld [vmem:[%s0 + $0xc4] sm:$0xf]
  %v65 = vld [vmem:[%s0 + $0xc8] sm:$0xf]
  %v66 = vld [vmem:[%s0 + $0xcc] sm:$0xf]
  %v67 = vld [vmem:[%s0 + $0xd0] sm:$0xf]
  %v68 = vld [vmem:[%s0 + $0xd4] sm:$0xf]
  %v69 = vld [vmem:[%s0 + $0xd8] sm:$0xf]
  %v70 = vld [vmem:[%s0 + $0xdc] sm:$0xf]
  %v71 = vld [vmem:[%s0 + $0xe0] sm:$0xf]
  %v72 = vld [vmem:[%s0 + $0xe4] sm:$0xf]
  %v73 = vld [vmem:[%s0 + $0xe8] sm:$0xf]
  %v74 = vld [vmem:[%s0 + $0xec] sm:$0xf]
  %v75 = vld [vmem:[%s0 + $0xf0] sm:$0xf]
  %v76 = vld [vmem:[%s0 + $0xf4] sm:$0xf]
  %v77 = vld [vmem:[%s0 + $0xf8] sm:$0xf]
  %v78 = vld [vmem:[%s0 + $0xfc] sm:$0xf]
  %v79 = vld [vmem:[%s1] sm:$0xf]
  %v80 = vld [vmem:[%s1 + $0x4] sm:$0xf]
  %v81 = vld [vmem:[%s1 + $0x8] sm:$0xf]
  %v82 = vld [vmem:[%s1 + $0xc] sm:$0xf]
  %v83 = vld [vmem:[%s1 + $0x10] sm:$0xf]
  %v84 = vld [vmem:[%s1 + $0x14] sm:$0xf]
  %v85 = vld [vmem:[%s2] sm:$0x1]
  %v87 = vlaneseq
  %v88 = vshrl.u32 %v87, 7
  %v89 = vsub.s32 0, %v88
  %v90 = vrot.slane %v85, %v89
  %v156 = vunpack.c.l.b16 %v15
  %v157 = vunpack.c.l.b16 %v16
  %v158 = vunpack.c.l.b16 %v17
  %v159 = vunpack.c.l.b16 %v18
  %v160 = vunpack.c.l.b16 %v19
  %v161 = vunpack.c.l.b16 %v20
  %v162 = vunpack.c.l.b16 %v21
  %v163 = vunpack.c.l.b16 %v22
  %v164 = vunpack.c.l.b16 %v23
  %v165 = vunpack.c.l.b16 %v24
  %v166 = vunpack.c.l.b16 %v25
  %v167 = vunpack.c.l.b16 %v26
  %v168 = vunpack.c.l.b16 %v27
  %v169 = vunpack.c.l.b16 %v28
  %v170 = vunpack.c.l.b16 %v29
  %v171 = vunpack.c.l.b16 %v30
  %v172 = vunpack.c.l.b16 %v31
  %v173 = vunpack.c.l.b16 %v32
  %v174 = vunpack.c.l.b16 %v33
  %v175 = vunpack.c.l.b16 %v34
  %v176 = vunpack.c.l.b16 %v35
  %v177 = vunpack.c.l.b16 %v36
  %v178 = vunpack.c.l.b16 %v37
  %v179 = vunpack.c.l.b16 %v38
  %v180 = vunpack.c.l.b16 %v39
  %v181 = vunpack.c.l.b16 %v40
  %v182 = vunpack.c.l.b16 %v41
  %v183 = vunpack.c.l.b16 %v42
  %v184 = vunpack.c.l.b16 %v43
  %v185 = vunpack.c.l.b16 %v44
  %v186 = vunpack.c.l.b16 %v45
  %v187 = vunpack.c.l.b16 %v46
  %v188 = vunpack.c.l.b16 %v47
  %v189 = vunpack.c.l.b16 %v48
  %v190 = vunpack.c.l.b16 %v49
  %v191 = vunpack.c.l.b16 %v50
  %v192 = vunpack.c.l.b16 %v51
  %v193 = vunpack.c.l.b16 %v52
  %v194 = vunpack.c.l.b16 %v53
  %v195 = vunpack.c.l.b16 %v54
  %v196 = vunpack.c.l.b16 %v55
  %v197 = vunpack.c.l.b16 %v56
  %v198 = vunpack.c.l.b16 %v57
  %v199 = vunpack.c.l.b16 %v58
  %v200 = vunpack.c.l.b16 %v59
  %v201 = vunpack.c.l.b16 %v60
  %v202 = vunpack.c.l.b16 %v61
  %v203 = vunpack.c.l.b16 %v62
  %v204 = vunpack.c.l.b16 %v63
  %v205 = vunpack.c.l.b16 %v64
  %v206 = vunpack.c.l.b16 %v65
  %v207 = vunpack.c.l.b16 %v66
  %v208 = vunpack.c.l.b16 %v67
  %v209 = vunpack.c.l.b16 %v68
  %v210 = vunpack.c.l.b16 %v69
  %v211 = vunpack.c.l.b16 %v70
  %v212 = vunpack.c.l.b16 %v71
  %v213 = vunpack.c.l.b16 %v72
  %v214 = vunpack.c.l.b16 %v73
  %v215 = vunpack.c.l.b16 %v74
  %v216 = vunpack.c.l.b16 %v75
  %v217 = vunpack.c.l.b16 %v76
  %v218 = vunpack.c.l.b16 %v77
  %v219 = vunpack.c.l.b16 %v78
  %v220 = vpack.c.b16 %v157, %v156
  %v221 = vpack.c.b16 %v159, %v158
  %v222 = vpack.c.b16 %v161, %v160
  %v223 = vpack.c.b16 %v163, %v162
  %v224 = vpack.c.b16 %v165, %v164
  %v225 = vpack.c.b16 %v167, %v166
  %v226 = vpack.c.b16 %v169, %v168
  %v227 = vpack.c.b16 %v171, %v170
  %v228 = vpack.c.b16 %v173, %v172
  %v229 = vpack.c.b16 %v175, %v174
  %v230 = vpack.c.b16 %v177, %v176
  %v231 = vpack.c.b16 %v179, %v178
  %v232 = vpack.c.b16 %v181, %v180
  %v233 = vpack.c.b16 %v183, %v182
  %v234 = vpack.c.b16 %v185, %v184
  %v235 = vpack.c.b16 %v187, %v186
  %v236 = vpack.c.b16 %v189, %v188
  %v237 = vpack.c.b16 %v191, %v190
  %v238 = vpack.c.b16 %v193, %v192
  %v239 = vpack.c.b16 %v195, %v194
  %v240 = vpack.c.b16 %v197, %v196
  %v241 = vpack.c.b16 %v199, %v198
  %v242 = vpack.c.b16 %v201, %v200
  %v243 = vpack.c.b16 %v203, %v202
  %v244 = vpack.c.b16 %v205, %v204
  %v245 = vpack.c.b16 %v207, %v206
  %v246 = vpack.c.b16 %v209, %v208
  %v247 = vpack.c.b16 %v211, %v210
  %v248 = vpack.c.b16 %v213, %v212
  %v249 = vpack.c.b16 %v215, %v214
  %v250 = vpack.c.b16 %v217, %v216
  %v251 = vpack.c.b16 %v219, %v218
  %v258 = vunpack.c.l.b16 %v79
  %v259 = vunpack.c.l.b16 %v80
  %v260 = vunpack.c.l.b16 %v81
  %v261 = vunpack.c.l.b16 %v82
  %v262 = vunpack.c.l.b16 %v83
  %v263 = vunpack.c.l.b16 %v84
  %v264 = vpack.c.b16 %v259, %v258
  %v265 = vpack.c.b16 %v261, %v260
  %v266 = vpack.c.b16 %v263, %v262
  %vm270 = vcmask 392192
  %v272 = vsel %vm270, %v220, 0
  %v275 = vsel %vm270, %v221, 0
  %v278 = vsel %vm270, %v222, 0
  %v281 = vsel %vm270, %v223, 0
  %v284 = vsel %vm270, %v224, 0
  %v287 = vsel %vm270, %v225, 0
  %v290 = vsel %vm270, %v226, 0
  %v293 = vsel %vm270, %v227, 0
  %v296 = vsel %vm270, %v228, 0
  %v299 = vsel %vm270, %v229, 0
  %v302 = vsel %vm270, %v230, 0
  %v305 = vsel %vm270, %v231, 0
  %v308 = vsel %vm270, %v232, 0
  %v311 = vsel %vm270, %v233, 0
  %v314 = vsel %vm270, %v234, 0
  %v317 = vsel %vm270, %v235, 0
  %v320 = vsel %vm270, %v236, 0
  %v323 = vsel %vm270, %v237, 0
  %v326 = vsel %vm270, %v238, 0
  %v329 = vsel %vm270, %v239, 0
  %v332 = vsel %vm270, %v240, 0
  %v335 = vsel %vm270, %v241, 0
  %v338 = vsel %vm270, %v242, 0
  %v341 = vsel %vm270, %v243, 0
  %v344 = vsel %vm270, %v244, 0
  %v347 = vsel %vm270, %v245, 0
  %v350 = vsel %vm270, %v246, 0
  %v353 = vsel %vm270, %v247, 0
  %v356 = vsel %vm270, %v248, 0
  %v359 = vsel %vm270, %v249, 0
  %v362 = vsel %vm270, %v250, 0
  %v365 = vsel %vm270, %v251, 0
  %367 = vmatprep.subr.bf16.mxu0 0
  %368 = vmatpush1.bf16.msra.mxu0 %v264
  %369 = vmatprep.subr.bf16.mxu0 0
  %370 = vmatpush1.bf16.msra.mxu0 %v265
  %371 = vmatprep.subr.bf16.mxu0 0
  %372 = vmatpush1.bf16.msra.mxu0 %v266
  %373 = vmatprep.subr.bf16.mxu0 0
  %374 = vmatpush1.bf16.msra.mxu0 0
  %375 = vmatprep.subr.bf16.mxu0 0
  %376 = vmatpush1.bf16.msra.mxu0 0
  %377 = vmatprep.subr.bf16.mxu0 0
  %378 = vmatpush1.bf16.msra.mxu0 0
  %379 = vmatprep.subr.bf16.mxu0 0
  %380 = vmatpush1.bf16.msra.mxu0 0
  %381 = vmatprep.subr.bf16.mxu0 0
  %382 = vmatpush1.bf16.msra.mxu0 0
  %383 = vmatprep.subr.bf16.mxu0 0
  %384 = vmatpush1.bf16.msra.mxu0 0
  %385 = vmatprep.subr.bf16.mxu0 0
  %386 = vmatpush1.bf16.msra.mxu0 0
  %387 = vmatprep.subr.bf16.mxu0 0
  %388 = vmatpush1.bf16.msra.mxu0 0
  %389 = vmatprep.subr.bf16.mxu0 0
  %390 = vmatpush1.bf16.msra.mxu0 0
  %391 = vmatprep.subr.bf16.mxu0 0
  %392 = vmatpush1.bf16.msra.mxu0 0
  %393 = vmatprep.subr.bf16.mxu0 0
  %394 = vmatpush1.bf16.msra.mxu0 0
  %395 = vmatprep.subr.bf16.mxu0 0
  %396 = vmatpush1.bf16.msra.mxu0 0
  %397 = vmatprep.subr.bf16.mxu0 0
  %398 = vmatpush1.bf16.msra.mxu0 0
  %399 = vmatprep.mubr.bf16.mxu0 0
  %400 = vmatmul.mubr.bf16.gmra.mrb[0].mxu0 %v272
  %v401 = vpop.f32.mrb[0].mxu0
  %v402 = vadd.f32 %v90, %v401
  %v403 = vpop.f32.mrb[0].mxu0
  %v404 = vpop.f32.mrb[0].mxu0
  %v405 = vadd.f32 %v90, %v404
  %v406 = vpop.f32.mrb[0].mxu0
  %407 = vmatprep.mubr.bf16.mxu0 0
  %408 = vmatmul.mubr.bf16.gmra.mrb[0].mxu0 %v275
  %v409 = vpop.f32.mrb[0].mxu0
  %v410 = vadd.f32 %v90, %v409
  %v411 = vpop.f32.mrb[0].mxu0
  %v412 = vpop.f32.mrb[0].mxu0
  %v413 = vadd.f32 %v90, %v412
  %v414 = vpop.f32.mrb[0].mxu0
  %415 = vmatprep.mubr.bf16.mxu0 0
  %416 = vmatmul.mubr.bf16.gmra.mrb[0].mxu0 %v278
  %v417 = vpop.f32.mrb[0].mxu0
  %v418 = vadd.f32 %v90, %v417
  %v419 = vpop.f32.mrb[0].mxu0
  %v420 = vpop.f32.mrb[0].mxu0
  %v421 = vadd.f32 %v90, %v420
  %v422 = vpop.f32.mrb[0].mxu0
  %423 = vmatprep.mubr.bf16.mxu0 0
  %424 = vmatmul.mubr.bf16.gmra.mrb[0].mxu0 %v281
  %v425 = vpop.f32.mrb[0].mxu0
  %v426 = vadd.f32 %v90, %v425
  %v427 = vpop.f32.mrb[0].mxu0
  %v428 = vpop.f32.mrb[0].mxu0
  %v429 = vadd.f32 %v90, %v428
  %v430 = vpop.f32.mrb[0].mxu0
  %431 = vmatprep.mubr.bf16.mxu0 0
  %432 = vmatmul.mubr.bf16.gmra.mrb[0].mxu0 %v284
  %v433 = vpop.f32.mrb[0].mxu0
  %v434 = vadd.f32 %v90, %v433
  %v435 = vpop.f32.mrb[0].mxu0
  %v436 = vpop.f32.mrb[0].mxu0
  %v437 = vadd.f32 %v90, %v436
  %v438 = vpop.f32.mrb[0].mxu0
  %439 = vmatprep.mubr.bf16.mxu0 0
  %440 = vmatmul.mubr.bf16.gmra.mrb[0].mxu0 %v287
  %v441 = vpop.f32.mrb[0].mxu0
  %v442 = vadd.f32 %v90, %v441
  %v443 = vpop.f32.mrb[0].mxu0
  %v444 = vpop.f32.mrb[0].mxu0
  %v445 = vadd.f32 %v90, %v444
  %v446 = vpop.f32.mrb[0].mxu0
  %447 = vmatprep.mubr.bf16.mxu0 0
  %448 = vmatmul.mubr.bf16.gmra.mrb[0].mxu0 %v290
  %v449 = vpop.f32.mrb[0].mxu0
  %v450 = vadd.f32 %v90, %v449
  %v451 = vpop.f32.mrb[0].mxu0
  %v452 = vpop.f32.mrb[0].mxu0
  %v453 = vadd.f32 %v90, %v452
  %v454 = vpop.f32.mrb[0].mxu0
  %455 = vmatprep.mubr.bf16.mxu0 0
  %456 = vmatmul.mubr.bf16.gmra.mrb[0].mxu0 %v293
  %v457 = vpop.f32.mrb[0].mxu0
  %v458 = vadd.f32 %v90, %v457
  %v459 = vpop.f32.mrb[0].mxu0
  %v460 = vpop.f32.mrb[0].mxu0
  %v461 = vadd.f32 %v90, %v460
  %v462 = vpop.f32.mrb[0].mxu0
  %463 = vmatprep.mubr.bf16.mxu0 0
  %464 = vmatmul.mubr.bf16.gmra.mrb[0].mxu0 %v296
  %v465 = vpop.f32.mrb[0].mxu0
  %v466 = vadd.f32 %v90, %v465
  %v467 = vpop.f32.mrb[0].mxu0
  %v468 = vpop.f32.mrb[0].mxu0
  %v469 = vadd.f32 %v90, %v468
  %v470 = vpop.f32.mrb[0].mxu0
  %471 = vmatprep.mubr.bf16.mxu0 0
  %472 = vmatmul.mubr.bf16.gmra.mrb[0].mxu0 %v299
  %v473 = vpop.f32.mrb[0].mxu0
  %v474 = vadd.f32 %v90, %v473
  %v475 = vpop.f32.mrb[0].mxu0
  %v476 = vpop.f32.mrb[0].mxu0
  %v477 = vadd.f32 %v90, %v476
  %v478 = vpop.f32.mrb[0].mxu0
  %479 = vmatprep.mubr.bf16.mxu0 0
  %480 = vmatmul.mubr.bf16.gmra.mrb[0].mxu0 %v302
  %v481 = vpop.f32.mrb[0].mxu0
  %v482 = vadd.f32 %v90, %v481
  %v483 = vpop.f32.mrb[0].mxu0
  %v484 = vpop.f32.mrb[0].mxu0
  %v485 = vadd.f32 %v90, %v484
  %v486 = vpop.f32.mrb[0].mxu0
  %487 = vmatprep.mubr.bf16.mxu0 0
  %488 = vmatmul.mubr.bf16.gmra.mrb[0].mxu0 %v305
  %v489 = vpop.f32.mrb[0].mxu0
  %v490 = vadd.f32 %v90, %v489
  %v491 = vpop.f32.mrb[0].mxu0
  %v492 = vpop.f32.mrb[0].mxu0
  %v493 = vadd.f32 %v90, %v492
  %v494 = vpop.f32.mrb[0].mxu0
  %495 = vmatprep.mubr.bf16.mxu0 0
  %496 = vmatmul.mubr.bf16.gmra.mrb[0].mxu0 %v308
  %v497 = vpop.f32.mrb[0].mxu0
  %v498 = vadd.f32 %v90, %v497
  %v499 = vpop.f32.mrb[0].mxu0
  %v500 = vpop.f32.mrb[0].mxu0
  %v501 = vadd.f32 %v90, %v500
  %v502 = vpop.f32.mrb[0].mxu0
  %503 = vmatprep.mubr.bf16.mxu0 0
  %504 = vmatmul.mubr.bf16.gmra.mrb[0].mxu0 %v311
  %v505 = vpop.f32.mrb[0].mxu0
  %v506 = vadd.f32 %v90, %v505
  %v507 = vpop.f32.mrb[0].mxu0
  %v508 = vpop.f32.mrb[0].mxu0
  %v509 = vadd.f32 %v90, %v508
  %v510 = vpop.f32.mrb[0].mxu0
  %511 = vmatprep.mubr.bf16.mxu0 0
  %512 = vmatmul.mubr.bf16.gmra.mrb[0].mxu0 %v314
  %v513 = vpop.f32.mrb[0].mxu0
  %v514 = vadd.f32 %v90, %v513
  %v515 = vpop.f32.mrb[0].mxu0
  %v516 = vpop.f32.mrb[0].mxu0
  %v517 = vadd.f32 %v90, %v516
  %v518 = vpop.f32.mrb[0].mxu0
  %519 = vmatprep.mubr.bf16.mxu0 0
  %520 = vmatmul.mubr.bf16.gmra.mrb[0].mxu0 %v317
  %v521 = vpop.f32.mrb[0].mxu0
  %v522 = vadd.f32 %v90, %v521
  %v523 = vpop.f32.mrb[0].mxu0
  %v524 = vpop.f32.mrb[0].mxu0
  %v525 = vadd.f32 %v90, %v524
  %v526 = vpop.f32.mrb[0].mxu0
  %527 = vmatprep.mubr.bf16.mxu0 0
  %528 = vmatmul.mubr.bf16.gmra.mrb[0].mxu0 %v320
  %v529 = vpop.f32.mrb[0].mxu0
  %v530 = vadd.f32 %v90, %v529
  %v531 = vpop.f32.mrb[0].mxu0
  %v532 = vpop.f32.mrb[0].mxu0
  %v533 = vadd.f32 %v90, %v532
  %v534 = vpop.f32.mrb[0].mxu0
  %535 = vmatprep.mubr.bf16.mxu0 0
  %536 = vmatmul.mubr.bf16.gmra.mrb[0].mxu0 %v323
  %v537 = vpop.f32.mrb[0].mxu0
  %v538 = vadd.f32 %v90, %v537
  %v539 = vpop.f32.mrb[0].mxu0
  %v540 = vpop.f32.mrb[0].mxu0
  %v541 = vadd.f32 %v90, %v540
  %v542 = vpop.f32.mrb[0].mxu0
  %543 = vmatprep.mubr.bf16.mxu0 0
  %544 = vmatmul.mubr.bf16.gmra.mrb[0].mxu0 %v326
  %v545 = vpop.f32.mrb[0].mxu0
  %v546 = vadd.f32 %v90, %v545
  %v547 = vpop.f32.mrb[0].mxu0
  %v548 = vpop.f32.mrb[0].mxu0
  %v549 = vadd.f32 %v90, %v548
  %v550 = vpop.f32.mrb[0].mxu0
  %551 = vmatprep.mubr.bf16.mxu0 0
  %552 = vmatmul.mubr.bf16.gmra.mrb[0].mxu0 %v329
  %v553 = vpop.f32.mrb[0].mxu0
  %v554 = vadd.f32 %v90, %v553
  %v555 = vpop.f32.mrb[0].mxu0
  %v556 = vpop.f32.mrb[0].mxu0
  %v557 = vadd.f32 %v90, %v556
  %v558 = vpop.f32.mrb[0].mxu0
  %559 = vmatprep.mubr.bf16.mxu0 0
  %560 = vmatmul.mubr.bf16.gmra.mrb[0].mxu0 %v332
  %v561 = vpop.f32.mrb[0].mxu0
  %v562 = vadd.f32 %v90, %v561
  %v563 = vpop.f32.mrb[0].mxu0
  %v564 = vpop.f32.mrb[0].mxu0
  %v565 = vadd.f32 %v90, %v564
  %v566 = vpop.f32.mrb[0].mxu0
  %567 = vmatprep.mubr.bf16.mxu0 0
  %568 = vmatmul.mubr.bf16.gmra.mrb[0].mxu0 %v335
  %v569 = vpop.f32.mrb[0].mxu0
  %v570 = vadd.f32 %v90, %v569
  %v571 = vpop.f32.mrb[0].mxu0
  %v572 = vpop.f32.mrb[0].mxu0
  %v573 = vadd.f32 %v90, %v572
  %v574 = vpop.f32.mrb[0].mxu0
  %575 = vmatprep.mubr.bf16.mxu0 0
  %576 = vmatmul.mubr.bf16.gmra.mrb[0].mxu0 %v338
  %v577 = vpop.f32.mrb[0].mxu0
  %v578 = vadd.f32 %v90, %v577
  %v579 = vpop.f32.mrb[0].mxu0
  %v580 = vpop.f32.mrb[0].mxu0
  %v581 = vadd.f32 %v90, %v580
  %v582 = vpop.f32.mrb[0].mxu0
  %583 = vmatprep.mubr.bf16.mxu0 0
  %584 = vmatmul.mubr.bf16.gmra.mrb[0].mxu0 %v341
  %v585 = vpop.f32.mrb[0].mxu0
  %v586 = vadd.f32 %v90, %v585
  %v587 = vpop.f32.mrb[0].mxu0
  %v588 = vpop.f32.mrb[0].mxu0
  %v589 = vadd.f32 %v90, %v588
  %v590 = vpop.f32.mrb[0].mxu0
  %591 = vmatprep.mubr.bf16.mxu0 0
  %592 = vmatmul.mubr.bf16.gmra.mrb[0].mxu0 %v344
  %v593 = vpop.f32.mrb[0].mxu0
  %v594 = vadd.f32 %v90, %v593
  %v595 = vpop.f32.mrb[0].mxu0
  %v596 = vpop.f32.mrb[0].mxu0
  %v597 = vadd.f32 %v90, %v596
  %v598 = vpop.f32.mrb[0].mxu0
  %599 = vmatprep.mubr.bf16.mxu0 0
  %600 = vmatmul.mubr.bf16.gmra.mrb[0].mxu0 %v347
  %v601 = vpop.f32.mrb[0].mxu0
  %v602 = vadd.f32 %v90, %v601
  %v603 = vpop.f32.mrb[0].mxu0
  %v604 = vpop.f32.mrb[0].mxu0
  %v605 = vadd.f32 %v90, %v604
  %v606 = vpop.f32.mrb[0].mxu0
  %607 = vmatprep.mubr.bf16.mxu0 0
  %608 = vmatmul.mubr.bf16.gmra.mrb[0].mxu0 %v350
  %v609 = vpop.f32.mrb[0].mxu0
  %v610 = vadd.f32 %v90, %v609
  %v611 = vpop.f32.mrb[0].mxu0
  %v612 = vpop.f32.mrb[0].mxu0
  %v613 = vadd.f32 %v90, %v612
  %v614 = vpop.f32.mrb[0].mxu0
  %615 = vmatprep.mubr.bf16.mxu0 0
  %616 = vmatmul.mubr.bf16.gmra.mrb[0].mxu0 %v353
  %v617 = vpop.f32.mrb[0].mxu0
  %v618 = vadd.f32 %v90, %v617
  %v619 = vpop.f32.mrb[0].mxu0
  %v620 = vpop.f32.mrb[0].mxu0
  %v621 = vadd.f32 %v90, %v620
  %v622 = vpop.f32.mrb[0].mxu0
  %623 = vmatprep.mubr.bf16.mxu0 0
  %624 = vmatmul.mubr.bf16.gmra.mrb[0].mxu0 %v356
  %v625 = vpop.f32.mrb[0].mxu0
  %v626 = vadd.f32 %v90, %v625
  %v627 = vpop.f32.mrb[0].mxu0
  %v628 = vpop.f32.mrb[0].mxu0
  %v629 = vadd.f32 %v90, %v628
  %v630 = vpop.f32.mrb[0].mxu0
  %631 = vmatprep.mubr.bf16.mxu0 0
  %632 = vmatmul.mubr.bf16.gmra.mrb[0].mxu0 %v359
  %v633 = vpop.f32.mrb[0].mxu0
  %v634 = vadd.f32 %v90, %v633
  %v635 = vpop.f32.mrb[0].mxu0
  %v636 = vpop.f32.mrb[0].mxu0
  %v637 = vadd.f32 %v90, %v636
  %v638 = vpop.f32.mrb[0].mxu0
  %639 = vmatprep.mubr.bf16.mxu0 0
  %640 = vmatmul.mubr.bf16.gmra.mrb[0].mxu0 %v362
  %v641 = vpop.f32.mrb[0].mxu0
  %v642 = vadd.f32 %v90, %v641
  %v643 = vpop.f32.mrb[0].mxu0
  %v644 = vpop.f32.mrb[0].mxu0
  %v645 = vadd.f32 %v90, %v644
  %v646 = vpop.f32.mrb[0].mxu0
  %647 = vmatprep.mubr.bf16.mxu0 0
  %648 = vmatmul.mubr.bf16.gmra.mrb[0].mxu0 %v365
  %v649 = vpop.f32.mrb[0].mxu0
  %v650 = vadd.f32 %v90, %v649
  %v651 = vpop.f32.mrb[0].mxu0
  %v652 = vpop.f32.mrb[0].mxu0
  %v653 = vadd.f32 %v90, %v652
  %v654 = vpop.f32.mrb[0].mxu0
  %655 = vdwg.mxu0
  %vm656 = vcmask 64512
  %657 = vst.msk [vmem:[%s3] sm:$0xff] %vm656, %v402
  %658 = vst.msk [vmem:[%s3 + $0x8] sm:$0xff] %vm656, %v405
  %659 = vst.msk [vmem:[%s3 + $0x10] sm:$0xff] %vm656, %v410
  %660 = vst.msk [vmem:[%s3 + $0x18] sm:$0xff] %vm656, %v413
  %661 = vst.msk [vmem:[%s3 + $0x20] sm:$0xff] %vm656, %v418
  %662 = vst.msk [vmem:[%s3 + $0x28] sm:$0xff] %vm656, %v421
  %663 = vst.msk [vmem:[%s3 + $0x30] sm:$0xff] %vm656, %v426
  %664 = vst.msk [vmem:[%s3 + $0x38] sm:$0xff] %vm656, %v429
  %665 = vst.msk [vmem:[%s3 + $0x40] sm:$0xff] %vm656, %v434
  %666 = vst.msk [vmem:[%s3 + $0x48] sm:$0xff] %vm656, %v437
  %667 = vst.msk [vmem:[%s3 + $0x50] sm:$0xff] %vm656, %v442
  %668 = vst.msk [vmem:[%s3 + $0x58] sm:$0xff] %vm656, %v445
  %669 = vst.msk [vmem:[%s3 + $0x60] sm:$0xff] %vm656, %v450
  %670 = vst.msk [vmem:[%s3 + $0x68] sm:$0xff] %vm656, %v453
  %671 = vst.msk [vmem:[%s3 + $0x70] sm:$0xff] %vm656, %v458
  %672 = vst.msk [vmem:[%s3 + $0x78] sm:$0xff] %vm656, %v461
  %673 = vst.msk [vmem:[%s3 + $0x80] sm:$0xff] %vm656, %v466
  %674 = vst.msk [vmem:[%s3 + $0x88] sm:$0xff] %vm656, %v469
  %675 = vst.msk [vmem:[%s3 + $0x90] sm:$0xff] %vm656, %v474
  %676 = vst.msk [vmem:[%s3 + $0x98] sm:$0xff] %vm656, %v477
  %677 = vst.msk [vmem:[%s3 + $0xa0] sm:$0xff] %vm656, %v482
  %678 = vst.msk [vmem:[%s3 + $0xa8] sm:$0xff] %vm656, %v485
  %679 = vst.msk [vmem:[%s3 + $0xb0] sm:$0xff] %vm656, %v490
  %680 = vst.msk [vmem:[%s3 + $0xb8] sm:$0xff] %vm656, %v493
  %681 = vst.msk [vmem:[%s3 + $0xc0] sm:$0xff] %vm656, %v498
  %682 = vst.msk [vmem:[%s3 + $0xc8] sm:$0xff] %vm656, %v501
  %683 = vst.msk [vmem:[%s3 + $0xd0] sm:$0xff] %vm656, %v506
  %684 = vst.msk [vmem:[%s3 + $0xd8] sm:$0xff] %vm656, %v509
  %685 = vst.msk [vmem:[%s3 + $0xe0] sm:$0xff] %vm656, %v514
  %686 = vst.msk [vmem:[%s3 + $0xe8] sm:$0xff] %vm656, %v517
  %687 = vst.msk [vmem:[%s3 + $0xf0] sm:$0xff] %vm656, %v522
  %688 = vst.msk [vmem:[%s3 + $0xf8] sm:$0xff] %vm656, %v525
  %689 = vst.msk [vmem:[%s3 + $0x100] sm:$0xff] %vm656, %v530
  %690 = vst.msk [vmem:[%s3 + $0x108] sm:$0xff] %vm656, %v533
  %691 = vst.msk [vmem:[%s3 + $0x110] sm:$0xff] %vm656, %v538
  %692 = vst.msk [vmem:[%s3 + $0x118] sm:$0xff] %vm656, %v541
  %693 = vst.msk [vmem:[%s3 + $0x120] sm:$0xff] %vm656, %v546
  %694 = vst.msk [vmem:[%s3 + $0x128] sm:$0xff] %vm656, %v549
  %695 = vst.msk [vmem:[%s3 + $0x130] sm:$0xff] %vm656, %v554
  %696 = vst.msk [vmem:[%s3 + $0x138] sm:$0xff] %vm656, %v557
  %697 = vst.msk [vmem:[%s3 + $0x140] sm:$0xff] %vm656, %v562
  %698 = vst.msk [vmem:[%s3 + $0x148] sm:$0xff] %vm656, %v565
  %699 = vst.msk [vmem:[%s3 + $0x150] sm:$0xff] %vm656, %v570
  %700 = vst.msk [vmem:[%s3 + $0x158] sm:$0xff] %vm656, %v573
  %701 = vst.msk [vmem:[%s3 + $0x160] sm:$0xff] %vm656, %v578
  %702 = vst.msk [vmem:[%s3 + $0x168] sm:$0xff] %vm656, %v581
  %703 = vst.msk [vmem:[%s3 + $0x170] sm:$0xff] %vm656, %v586
  %704 = vst.msk [vmem:[%s3 + $0x178] sm:$0xff] %vm656, %v589
  %705 = vst.msk [vmem:[%s3 + $0x180] sm:$0xff] %vm656, %v594
  %706 = vst.msk [vmem:[%s3 + $0x188] sm:$0xff] %vm656, %v597
  %707 = vst.msk [vmem:[%s3 + $0x190] sm:$0xff] %vm656, %v602
  %708 = vst.msk [vmem:[%s3 + $0x198] sm:$0xff] %vm656, %v605
  %709 = vst.msk [vmem:[%s3 + $0x1a0] sm:$0xff] %vm656, %v610
  %710 = vst.msk [vmem:[%s3 + $0x1a8] sm:$0xff] %vm656, %v613
  %711 = vst.msk [vmem:[%s3 + $0x1b0] sm:$0xff] %vm656, %v618
  %712 = vst.msk [vmem:[%s3 + $0x1b8] sm:$0xff] %vm656, %v621
  %713 = vst.msk [vmem:[%s3 + $0x1c0] sm:$0xff] %vm656, %v626
  %714 = vst.msk [vmem:[%s3 + $0x1c8] sm:$0xff] %vm656, %v629
  %715 = vst.msk [vmem:[%s3 + $0x1d0] sm:$0xff] %vm656, %v634
  %716 = vst.msk [vmem:[%s3 + $0x1d8] sm:$0xff] %vm656, %v637
  %717 = vst.msk [vmem:[%s3 + $0x1e0] sm:$0xff] %vm656, %v642
  %718 = vst.msk [vmem:[%s3 + $0x1e8] sm:$0xff] %vm656, %v645
  %719 = vst.msk [vmem:[%s3 + $0x1f0] sm:$0xff] %vm656, %v650
  %720 = vst.msk [vmem:[%s3 + $0x1f8] sm:$0xff] %vm656, %v653
  // Predicated region
  $region14: #{unet_forward.10} parent=0 // pred_check
    _
  $region15: #{unet_forward.10} parent=0 // pred_check_branch
    %722 = sbr.rel (0) target = $region17
  $region16: #{unet_forward.10} parent=0 // pred_region
    _
  $region17: #{unet_forward.10} parent=0 // pred_fallthru
    _
  // Predicated region
  $region18: #{unet_forward.10} parent=0 // pred_check
    _
  $region19: #{unet_forward.10} parent=0 // pred_check_branch
    %724 = sbr.rel (0) target = $region21
  $region20: #{unet_forward.10} parent=0 // pred_region
    _
  $region21: #{unet_forward.10} parent=0 // pred_fallthru
    _

// kernel: unet_forward.11
$region0: #{unet_forward.11}
  #allocation0 [shape = 'u32[]', space=smem, size = 0x4, offset = 0x4, fixed_abs, tag = 'smem constant byte address 0x4 - core index']
  #allocation1 [shape = 'u32[144,128]{1,0:T(1,128)}', space=vmem, size = 0x12000, scoped, tag = 'internal scratch']
  %s0 = inlined_call_operand.vmem [shape: bf16[128,128], index: 0, kind: input, shape index: {}]
  %s1 = inlined_call_operand.vmem [shape: bf16[128,16], index: 1, kind: input, shape index: {}]
  %s2 = inlined_call_operand.vmem [shape: f32[1,16], index: 2, kind: input, shape index: {}]
  %s3 = inlined_call_operand.vmem [shape: f32[128,16], index: 3, kind: output, shape index: {0}]
  %s4 = inlined_call_operand.vmem [shape: f32[1,16], index: 4, kind: output, shape index: {1}]
  %s5 = inlined_call_operand.vmem [shape: f32[1,16], index: 5, kind: output, shape index: {2}]
  %6 = xla_tuple %s3, %s4, %s5
  %s7 = sld [smem:[#allocation0]]
  $region42: #{unet_forward.11} parent=0
    _
  %s9 = ssub.s32 1, %s7
  %s10 = scalar_select 0, %s9, %s7
  // Predicated region
  $region2: #{unet_forward.11} parent=0 // pred_check
    _
  $region3: #{unet_forward.11} parent=0 // pred_check_branch
    %12 = sbr.rel (0) target = $region5
  $region4: #{unet_forward.11} parent=0 // pred_region
    _
  $region5: #{unet_forward.11} parent=0 // pred_fallthru
    _
  // Predicated region
  $region6: #{unet_forward.11} parent=0 // pred_check
    _
  $region7: #{unet_forward.11} parent=0 // pred_check_branch
    %14 = sbr.rel (0) target = $region9
  $region8: #{unet_forward.11} parent=0 // pred_region
    _
  $region9: #{unet_forward.11} parent=0 // pred_fallthru
    _
  // Predicated region
  $region10: #{unet_forward.11} parent=0 // pred_check
    _
  $region11: #{unet_forward.11} parent=0 // pred_check_branch
    %16 = sbr.rel (0) target = $region13
  $region12: #{unet_forward.11} parent=0 // pred_region
    _
  $region13: #{unet_forward.11} parent=0 // pred_fallthru
    _
  %v18 = vld [vmem:[%s0] sm:$0xf]
  %v19 = vld [vmem:[%s0 + $0x4] sm:$0xf]
  %v20 = vld [vmem:[%s0 + $0x8] sm:$0xf]
  %v21 = vld [vmem:[%s0 + $0xc] sm:$0xf]
  %v22 = vld [vmem:[%s0 + $0x10] sm:$0xf]
  %v23 = vld [vmem:[%s0 + $0x14] sm:$0xf]
  %v24 = vld [vmem:[%s0 + $0x18] sm:$0xf]
  %v25 = vld [vmem:[%s0 + $0x1c] sm:$0xf]
  %v26 = vld [vmem:[%s0 + $0x20] sm:$0xf]
  %v27 = vld [vmem:[%s0 + $0x24] sm:$0xf]
  %v28 = vld [vmem:[%s0 + $0x28] sm:$0xf]
  %v29 = vld [vmem:[%s0 + $0x2c] sm:$0xf]
  %v30 = vld [vmem:[%s0 + $0x30] sm:$0xf]
  %v31 = vld [vmem:[%s0 + $0x34] sm:$0xf]
  %v32 = vld [vmem:[%s0 + $0x38] sm:$0xf]
  %v33 = vld [vmem:[%s0 + $0x3c] sm:$0xf]
  %v34 = vunpack.c.l.bf16 %v18
  %v35 = vunpack.c.l.bf16 %v19
  %v36 = vunpack.c.l.bf16 %v20
  %v37 = vunpack.c.l.bf16 %v21
  %v38 = vunpack.c.l.bf16 %v22
  %v39 = vunpack.c.l.bf16 %v23
  %v40 = vunpack.c.l.bf16 %v24
  %v41 = vunpack.c.l.bf16 %v25
  %v42 = vunpack.c.l.bf16 %v26
  %v43 = vunpack.c.l.bf16 %v27
  %v44 = vunpack.c.l.bf16 %v28
  %v45 = vunpack.c.l.bf16 %v29
  %v46 = vunpack.c.l.bf16 %v30
  %v47 = vunpack.c.l.bf16 %v31
  %v48 = vunpack.c.l.bf16 %v32
  %v49 = vunpack.c.l.bf16 %v33
  %vm50 = vcmp.gt.f32.partialorder %v34, 0.0
  %vm51 = vcmp.gt.f32.partialorder %v35, 0.0
  %vm52 = vcmp.gt.f32.partialorder %v36, 0.0
  %vm53 = vcmp.gt.f32.partialorder %v37, 0.0
  %vm54 = vcmp.gt.f32.partialorder %v38, 0.0
  %vm55 = vcmp.gt.f32.partialorder %v39, 0.0
  %vm56 = vcmp.gt.f32.partialorder %v40, 0.0
  %vm57 = vcmp.gt.f32.partialorder %v41, 0.0
  %vm58 = vcmp.gt.f32.partialorder %v42, 0.0
  %vm59 = vcmp.gt.f32.partialorder %v43, 0.0
  %vm60 = vcmp.gt.f32.partialorder %v44, 0.0
  %vm61 = vcmp.gt.f32.partialorder %v45, 0.0
  %vm62 = vcmp.gt.f32.partialorder %v46, 0.0
  %vm63 = vcmp.gt.f32.partialorder %v47, 0.0
  %vm64 = vcmp.gt.f32.partialorder %v48, 0.0
  %vm65 = vcmp.gt.f32.partialorder %v49, 0.0
  %v66 = vmul.f32 %v34, 0.2
  %v67 = vmul.f32 %v35, 0.2
  %v68 = vmul.f32 %v36, 0.2
  %v69 = vmul.f32 %v37, 0.2
  %v70 = vmul.f32 %v38, 0.2
  %v71 = vmul.f32 %v39, 0.2
  %v72 = vmul.f32 %v40, 0.2
  %v73 = vmul.f32 %v41, 0.2
  %v74 = vmul.f32 %v42, 0.2
  %v75 = vmul.f32 %v43, 0.2
  %v76 = vmul.f32 %v44, 0.2
  %v77 = vmul.f32 %v45, 0.2
  %v78 = vmul.f32 %v46, 0.2
  %v79 = vmul.f32 %v47, 0.2
  %v80 = vmul.f32 %v48, 0.2
  %v81 = vmul.f32 %v49, 0.2
  %v82 = vsel %vm50, %v34, %v66
  %v83 = vsel %vm51, %v35, %v67
  %v84 = vsel %vm52, %v36, %v68
  %v85 = vsel %vm53, %v37, %v69
  %v86 = vsel %vm54, %v38, %v70
  %v87 = vsel %vm55, %v39, %v71
  %v88 = vsel %vm56, %v40, %v72
  %v89 = vsel %vm57, %v41, %v73
  %v90 = vsel %vm58, %v42, %v74
  %v91 = vsel %vm59, %v43, %v75
  %v92 = vsel %vm60, %v44, %v76
  %v93 = vsel %vm61, %v45, %v77
  %v94 = vsel %vm62, %v46, %v78
  %v95 = vsel %vm63, %v47, %v79
  %v96 = vsel %vm64, %v48, %v80
  %v97 = vsel %vm65, %v49, %v81
  %v98 = vpack.c.bf16 %v83, %v82
  %v99 = vpack.c.bf16 %v85, %v84
  %v100 = vpack.c.bf16 %v87, %v86
  %v101 = vpack.c.bf16 %v89, %v88
  %v102 = vpack.c.bf16 %v91, %v90
  %v103 = vpack.c.bf16 %v93, %v92
  %v104 = vpack.c.bf16 %v95, %v94
  %v105 = vpack.c.bf16 %v97, %v96
  %v106 = vld [vmem:[%s1] sm:$0xf]
  %v107 = vld [vmem:[%s1 + $0x4] sm:$0xf]
  %v108 = vld [vmem:[%s1 + $0x8] sm:$0xf]
  %v109 = vld [vmem:[%s1 + $0xc] sm:$0xf]
  %v110 = vld [vmem:[%s1 + $0x10] sm:$0xf]
  %v111 = vld [vmem:[%s1 + $0x14] sm:$0xf]
  %v112 = vld [vmem:[%s1 + $0x18] sm:$0xf]
  %v113 = vld [vmem:[%s1 + $0x1c] sm:$0xf]
  %v114 = vld [vmem:[%s1 + $0x20] sm:$0xf]
  %v115 = vld [vmem:[%s1 + $0x24] sm:$0xf]
  %v116 = vld [vmem:[%s1 + $0x28] sm:$0xf]
  %v117 = vld [vmem:[%s1 + $0x2c] sm:$0xf]
  %v118 = vld [vmem:[%s1 + $0x30] sm:$0xf]
  %v119 = vld [vmem:[%s1 + $0x34] sm:$0xf]
  %v120 = vld [vmem:[%s1 + $0x38] sm:$0xf]
  %v121 = vld [vmem:[%s1 + $0x3c] sm:$0xf]
  %v122 = vld [vmem:[%s2] sm:$0x1]
  %v124 = vlaneseq
  %v125 = vshrl.u32 %v124, 7
  %v126 = vsub.s32 0, %v125
  %v127 = vrot.slane %v122, %v126
  %v145 = vunpack.c.l.b16 %v106
  %v146 = vunpack.c.l.b16 %v107
  %v147 = vunpack.c.l.b16 %v108
  %v148 = vunpack.c.l.b16 %v109
  %v149 = vunpack.c.l.b16 %v110
  %v150 = vunpack.c.l.b16 %v111
  %v151 = vunpack.c.l.b16 %v112
  %v152 = vunpack.c.l.b16 %v113
  %v153 = vunpack.c.l.b16 %v114
  %v154 = vunpack.c.l.b16 %v115
  %v155 = vunpack.c.l.b16 %v116
  %v156 = vunpack.c.l.b16 %v117
  %v157 = vunpack.c.l.b16 %v118
  %v158 = vunpack.c.l.b16 %v119
  %v159 = vunpack.c.l.b16 %v120
  %v160 = vunpack.c.l.b16 %v121
  %v161 = vpack.c.b16 %v146, %v145
  %v162 = vpack.c.b16 %v148, %v147
  %v163 = vpack.c.b16 %v150, %v149
  %v164 = vpack.c.b16 %v152, %v151
  %v165 = vpack.c.b16 %v154, %v153
  %v166 = vpack.c.b16 %v156, %v155
  %v167 = vpack.c.b16 %v158, %v157
  %v168 = vpack.c.b16 %v160, %v159
  %177 = vmatprep.subr.bf16.mxu0 0
  %178 = vmatpush1.bf16.msra.mxu0 %v161
  %179 = vmatprep.subr.bf16.mxu0 0
  %180 = vmatpush1.bf16.msra.mxu0 %v162
  %181 = vmatprep.subr.bf16.mxu0 0
  %182 = vmatpush1.bf16.msra.mxu0 %v163
  %183 = vmatprep.subr.bf16.mxu0 0
  %184 = vmatpush1.bf16.msra.mxu0 %v164
  %185 = vmatprep.subr.bf16.mxu0 0
  %186 = vmatpush1.bf16.msra.mxu0 %v165
  %187 = vmatprep.subr.bf16.mxu0 0
  %188 = vmatpush1.bf16.msra.mxu0 %v166
  %189 = vmatprep.subr.bf16.mxu0 0
  %190 = vmatpush1.bf16.msra.mxu0 %v167
  %191 = vmatprep.subr.bf16.mxu0 0
  %192 = vmatpush1.bf16.msra.mxu0 %v168
  %193 = vmatprep.subr.bf16.mxu0 0
  %194 = vmatpush1.bf16.msra.mxu0 0
  %195 = vmatprep.subr.bf16.mxu0 0
  %196 = vmatpush1.bf16.msra.mxu0 0
  %197 = vmatprep.subr.bf16.mxu0 0
  %198 = vmatpush1.bf16.msra.mxu0 0
  %199 = vmatprep.subr.bf16.mxu0 0
  %200 = vmatpush1.bf16.msra.mxu0 0
  %201 = vmatprep.subr.bf16.mxu0 0
  %202 = vmatpush1.bf16.msra.mxu0 0
  %203 = vmatprep.subr.bf16.mxu0 0
  %204 = vmatpush1.bf16.msra.mxu0 0
  %205 = vmatprep.subr.bf16.mxu0 0
  %206 = vmatpush1.bf16.msra.mxu0 0
  %207 = vmatprep.subr.bf16.mxu0 0
  %208 = vmatpush1.bf16.msra.mxu0 0
  %209 = vmatprep.mubr.bf16.mxu0 0
  %210 = vmatmul.mubr.bf16.gmra.mrb[0].mxu0 %v98
  %v211 = vpop.f32.mrb[0].mxu0
  %v212 = vadd.f32 %v127, %v211
  %v213 = vpop.f32.mrb[0].mxu0
  %v214 = vpop.f32.mrb[0].mxu0
  %v215 = vadd.f32 %v127, %v214
  %v216 = vpop.f32.mrb[0].mxu0
  %217 = vmatprep.mubr.bf16.mxu0 0
  %218 = vmatmul.mubr.bf16.gmra.mrb[0].mxu0 %v99
  %v219 = vpop.f32.mrb[0].mxu0
  %v220 = vadd.f32 %v127, %v219
  %v221 = vpop.f32.mrb[0].mxu0
  %v222 = vpop.f32.mrb[0].mxu0
  %v223 = vadd.f32 %v127, %v222
  %v224 = vpop.f32.mrb[0].mxu0
  %225 = vmatprep.mubr.bf16.mxu0 0
  %226 = vmatmul.mubr.bf16.gmra.mrb[0].mxu0 %v100
  %v227 = vpop.f32.mrb[0].mxu0
  %v228 = vadd.f32 %v127, %v227
  %v229 = vpop.f32.mrb[0].mxu0
  %v230 = vpop.f32.mrb[0].mxu0
  %v231 = vadd.f32 %v127, %v230
  %v232 = vpop.f32.mrb[0].mxu0
  %233 = vmatprep.mubr.bf16.mxu0 0
  %234 = vmatmul.mubr.bf16.gmra.mrb[0].mxu0 %v101
  %v235 = vpop.f32.mrb[0].mxu0
  %v236 = vadd.f32 %v127, %v235
  %v237 = vpop.f32.mrb[0].mxu0
  %v238 = vpop.f32.mrb[0].mxu0
  %v239 = vadd.f32 %v127, %v238
  %v240 = vpop.f32.mrb[0].mxu0
  %241 = vmatprep.mubr.bf16.mxu0 0
  %242 = vmatmul.mubr.bf16.gmra.mrb[0].mxu0 %v102
  %v243 = vpop.f32.mrb[0].mxu0
  %v244 = vadd.f32 %v127, %v243
  %v245 = vpop.f32.mrb[0].mxu0
  %v246 = vpop.f32.mrb[0].mxu0
  %v247 = vadd.f32 %v127, %v246
  %v248 = vpop.f32.mrb[0].mxu0
  %249 = vmatprep.mubr.bf16.mxu0 0
  %250 = vmatmul.mubr.bf16.gmra.mrb[0].mxu0 %v103
  %v251 = vpop.f32.mrb[0].mxu0
  %v252 = vadd.f32 %v127, %v251
  %v253 = vpop.f32.mrb[0].mxu0
  %v254 = vpop.f32.mrb[0].mxu0
  %v255 = vadd.f32 %v127, %v254
  %v256 = vpop.f32.mrb[0].mxu0
  %257 = vmatprep.mubr.bf16.mxu0 0
  %258 = vmatmul.mubr.bf16.gmra.mrb[0].mxu0 %v104
  %v259 = vpop.f32.mrb[0].mxu0
  %v260 = vadd.f32 %v127, %v259
  %v261 = vpop.f32.mrb[0].mxu0
  %v262 = vpop.f32.mrb[0].mxu0
  %v263 = vadd.f32 %v127, %v262
  %v264 = vpop.f32.mrb[0].mxu0
  %265 = vmatprep.mubr.bf16.mxu0 0
  %266 = vmatmul.mubr.bf16.gmra.mrb[0].mxu0 %v105
  %v267 = vpop.f32.mrb[0].mxu0
  %v268 = vadd.f32 %v127, %v267
  %v269 = vpop.f32.mrb[0].mxu0
  %v270 = vpop.f32.mrb[0].mxu0
  %v271 = vadd.f32 %v127, %v270
  %v272 = vpop.f32.mrb[0].mxu0
  %273 = vdwg.mxu0
  %vm274 = vcmask 130048
  %275 = vst.msk [vmem:[%s3] sm:$0xff] %vm274, %v212
  %276 = vst.msk [vmem:[%s3 + $0x8] sm:$0xff] %vm274, %v215
  %277 = vst.msk [vmem:[%s3 + $0x10] sm:$0xff] %vm274, %v220
  %278 = vst.msk [vmem:[%s3 + $0x18] sm:$0xff] %vm274, %v223
  %279 = vst.msk [vmem:[%s3 + $0x20] sm:$0xff] %vm274, %v228
  %280 = vst.msk [vmem:[%s3 + $0x28] sm:$0xff] %vm274, %v231
  %281 = vst.msk [vmem:[%s3 + $0x30] sm:$0xff] %vm274, %v236
  %282 = vst.msk [vmem:[%s3 + $0x38] sm:$0xff] %vm274, %v239
  %283 = vst.msk [vmem:[%s3 + $0x40] sm:$0xff] %vm274, %v244
  %284 = vst.msk [vmem:[%s3 + $0x48] sm:$0xff] %vm274, %v247
  %285 = vst.msk [vmem:[%s3 + $0x50] sm:$0xff] %vm274, %v252
  %286 = vst.msk [vmem:[%s3 + $0x58] sm:$0xff] %vm274, %v255
  %287 = vst.msk [vmem:[%s3 + $0x60] sm:$0xff] %vm274, %v260
  %288 = vst.msk [vmem:[%s3 + $0x68] sm:$0xff] %vm274, %v263
  %289 = vst.msk [vmem:[%s3 + $0x70] sm:$0xff] %vm274, %v268
  %290 = vst.msk [vmem:[%s3 + $0x78] sm:$0xff] %vm274, %v271
  %p291 = scmp.eq.s32.totalorder 0, 0
  // Predicated region
  $region14: #{unet_forward.11} parent=0 // pred_check
    %p292 = pneg %p291
  $region15: #{unet_forward.11} parent=0 // pred_check_branch
    %294 = sbr.rel (%p292) target = $region17
  $region16: #{unet_forward.11} parent=0 // pred_region
    %vm295 = vcmask 122880
    %296 = vst.msk [vmem:[%s4] sm:$0x1] %vm295, 0.0
    %297 = vst.msk [vmem:[%s5] sm:$0x1] %vm295, 0.0
  $region17: #{unet_forward.11} parent=0 // pred_fallthru
    _
  %v298 = vld [vmem:[%s4] sm:$0x1]
  %v299 = vsel %vm274, %v212, 0.0
  %v300 = vsel %vm274, %v215, 0.0
  %v301 = vadd.f32 %v299, %v300
  %v302 = vsel %vm274, %v220, 0.0
  %v303 = vadd.f32 %v301, %v302
  %v304 = vsel %vm274, %v223, 0.0
  %v305 = vadd.f32 %v303, %v304
  %v306 = vsel %vm274, %v228, 0.0
  %v307 = vadd.f32 %v305, %v306
  %v308 = vsel %vm274, %v231, 0.0
  %v309 = vadd.f32 %v307, %v308
  %v310 = vsel %vm274, %v236, 0.0
  %v311 = vadd.f32 %v309, %v310
  %v312 = vsel %vm274, %v239, 0.0
  %v313 = vadd.f32 %v311, %v312
  %v314 = vsel %vm274, %v244, 0.0
  %v315 = vadd.f32 %v313, %v314
  %v316 = vsel %vm274, %v247, 0.0
  %v317 = vadd.f32 %v315, %v316
  %v318 = vsel %vm274, %v252, 0.0
  %v319 = vadd.f32 %v317, %v318
  %v320 = vsel %vm274, %v255, 0.0
  %v321 = vadd.f32 %v319, %v320
  %v322 = vsel %vm274, %v260, 0.0
  %v323 = vadd.f32 %v321, %v322
  %v324 = vsel %vm274, %v263, 0.0
  %v325 = vadd.f32 %v323, %v324
  %v326 = vsel %vm274, %v268, 0.0
  %v327 = vadd.f32 %v325, %v326
  %v328 = vsel %vm274, %v271, 0.0
  %v329 = vadd.f32 %v327, %v328
  %v330 = vrot.slane %v329, 4
  %v331 = vadd.f32 %v329, %v330
  %v332 = vrot.slane %v331, 2
  %v333 = vadd.f32 %v331, %v332
  %v334 = vrot.slane %v333, 1
  %v335 = vadd.f32 %v333, %v334
  %v336 = vadd.f32 %v298, %v335
  %vm337 = vcmask 122880
  %338 = vst.msk [vmem:[%s4] sm:$0x1] %vm337, %v336
  %v339 = vld [vmem:[%s5] sm:$0x1]
  %v340 = vmul.f32 %v212, %v212
  %v341 = vmul.f32 %v215, %v215
  %v342 = vmul.f32 %v220, %v220
  %v343 = vmul.f32 %v223, %v223
  %v344 = vmul.f32 %v228, %v228
  %v345 = vmul.f32 %v231, %v231
  %v346 = vmul.f32 %v236, %v236
  %v347 = vmul.f32 %v239, %v239
  %v348 = vmul.f32 %v244, %v244
  %v349 = vmul.f32 %v247, %v247
  %v350 = vmul.f32 %v252, %v252
  %v351 = vmul.f32 %v255, %v255
  %v352 = vmul.f32 %v260, %v260
  %v353 = vmul.f32 %v263, %v263
  %v354 = vmul.f32 %v268, %v268
  %v355 = vmul.f32 %v271, %v271
  %v356 = vsel %vm274, %v340, 0.0
  %v357 = vsel %vm274, %v341, 0.0
  %v358 = vadd.f32 %v356, %v357
  %v359 = vsel %vm274, %v342, 0.0
  %v360 = vadd.f32 %v358, %v359
  %v361 = vsel %vm274, %v343, 0.0
  %v362 = vadd.f32 %v360, %v361
  %v363 = vsel %vm274, %v344, 0.0
  %v364 = vadd.f32 %v362, %v363
  %v365 = vsel %vm274, %v345, 0.0
  %v366 = vadd.f32 %v364, %v365
  %v367 = vsel %vm274, %v346, 0.0
  %v368 = vadd.f32 %v366, %v367
  %v369 = vsel %vm274, %v347, 0.0
  %v370 = vadd.f32 %v368, %v369
  %v371 = vsel %vm274, %v348, 0.0
  %v372 = vadd.f32 %v370, %v371
  %v373 = vsel %vm274, %v349, 0.0
  %v374 = vadd.f32 %v372, %v373
  %v375 = vsel %vm274, %v350, 0.0
  %v376 = vadd.f32 %v374, %v375
  %v377 = vsel %vm274, %v351, 0.0
  %v378 = vadd.f32 %v376, %v377
  %v379 = vsel %vm274, %v352, 0.0
  %v380 = vadd.f32 %v378, %v379
  %v381 = vsel %vm274, %v353, 0.0
  %v382 = vadd.f32 %v380, %v381
  %v383 = vsel %vm274, %v354, 0.0
  %v384 = vadd.f32 %v382, %v383
  %v385 = vsel %vm274, %v355, 0.0
  %v386 = vadd.f32 %v384, %v385
  %v387 = vrot.slane %v386, 4
  %v388 = vadd.f32 %v386, %v387
  %v389 = vrot.slane %v388, 2
  %v390 = vadd.f32 %v388, %v389
  %v391 = vrot.slane %v390, 1
  %v392 = vadd.f32 %v390, %v391
  %v393 = vadd.f32 %v339, %v392
  %394 = vst.msk [vmem:[%s5] sm:$0x1] %vm337, %v393
  // Predicated region
  $region18: #{unet_forward.11} parent=0 // pred_check
    _
  $region19: #{unet_forward.11} parent=0 // pred_check_branch
    %396 = sbr.rel (0) target = $region21
  $region20: #{unet_forward.11} parent=0 // pred_region
    _
  $region21: #{unet_forward.11} parent=0 // pred_fallthru
    _
  // Predicated region
  $region22: #{unet_forward.11} parent=0 // pred_check
    _
  $region23: #{unet_forward.11} parent=0 // pred_check_branch
    %398 = sbr.rel (0) target = $region25
  $region24: #{unet_forward.11} parent=0 // pred_region
    _
  $region25: #{unet_forward.11} parent=0 // pred_fallthru
    _
  // Predicated region
  $region26: #{unet_forward.11} parent=0 // pred_check
    _
  $region27: #{unet_forward.11} parent=0 // pred_check_branch
    %400 = sbr.rel (0) target = $region29
  $region28: #{unet_forward.11} parent=0 // pred_region
    _
  $region29: #{unet_forward.11} parent=0 // pred_fallthru
    _
  // Predicated region
  $region30: #{unet_forward.11} parent=0 // pred_check
    _
  $region31: #{unet_forward.11} parent=0 // pred_check_branch
    %402 = sbr.rel (0) target = $region33
  $region32: #{unet_forward.11} parent=0 // pred_region
    _
  $region33: #{unet_forward.11} parent=0 // pred_fallthru
    _
  // Predicated region
  $region34: #{unet_forward.11} parent=0 // pred_check
    _
  $region35: #{unet_forward.11} parent=0 // pred_check_branch
    %404 = sbr.rel (0) target = $region37
  $region36: #{unet_forward.11} parent=0 // pred_region
    _
  $region37: #{unet_forward.11} parent=0 // pred_fallthru
    _
  // Predicated region
  $region38: #{unet_forward.11} parent=0 // pred_check
    _
  $region39: #{unet_forward.11} parent=0 // pred_check_branch
    %406 = sbr.rel (0) target = $region41
  $region40: #{unet_forward.11} parent=0 // pred_region
    _
  $region41: #{unet_forward.11} parent=0 // pred_fallthru
    _

// kernel: unet_forward.12
$region0: #{unet_forward.12}
  #allocation0 [shape = 'u32[]', space=smem, size = 0x4, offset = 0x4, fixed_abs, tag = 'smem constant byte address 0x4 - core index']
  #allocation1 [shape = 'u32[144,128]{1,0:T(1,128)}', space=vmem, size = 0x12000, scoped, tag = 'internal scratch']
  %s0 = inlined_call_operand.vmem [shape: bf16[32,256], index: 0, kind: input, shape index: {}]
  %s1 = inlined_call_operand.vmem [shape: bf16[256,32], index: 1, kind: input, shape index: {}]
  %s2 = inlined_call_operand.vmem [shape: f32[1,32], index: 2, kind: input, shape index: {}]
  %s3 = inlined_call_operand.vmem [shape: f32[32,32], index: 3, kind: output, shape index: {0}]
  %s4 = inlined_call_operand.vmem [shape: f32[1,32], index: 4, kind: output, shape index: {1}]
  %s5 = inlined_call_operand.vmem [shape: f32[1,32], index: 5, kind: output, shape index: {2}]
  %6 = xla_tuple %s3, %s4, %s5
  %s7 = sld [smem:[#allocation0]]
  $region42: #{unet_forward.12} parent=0
    _
  %s9 = ssub.s32 1, %s7
  %s10 = scalar_select 0, %s9, %s7
  // Predicated region
  $region2: #{unet_forward.12} parent=0 // pred_check
    _
  $region3: #{unet_forward.12} parent=0 // pred_check_branch
    %12 = sbr.rel (0) target = $region5
  $region4: #{unet_forward.12} parent=0 // pred_region
    _
  $region5: #{unet_forward.12} parent=0 // pred_fallthru
    _
  // Predicated region
  $region6: #{unet_forward.12} parent=0 // pred_check
    _
  $region7: #{unet_forward.12} parent=0 // pred_check_branch
    %14 = sbr.rel (0) target = $region9
  $region8: #{unet_forward.12} parent=0 // pred_region
    _
  $region9: #{unet_forward.12} parent=0 // pred_fallthru
    _
  // Predicated region
  $region10: #{unet_forward.12} parent=0 // pred_check
    _
  $region11: #{unet_forward.12} parent=0 // pred_check_branch
    %16 = sbr.rel (0) target = $region13
  $region12: #{unet_forward.12} parent=0 // pred_region
    _
  $region13: #{unet_forward.12} parent=0 // pred_fallthru
    _
  %v18 = vld [vmem:[%s0] sm:$0xff]
  %v19 = vld [vmem:[%s0 + $0x8] sm:$0xff]
  %v20 = vld [vmem:[%s0 + $0x10] sm:$0xff]
  %v21 = vld [vmem:[%s0 + $0x18] sm:$0xff]
  %v22 = vunpack.c.l.bf16 %v18
  %v23 = vunpack.c.h.bf16 %v18
  %v24 = vunpack.c.l.bf16 %v19
  %v25 = vunpack.c.h.bf16 %v19
  %v26 = vunpack.c.l.bf16 %v20
  %v27 = vunpack.c.h.bf16 %v20
  %v28 = vunpack.c.l.bf16 %v21
  %v29 = vunpack.c.h.bf16 %v21
  %vm30 = vcmp.gt.f32.partialorder %v22, 0.0
  %vm31 = vcmp.gt.f32.partialorder %v23, 0.0
  %vm32 = vcmp.gt.f32.partialorder %v24, 0.0
  %vm33 = vcmp.gt.f32.partialorder %v25, 0.0
  %vm34 = vcmp.gt.f32.partialorder %v26, 0.0
  %vm35 = vcmp.gt.f32.partialorder %v27, 0.0
  %vm36 = vcmp.gt.f32.partialorder %v28, 0.0
  %vm37 = vcmp.gt.f32.partialorder %v29, 0.0
  %v38 = vmul.f32 %v22, 0.2
  %v39 = vmul.f32 %v23, 0.2
  %v40 = vmul.f32 %v24, 0.2
  %v41 = vmul.f32 %v25, 0.2
  %v42 = vmul.f32 %v26, 0.2
  %v43 = vmul.f32 %v27, 0.2
  %v44 = vmul.f32 %v28, 0.2
  %v45 = vmul.f32 %v29, 0.2
  %v46 = vsel %vm30, %v22, %v38
  %v47 = vsel %vm31, %v23, %v39
  %v48 = vsel %vm32, %v24, %v40
  %v49 = vsel %vm33, %v25, %v41
  %v50 = vsel %vm34, %v26, %v42
  %v51 = vsel %vm35, %v27, %v43
  %v52 = vsel %vm36, %v28, %v44
  %v53 = vsel %vm37, %v29, %v45
  %v54 = vpack.c.bf16 %v48, %v46
  %v55 = vpack.c.bf16 %v49, %v47
  %v56 = vpack.c.bf16 %v52, %v50
  %v57 = vpack.c.bf16 %v53, %v51
  %v58 = vld [vmem:[%s1] sm:$0xf]
  %v59 = vld [vmem:[%s1 + $0x4] sm:$0xf]
  %v60 = vld [vmem:[%s1 + $0x8] sm:$0xf]
  %v61 = vld [vmem:[%s1 + $0xc] sm:$0xf]
  %v62 = vld [vmem:[%s1 + $0x10] sm:$0xf]
  %v63 = vld [vmem:[%s1 + $0x14] sm:$0xf]
  %v64 = vld [vmem:[%s1 + $0x18] sm:$0xf]
  %v65 = vld [vmem:[%s1 + $0x1c] sm:$0xf]
  %v66 = vld [vmem:[%s1 + $0x20] sm:$0xf]
  %v67 = vld [vmem:[%s1 + $0x24] sm:$0xf]
  %v68 = vld [vmem:[%s1 + $0x28] sm:$0xf]
  %v69 = vld [vmem:[%s1 + $0x2c] sm:$0xf]
  %v70 = vld [vmem:[%s1 + $0x30] sm:$0xf]
  %v71 = vld [vmem:[%s1 + $0x34] sm:$0xf]
  %v72 = vld [vmem:[%s1 + $0x38] sm:$0xf]
  %v73 = vld [vmem:[%s1 + $0x3c] sm:$0xf]
  %v74 = vld [vmem:[%s1 + $0x40] sm:$0xf]
  %v75 = vld [vmem:[%s1 + $0x44] sm:$0xf]
  %v76 = vld [vmem:[%s1 + $0x48] sm:$0xf]
  %v77 = vld [vmem:[%s1 + $0x4c] sm:$0xf]
  %v78 = vld [vmem:[%s1 + $0x50] sm:$0xf]
  %v79 = vld [vmem:[%s1 + $0x54] sm:$0xf]
  %v80 = vld [vmem:[%s1 + $0x58] sm:$0xf]
  %v81 = vld [vmem:[%s1 + $0x5c] sm:$0xf]
  %v82 = vld [vmem:[%s1 + $0x60] sm:$0xf]
  %v83 = vld [vmem:[%s1 + $0x64] sm:$0xf]
  %v84 = vld [vmem:[%s1 + $0x68] sm:$0xf]
  %v85 = vld [vmem:[%s1 + $0x6c] sm:$0xf]
  %v86 = vld [vmem:[%s1 + $0x70] sm:$0xf]
  %v87 = vld [vmem:[%s1 + $0x74] sm:$0xf]
  %v88 = vld [vmem:[%s1 + $0x78] sm:$0xf]
  %v89 = vld [vmem:[%s1 + $0x7c] sm:$0xf]
  %v90 = vld [vmem:[%s2] sm:$0x1]
  %v92 = vlaneseq
  %v93 = vshrl.u32 %v92, 7
  %v94 = vsub.s32 0, %v93
  %v95 = vrot.slane %v90, %v94
  %v129 = vunpack.c.l.b16 %v58
  %v130 = vunpack.c.l.b16 %v59
  %v131 = vunpack.c.l.b16 %v60
  %v132 = vunpack.c.l.b16 %v61
  %v133 = vunpack.c.l.b16 %v62
  %v134 = vunpack.c.l.b16 %v63
  %v135 = vunpack.c.l.b16 %v64
  %v136 = vunpack.c.l.b16 %v65
  %v137 = vunpack.c.l.b16 %v66
  %v138 = vunpack.c.l.b16 %v67
  %v139 = vunpack.c.l.b16 %v68
  %v140 = vunpack.c.l.b16 %v69
  %v141 = vunpack.c.l.b16 %v70
  %v142 = vunpack.c.l.b16 %v71
  %v143 = vunpack.c.l.b16 %v72
  %v144 = vunpack.c.l.b16 %v73
  %v145 = vunpack.c.l.b16 %v74
  %v146 = vunpack.c.l.b16 %v75
  %v147 = vunpack.c.l.b16 %v76
  %v148 = vunpack.c.l.b16 %v77
  %v149 = vunpack.c.l.b16 %v78
  %v150 = vunpack.c.l.b16 %v79
  %v151 = vunpack.c.l.b16 %v80
  %v152 = vunpack.c.l.b16 %v81
  %v153 = vunpack.c.l.b16 %v82
  %v154 = vunpack.c.l.b16 %v83
  %v155 = vunpack.c.l.b16 %v84
  %v156 = vunpack.c.l.b16 %v85
  %v157 = vunpack.c.l.b16 %v86
  %v158 = vunpack.c.l.b16 %v87
  %v159 = vunpack.c.l.b16 %v88
  %v160 = vunpack.c.l.b16 %v89
  %v161 = vpack.c.b16 %v130, %v129
  %v162 = vpack.c.b16 %v132, %v131
  %v163 = vpack.c.b16 %v134, %v133
  %v164 = vpack.c.b16 %v136, %v135
  %v165 = vpack.c.b16 %v138, %v137
  %v166 = vpack.c.b16 %v140, %v139
  %v167 = vpack.c.b16 %v142, %v141
  %v168 = vpack.c.b16 %v144, %v143
  %v169 = vpack.c.b16 %v146, %v145
  %v170 = vpack.c.b16 %v148, %v147
  %v171 = vpack.c.b16 %v150, %v149
  %v172 = vpack.c.b16 %v152, %v151
  %v173 = vpack.c.b16 %v154, %v153
  %v174 = vpack.c.b16 %v156, %v155
  %v175 = vpack.c.b16 %v158, %v157
  %v176 = vpack.c.b16 %v160, %v159
  %193 = vmatprep.subr.bf16.mxu0 0
  %194 = vmatpush1.bf16.msra.mxu0 %v161
  %195 = vmatprep.subr.bf16.mxu0 0
  %196 = vmatpush1.bf16.msra.mxu0 %v162
  %197 = vmatprep.subr.bf16.mxu0 0
  %198 = vmatpush1.bf16.msra.mxu0 %v163
  %199 = vmatprep.subr.bf16.mxu0 0
  %200 = vmatpush1.bf16.msra.mxu0 %v164
  %201 = vmatprep.subr.bf16.mxu0 0
  %202 = vmatpush1.bf16.msra.mxu0 %v165
  %203 = vmatprep.subr.bf16.mxu0 0
  %204 = vmatpush1.bf16.msra.mxu0 %v166
  %205 = vmatprep.subr.bf16.mxu0 0
  %206 = vmatpush1.bf16.msra.mxu0 %v167
  %207 = vmatprep.subr.bf16.mxu0 0
  %208 = vmatpush1.bf16.msra.mxu0 %v168
  %209 = vmatprep.subr.bf16.mxu0 0
  %210 = vmatpush1.bf16.msra.mxu0 %v169
  %211 = vmatprep.subr.bf16.mxu0 0
  %212 = vmatpush1.bf16.msra.mxu0 %v170
  %213 = vmatprep.subr.bf16.mxu0 0
  %214 = vmatpush1.bf16.msra.mxu0 %v171
  %215 = vmatprep.subr.bf16.mxu0 0
  %216 = vmatpush1.bf16.msra.mxu0 %v172
  %217 = vmatprep.subr.bf16.mxu0 0
  %218 = vmatpush1.bf16.msra.mxu0 %v173
  %219 = vmatprep.subr.bf16.mxu0 0
  %220 = vmatpush1.bf16.msra.mxu0 %v174
  %221 = vmatprep.subr.bf16.mxu0 0
  %222 = vmatpush1.bf16.msra.mxu0 %v175
  %223 = vmatprep.subr.bf16.mxu0 0
  %224 = vmatpush1.bf16.msra.mxu0 %v176
  %225 = vmatprep.mubr.bf16.mxu0 %v55
  %226 = vmatmul.mubr.bf16.gmra.mrb[0].mxu0 %v54
  %v227 = vpop.f32.mrb[0].mxu0
  %v228 = vadd.f32 %v95, %v227
  %v229 = vpop.f32.mrb[0].mxu0
  %v230 = vpop.f32.mrb[0].mxu0
  %v231 = vadd.f32 %v95, %v230
  %v232 = vpop.f32.mrb[0].mxu0
  %233 = vmatprep.mubr.bf16.mxu0 %v57
  %234 = vmatmul.mubr.bf16.gmra.mrb[0].mxu0 %v56
  %v235 = vpop.f32.mrb[0].mxu0
  %v236 = vadd.f32 %v95, %v235
  %v237 = vpop.f32.mrb[0].mxu0
  %v238 = vpop.f32.mrb[0].mxu0
  %v239 = vadd.f32 %v95, %v238
  %v240 = vpop.f32.mrb[0].mxu0
  %241 = vdwg.mxu0
  %vm242 = vcmask 261120
  %243 = vst.msk [vmem:[%s3] sm:$0xff] %vm242, %v228
  %244 = vst.msk [vmem:[%s3 + $0x8] sm:$0xff] %vm242, %v231
  %245 = vst.msk [vmem:[%s3 + $0x10] sm:$0xff] %vm242, %v236
  %246 = vst.msk [vmem:[%s3 + $0x18] sm:$0xff] %vm242, %v239
  %p247 = scmp.eq.s32.totalorder 0, 0
  // Predicated region
  $region14: #{unet_forward.12} parent=0 // pred_check
    %p248 = pneg %p247
  $region15: #{unet_forward.12} parent=0 // pred_check_branch
    %250 = sbr.rel (%p248) target = $region17
  $region16: #{unet_forward.12} parent=0 // pred_region
    %vm251 = vcmask 253952
    %252 = vst.msk [vmem:[%s4] sm:$0x1] %vm251, 0.0
    %253 = vst.msk [vmem:[%s5] sm:$0x1] %vm251, 0.0
  $region17: #{unet_forward.12} parent=0 // pred_fallthru
    _
  %v254 = vld [vmem:[%s4] sm:$0x1]
  %v255 = vsel %vm242, %v228, 0.0
  %v256 = vsel %vm242, %v231, 0.0
  %v257 = vadd.f32 %v255, %v256
  %v258 = vsel %vm242, %v236, 0.0
  %v259 = vadd.f32 %v257, %v258
  %v260 = vsel %vm242, %v239, 0.0
  %v261 = vadd.f32 %v259, %v260
  %v262 = vrot.slane %v261, 4
  %v263 = vadd.f32 %v261, %v262
  %v264 = vrot.slane %v263, 2
  %v265 = vadd.f32 %v263, %v264
  %v266 = vrot.slane %v265, 1
  %v267 = vadd.f32 %v265, %v266
  %v268 = vadd.f32 %v254, %v267
  %vm269 = vcmask 253952
  %270 = vst.msk [vmem:[%s4] sm:$0x1] %vm269, %v268
  %v271 = vld [vmem:[%s5] sm:$0x1]
  %v272 = vmul.f32 %v228, %v228
  %v273 = vmul.f32 %v231, %v231
  %v274 = vmul.f32 %v236, %v236
  %v275 = vmul.f32 %v239, %v239
  %v276 = vsel %vm242, %v272, 0.0
  %v277 = vsel %vm242, %v273, 0.0
  %v278 = vadd.f32 %v276, %v277
  %v279 = vsel %vm242, %v274, 0.0
  %v280 = vadd.f32 %v278, %v279
  %v281 = vsel %vm242, %v275, 0.0
  %v282 = vadd.f32 %v280, %v281
  %v283 = vrot.slane %v282, 4
  %v284 = vadd.f32 %v282, %v283
  %v285 = vrot.slane %v284, 2
  %v286 = vadd.f32 %v284, %v285
  %v287 = vrot.slane %v286, 1
  %v288 = vadd.f32 %v286, %v287
  %v289 = vadd.f32 %v271, %v288
  %290 = vst.msk [vmem:[%s5] sm:$0x1] %vm269, %v289
  // Predicated region
  $region18: #{unet_forward.12} parent=0 // pred_check
    _
  $region19: #{unet_forward.12} parent=0 // pred_check_branch
    %292 = sbr.rel (0) target = $region21
  $region20: #{unet_forward.12} parent=0 // pred_region
    _
  $region21: #{unet_forward.12} parent=0 // pred_fallthru
    _
  // Predicated region
  $region22: #{unet_forward.12} parent=0 // pred_check
    _
  $region23: #{unet_forward.12} parent=0 // pred_check_branch
    %294 = sbr.rel (0) target = $region25
  $region24: #{unet_forward.12} parent=0 // pred_region
    _
  $region25: #{unet_forward.12} parent=0 // pred_fallthru
    _
  // Predicated region
  $region26: #{unet_forward.12} parent=0 // pred_check
    _
  $region27: #{unet_forward.12} parent=0 // pred_check_branch
    %296 = sbr.rel (0) target = $region29
  $region28: #{unet_forward.12} parent=0 // pred_region
    _
  $region29: #{unet_forward.12} parent=0 // pred_fallthru
    _
  // Predicated region
  $region30: #{unet_forward.12} parent=0 // pred_check
    _
  $region31: #{unet_forward.12} parent=0 // pred_check_branch
    %298 = sbr.rel (0) target = $region33
  $region32: #{unet_forward.12} parent=0 // pred_region
    _
  $region33: #{unet_forward.12} parent=0 // pred_fallthru
    _
  // Predicated region
  $region34: #{unet_forward.12} parent=0 // pred_check
    _
  $region35: #{unet_forward.12} parent=0 // pred_check_branch
    %300 = sbr.rel (0) target = $region37
  $region36: #{unet_forward.12} parent=0 // pred_region
    _
  $region37: #{unet_forward.12} parent=0 // pred_fallthru
    _
  // Predicated region
  $region38: #{unet_forward.12} parent=0 // pred_check
    _
  $region39: #{unet_forward.12} parent=0 // pred_check_branch
    %302 = sbr.rel (0) target = $region41
  $region40: #{unet_forward.12} parent=0 // pred_region
    _
  $region41: #{unet_forward.12} parent=0 // pred_fallthru
    _

// kernel: unet_forward.13
$region0: #{unet_forward.13}
  #allocation0 [shape = 'u32[]', space=smem, size = 0x4, offset = 0x4, fixed_abs, tag = 'smem constant byte address 0x4 - core index']
  #allocation1 [shape = 'u32[144,128]{1,0:T(1,128)}', space=vmem, size = 0x12000, scoped, tag = 'internal scratch']
  %s0 = inlined_call_operand.vmem [shape: bf16[8,512], index: 0, kind: input, shape index: {}]
  %s1 = inlined_call_operand.vmem [shape: bf16[512,64], index: 1, kind: input, shape index: {}]
  %s2 = inlined_call_operand.vmem [shape: f32[1,64], index: 2, kind: input, shape index: {}]
  %s3 = inlined_call_operand.vmem [shape: f32[8,64], index: 3, kind: output, shape index: {0}]
  %s4 = inlined_call_operand.vmem [shape: f32[1,64], index: 4, kind: output, shape index: {1}]
  %s5 = inlined_call_operand.vmem [shape: f32[1,64], index: 5, kind: output, shape index: {2}]
  %6 = xla_tuple %s3, %s4, %s5
  %s7 = sld [smem:[#allocation0]]
  $region42: #{unet_forward.13} parent=0
    _
  %s9 = ssub.s32 1, %s7
  %s10 = scalar_select 0, %s9, %s7
  // Predicated region
  $region2: #{unet_forward.13} parent=0 // pred_check
    _
  $region3: #{unet_forward.13} parent=0 // pred_check_branch
    %12 = sbr.rel (0) target = $region5
  $region4: #{unet_forward.13} parent=0 // pred_region
    _
  $region5: #{unet_forward.13} parent=0 // pred_fallthru
    _
  // Predicated region
  $region6: #{unet_forward.13} parent=0 // pred_check
    _
  $region7: #{unet_forward.13} parent=0 // pred_check_branch
    %14 = sbr.rel (0) target = $region9
  $region8: #{unet_forward.13} parent=0 // pred_region
    _
  $region9: #{unet_forward.13} parent=0 // pred_fallthru
    _
  // Predicated region
  $region10: #{unet_forward.13} parent=0 // pred_check
    _
  $region11: #{unet_forward.13} parent=0 // pred_check_branch
    %16 = sbr.rel (0) target = $region13
  $region12: #{unet_forward.13} parent=0 // pred_region
    _
  $region13: #{unet_forward.13} parent=0 // pred_fallthru
    _
  %v18 = vld [vmem:[%s0] sm:$0xff]
  %v19 = vld [vmem:[%s0 + $0x8] sm:$0xff]
  %v20 = vunpack.c.l.bf16 %v18
  %v21 = vunpack.c.h.bf16 %v18
  %v22 = vunpack.c.l.bf16 %v19
  %v23 = vunpack.c.h.bf16 %v19
  %vm24 = vcmp.gt.f32.partialorder %v20, 0.0
  %vm25 = vcmp.gt.f32.partialorder %v21, 0.0
  %vm26 = vcmp.gt.f32.partialorder %v22, 0.0
  %vm27 = vcmp.gt.f32.partialorder %v23, 0.0
  %v28 = vmul.f32 %v20, 0.2
  %v29 = vmul.f32 %v21, 0.2
  %v30 = vmul.f32 %v22, 0.2
  %v31 = vmul.f32 %v23, 0.2
  %v32 = vsel %vm24, %v20, %v28
  %v33 = vsel %vm25, %v21, %v29
  %v34 = vsel %vm26, %v22, %v30
  %v35 = vsel %vm27, %v23, %v31
  %v36 = vpack.c.bf16 %v32, %v32
  %v37 = vpack.c.bf16 %v33, %v33
  %v38 = vpack.c.bf16 %v34, %v34
  %v39 = vpack.c.bf16 %v35, %v35
  %v40 = vld [vmem:[%s1] sm:$0xf]
  %v41 = vld [vmem:[%s1 + $0x4] sm:$0xf]
  %v42 = vld [vmem:[%s1 + $0x8] sm:$0xf]
  %v43 = vld [vmem:[%s1 + $0xc] sm:$0xf]
  %v44 = vld [vmem:[%s1 + $0x10] sm:$0xf]
  %v45 = vld [vmem:[%s1 + $0x14] sm:$0xf]
  %v46 = vld [vmem:[%s1 + $0x18] sm:$0xf]
  %v47 = vld [vmem:[%s1 + $0x1c] sm:$0xf]
  %v48 = vld [vmem:[%s1 + $0x20] sm:$0xf]
  %v49 = vld [vmem:[%s1 + $0x24] sm:$0xf]
  %v50 = vld [vmem:[%s1 + $0x28] sm:$0xf]
  %v51 = vld [vmem:[%s1 + $0x2c] sm:$0xf]
  %v52 = vld [vmem:[%s1 + $0x30] sm:$0xf]
  %v53 = vld [vmem:[%s1 + $0x34] sm:$0xf]
  %v54 = vld [vmem:[%s1 + $0x38] sm:$0xf]
  %v55 = vld [vmem:[%s1 + $0x3c] sm:$0xf]
  %v56 = vld [vmem:[%s1 + $0x40] sm:$0xf]
  %v57 = vld [vmem:[%s1 + $0x44] sm:$0xf]
  %v58 = vld [vmem:[%s1 + $0x48] sm:$0xf]
  %v59 = vld [vmem:[%s1 + $0x4c] sm:$0xf]
  %v60 = vld [vmem:[%s1 + $0x50] sm:$0xf]
  %v61 = vld [vmem:[%s1 + $0x54] sm:$0xf]
  %v62 = vld [vmem:[%s1 + $0x58] sm:$0xf]
  %v63 = vld [vmem:[%s1 + $0x5c] sm:$0xf]
  %v64 = vld [vmem:[%s1 + $0x60] sm:$0xf]
  %v65 = vld [vmem:[%s1 + $0x64] sm:$0xf]
  %v66 = vld [vmem:[%s1 + $0x68] sm:$0xf]
  %v67 = vld [vmem:[%s1 + $0x6c] sm:$0xf]
  %v68 = vld [vmem:[%s1 + $0x70] sm:$0xf]
  %v69 = vld [vmem:[%s1 + $0x74] sm:$0xf]
  %v70 = vld [vmem:[%s1 + $0x78] sm:$0xf]
  %v71 = vld [vmem:[%s1 + $0x7c] sm:$0xf]
  %v72 = vld [vmem:[%s1 + $0x80] sm:$0xf]
  %v73 = vld [vmem:[%s1 + $0x84] sm:$0xf]
  %v74 = vld [vmem:[%s1 + $0x88] sm:$0xf]
  %v75 = vld [vmem:[%s1 + $0x8c] sm:$0xf]
  %v76 = vld [vmem:[%s1 + $0x90] sm:$0xf]
  %v77 = vld [vmem:[%s1 + $0x94] sm:$0xf]
  %v78 = vld [vmem:[%s1 + $0x98] sm:$0xf]
  %v79 = vld [vmem:[%s1 + $0x9c] sm:$0xf]
  %v80 = vld [vmem:[%s1 + $0xa0] sm:$0xf]
  %v81 = vld [vmem:[%s1 + $0xa4] sm:$0xf]
  %v82 = vld [vmem:[%s1 + $0xa8] sm:$0xf]
  %v83 = vld [vmem:[%s1 + $0xac] sm:$0xf]
  %v84 = vld [vmem:[%s1 + $0xb0] sm:$0xf]
  %v85 = vld [vmem:[%s1 + $0xb4] sm:$0xf]
  %v86 = vld [vmem:[%s1 + $0xb8] sm:$0xf]
  %v87 = vld [vmem:[%s1 + $0xbc] sm:$0xf]
  %v88 = vld [vmem:[%s1 + $0xc0] sm:$0xf]
  %v89 = vld [vmem:[%s1 + $0xc4] sm:$0xf]
  %v90 = vld [vmem:[%s1 + $0xc8] sm:$0xf]
  %v91 = vld [vmem:[%s1 + $0xcc] sm:$0xf]
  %v92 = vld [vmem:[%s1 + $0xd0] sm:$0xf]
  %v93 = vld [vmem:[%s1 + $0xd4] sm:$0xf]
  %v94 = vld [vmem:[%s1 + $0xd8] sm:$0xf]
  %v95 = vld [vmem:[%s1 + $0xdc] sm:$0xf]
  %v96 = vld [vmem:[%s1 + $0xe0] sm:$0xf]
  %v97 = vld [vmem:[%s1 + $0xe4] sm:$0xf]
  %v98 = vld [vmem:[%s1 + $0xe8] sm:$0xf]
  %v99 = vld [vmem:[%s1 + $0xec] sm:$0xf]
  %v100 = vld [vmem:[%s1 + $0xf0] sm:$0xf]
  %v101 = vld [vmem:[%s1 + $0xf4] sm:$0xf]
  %v102 = vld [vmem:[%s1 + $0xf8] sm:$0xf]
  %v103 = vld [vmem:[%s1 + $0xfc] sm:$0xf]
  %v104 = vld [vmem:[%s2] sm:$0x1]
  %v106 = vlaneseq
  %v107 = vshrl.u32 %v106, 7
  %v108 = vsub.s32 0, %v107
  %v109 = vrot.slane %v104, %v108
  %v175 = vunpack.c.l.b16 %v40
  %v176 = vunpack.c.l.b16 %v41
  %v177 = vunpack.c.l.b16 %v42
  %v178 = vunpack.c.l.b16 %v43
  %v179 = vunpack.c.l.b16 %v44
  %v180 = vunpack.c.l.b16 %v45
  %v181 = vunpack.c.l.b16 %v46
  %v182 = vunpack.c.l.b16 %v47
  %v183 = vunpack.c.l.b16 %v48
  %v184 = vunpack.c.l.b16 %v49
  %v185 = vunpack.c.l.b16 %v50
  %v186 = vunpack.c.l.b16 %v51
  %v187 = vunpack.c.l.b16 %v52
  %v188 = vunpack.c.l.b16 %v53
  %v189 = vunpack.c.l.b16 %v54
  %v190 = vunpack.c.l.b16 %v55
  %v191 = vunpack.c.l.b16 %v56
  %v192 = vunpack.c.l.b16 %v57
  %v193 = vunpack.c.l.b16 %v58
  %v194 = vunpack.c.l.b16 %v59
  %v195 = vunpack.c.l.b16 %v60
  %v196 = vunpack.c.l.b16 %v61
  %v197 = vunpack.c.l.b16 %v62
  %v198 = vunpack.c.l.b16 %v63
  %v199 = vunpack.c.l.b16 %v64
  %v200 = vunpack.c.l.b16 %v65
  %v201 = vunpack.c.l.b16 %v66
  %v202 = vunpack.c.l.b16 %v67
  %v203 = vunpack.c.l.b16 %v68
  %v204 = vunpack.c.l.b16 %v69
  %v205 = vunpack.c.l.b16 %v70
  %v206 = vunpack.c.l.b16 %v71
  %v207 = vunpack.c.l.b16 %v72
  %v208 = vunpack.c.l.b16 %v73
  %v209 = vunpack.c.l.b16 %v74
  %v210 = vunpack.c.l.b16 %v75
  %v211 = vunpack.c.l.b16 %v76
  %v212 = vunpack.c.l.b16 %v77
  %v213 = vunpack.c.l.b16 %v78
  %v214 = vunpack.c.l.b16 %v79
  %v215 = vunpack.c.l.b16 %v80
  %v216 = vunpack.c.l.b16 %v81
  %v217 = vunpack.c.l.b16 %v82
  %v218 = vunpack.c.l.b16 %v83
  %v219 = vunpack.c.l.b16 %v84
  %v220 = vunpack.c.l.b16 %v85
  %v221 = vunpack.c.l.b16 %v86
  %v222 = vunpack.c.l.b16 %v87
  %v223 = vunpack.c.l.b16 %v88
  %v224 = vunpack.c.l.b16 %v89
  %v225 = vunpack.c.l.b16 %v90
  %v226 = vunpack.c.l.b16 %v91
  %v227 = vunpack.c.l.b16 %v92
  %v228 = vunpack.c.l.b16 %v93
  %v229 = vunpack.c.l.b16 %v94
  %v230 = vunpack.c.l.b16 %v95
  %v231 = vunpack.c.l.b16 %v96
  %v232 = vunpack.c.l.b16 %v97
  %v233 = vunpack.c.l.b16 %v98
  %v234 = vunpack.c.l.b16 %v99
  %v235 = vunpack.c.l.b16 %v100
  %v236 = vunpack.c.l.b16 %v101
  %v237 = vunpack.c.l.b16 %v102
  %v238 = vunpack.c.l.b16 %v103
  %v239 = vpack.c.b16 %v176, %v175
  %v240 = vpack.c.b16 %v178, %v177
  %v241 = vpack.c.b16 %v180, %v179
  %v242 = vpack.c.b16 %v182, %v181
  %v243 = vpack.c.b16 %v184, %v183
  %v244 = vpack.c.b16 %v186, %v185
  %v245 = vpack.c.b16 %v188, %v187
  %v246 = vpack.c.b16 %v190, %v189
  %v247 = vpack.c.b16 %v192, %v191
  %v248 = vpack.c.b16 %v194, %v193
  %v249 = vpack.c.b16 %v196, %v195
  %v250 = vpack.c.b16 %v198, %v197
  %v251 = vpack.c.b16 %v200, %v199
  %v252 = vpack.c.b16 %v202, %v201
  %v253 = vpack.c.b16 %v204, %v203
  %v254 = vpack.c.b16 %v206, %v205
  %v255 = vpack.c.b16 %v208, %v207
  %v256 = vpack.c.b16 %v210, %v209
  %v257 = vpack.c.b16 %v212, %v211
  %v258 = vpack.c.b16 %v214, %v213
  %v259 = vpack.c.b16 %v216, %v215
  %v260 = vpack.c.b16 %v218, %v217
  %v261 = vpack.c.b16 %v220, %v219
  %v262 = vpack.c.b16 %v222, %v221
  %v263 = vpack.c.b16 %v224, %v223
  %v264 = vpack.c.b16 %v226, %v225
  %v265 = vpack.c.b16 %v228, %v227
  %v266 = vpack.c.b16 %v230, %v229
  %v267 = vpack.c.b16 %v232, %v231
  %v268 = vpack.c.b16 %v234, %v233
  %v269 = vpack.c.b16 %v236, %v235
  %v270 = vpack.c.b16 %v238, %v237
  %303 = vmatprep.subr.bf16.mxu0 0
  %304 = vmatpush1.bf16.msra.mxu0 %v239
  %305 = vmatprep.subr.bf16.mxu0 0
  %306 = vmatpush1.bf16.msra.mxu0 %v240
  %307 = vmatprep.subr.bf16.mxu0 0
  %308 = vmatpush1.bf16.msra.mxu0 %v241
  %309 = vmatprep.subr.bf16.mxu0 0
  %310 = vmatpush1.bf16.msra.mxu0 %v242
  %311 = vmatprep.subr.bf16.mxu0 0
  %312 = vmatpush1.bf16.msra.mxu0 %v243
  %313 = vmatprep.subr.bf16.mxu0 0
  %314 = vmatpush1.bf16.msra.mxu0 %v244
  %315 = vmatprep.subr.bf16.mxu0 0
  %316 = vmatpush1.bf16.msra.mxu0 %v245
  %317 = vmatprep.subr.bf16.mxu0 0
  %318 = vmatpush1.bf16.msra.mxu0 %v246
  %319 = vmatprep.subr.bf16.mxu0 0
  %320 = vmatpush1.bf16.msra.mxu0 %v247
  %321 = vmatprep.subr.bf16.mxu0 0
  %322 = vmatpush1.bf16.msra.mxu0 %v248
  %323 = vmatprep.subr.bf16.mxu0 0
  %324 = vmatpush1.bf16.msra.mxu0 %v249
  %325 = vmatprep.subr.bf16.mxu0 0
  %326 = vmatpush1.bf16.msra.mxu0 %v250
  %327 = vmatprep.subr.bf16.mxu0 0
  %328 = vmatpush1.bf16.msra.mxu0 %v251
  %329 = vmatprep.subr.bf16.mxu0 0
  %330 = vmatpush1.bf16.msra.mxu0 %v252
  %331 = vmatprep.subr.bf16.mxu0 0
  %332 = vmatpush1.bf16.msra.mxu0 %v253
  %333 = vmatprep.subr.bf16.mxu0 0
  %334 = vmatpush1.bf16.msra.mxu0 %v254
  %335 = vmatprep.mubr.bf16.mxu0 %v37
  %336 = vmatmul.mubr.bf16.gmra.mrb[0].mxu0 %v36
  %v337 = vpop.f32.mrb[0].mxu0
  %v338 = vadd.f32 %v109, %v337
  %v339 = vpop.f32.mrb[0].mxu0
  %v340 = vpop.f32.mrb[0].mxu0
  %v341 = vpop.f32.mrb[0].mxu0
  %342 = vdwg.mxu0
  %343 = vmatprep.subr.bf16.mxu0 0
  %344 = vmatpush1.bf16.msra.mxu0 %v255
  %345 = vmatprep.subr.bf16.mxu0 0
  %346 = vmatpush1.bf16.msra.mxu0 %v256
  %347 = vmatprep.subr.bf16.mxu0 0
  %348 = vmatpush1.bf16.msra.mxu0 %v257
  %349 = vmatprep.subr.bf16.mxu0 0
  %350 = vmatpush1.bf16.msra.mxu0 %v258
  %351 = vmatprep.subr.bf16.mxu0 0
  %352 = vmatpush1.bf16.msra.mxu0 %v259
  %353 = vmatprep.subr.bf16.mxu0 0
  %354 = vmatpush1.bf16.msra.mxu0 %v260
  %355 = vmatprep.subr.bf16.mxu0 0
  %356 = vmatpush1.bf16.msra.mxu0 %v261
  %357 = vmatprep.subr.bf16.mxu0 0
  %358 = vmatpush1.bf16.msra.mxu0 %v262
  %359 = vmatprep.subr.bf16.mxu0 0
  %360 = vmatpush1.bf16.msra.mxu0 %v263
  %361 = vmatprep.subr.bf16.mxu0 0
  %362 = vmatpush1.bf16.msra.mxu0 %v264
  %363 = vmatprep.subr.bf16.mxu0 0
  %364 = vmatpush1.bf16.msra.mxu0 %v265
  %365 = vmatprep.subr.bf16.mxu0 0
  %366 = vmatpush1.bf16.msra.mxu0 %v266
  %367 = vmatprep.subr.bf16.mxu0 0
  %368 = vmatpush1.bf16.msra.mxu0 %v267
  %369 = vmatprep.subr.bf16.mxu0 0
  %370 = vmatpush1.bf16.msra.mxu0 %v268
  %371 = vmatprep.subr.bf16.mxu0 0
  %372 = vmatpush1.bf16.msra.mxu0 %v269
  %373 = vmatprep.subr.bf16.mxu0 0
  %374 = vmatpush1.bf16.msra.mxu0 %v270
  %375 = vmatprep.mubr.bf16.mxu0 %v39
  %376 = vmatmul.mubr.bf16.gmra.mrb[0].mxu0 %v38
  %v377 = vpop.f32.mrb[0].mxu0
  %v378 = vadd.f32 %v338, %v377
  %v379 = vpop.f32.mrb[0].mxu0
  %v380 = vpop.f32.mrb[0].mxu0
  %v381 = vpop.f32.mrb[0].mxu0
  %382 = vdwg.mxu0
  %vm383 = vcmask 523264
  %384 = vst.msk [vmem:[%s3] sm:$0xff] %vm383, %v378
  %p385 = scmp.eq.s32.totalorder 0, 0
  // Predicated region
  $region14: #{unet_forward.13} parent=0 // pred_check
    %p386 = pneg %p385
  $region15: #{unet_forward.13} parent=0 // pred_check_branch
    %388 = sbr.rel (%p386) target = $region17
  $region16: #{unet_forward.13} parent=0 // pred_region
    %vm389 = vcmask 516096
    %390 = vst.msk [vmem:[%s4] sm:$0x1] %vm389, 0.0
    %391 = vst.msk [vmem:[%s5] sm:$0x1] %vm389, 0.0
  $region17: #{unet_forward.13} parent=0 // pred_fallthru
    _
  %v392 = vld [vmem:[%s4] sm:$0x1]
  %v393 = vsel %vm383, %v378, 0.0
  %v394 = vrot.slane %v393, 4
  %v395 = vadd.f32 %v393, %v394
  %v396 = vrot.slane %v395, 2
  %v397 = vadd.f32 %v395, %v396
  %v398 = vrot.slane %v397, 1
  %v399 = vadd.f32 %v397, %v398
  %v400 = vadd.f32 %v392, %v399
  %vm401 = vcmask 516096
  %402 = vst.msk [vmem:[%s4] sm:$0x1] %vm401, %v400
  %v403 = vld [vmem:[%s5] sm:$0x1]
  %v404 = vmul.f32 %v378, %v378
  %v405 = vsel %vm383, %v404, 0.0
  %v406 = vrot.slane %v405, 4
  %v407 = vadd.f32 %v405, %v406
  %v408 = vrot.slane %v407, 2
  %v409 = vadd.f32 %v407, %v408
  %v410 = vrot.slane %v409, 1
  %v411 = vadd.f32 %v409, %v410
  %v412 = vadd.f32 %v403, %v411
  %413 = vst.msk [vmem:[%s5] sm:$0x1] %vm401, %v412
  // Predicated region
  $region18: #{unet_forward.13} parent=0 // pred_check
    _
  $region19: #{unet_forward.13} parent=0 // pred_check_branch
    %415 = sbr.rel (0) target = $region21
  $region20: #{unet_forward.13} parent=0 // pred_region
    _
  $region21: #{unet_forward.13} parent=0 // pred_fallthru
    _
  // Predicated region
  $region22: #{unet_forward.13} parent=0 // pred_check
    _
  $region23: #{unet_forward.13} parent=0 // pred_check_branch
    %417 = sbr.rel (0) target = $region25
  $region24: #{unet_forward.13} parent=0 // pred_region
    _
  $region25: #{unet_forward.13} parent=0 // pred_fallthru
    _
  // Predicated region
  $region26: #{unet_forward.13} parent=0 // pred_check
    _
  $region27: #{unet_forward.13} parent=0 // pred_check_branch
    %419 = sbr.rel (0) target = $region29
  $region28: #{unet_forward.13} parent=0 // pred_region
    _
  $region29: #{unet_forward.13} parent=0 // pred_fallthru
    _
  // Predicated region
  $region30: #{unet_forward.13} parent=0 // pred_check
    _
  $region31: #{unet_forward.13} parent=0 // pred_check_branch
    %421 = sbr.rel (0) target = $region33
  $region32: #{unet_forward.13} parent=0 // pred_region
    _
  $region33: #{unet_forward.13} parent=0 // pred_fallthru
    _
  // Predicated region
  $region34: #{unet_forward.13} parent=0 // pred_check
    _
  $region35: #{unet_forward.13} parent=0 // pred_check_branch
    %423 = sbr.rel (0) target = $region37
  $region36: #{unet_forward.13} parent=0 // pred_region
    _
  $region37: #{unet_forward.13} parent=0 // pred_fallthru
    _
  // Predicated region
  $region38: #{unet_forward.13} parent=0 // pred_check
    _
  $region39: #{unet_forward.13} parent=0 // pred_check_branch
    %425 = sbr.rel (0) target = $region41
  $region40: #{unet_forward.13} parent=0 // pred_region
    _
  $region41: #{unet_forward.13} parent=0 // pred_fallthru
    _

// kernel: unet_forward.14
$region0: #{unet_forward.14}
  #allocation0 [shape = 'u32[]', space=smem, size = 0x4, offset = 0x4, fixed_abs, tag = 'smem constant byte address 0x4 - core index']
  #allocation1 [shape = 'u32[144,128]{1,0:T(1,128)}', space=vmem, size = 0x12000, scoped, tag = 'internal scratch']
  %s0 = inlined_call_operand.vmem [shape: bf16[2,1024], index: 0, kind: input, shape index: {}]
  %s1 = inlined_call_operand.vmem [shape: bf16[1024,64], index: 1, kind: input, shape index: {}]
  %s2 = inlined_call_operand.vmem [shape: f32[1,64], index: 2, kind: input, shape index: {}]
  %s3 = inlined_call_operand.vmem [shape: f32[2,64], index: 3, kind: output, shape index: {}]
  %s4 = sld [smem:[#allocation0]]
  $region22: #{unet_forward.14} parent=0
    _
  %s6 = ssub.s32 1, %s4
  %s7 = scalar_select 0, %s6, %s4
  // Predicated region
  $region2: #{unet_forward.14} parent=0 // pred_check
    _
  $region3: #{unet_forward.14} parent=0 // pred_check_branch
    %9 = sbr.rel (0) target = $region5
  $region4: #{unet_forward.14} parent=0 // pred_region
    _
  $region5: #{unet_forward.14} parent=0 // pred_fallthru
    _
  // Predicated region
  $region6: #{unet_forward.14} parent=0 // pred_check
    _
  $region7: #{unet_forward.14} parent=0 // pred_check_branch
    %11 = sbr.rel (0) target = $region9
  $region8: #{unet_forward.14} parent=0 // pred_region
    _
  $region9: #{unet_forward.14} parent=0 // pred_fallthru
    _
  // Predicated region
  $region10: #{unet_forward.14} parent=0 // pred_check
    _
  $region11: #{unet_forward.14} parent=0 // pred_check_branch
    %13 = sbr.rel (0) target = $region13
  $region12: #{unet_forward.14} parent=0 // pred_region
    _
  $region13: #{unet_forward.14} parent=0 // pred_fallthru
    _
  %v15 = vld [vmem:[%s0] sm:$0xff]
  %v16 = vunpack.c.l.bf16 %v15
  %v17 = vunpack.c.h.bf16 %v15
  %vm18 = vcmp.gt.f32.partialorder %v16, 0.0
  %vm19 = vcmp.gt.f32.partialorder %v17, 0.0
  %v20 = vmul.f32 %v16, 0.2
  %v21 = vmul.f32 %v17, 0.2
  %v22 = vsel %vm18, %v16, %v20
  %v23 = vsel %vm19, %v17, %v21
  %v26 = vcombine.high %v22, %v22
  %v28 = vunpack.c.l.s4 1983009808
  %v29 = vunpack.c.0.s8 %v28
  %v30 = vlaneseq
  %v31 = vshrl.u32 %v30, 7
  %v32 = vsub.s32 %v29, %v31
  %v33 = vrot.slane %v22, %v32
  %v35 = vunpack.c.l.s4 1983009808
  %v36 = vunpack.c.0.s8 %v35
  %v37 = vlaneseq
  %v38 = vshrl.u32 %v37, 7
  %v39 = vsub.s32 %v36, %v38
  %v40 = vrot.slane %v26, %v39
  %v41 = vcombine.high %v33, %v33
  %v42 = vcombine.high %v40, %v40
  %v43 = vcombine.high %v23, %v23
  %v45 = vunpack.c.l.s4 1983009808
  %v46 = vunpack.c.0.s8 %v45
  %v47 = vlaneseq
  %v48 = vshrl.u32 %v47, 7
  %v49 = vsub.s32 %v46, %v48
  %v50 = vrot.slane %v23, %v49
  %v52 = vunpack.c.l.s4 1983009808
  %v53 = vunpack.c.0.s8 %v52
  %v54 = vlaneseq
  %v55 = vshrl.u32 %v54, 7
  %v56 = vsub.s32 %v53, %v55
  %v57 = vrot.slane %v43, %v56
  %v58 = vcombine.high %v50, %v50
  %v59 = vcombine.high %v57, %v57
  %v68 = vpack.c.bf16 %v33, %v33
  %v69 = vpack.c.bf16 %v41, %v41
  %v70 = vpack.c.bf16 %v40, %v40
  %v71 = vpack.c.bf16 %v42, %v42
  %v72 = vpack.c.bf16 %v50, %v50
  %v73 = vpack.c.bf16 %v58, %v58
  %v74 = vpack.c.bf16 %v57, %v57
  %v75 = vpack.c.bf16 %v59, %v59
  %v76 = vld [vmem:[%s1] sm:$0xf]
  %v77 = vld [vmem:[%s1 + $0x4] sm:$0xf]
  %v78 = vld [vmem:[%s1 + $0x8] sm:$0xf]
  %v79 = vld [vmem:[%s1 + $0xc] sm:$0xf]
  %v80 = vld [vmem:[%s1 + $0x10] sm:$0xf]
  %v81 = vld [vmem:[%s1 + $0x14] sm:$0xf]
  %v82 = vld [vmem:[%s1 + $0x18] sm:$0xf]
  %v83 = vld [vmem:[%s1 + $0x1c] sm:$0xf]
  %v84 = vld [vmem:[%s1 + $0x20] sm:$0xf]
  %v85 = vld [vmem:[%s1 + $0x24] sm:$0xf]
  %v86 = vld [vmem:[%s1 + $0x28] sm:$0xf]
  %v87 = vld [vmem:[%s1 + $0x2c] sm:$0xf]
  %v88 = vld [vmem:[%s1 + $0x30] sm:$0xf]
  %v89 = vld [vmem:[%s1 + $0x34] sm:$0xf]
  %v90 = vld [vmem:[%s1 + $0x38] sm:$0xf]
  %v91 = vld [vmem:[%s1 + $0x3c] sm:$0xf]
  %v92 = vld [vmem:[%s1 + $0x40] sm:$0xf]
  %v93 = vld [vmem:[%s1 + $0x44] sm:$0xf]
  %v94 = vld [vmem:[%s1 + $0x48] sm:$0xf]
  %v95 = vld [vmem:[%s1 + $0x4c] sm:$0xf]
  %v96 = vld [vmem:[%s1 + $0x50] sm:$0xf]
  %v97 = vld [vmem:[%s1 + $0x54] sm:$0xf]
  %v98 = vld [vmem:[%s1 + $0x58] sm:$0xf]
  %v99 = vld [vmem:[%s1 + $0x5c] sm:$0xf]
  %v100 = vld [vmem:[%s1 + $0x60] sm:$0xf]
  %v101 = vld [vmem:[%s1 + $0x64] sm:$0xf]
  %v102 = vld [vmem:[%s1 + $0x68] sm:$0xf]
  %v103 = vld [vmem:[%s1 + $0x6c] sm:$0xf]
  %v104 = vld [vmem:[%s1 + $0x70] sm:$0xf]
  %v105 = vld [vmem:[%s1 + $0x74] sm:$0xf]
  %v106 = vld [vmem:[%s1 + $0x78] sm:$0xf]
  %v107 = vld [vmem:[%s1 + $0x7c] sm:$0xf]
  %v108 = vld [vmem:[%s1 + $0x80] sm:$0xf]
  %v109 = vld [vmem:[%s1 + $0x84] sm:$0xf]
  %v110 = vld [vmem:[%s1 + $0x88] sm:$0xf]
  %v111 = vld [vmem:[%s1 + $0x8c] sm:$0xf]
  %v112 = vld [vmem:[%s1 + $0x90] sm:$0xf]
  %v113 = vld [vmem:[%s1 + $0x94] sm:$0xf]
  %v114 = vld [vmem:[%s1 + $0x98] sm:$0xf]
  %v115 = vld [vmem:[%s1 + $0x9c] sm:$0xf]
  %v116 = vld [vmem:[%s1 + $0xa0] sm:$0xf]
  %v117 = vld [vmem:[%s1 + $0xa4] sm:$0xf]
  %v118 = vld [vmem:[%s1 + $0xa8] sm:$0xf]
  %v119 = vld [vmem:[%s1 + $0xac] sm:$0xf]
  %v120 = vld [vmem:[%s1 + $0xb0] sm:$0xf]
  %v121 = vld [vmem:[%s1 + $0xb4] sm:$0xf]
  %v122 = vld [vmem:[%s1 + $0xb8] sm:$0xf]
  %v123 = vld [vmem:[%s1 + $0xbc] sm:$0xf]
  %v124 = vld [vmem:[%s1 + $0xc0] sm:$0xf]
  %v125 = vld [vmem:[%s1 + $0xc4] sm:$0xf]
  %v126 = vld [vmem:[%s1 + $0xc8] sm:$0xf]
  %v127 = vld [vmem:[%s1 + $0xcc] sm:$0xf]
  %v128 = vld [vmem:[%s1 + $0xd0] sm:$0xf]
  %v129 = vld [vmem:[%s1 + $0xd4] sm:$0xf]
  %v130 = vld [vmem:[%s1 + $0xd8] sm:$0xf]
  %v131 = vld [vmem:[%s1 + $0xdc] sm:$0xf]
  %v132 = vld [vmem:[%s1 + $0xe0] sm:$0xf]
  %v133 = vld [vmem:[%s1 + $0xe4] sm:$0xf]
  %v134 = vld [vmem:[%s1 + $0xe8] sm:$0xf]
  %v135 = vld [vmem:[%s1 + $0xec] sm:$0xf]
  %v136 = vld [vmem:[%s1 + $0xf0] sm:$0xf]
  %v137 = vld [vmem:[%s1 + $0xf4] sm:$0xf]
  %v138 = vld [vmem:[%s1 + $0xf8] sm:$0xf]
  %v139 = vld [vmem:[%s1 + $0xfc] sm:$0xf]
  %v140 = vld [vmem:[%s1 + $0x100] sm:$0xf]
  %v141 = vld [vmem:[%s1 + $0x104] sm:$0xf]
  %v142 = vld [vmem:[%s1 + $0x108] sm:$0xf]
  %v143 = vld [vmem:[%s1 + $0x10c] sm:$0xf]
  %v144 = vld [vmem:[%s1 + $0x110] sm:$0xf]
  %v145 = vld [vmem:[%s1 + $0x114] sm:$0xf]
  %v146 = vld [vmem:[%s1 + $0x118] sm:$0xf]
  %v147 = vld [vmem:[%s1 + $0x11c] sm:$0xf]
  %v148 = vld [vmem:[%s1 + $0x120] sm:$0xf]
  %v149 = vld [vmem:[%s1 + $0x124] sm:$0xf]
  %v150 = vld [vmem:[%s1 + $0x128] sm:$0xf]
  %v151 = vld [vmem:[%s1 + $0x12c] sm:$0xf]
  %v152 = vld [vmem:[%s1 + $0x130] sm:$0xf]
  %v153 = vld [vmem:[%s1 + $0x134] sm:$0xf]
  %v154 = vld [vmem:[%s1 + $0x138] sm:$0xf]
  %v155 = vld [vmem:[%s1 + $0x13c] sm:$0xf]
  %v156 = vld [vmem:[%s1 + $0x140] sm:$0xf]
  %v157 = vld [vmem:[%s1 + $0x144] sm:$0xf]
  %v158 = vld [vmem:[%s1 + $0x148] sm:$0xf]
  %v159 = vld [vmem:[%s1 + $0x14c] sm:$0xf]
  %v160 = vld [vmem:[%s1 + $0x150] sm:$0xf]
  %v161 = vld [vmem:[%s1 + $0x154] sm:$0xf]
  %v162 = vld [vmem:[%s1 + $0x158] sm:$0xf]
  %v163 = vld [vmem:[%s1 + $0x15c] sm:$0xf]
  %v164 = vld [vmem:[%s1 + $0x160] sm:$0xf]
  %v165 = vld [vmem:[%s1 + $0x164] sm:$0xf]
  %v166 = vld [vmem:[%s1 + $0x168] sm:$0xf]
  %v167 = vld [vmem:[%s1 + $0x16c] sm:$0xf]
  %v168 = vld [vmem:[%s1 + $0x170] sm:$0xf]
  %v169 = vld [vmem:[%s1 + $0x174] sm:$0xf]
  %v170 = vld [vmem:[%s1 + $0x178] sm:$0xf]
  %v171 = vld [vmem:[%s1 + $0x17c] sm:$0xf]
  %v172 = vld [vmem:[%s1 + $0x180] sm:$0xf]
  %v173 = vld [vmem:[%s1 + $0x184] sm:$0xf]
  %v174 = vld [vmem:[%s1 + $0x188] sm:$0xf]
  %v175 = vld [vmem:[%s1 + $0x18c] sm:$0xf]
  %v176 = vld [vmem:[%s1 + $0x190] sm:$0xf]
  %v177 = vld [vmem:[%s1 + $0x194] sm:$0xf]
  %v178 = vld [vmem:[%s1 + $0x198] sm:$0xf]
  %v179 = vld [vmem:[%s1 + $0x19c] sm:$0xf]
  %v180 = vld [vmem:[%s1 + $0x1a0] sm:$0xf]
  %v181 = vld [vmem:[%s1 + $0x1a4] sm:$0xf]
  %v182 = vld [vmem:[%s1 + $0x1a8] sm:$0xf]
  %v183 = vld [vmem:[%s1 + $0x1ac] sm:$0xf]
  %v184 = vld [vmem:[%s1 + $0x1b0] sm:$0xf]
  %v185 = vld [vmem:[%s1 + $0x1b4] sm:$0xf]
  %v186 = vld [vmem:[%s1 + $0x1b8] sm:$0xf]
  %v187 = vld [vmem:[%s1 + $0x1bc] sm:$0xf]
  %v188 = vld [vmem:[%s1 + $0x1c0] sm:$0xf]
  %v189 = vld [vmem:[%s1 + $0x1c4] sm:$0xf]
  %v190 = vld [vmem:[%s1 + $0x1c8] sm:$0xf]
  %v191 = vld [vmem:[%s1 + $0x1cc] sm:$0xf]
  %v192 = vld [vmem:[%s1 + $0x1d0] sm:$0xf]
  %v193 = vld [vmem:[%s1 + $0x1d4] sm:$0xf]
  %v194 = vld [vmem:[%s1 + $0x1d8] sm:$0xf]
  %v195 = vld [vmem:[%s1 + $0x1dc] sm:$0xf]
  %v196 = vld [vmem:[%s1 + $0x1e0] sm:$0xf]
  %v197 = vld [vmem:[%s1 + $0x1e4] sm:$0xf]
  %v198 = vld [vmem:[%s1 + $0x1e8] sm:$0xf]
  %v199 = vld [vmem:[%s1 + $0x1ec] sm:$0xf]
  %v200 = vld [vmem:[%s1 + $0x1f0] sm:$0xf]
  %v201 = vld [vmem:[%s1 + $0x1f4] sm:$0xf]
  %v202 = vld [vmem:[%s1 + $0x1f8] sm:$0xf]
  %v203 = vld [vmem:[%s1 + $0x1fc] sm:$0xf]
  %v204 = vld [vmem:[%s2] sm:$0x1]
  %v206 = vlaneseq
  %v207 = vshrl.u32 %v206, 7
  %v208 = vsub.s32 0, %v207
  %v209 = vrot.slane %v204, %v208
  %v339 = vunpack.c.l.b16 %v76
  %v340 = vunpack.c.l.b16 %v77
  %v341 = vunpack.c.l.b16 %v78
  %v342 = vunpack.c.l.b16 %v79
  %v343 = vunpack.c.l.b16 %v80
  %v344 = vunpack.c.l.b16 %v81
  %v345 = vunpack.c.l.b16 %v82
  %v346 = vunpack.c.l.b16 %v83
  %v347 = vunpack.c.l.b16 %v84
  %v348 = vunpack.c.l.b16 %v85
  %v349 = vunpack.c.l.b16 %v86
  %v350 = vunpack.c.l.b16 %v87
  %v351 = vunpack.c.l.b16 %v88
  %v352 = vunpack.c.l.b16 %v89
  %v353 = vunpack.c.l.b16 %v90
  %v354 = vunpack.c.l.b16 %v91
  %v355 = vunpack.c.l.b16 %v92
  %v356 = vunpack.c.l.b16 %v93
  %v357 = vunpack.c.l.b16 %v94
  %v358 = vunpack.c.l.b16 %v95
  %v359 = vunpack.c.l.b16 %v96
  %v360 = vunpack.c.l.b16 %v97
  %v361 = vunpack.c.l.b16 %v98
  %v362 = vunpack.c.l.b16 %v99
  %v363 = vunpack.c.l.b16 %v100
  %v364 = vunpack.c.l.b16 %v101
  %v365 = vunpack.c.l.b16 %v102
  %v366 = vunpack.c.l.b16 %v103
  %v367 = vunpack.c.l.b16 %v104
  %v368 = vunpack.c.l.b16 %v105
  %v369 = vunpack.c.l.b16 %v106
  %v370 = vunpack.c.l.b16 %v107
  %v371 = vunpack.c.l.b16 %v108
  %v372 = vunpack.c.l.b16 %v109
  %v373 = vunpack.c.l.b16 %v110
  %v374 = vunpack.c.l.b16 %v111
  %v375 = vunpack.c.l.b16 %v112
  %v376 = vunpack.c.l.b16 %v113
  %v377 = vunpack.c.l.b16 %v114
  %v378 = vunpack.c.l.b16 %v115
  %v379 = vunpack.c.l.b16 %v116
  %v380 = vunpack.c.l.b16 %v117
  %v381 = vunpack.c.l.b16 %v118
  %v382 = vunpack.c.l.b16 %v119
  %v383 = vunpack.c.l.b16 %v120
  %v384 = vunpack.c.l.b16 %v121
  %v385 = vunpack.c.l.b16 %v122
  %v386 = vunpack.c.l.b16 %v123
  %v387 = vunpack.c.l.b16 %v124
  %v388 = vunpack.c.l.b16 %v125
  %v389 = vunpack.c.l.b16 %v126
  %v390 = vunpack.c.l.b16 %v127
  %v391 = vunpack.c.l.b16 %v128
  %v392 = vunpack.c.l.b16 %v129
  %v393 = vunpack.c.l.b16 %v130
  %v394 = vunpack.c.l.b16 %v131
  %v395 = vunpack.c.l.b16 %v132
  %v396 = vunpack.c.l.b16 %v133
  %v397 = vunpack.c.l.b16 %v134
  %v398 = vunpack.c.l.b16 %v135
  %v399 = vunpack.c.l.b16 %v136
  %v400 = vunpack.c.l.b16 %v137
  %v401 = vunpack.c.l.b16 %v138
  %v402 = vunpack.c.l.b16 %v139
  %v403 = vunpack.c.l.b16 %v140
  %v404 = vunpack.c.l.b16 %v141
  %v405 = vunpack.c.l.b16 %v142
  %v406 = vunpack.c.l.b16 %v143
  %v407 = vunpack.c.l.b16 %v144
  %v408 = vunpack.c.l.b16 %v145
  %v409 = vunpack.c.l.b16 %v146
  %v410 = vunpack.c.l.b16 %v147
  %v411 = vunpack.c.l.b16 %v148
  %v412 = vunpack.c.l.b16 %v149
  %v413 = vunpack.c.l.b16 %v150
  %v414 = vunpack.c.l.b16 %v151
  %v415 = vunpack.c.l.b16 %v152
  %v416 = vunpack.c.l.b16 %v153
  %v417 = vunpack.c.l.b16 %v154
  %v418 = vunpack.c.l.b16 %v155
  %v419 = vunpack.c.l.b16 %v156
  %v420 = vunpack.c.l.b16 %v157
  %v421 = vunpack.c.l.b16 %v158
  %v422 = vunpack.c.l.b16 %v159
  %v423 = vunpack.c.l.b16 %v160
  %v424 = vunpack.c.l.b16 %v161
  %v425 = vunpack.c.l.b16 %v162
  %v426 = vunpack.c.l.b16 %v163
  %v427 = vunpack.c.l.b16 %v164
  %v428 = vunpack.c.l.b16 %v165
  %v429 = vunpack.c.l.b16 %v166
  %v430 = vunpack.c.l.b16 %v167
  %v431 = vunpack.c.l.b16 %v168
  %v432 = vunpack.c.l.b16 %v169
  %v433 = vunpack.c.l.b16 %v170
  %v434 = vunpack.c.l.b16 %v171
  %v435 = vunpack.c.l.b16 %v172
  %v436 = vunpack.c.l.b16 %v173
  %v437 = vunpack.c.l.b16 %v174
  %v438 = vunpack.c.l.b16 %v175
  %v439 = vunpack.c.l.b16 %v176
  %v440 = vunpack.c.l.b16 %v177
  %v441 = vunpack.c.l.b16 %v178
  %v442 = vunpack.c.l.b16 %v179
  %v443 = vunpack.c.l.b16 %v180
  %v444 = vunpack.c.l.b16 %v181
  %v445 = vunpack.c.l.b16 %v182
  %v446 = vunpack.c.l.b16 %v183
  %v447 = vunpack.c.l.b16 %v184
  %v448 = vunpack.c.l.b16 %v185
  %v449 = vunpack.c.l.b16 %v186
  %v450 = vunpack.c.l.b16 %v187
  %v451 = vunpack.c.l.b16 %v188
  %v452 = vunpack.c.l.b16 %v189
  %v453 = vunpack.c.l.b16 %v190
  %v454 = vunpack.c.l.b16 %v191
  %v455 = vunpack.c.l.b16 %v192
  %v456 = vunpack.c.l.b16 %v193
  %v457 = vunpack.c.l.b16 %v194
  %v458 = vunpack.c.l.b16 %v195
  %v459 = vunpack.c.l.b16 %v196
  %v460 = vunpack.c.l.b16 %v197
  %v461 = vunpack.c.l.b16 %v198
  %v462 = vunpack.c.l.b16 %v199
  %v463 = vunpack.c.l.b16 %v200
  %v464 = vunpack.c.l.b16 %v201
  %v465 = vunpack.c.l.b16 %v202
  %v466 = vunpack.c.l.b16 %v203
  %v467 = vpack.c.b16 %v340, %v339
  %v468 = vpack.c.b16 %v342, %v341
  %v469 = vpack.c.b16 %v344, %v343
  %v470 = vpack.c.b16 %v346, %v345
  %v471 = vpack.c.b16 %v348, %v347
  %v472 = vpack.c.b16 %v350, %v349
  %v473 = vpack.c.b16 %v352, %v351
  %v474 = vpack.c.b16 %v354, %v353
  %v475 = vpack.c.b16 %v356, %v355
  %v476 = vpack.c.b16 %v358, %v357
  %v477 = vpack.c.b16 %v360, %v359
  %v478 = vpack.c.b16 %v362, %v361
  %v479 = vpack.c.b16 %v364, %v363
  %v480 = vpack.c.b16 %v366, %v365
  %v481 = vpack.c.b16 %v368, %v367
  %v482 = vpack.c.b16 %v370, %v369
  %v483 = vpack.c.b16 %v372, %v371
  %v484 = vpack.c.b16 %v374, %v373
  %v485 = vpack.c.b16 %v376, %v375
  %v486 = vpack.c.b16 %v378, %v377
  %v487 = vpack.c.b16 %v380, %v379
  %v488 = vpack.c.b16 %v382, %v381
  %v489 = vpack.c.b16 %v384, %v383
  %v490 = vpack.c.b16 %v386, %v385
  %v491 = vpack.c.b16 %v388, %v387
  %v492 = vpack.c.b16 %v390, %v389
  %v493 = vpack.c.b16 %v392, %v391
  %v494 = vpack.c.b16 %v394, %v393
  %v495 = vpack.c.b16 %v396, %v395
  %v496 = vpack.c.b16 %v398, %v397
  %v497 = vpack.c.b16 %v400, %v399
  %v498 = vpack.c.b16 %v402, %v401
  %v499 = vpack.c.b16 %v404, %v403
  %v500 = vpack.c.b16 %v406, %v405
  %v501 = vpack.c.b16 %v408, %v407
  %v502 = vpack.c.b16 %v410, %v409
  %v503 = vpack.c.b16 %v412, %v411
  %v504 = vpack.c.b16 %v414, %v413
  %v505 = vpack.c.b16 %v416, %v415
  %v506 = vpack.c.b16 %v418, %v417
  %v507 = vpack.c.b16 %v420, %v419
  %v508 = vpack.c.b16 %v422, %v421
  %v509 = vpack.c.b16 %v424, %v423
  %v510 = vpack.c.b16 %v426, %v425
  %v511 = vpack.c.b16 %v428, %v427
  %v512 = vpack.c.b16 %v430, %v429
  %v513 = vpack.c.b16 %v432, %v431
  %v514 = vpack.c.b16 %v434, %v433
  %v515 = vpack.c.b16 %v436, %v435
  %v516 = vpack.c.b16 %v438, %v437
  %v517 = vpack.c.b16 %v440, %v439
  %v518 = vpack.c.b16 %v442, %v441
  %v519 = vpack.c.b16 %v444, %v443
  %v520 = vpack.c.b16 %v446, %v445
  %v521 = vpack.c.b16 %v448, %v447
  %v522 = vpack.c.b16 %v450, %v449
  %v523 = vpack.c.b16 %v452, %v451
  %v524 = vpack.c.b16 %v454, %v453
  %v525 = vpack.c.b16 %v456, %v455
  %v526 = vpack.c.b16 %v458, %v457
  %v527 = vpack.c.b16 %v460, %v459
  %v528 = vpack.c.b16 %v462, %v461
  %v529 = vpack.c.b16 %v464, %v463
  %v530 = vpack.c.b16 %v466, %v465
  %595 = vmatprep.subr.bf16.mxu0 0
  %596 = vmatpush1.bf16.msra.mxu0 %v467
  %597 = vmatprep.subr.bf16.mxu0 0
  %598 = vmatpush1.bf16.msra.mxu0 %v468
  %599 = vmatprep.subr.bf16.mxu0 0
  %600 = vmatpush1.bf16.msra.mxu0 %v469
  %601 = vmatprep.subr.bf16.mxu0 0
  %602 = vmatpush1.bf16.msra.mxu0 %v470
  %603 = vmatprep.subr.bf16.mxu0 0
  %604 = vmatpush1.bf16.msra.mxu0 %v471
  %605 = vmatprep.subr.bf16.mxu0 0
  %606 = vmatpush1.bf16.msra.mxu0 %v472
  %607 = vmatprep.subr.bf16.mxu0 0
  %608 = vmatpush1.bf16.msra.mxu0 %v473
  %609 = vmatprep.subr.bf16.mxu0 0
  %610 = vmatpush1.bf16.msra.mxu0 %v474
  %611 = vmatprep.subr.bf16.mxu0 0
  %612 = vmatpush1.bf16.msra.mxu0 %v475
  %613 = vmatprep.subr.bf16.mxu0 0
  %614 = vmatpush1.bf16.msra.mxu0 %v476
  %615 = vmatprep.subr.bf16.mxu0 0
  %616 = vmatpush1.bf16.msra.mxu0 %v477
  %617 = vmatprep.subr.bf16.mxu0 0
  %618 = vmatpush1.bf16.msra.mxu0 %v478
  %619 = vmatprep.subr.bf16.mxu0 0
  %620 = vmatpush1.bf16.msra.mxu0 %v479
  %621 = vmatprep.subr.bf16.mxu0 0
  %622 = vmatpush1.bf16.msra.mxu0 %v480
  %623 = vmatprep.subr.bf16.mxu0 0
  %624 = vmatpush1.bf16.msra.mxu0 %v481
  %625 = vmatprep.subr.bf16.mxu0 0
  %626 = vmatpush1.bf16.msra.mxu0 %v482
  %627 = vmatprep.mubr.bf16.mxu0 %v69
  %628 = vmatmul.mubr.bf16.gmra.mrb[0].mxu0 %v68
  %v629 = vpop.f32.mrb[0].mxu0
  %v630 = vadd.f32 %v209, %v629
  %v631 = vpop.f32.mrb[0].mxu0
  %v632 = vpop.f32.mrb[0].mxu0
  %v633 = vpop.f32.mrb[0].mxu0
  %634 = vdwg.mxu0
  %635 = vmatprep.subr.bf16.mxu0 0
  %636 = vmatpush1.bf16.msra.mxu0 %v483
  %637 = vmatprep.subr.bf16.mxu0 0
  %638 = vmatpush1.bf16.msra.mxu0 %v484
  %639 = vmatprep.subr.bf16.mxu0 0
  %640 = vmatpush1.bf16.msra.mxu0 %v485
  %641 = vmatprep.subr.bf16.mxu0 0
  %642 = vmatpush1.bf16.msra.mxu0 %v486
  %643 = vmatprep.subr.bf16.mxu0 0
  %644 = vmatpush1.bf16.msra.mxu0 %v487
  %645 = vmatprep.subr.bf16.mxu0 0
  %646 = vmatpush1.bf16.msra.mxu0 %v488
  %647 = vmatprep.subr.bf16.mxu0 0
  %648 = vmatpush1.bf16.msra.mxu0 %v489
  %649 = vmatprep.subr.bf16.mxu0 0
  %650 = vmatpush1.bf16.msra.mxu0 %v490
  %651 = vmatprep.subr.bf16.mxu0 0
  %652 = vmatpush1.bf16.msra.mxu0 %v491
  %653 = vmatprep.subr.bf16.mxu0 0
  %654 = vmatpush1.bf16.msra.mxu0 %v492
  %655 = vmatprep.subr.bf16.mxu0 0
  %656 = vmatpush1.bf16.msra.mxu0 %v493
  %657 = vmatprep.subr.bf16.mxu0 0
  %658 = vmatpush1.bf16.msra.mxu0 %v494
  %659 = vmatprep.subr.bf16.mxu0 0
  %660 = vmatpush1.bf16.msra.mxu0 %v495
  %661 = vmatprep.subr.bf16.mxu0 0
  %662 = vmatpush1.bf16.msra.mxu0 %v496
  %663 = vmatprep.subr.bf16.mxu0 0
  %664 = vmatpush1.bf16.msra.mxu0 %v497
  %665 = vmatprep.subr.bf16.mxu0 0
  %666 = vmatpush1.bf16.msra.mxu0 %v498
  %667 = vmatprep.mubr.bf16.mxu0 %v71
  %668 = vmatmul.mubr.bf16.gmra.mrb[0].mxu0 %v70
  %v669 = vpop.f32.mrb[0].mxu0
  %v670 = vadd.f32 %v630, %v669
  %v671 = vpop.f32.mrb[0].mxu0
  %v672 = vpop.f32.mrb[0].mxu0
  %v673 = vpop.f32.mrb[0].mxu0
  %674 = vdwg.mxu0
  %675 = vmatprep.subr.bf16.mxu0 0
  %676 = vmatpush1.bf16.msra.mxu0 %v499
  %677 = vmatprep.subr.bf16.mxu0 0
  %678 = vmatpush1.bf16.msra.mxu0 %v500
  %679 = vmatprep.subr.bf16.mxu0 0
  %680 = vmatpush1.bf16.msra.mxu0 %v501
  %681 = vmatprep.subr.bf16.mxu0 0
  %682 = vmatpush1.bf16.msra.mxu0 %v502
  %683 = vmatprep.subr.bf16.mxu0 0
  %684 = vmatpush1.bf16.msra.mxu0 %v503
  %685 = vmatprep.subr.bf16.mxu0 0
  %686 = vmatpush1.bf16.msra.mxu0 %v504
  %687 = vmatprep.subr.bf16.mxu0 0
  %688 = vmatpush1.bf16.msra.mxu0 %v505
  %689 = vmatprep.subr.bf16.mxu0 0
  %690 = vmatpush1.bf16.msra.mxu0 %v506
  %691 = vmatprep.subr.bf16.mxu0 0
  %692 = vmatpush1.bf16.msra.mxu0 %v507
  %693 = vmatprep.subr.bf16.mxu0 0
  %694 = vmatpush1.bf16.msra.mxu0 %v508
  %695 = vmatprep.subr.bf16.mxu0 0
  %696 = vmatpush1.bf16.msra.mxu0 %v509
  %697 = vmatprep.subr.bf16.mxu0 0
  %698 = vmatpush1.bf16.msra.mxu0 %v510
  %699 = vmatprep.subr.bf16.mxu0 0
  %700 = vmatpush1.bf16.msra.mxu0 %v511
  %701 = vmatprep.subr.bf16.mxu0 0
  %702 = vmatpush1.bf16.msra.mxu0 %v512
  %703 = vmatprep.subr.bf16.mxu0 0
  %704 = vmatpush1.bf16.msra.mxu0 %v513
  %705 = vmatprep.subr.bf16.mxu0 0
  %706 = vmatpush1.bf16.msra.mxu0 %v514
  %707 = vmatprep.mubr.bf16.mxu0 %v73
  %708 = vmatmul.mubr.bf16.gmra.mrb[0].mxu0 %v72
  %v709 = vpop.f32.mrb[0].mxu0
  %v710 = vadd.f32 %v670, %v709
  %v711 = vpop.f32.mrb[0].mxu0
  %v712 = vpop.f32.mrb[0].mxu0
  %v713 = vpop.f32.mrb[0].mxu0
  %714 = vdwg.mxu0
  %715 = vmatprep.subr.bf16.mxu0 0
  %716 = vmatpush1.bf16.msra.mxu0 %v515
  %717 = vmatprep.subr.bf16.mxu0 0
  %718 = vmatpush1.bf16.msra.mxu0 %v516
  %719 = vmatprep.subr.bf16.mxu0 0
  %720 = vmatpush1.bf16.msra.mxu0 %v517
  %721 = vmatprep.subr.bf16.mxu0 0
  %722 = vmatpush1.bf16.msra.mxu0 %v518
  %723 = vmatprep.subr.bf16.mxu0 0
  %724 = vmatpush1.bf16.msra.mxu0 %v519
  %725 = vmatprep.subr.bf16.mxu0 0
  %726 = vmatpush1.bf16.msra.mxu0 %v520
  %727 = vmatprep.subr.bf16.mxu0 0
  %728 = vmatpush1.bf16.msra.mxu0 %v521
  %729 = vmatprep.subr.bf16.mxu0 0
  %730 = vmatpush1.bf16.msra.mxu0 %v522
  %731 = vmatprep.subr.bf16.mxu0 0
  %732 = vmatpush1.bf16.msra.mxu0 %v523
  %733 = vmatprep.subr.bf16.mxu0 0
  %734 = vmatpush1.bf16.msra.mxu0 %v524
  %735 = vmatprep.subr.bf16.mxu0 0
  %736 = vmatpush1.bf16.msra.mxu0 %v525
  %737 = vmatprep.subr.bf16.mxu0 0
  %738 = vmatpush1.bf16.msra.mxu0 %v526
  %739 = vmatprep.subr.bf16.mxu0 0
  %740 = vmatpush1.bf16.msra.mxu0 %v527
  %741 = vmatprep.subr.bf16.mxu0 0
  %742 = vmatpush1.bf16.msra.mxu0 %v528
  %743 = vmatprep.subr.bf16.mxu0 0
  %744 = vmatpush1.bf16.msra.mxu0 %v529
  %745 = vmatprep.subr.bf16.mxu0 0
  %746 = vmatpush1.bf16.msra.mxu0 %v530
  %747 = vmatprep.mubr.bf16.mxu0 %v75
  %748 = vmatmul.mubr.bf16.gmra.mrb[0].mxu0 %v74
  %v749 = vpop.f32.mrb[0].mxu0
  %v750 = vadd.f32 %v710, %v749
  %v751 = vpop.f32.mrb[0].mxu0
  %v752 = vpop.f32.mrb[0].mxu0
  %v753 = vpop.f32.mrb[0].mxu0
  %754 = vdwg.mxu0
  %v755 = vmax.f32 %v750, 0.0
  %vm756 = vcmask 517120
  %757 = vst.msk [vmem:[%s3] sm:$0x3] %vm756, %v755
  // Predicated region
  $region14: #{unet_forward.14} parent=0 // pred_check
    _
  $region15: #{unet_forward.14} parent=0 // pred_check_branch
    %759 = sbr.rel (0) target = $region17
  $region16: #{unet_forward.14} parent=0 // pred_region
    _
  $region17: #{unet_forward.14} parent=0 // pred_fallthru
    _
  // Predicated region
  $region18: #{unet_forward.14} parent=0 // pred_check
    _
  $region19: #{unet_forward.14} parent=0 // pred_check_branch
    %761 = sbr.rel (0) target = $region21
  $region20: #{unet_forward.14} parent=0 // pred_region
    _
  $region21: #{unet_forward.14} parent=0 // pred_fallthru
    _

// kernel: unet_forward.15
$region0: #{unet_forward.15}
  #allocation0 [shape = 'u32[]', space=smem, size = 0x4, offset = 0x4, fixed_abs, tag = 'smem constant byte address 0x4 - core index']
  #allocation1 [shape = 'u32[144,128]{1,0:T(1,128)}', space=vmem, size = 0x12000, scoped, tag = 'internal scratch']
  %s0 = inlined_call_operand.vmem [shape: bf16[2,576], index: 0, kind: input, shape index: {}]
  %s1 = inlined_call_operand.vmem [shape: bf16[576,256], index: 1, kind: input, shape index: {}]
  %s2 = inlined_call_operand.vmem [shape: f32[1,256], index: 2, kind: input, shape index: {}]
  %s3 = inlined_call_operand.vmem [shape: f32[2,256], index: 3, kind: output, shape index: {0}]
  %s4 = inlined_call_operand.vmem [shape: f32[1,256], index: 4, kind: output, shape index: {1}]
  %s5 = inlined_call_operand.vmem [shape: f32[1,256], index: 5, kind: output, shape index: {2}]
  %6 = xla_tuple %s3, %s4, %s5
  %s7 = sld [smem:[#allocation0]]
  $region42: #{unet_forward.15} parent=0
    _
  %s9 = ssub.s32 1, %s7
  %s10 = scalar_select 0, %s9, %s7
  // Predicated region
  $region2: #{unet_forward.15} parent=0 // pred_check
    _
  $region3: #{unet_forward.15} parent=0 // pred_check_branch
    %12 = sbr.rel (0) target = $region5
  $region4: #{unet_forward.15} parent=0 // pred_region
    _
  $region5: #{unet_forward.15} parent=0 // pred_fallthru
    _
  // Predicated region
  $region6: #{unet_forward.15} parent=0 // pred_check
    _
  $region7: #{unet_forward.15} parent=0 // pred_check_branch
    %14 = sbr.rel (0) target = $region9
  $region8: #{unet_forward.15} parent=0 // pred_region
    _
  $region9: #{unet_forward.15} parent=0 // pred_fallthru
    _
  // Predicated region
  $region10: #{unet_forward.15} parent=0 // pred_check
    _
  $region11: #{unet_forward.15} parent=0 // pred_check_branch
    %16 = sbr.rel (0) target = $region13
  $region12: #{unet_forward.15} parent=0 // pred_region
    _
  $region13: #{unet_forward.15} parent=0 // pred_fallthru
    _
  %v18 = vld [vmem:[%s0] sm:$0x1f]
  %v19 = vld [vmem:[%s1] sm:$0xff]
  %v20 = vld [vmem:[%s1 + $0x8] sm:$0xff]
  %v21 = vld [vmem:[%s1 + $0x10] sm:$0xff]
  %v22 = vld [vmem:[%s1 + $0x18] sm:$0xff]
  %v23 = vld [vmem:[%s1 + $0x20] sm:$0xff]
  %v24 = vld [vmem:[%s1 + $0x28] sm:$0xff]
  %v25 = vld [vmem:[%s1 + $0x30] sm:$0xff]
  %v26 = vld [vmem:[%s1 + $0x38] sm:$0xff]
  %v27 = vld [vmem:[%s1 + $0x40] sm:$0xff]
  %v28 = vld [vmem:[%s1 + $0x48] sm:$0xff]
  %v29 = vld [vmem:[%s1 + $0x50] sm:$0xff]
  %v30 = vld [vmem:[%s1 + $0x58] sm:$0xff]
  %v31 = vld [vmem:[%s1 + $0x60] sm:$0xff]
  %v32 = vld [vmem:[%s1 + $0x68] sm:$0xff]
  %v33 = vld [vmem:[%s1 + $0x70] sm:$0xff]
  %v34 = vld [vmem:[%s1 + $0x78] sm:$0xff]
  %v35 = vld [vmem:[%s1 + $0x80] sm:$0xff]
  %v36 = vld [vmem:[%s1 + $0x88] sm:$0xff]
  %v37 = vld [vmem:[%s1 + $0x90] sm:$0xff]
  %v38 = vld [vmem:[%s1 + $0x98] sm:$0xff]
  %v39 = vld [vmem:[%s1 + $0xa0] sm:$0xff]
  %v40 = vld [vmem:[%s1 + $0xa8] sm:$0xff]
  %v41 = vld [vmem:[%s1 + $0xb0] sm:$0xff]
  %v42 = vld [vmem:[%s1 + $0xb8] sm:$0xff]
  %v43 = vld [vmem:[%s1 + $0xc0] sm:$0xff]
  %v44 = vld [vmem:[%s1 + $0xc8] sm:$0xff]
  %v45 = vld [vmem:[%s1 + $0xd0] sm:$0xff]
  %v46 = vld [vmem:[%s1 + $0xd8] sm:$0xff]
  %v47 = vld [vmem:[%s1 + $0xe0] sm:$0xff]
  %v48 = vld [vmem:[%s1 + $0xe8] sm:$0xff]
  %v49 = vld [vmem:[%s1 + $0xf0] sm:$0xff]
  %v50 = vld [vmem:[%s1 + $0xf8] sm:$0xff]
  %v51 = vld [vmem:[%s1 + $0x100] sm:$0xff]
  %v52 = vld [vmem:[%s1 + $0x108] sm:$0xff]
  %v53 = vld [vmem:[%s1 + $0x110] sm:$0xff]
  %v54 = vld [vmem:[%s1 + $0x118] sm:$0xff]
  %v55 = vld [vmem:[%s1 + $0x120] sm:$0xff]
  %v56 = vld [vmem:[%s1 + $0x128] sm:$0xff]
  %v57 = vld [vmem:[%s1 + $0x130] sm:$0xff]
  %v58 = vld [vmem:[%s1 + $0x138] sm:$0xff]
  %v59 = vld [vmem:[%s1 + $0x140] sm:$0xff]
  %v60 = vld [vmem:[%s1 + $0x148] sm:$0xff]
  %v61 = vld [vmem:[%s1 + $0x150] sm:$0xff]
  %v62 = vld [vmem:[%s1 + $0x158] sm:$0xff]
  %v63 = vld [vmem:[%s1 + $0x160] sm:$0xff]
  %v64 = vld [vmem:[%s1 + $0x168] sm:$0xff]
  %v65 = vld [vmem:[%s1 + $0x170] sm:$0xff]
  %v66 = vld [vmem:[%s1 + $0x178] sm:$0xff]
  %v67 = vld [vmem:[%s1 + $0x180] sm:$0xff]
  %v68 = vld [vmem:[%s1 + $0x188] sm:$0xff]
  %v69 = vld [vmem:[%s1 + $0x190] sm:$0xff]
  %v70 = vld [vmem:[%s1 + $0x198] sm:$0xff]
  %v71 = vld [vmem:[%s1 + $0x1a0] sm:$0xff]
  %v72 = vld [vmem:[%s1 + $0x1a8] sm:$0xff]
  %v73 = vld [vmem:[%s1 + $0x1b0] sm:$0xff]
  %v74 = vld [vmem:[%s1 + $0x1b8] sm:$0xff]
  %v75 = vld [vmem:[%s1 + $0x1c0] sm:$0xff]
  %v76 = vld [vmem:[%s1 + $0x1c8] sm:$0xff]
  %v77 = vld [vmem:[%s1 + $0x1d0] sm:$0xff]
  %v78 = vld [vmem:[%s1 + $0x1d8] sm:$0xff]
  %v79 = vld [vmem:[%s1 + $0x1e0] sm:$0xff]
  %v80 = vld [vmem:[%s1 + $0x1e8] sm:$0xff]
  %v81 = vld [vmem:[%s1 + $0x1f0] sm:$0xff]
  %v82 = vld [vmem:[%s1 + $0x1f8] sm:$0xff]
  %v83 = vld [vmem:[%s1 + $0x200] sm:$0xff]
  %v84 = vld [vmem:[%s1 + $0x208] sm:$0xff]
  %v85 = vld [vmem:[%s1 + $0x210] sm:$0xff]
  %v86 = vld [vmem:[%s1 + $0x218] sm:$0xff]
  %v87 = vld [vmem:[%s1 + $0x220] sm:$0xff]
  %v88 = vld [vmem:[%s1 + $0x228] sm:$0xff]
  %v89 = vld [vmem:[%s1 + $0x230] sm:$0xff]
  %v90 = vld [vmem:[%s1 + $0x238] sm:$0xff]
  %v91 = vld [vmem:[%s2] sm:$0x3]
  %v93 = vlaneseq
  %v94 = vshrl.u32 %v93, 7
  %v95 = vsub.s32 0, %v94
  %v96 = vrot.slane %v91, %v95
  %v97 = vlaneseq
  %v98 = vshrl.u32 %v97, 7
  %v99 = vsub.s32 1, %v98
  %v100 = vrot.slane %v91, %v99
  %v104 = vcombine.high %v18, %v18
  %v106 = vunpack.c.l.s4 1966171168
  %v107 = vunpack.c.0.s8 %v106
  %v108 = vlaneseq
  %v109 = vshrl.u32 %v108, 7
  %v110 = vsub.s32 %v107, %v109
  %v111 = vrot.slane %v18, %v110
  %v113 = vunpack.c.l.s4 1966171168
  %v114 = vunpack.c.0.s8 %v113
  %v115 = vlaneseq
  %v116 = vshrl.u32 %v115, 7
  %v117 = vsub.s32 %v114, %v116
  %v118 = vrot.slane %v104, %v117
  %v119 = vcombine.high %v111, %v111
  %v121 = vunpack.c.l.s4 1966171168
  %v122 = vunpack.c.0.s8 %v121
  %v123 = vlaneseq
  %v124 = vshrl.u32 %v123, 7
  %v125 = vsub.s32 %v122, %v124
  %v126 = vrot.slane %v111, %v125
  %v128 = vunpack.c.l.s4 1966171168
  %v129 = vunpack.c.0.s8 %v128
  %v130 = vlaneseq
  %v131 = vshrl.u32 %v130, 7
  %v132 = vsub.s32 %v129, %v131
  %v133 = vrot.slane %v118, %v132
  %v135 = vunpack.c.l.s4 1966171168
  %v136 = vunpack.c.0.s8 %v135
  %v137 = vlaneseq
  %v138 = vshrl.u32 %v137, 7
  %v139 = vsub.s32 %v136, %v138
  %v140 = vrot.slane %v119, %v139
  %v141 = vcombine.high %v126, %v126
  %v142 = vcombine.high %v140, %v140
  %v219 = vunpack.c.l.b16 %v19
  %v220 = vunpack.c.h.b16 %v19
  %v221 = vunpack.c.l.b16 %v20
  %v222 = vunpack.c.h.b16 %v20
  %v223 = vunpack.c.l.b16 %v21
  %v224 = vunpack.c.h.b16 %v21
  %v225 = vunpack.c.l.b16 %v22
  %v226 = vunpack.c.h.b16 %v22
  %v227 = vunpack.c.l.b16 %v23
  %v228 = vunpack.c.h.b16 %v23
  %v229 = vunpack.c.l.b16 %v24
  %v230 = vunpack.c.h.b16 %v24
  %v231 = vunpack.c.l.b16 %v25
  %v232 = vunpack.c.h.b16 %v25
  %v233 = vunpack.c.l.b16 %v26
  %v234 = vunpack.c.h.b16 %v26
  %v235 = vunpack.c.l.b16 %v27
  %v236 = vunpack.c.h.b16 %v27
  %v237 = vunpack.c.l.b16 %v28
  %v238 = vunpack.c.h.b16 %v28
  %v239 = vunpack.c.l.b16 %v29
  %v240 = vunpack.c.h.b16 %v29
  %v241 = vunpack.c.l.b16 %v30
  %v242 = vunpack.c.h.b16 %v30
  %v243 = vunpack.c.l.b16 %v31
  %v244 = vunpack.c.h.b16 %v31
  %v245 = vunpack.c.l.b16 %v32
  %v246 = vunpack.c.h.b16 %v32
  %v247 = vunpack.c.l.b16 %v33
  %v248 = vunpack.c.h.b16 %v33
  %v249 = vunpack.c.l.b16 %v34
  %v250 = vunpack.c.h.b16 %v34
  %v251 = vunpack.c.l.b16 %v35
  %v252 = vunpack.c.h.b16 %v35
  %v253 = vunpack.c.l.b16 %v36
  %v254 = vunpack.c.h.b16 %v36
  %v255 = vunpack.c.l.b16 %v37
  %v256 = vunpack.c.h.b16 %v37
  %v257 = vunpack.c.l.b16 %v38
  %v258 = vunpack.c.h.b16 %v38
  %v259 = vunpack.c.l.b16 %v39
  %v260 = vunpack.c.h.b16 %v39
  %v261 = vunpack.c.l.b16 %v40
  %v262 = vunpack.c.h.b16 %v40
  %v263 = vunpack.c.l.b16 %v41
  %v264 = vunpack.c.h.b16 %v41
  %v265 = vunpack.c.l.b16 %v42
  %v266 = vunpack.c.h.b16 %v42
  %v267 = vunpack.c.l.b16 %v43
  %v268 = vunpack.c.h.b16 %v43
  %v269 = vunpack.c.l.b16 %v44
  %v270 = vunpack.c.h.b16 %v44
  %v271 = vunpack.c.l.b16 %v45
  %v272 = vunpack.c.h.b16 %v45
  %v273 = vunpack.c.l.b16 %v46
  %v274 = vunpack.c.h.b16 %v46
  %v275 = vunpack.c.l.b16 %v47
  %v276 = vunpack.c.h.b16 %v47
  %v277 = vunpack.c.l.b16 %v48
  %v278 = vunpack.c.h.b16 %v48
  %v279 = vunpack.c.l.b16 %v49
  %v280 = vunpack.c.h.b16 %v49
  %v281 = vunpack.c.l.b16 %v50
  %v282 = vunpack.c.h.b16 %v50
  %v283 = vunpack.c.l.b16 %v51
  %v284 = vunpack.c.h.b16 %v51
  %v285 = vunpack.c.l.b16 %v52
  %v286 = vunpack.c.h.b16 %v52
  %v287 = vunpack.c.l.b16 %v53
  %v288 = vunpack.c.h.b16 %v53
  %v289 = vunpack.c.l.b16 %v54
  %v290 = vunpack.c.h.b16 %v54
  %v291 = vunpack.c.l.b16 %v55
  %v292 = vunpack.c.h.b16 %v55
  %v293 = vunpack.c.l.b16 %v56
  %v294 = vunpack.c.h.b16 %v56
  %v295 = vunpack.c.l.b16 %v57
  %v296 = vunpack.c.h.b16 %v57
  %v297 = vunpack.c.l.b16 %v58
  %v298 = vunpack.c.h.b16 %v58
  %v299 = vunpack.c.l.b16 %v59
  %v300 = vunpack.c.h.b16 %v59
  %v301 = vunpack.c.l.b16 %v60
  %v302 = vunpack.c.h.b16 %v60
  %v303 = vunpack.c.l.b16 %v61
  %v304 = vunpack.c.h.b16 %v61
  %v305 = vunpack.c.l.b16 %v62
  %v306 = vunpack.c.h.b16 %v62
  %v307 = vunpack.c.l.b16 %v63
  %v308 = vunpack.c.h.b16 %v63
  %v309 = vunpack.c.l.b16 %v64
  %v310 = vunpack.c.h.b16 %v64
  %v311 = vunpack.c.l.b16 %v65
  %v312 = vunpack.c.h.b16 %v65
  %v313 = vunpack.c.l.b16 %v66
  %v314 = vunpack.c.h.b16 %v66
  %v315 = vunpack.c.l.b16 %v67
  %v316 = vunpack.c.h.b16 %v67
  %v317 = vunpack.c.l.b16 %v68
  %v318 = vunpack.c.h.b16 %v68
  %v319 = vunpack.c.l.b16 %v69
  %v320 = vunpack.c.h.b16 %v69
  %v321 = vunpack.c.l.b16 %v70
  %v322 = vunpack.c.h.b16 %v70
  %v323 = vunpack.c.l.b16 %v71
  %v324 = vunpack.c.h.b16 %v71
  %v325 = vunpack.c.l.b16 %v72
  %v326 = vunpack.c.h.b16 %v72
  %v327 = vunpack.c.l.b16 %v73
  %v328 = vunpack.c.h.b16 %v73
  %v329 = vunpack.c.l.b16 %v74
  %v330 = vunpack.c.h.b16 %v74
  %v331 = vunpack.c.l.b16 %v75
  %v332 = vunpack.c.h.b16 %v75
  %v333 = vunpack.c.l.b16 %v76
  %v334 = vunpack.c.h.b16 %v76
  %v335 = vunpack.c.l.b16 %v77
  %v336 = vunpack.c.h.b16 %v77
  %v337 = vunpack.c.l.b16 %v78
  %v338 = vunpack.c.h.b16 %v78
  %v339 = vunpack.c.l.b16 %v79
  %v340 = vunpack.c.h.b16 %v79
  %v341 = vunpack.c.l.b16 %v80
  %v342 = vunpack.c.h.b16 %v80
  %v343 = vunpack.c.l.b16 %v81
  %v344 = vunpack.c.h.b16 %v81
  %v345 = vunpack.c.l.b16 %v82
  %v346 = vunpack.c.h.b16 %v82
  %v347 = vunpack.c.l.b16 %v83
  %v348 = vunpack.c.h.b16 %v83
  %v349 = vunpack.c.l.b16 %v84
  %v350 = vunpack.c.h.b16 %v84
  %v351 = vunpack.c.l.b16 %v85
  %v352 = vunpack.c.h.b16 %v85
  %v353 = vunpack.c.l.b16 %v86
  %v354 = vunpack.c.h.b16 %v86
  %v355 = vunpack.c.l.b16 %v87
  %v356 = vunpack.c.h.b16 %v87
  %v357 = vunpack.c.l.b16 %v88
  %v358 = vunpack.c.h.b16 %v88
  %v359 = vunpack.c.l.b16 %v89
  %v360 = vunpack.c.h.b16 %v89
  %v361 = vunpack.c.l.b16 %v90
  %v362 = vunpack.c.h.b16 %v90
  %v363 = vpack.c.b16 %v221, %v219
  %v364 = vpack.c.b16 %v222, %v220
  %v365 = vpack.c.b16 %v225, %v223
  %v366 = vpack.c.b16 %v226, %v224
  %v367 = vpack.c.b16 %v229, %v227
  %v368 = vpack.c.b16 %v230, %v228
  %v369 = vpack.c.b16 %v233, %v231
  %v370 = vpack.c.b16 %v234, %v232
  %v371 = vpack.c.b16 %v237, %v235
  %v372 = vpack.c.b16 %v238, %v236
  %v373 = vpack.c.b16 %v241, %v239
  %v374 = vpack.c.b16 %v242, %v240
  %v375 = vpack.c.b16 %v245, %v243
  %v376 = vpack.c.b16 %v246, %v244
  %v377 = vpack.c.b16 %v249, %v247
  %v378 = vpack.c.b16 %v250, %v248
  %v379 = vpack.c.b16 %v253, %v251
  %v380 = vpack.c.b16 %v254, %v252
  %v381 = vpack.c.b16 %v257, %v255
  %v382 = vpack.c.b16 %v258, %v256
  %v383 = vpack.c.b16 %v261, %v259
  %v384 = vpack.c.b16 %v262, %v260
  %v385 = vpack.c.b16 %v265, %v263
  %v386 = vpack.c.b16 %v266, %v264
  %v387 = vpack.c.b16 %v269, %v267
  %v388 = vpack.c.b16 %v270, %v268
  %v389 = vpack.c.b16 %v273, %v271
  %v390 = vpack.c.b16 %v274, %v272
  %v391 = vpack.c.b16 %v277, %v275
  %v392 = vpack.c.b16 %v278, %v276
  %v393 = vpack.c.b16 %v281, %v279
  %v394 = vpack.c.b16 %v282, %v280
  %v395 = vpack.c.b16 %v285, %v283
  %v396 = vpack.c.b16 %v286, %v284
  %v397 = vpack.c.b16 %v289, %v287
  %v398 = vpack.c.b16 %v290, %v288
  %v399 = vpack.c.b16 %v293, %v291
  %v400 = vpack.c.b16 %v294, %v292
  %v401 = vpack.c.b16 %v297, %v295
  %v402 = vpack.c.b16 %v298, %v296
  %v403 = vpack.c.b16 %v301, %v299
  %v404 = vpack.c.b16 %v302, %v300
  %v405 = vpack.c.b16 %v305, %v303
  %v406 = vpack.c.b16 %v306, %v304
  %v407 = vpack.c.b16 %v309, %v307
  %v408 = vpack.c.b16 %v310, %v308
  %v409 = vpack.c.b16 %v313, %v311
  %v410 = vpack.c.b16 %v314, %v312
  %v411 = vpack.c.b16 %v317, %v315
  %v412 = vpack.c.b16 %v318, %v316
  %v413 = vpack.c.b16 %v321, %v319
  %v414 = vpack.c.b16 %v322, %v320
  %v415 = vpack.c.b16 %v325, %v323
  %v416 = vpack.c.b16 %v326, %v324
  %v417 = vpack.c.b16 %v329, %v327
  %v418 = vpack.c.b16 %v330, %v328
  %v419 = vpack.c.b16 %v333, %v331
  %v420 = vpack.c.b16 %v334, %v332
  %v421 = vpack.c.b16 %v337, %v335
  %v422 = vpack.c.b16 %v338, %v336
  %v423 = vpack.c.b16 %v341, %v339
  %v424 = vpack.c.b16 %v342, %v340
  %v425 = vpack.c.b16 %v345, %v343
  %v426 = vpack.c.b16 %v346, %v344
  %v427 = vpack.c.b16 %v349, %v347
  %v428 = vpack.c.b16 %v350, %v348
  %v429 = vpack.c.b16 %v353, %v351
  %v430 = vpack.c.b16 %v354, %v352
  %v431 = vpack.c.b16 %v357, %v355
  %v432 = vpack.c.b16 %v358, %v356
  %v433 = vpack.c.b16 %v361, %v359
  %v434 = vpack.c.b16 %v362, %v360
  %vm507 = vcmask 523264
  %v509 = vsel %vm507, %v133, 0
  %511 = vmatprep.subr.bf16.mxu0 %v364
  %512 = vmatpush1.bf16.msra.mxu0 %v363
  %513 = vmatprep.subr.bf16.mxu0 %v366
  %514 = vmatpush1.bf16.msra.mxu0 %v365
  %515 = vmatprep.subr.bf16.mxu0 %v368
  %516 = vmatpush1.bf16.msra.mxu0 %v367
  %517 = vmatprep.subr.bf16.mxu0 %v370
  %518 = vmatpush1.bf16.msra.mxu0 %v369
  %519 = vmatprep.subr.bf16.mxu0 %v372
  %520 = vmatpush1.bf16.msra.mxu0 %v371
  %521 = vmatprep.subr.bf16.mxu0 %v374
  %522 = vmatpush1.bf16.msra.mxu0 %v373
  %523 = vmatprep.subr.bf16.mxu0 %v376
  %524 = vmatpush1.bf16.msra.mxu0 %v375
  %525 = vmatprep.subr.bf16.mxu0 %v378
  %526 = vmatpush1.bf16.msra.mxu0 %v377
  %527 = vmatprep.subr.bf16.mxu0 %v380
  %528 = vmatpush1.bf16.msra.mxu0 %v379
  %529 = vmatprep.subr.bf16.mxu0 %v382
  %530 = vmatpush1.bf16.msra.mxu0 %v381
  %531 = vmatprep.subr.bf16.mxu0 %v384
  %532 = vmatpush1.bf16.msra.mxu0 %v383
  %533 = vmatprep.subr.bf16.mxu0 %v386
  %534 = vmatpush1.bf16.msra.mxu0 %v385
  %535 = vmatprep.subr.bf16.mxu0 %v388
  %536 = vmatpush1.bf16.msra.mxu0 %v387
  %537 = vmatprep.subr.bf16.mxu0 %v390
  %538 = vmatpush1.bf16.msra.mxu0 %v389
  %539 = vmatprep.subr.bf16.mxu0 %v392
  %540 = vmatpush1.bf16.msra.mxu0 %v391
  %541 = vmatprep.subr.bf16.mxu0 %v394
  %542 = vmatpush1.bf16.msra.mxu0 %v393
  %543 = vmatprep.mubr.bf16.mxu0 %v140
  %544 = vmatmul.mubr.bf16.gmra.mrb[0].mxu0 %v126
  %v545 = vpop.f32.mrb[0].mxu0
  %v546 = vadd.f32 %v96, %v545
  %v547 = vpop.f32.mrb[0].mxu0
  %v548 = vadd.f32 %v100, %v547
  %v549 = vpop.f32.mrb[0].mxu0
  %v550 = vpop.f32.mrb[0].mxu0
  %551 = vdwg.mxu0
  %552 = vmatprep.subr.bf16.mxu0 %v396
  %553 = vmatpush1.bf16.msra.mxu0 %v395
  %554 = vmatprep.subr.bf16.mxu0 %v398
  %555 = vmatpush1.bf16.msra.mxu0 %v397
  %556 = vmatprep.subr.bf16.mxu0 %v400
  %557 = vmatpush1.bf16.msra.mxu0 %v399
  %558 = vmatprep.subr.bf16.mxu0 %v402
  %559 = vmatpush1.bf16.msra.mxu0 %v401
  %560 = vmatprep.subr.bf16.mxu0 %v404
  %561 = vmatpush1.bf16.msra.mxu0 %v403
  %562 = vmatprep.subr.bf16.mxu0 %v406
  %563 = vmatpush1.bf16.msra.mxu0 %v405
  %564 = vmatprep.subr.bf16.mxu0 %v408
  %565 = vmatpush1.bf16.msra.mxu0 %v407
  %566 = vmatprep.subr.bf16.mxu0 %v410
  %567 = vmatpush1.bf16.msra.mxu0 %v409
  %568 = vmatprep.subr.bf16.mxu0 %v412
  %569 = vmatpush1.bf16.msra.mxu0 %v411
  %570 = vmatprep.subr.bf16.mxu0 %v414
  %571 = vmatpush1.bf16.msra.mxu0 %v413
  %572 = vmatprep.subr.bf16.mxu0 %v416
  %573 = vmatpush1.bf16.msra.mxu0 %v415
  %574 = vmatprep.subr.bf16.mxu0 %v418
  %575 = vmatpush1.bf16.msra.mxu0 %v417
  %576 = vmatprep.subr.bf16.mxu0 %v420
  %577 = vmatpush1.bf16.msra.mxu0 %v419
  %578 = vmatprep.subr.bf16.mxu0 %v422
  %579 = vmatpush1.bf16.msra.mxu0 %v421
  %580 = vmatprep.subr.bf16.mxu0 %v424
  %581 = vmatpush1.bf16.msra.mxu0 %v423
  %582 = vmatprep.subr.bf16.mxu0 %v426
  %583 = vmatpush1.bf16.msra.mxu0 %v425
  %584 = vmatprep.mubr.bf16.mxu0 %v142
  %585 = vmatmul.mubr.bf16.gmra.mrb[0].mxu0 %v141
  %v586 = vpop.f32.mrb[0].mxu0
  %v587 = vadd.f32 %v546, %v586
  %v588 = vpop.f32.mrb[0].mxu0
  %v589 = vadd.f32 %v548, %v588
  %v590 = vpop.f32.mrb[0].mxu0
  %v591 = vpop.f32.mrb[0].mxu0
  %592 = vdwg.mxu0
  %593 = vmatprep.subr.bf16.mxu0 %v428
  %594 = vmatpush1.bf16.msra.mxu0 %v427
  %595 = vmatprep.subr.bf16.mxu0 %v430
  %596 = vmatpush1.bf16.msra.mxu0 %v429
  %597 = vmatprep.subr.bf16.mxu0 %v432
  %598 = vmatpush1.bf16.msra.mxu0 %v431
  %599 = vmatprep.subr.bf16.mxu0 %v434
  %600 = vmatpush1.bf16.msra.mxu0 %v433
  %601 = vmatprep.subr.bf16.mxu0 0
  %602 = vmatpush1.bf16.msra.mxu0 0
  %603 = vmatprep.subr.bf16.mxu0 0
  %604 = vmatpush1.bf16.msra.mxu0 0
  %605 = vmatprep.subr.bf16.mxu0 0
  %606 = vmatpush1.bf16.msra.mxu0 0
  %607 = vmatprep.subr.bf16.mxu0 0
  %608 = vmatpush1.bf16.msra.mxu0 0
  %609 = vmatprep.subr.bf16.mxu0 0
  %610 = vmatpush1.bf16.msra.mxu0 0
  %611 = vmatprep.subr.bf16.mxu0 0
  %612 = vmatpush1.bf16.msra.mxu0 0
  %613 = vmatprep.subr.bf16.mxu0 0
  %614 = vmatpush1.bf16.msra.mxu0 0
  %615 = vmatprep.subr.bf16.mxu0 0
  %616 = vmatpush1.bf16.msra.mxu0 0
  %617 = vmatprep.subr.bf16.mxu0 0
  %618 = vmatpush1.bf16.msra.mxu0 0
  %619 = vmatprep.subr.bf16.mxu0 0
  %620 = vmatpush1.bf16.msra.mxu0 0
  %621 = vmatprep.subr.bf16.mxu0 0
  %622 = vmatpush1.bf16.msra.mxu0 0
  %623 = vmatprep.subr.bf16.mxu0 0
  %624 = vmatpush1.bf16.msra.mxu0 0
  %625 = vmatprep.mubr.bf16.mxu0 0
  %626 = vmatmul.mubr.bf16.gmra.mrb[0].mxu0 %v509
  %v627 = vpop.f32.mrb[0].mxu0
  %v628 = vadd.f32 %v587, %v627
  %v629 = vpop.f32.mrb[0].mxu0
  %v630 = vadd.f32 %v589, %v629
  %v631 = vpop.f32.mrb[0].mxu0
  %v632 = vpop.f32.mrb[0].mxu0
  %633 = vdwg.mxu0
  %v636 = vcombine.low %v628, %v630
  %v638 = vunpack.c.l.s4 1983009808
  %v639 = vunpack.c.0.s8 %v638
  %v640 = vlaneseq
  %v641 = vshrl.u32 %v640, 7
  %v642 = vsub.s32 %v639, %v641
  %v643 = vrot.slane %v636, %v642
  %645 = vst [vmem:[%s3] sm:$0xf] %v643
  %p646 = scmp.eq.s32.totalorder 0, 0
  // Predicated region
  $region14: #{unet_forward.15} parent=0 // pred_check
    %p647 = pneg %p646
  $region15: #{unet_forward.15} parent=0 // pred_check_branch
    %649 = sbr.rel (%p647) target = $region17
  $region16: #{unet_forward.15} parent=0 // pred_region
    %v650 = vlaneseq
    %vm651 = vcmp.ge.s32.totalorder %v650, 0
    %vm652 = vcmp.lt.s32.totalorder %v650, 256
    %vm653 = vmand %vm651, %vm652
    %654 = vst.msk [vmem:[%s4] sm:$0x3] %vm653, 0.0
    %655 = vst.msk [vmem:[%s5] sm:$0x3] %vm653, 0.0
  $region17: #{unet_forward.15} parent=0 // pred_fallthru
    _
  %v656 = vld [vmem:[%s4] sm:$0x3]
  %vm657 = vcmask 1041408
  %v658 = vsel %vm657, %v628, 0.0
  %v659 = vrot.slane %v658, 4
  %v660 = vadd.f32 %v658, %v659
  %v661 = vrot.slane %v660, 2
  %v662 = vadd.f32 %v660, %v661
  %v663 = vrot.slane %v662, 1
  %v664 = vadd.f32 %v662, %v663
  %v665 = vsel %vm657, %v630, 0.0
  %v666 = vrot.slane %v665, 4
  %v667 = vadd.f32 %v665, %v666
  %v668 = vrot.slane %v667, 2
  %v669 = vadd.f32 %v667, %v668
  %v670 = vrot.slane %v669, 1
  %v671 = vadd.f32 %v669, %v670
  %v674 = vcombine.low %v664, %v671
  %v676 = vunpack.c.l.s4 1966171168
  %v677 = vunpack.c.0.s8 %v676
  %v678 = vlaneseq
  %v679 = vshrl.u32 %v678, 7
  %v680 = vsub.s32 %v677, %v679
  %v681 = vrot.slane %v674, %v680
  %v683 = vunpack.c.l.s4 1966171168
  %v684 = vunpack.c.0.s8 %v683
  %v685 = vlaneseq
  %v686 = vshrl.u32 %v685, 7
  %v687 = vsub.s32 %v684, %v686
  %v688 = vrot.slane %v681, %v687
  %v690 = vadd.f32 %v656, %v688
  %v691 = vlaneseq
  %vm692 = vcmp.ge.s32.totalorder %v691, 0
  %vm693 = vcmp.lt.s32.totalorder %v691, 256
  %vm694 = vmand %vm692, %vm693
  %695 = vst.msk [vmem:[%s4] sm:$0x3] %vm694, %v690
  %v696 = vld [vmem:[%s5] sm:$0x3]
  %v697 = vmul.f32 %v628, %v628
  %v698 = vmul.f32 %v630, %v630
  %v699 = vsel %vm657, %v697, 0.0
  %v700 = vrot.slane %v699, 4
  %v701 = vadd.f32 %v699, %v700
  %v702 = vrot.slane %v701, 2
  %v703 = vadd.f32 %v701, %v702
  %v704 = vrot.slane %v703, 1
  %v705 = vadd.f32 %v703, %v704
  %v706 = vsel %vm657, %v698, 0.0
  %v707 = vrot.slane %v706, 4
  %v708 = vadd.f32 %v706, %v707
  %v709 = vrot.slane %v708, 2
  %v710 = vadd.f32 %v708, %v709
  %v711 = vrot.slane %v710, 1
  %v712 = vadd.f32 %v710, %v711
  %v715 = vcombine.low %v705, %v712
  %v717 = vunpack.c.l.s4 1966171168
  %v718 = vunpack.c.0.s8 %v717
  %v719 = vlaneseq
  %v720 = vshrl.u32 %v719, 7
  %v721 = vsub.s32 %v718, %v720
  %v722 = vrot.slane %v715, %v721
  %v724 = vunpack.c.l.s4 1966171168
  %v725 = vunpack.c.0.s8 %v724
  %v726 = vlaneseq
  %v727 = vshrl.u32 %v726, 7
  %v728 = vsub.s32 %v725, %v727
  %v729 = vrot.slane %v722, %v728
  %v731 = vadd.f32 %v696, %v729
  %732 = vst.msk [vmem:[%s5] sm:$0x3] %vm694, %v731
  // Predicated region
  $region18: #{unet_forward.15} parent=0 // pred_check
    _
  $region19: #{unet_forward.15} parent=0 // pred_check_branch
    %734 = sbr.rel (0) target = $region21
  $region20: #{unet_forward.15} parent=0 // pred_region
    _
  $region21: #{unet_forward.15} parent=0 // pred_fallthru
    _
  // Predicated region
  $region22: #{unet_forward.15} parent=0 // pred_check
    _
  $region23: #{unet_forward.15} parent=0 // pred_check_branch
    %736 = sbr.rel (0) target = $region25
  $region24: #{unet_forward.15} parent=0 // pred_region
    _
  $region25: #{unet_forward.15} parent=0 // pred_fallthru
    _
  // Predicated region
  $region26: #{unet_forward.15} parent=0 // pred_check
    _
  $region27: #{unet_forward.15} parent=0 // pred_check_branch
    %738 = sbr.rel (0) target = $region29
  $region28: #{unet_forward.15} parent=0 // pred_region
    _
  $region29: #{unet_forward.15} parent=0 // pred_fallthru
    _
  // Predicated region
  $region30: #{unet_forward.15} parent=0 // pred_check
    _
  $region31: #{unet_forward.15} parent=0 // pred_check_branch
    %740 = sbr.rel (0) target = $region33
  $region32: #{unet_forward.15} parent=0 // pred_region
    _
  $region33: #{unet_forward.15} parent=0 // pred_fallthru
    _
  // Predicated region
  $region34: #{unet_forward.15} parent=0 // pred_check
    _
  $region35: #{unet_forward.15} parent=0 // pred_check_branch
    %742 = sbr.rel (0) target = $region37
  $region36: #{unet_forward.15} parent=0 // pred_region
    _
  $region37: #{unet_forward.15} parent=0 // pred_fallthru
    _
  // Predicated region
  $region38: #{unet_forward.15} parent=0 // pred_check
    _
  $region39: #{unet_forward.15} parent=0 // pred_check_branch
    %744 = sbr.rel (0) target = $region41
  $region40: #{unet_forward.15} parent=0 // pred_region
    _
  $region41: #{unet_forward.15} parent=0 // pred_fallthru
    _

// kernel: unet_forward.16
$region0: #{unet_forward.16}
  #allocation0 [shape = 'u32[]', space=smem, size = 0x4, offset = 0x4, fixed_abs, tag = 'smem constant byte address 0x4 - core index']
  #allocation1 [shape = 'u32[144,128]{1,0:T(1,128)}', space=vmem, size = 0x12000, scoped, tag = 'internal scratch']
  %s0 = inlined_call_operand.vmem [shape: bf16[8,1152], index: 0, kind: input, shape index: {}]
  %s1 = inlined_call_operand.vmem [shape: bf16[1152,128], index: 1, kind: input, shape index: {}]
  %s2 = inlined_call_operand.vmem [shape: f32[1,128], index: 2, kind: input, shape index: {}]
  %s3 = inlined_call_operand.vmem [shape: f32[8,128], index: 3, kind: output, shape index: {0}]
  %s4 = inlined_call_operand.vmem [shape: f32[1,128], index: 4, kind: output, shape index: {1}]
  %s5 = inlined_call_operand.vmem [shape: f32[1,128], index: 5, kind: output, shape index: {2}]
  %6 = xla_tuple %s3, %s4, %s5
  %s7 = sld [smem:[#allocation0]]
  $region42: #{unet_forward.16} parent=0
    _
  %s9 = ssub.s32 1, %s7
  %s10 = scalar_select 0, %s9, %s7
  // Predicated region
  $region2: #{unet_forward.16} parent=0 // pred_check
    _
  $region3: #{unet_forward.16} parent=0 // pred_check_branch
    %12 = sbr.rel (0) target = $region5
  $region4: #{unet_forward.16} parent=0 // pred_region
    _
  $region5: #{unet_forward.16} parent=0 // pred_fallthru
    _
  // Predicated region
  $region6: #{unet_forward.16} parent=0 // pred_check
    _
  $region7: #{unet_forward.16} parent=0 // pred_check_branch
    %14 = sbr.rel (0) target = $region9
  $region8: #{unet_forward.16} parent=0 // pred_region
    _
  $region9: #{unet_forward.16} parent=0 // pred_fallthru
    _
  // Predicated region
  $region10: #{unet_forward.16} parent=0 // pred_check
    _
  $region11: #{unet_forward.16} parent=0 // pred_check_branch
    %16 = sbr.rel (0) target = $region13
  $region12: #{unet_forward.16} parent=0 // pred_region
    _
  $region13: #{unet_forward.16} parent=0 // pred_fallthru
    _
  %v18 = vld [vmem:[%s0] sm:$0xff]
  %v19 = vld [vmem:[%s0 + $0x8] sm:$0xff]
  %v20 = vld [vmem:[%s0 + $0x10] sm:$0xff]
  %v21 = vld [vmem:[%s0 + $0x18] sm:$0xff]
  %v22 = vld [vmem:[%s0 + $0x20] sm:$0xf]
  %v23 = vunpack.c.l.bf16 %v18
  %v24 = vunpack.c.h.bf16 %v18
  %v25 = vunpack.c.l.bf16 %v19
  %v26 = vunpack.c.h.bf16 %v19
  %v27 = vunpack.c.l.bf16 %v20
  %v28 = vunpack.c.h.bf16 %v20
  %v29 = vunpack.c.l.bf16 %v21
  %v30 = vunpack.c.h.bf16 %v21
  %v31 = vunpack.c.l.bf16 %v22
  %vm32 = vcmp.gt.f32.partialorder %v23, 0.0
  %vm33 = vcmp.gt.f32.partialorder %v24, 0.0
  %vm34 = vcmp.gt.f32.partialorder %v25, 0.0
  %vm35 = vcmp.gt.f32.partialorder %v26, 0.0
  %vm36 = vcmp.gt.f32.partialorder %v27, 0.0
  %vm37 = vcmp.gt.f32.partialorder %v28, 0.0
  %vm38 = vcmp.gt.f32.partialorder %v29, 0.0
  %vm39 = vcmp.gt.f32.partialorder %v30, 0.0
  %vm40 = vcmp.gt.f32.partialorder %v31, 0.0
  %v41 = vmul.f32 %v23, 0.0
  %v42 = vmul.f32 %v24, 0.0
  %v43 = vmul.f32 %v25, 0.0
  %v44 = vmul.f32 %v26, 0.0
  %v45 = vmul.f32 %v27, 0.0
  %v46 = vmul.f32 %v28, 0.0
  %v47 = vmul.f32 %v29, 0.0
  %v48 = vmul.f32 %v30, 0.0
  %v49 = vmul.f32 %v31, 0.0
  %v50 = vsel %vm32, %v23, %v41
  %v51 = vsel %vm33, %v24, %v42
  %v52 = vsel %vm34, %v25, %v43
  %v53 = vsel %vm35, %v26, %v44
  %v54 = vsel %vm36, %v27, %v45
  %v55 = vsel %vm37, %v28, %v46
  %v56 = vsel %vm38, %v29, %v47
  %v57 = vsel %vm39, %v30, %v48
  %v58 = vsel %vm40, %v31, %v49
  %v59 = vpack.c.bf16 %v50, %v50
  %v60 = vpack.c.bf16 %v51, %v51
  %v61 = vpack.c.bf16 %v52, %v52
  %v62 = vpack.c.bf16 %v53, %v53
  %v63 = vpack.c.bf16 %v54, %v54
  %v64 = vpack.c.bf16 %v55, %v55
  %v65 = vpack.c.bf16 %v56, %v56
  %v66 = vpack.c.bf16 %v57, %v57
  %v67 = vpack.c.bf16 %v58, %v58
  %v68 = vld [vmem:[%s1] sm:$0xf]
  %v69 = vld [vmem:[%s1 + $0x4] sm:$0xf]
  %v70 = vld [vmem:[%s1 + $0x8] sm:$0xf]
  %v71 = vld [vmem:[%s1 + $0xc] sm:$0xf]
  %v72 = vld [vmem:[%s1 + $0x10] sm:$0xf]
  %v73 = vld [vmem:[%s1 + $0x14] sm:$0xf]
  %v74 = vld [vmem:[%s1 + $0x18] sm:$0xf]
  %v75 = vld [vmem:[%s1 + $0x1c] sm:$0xf]
  %v76 = vld [vmem:[%s1 + $0x20] sm:$0xf]
  %v77 = vld [vmem:[%s1 + $0x24] sm:$0xf]
  %v78 = vld [vmem:[%s1 + $0x28] sm:$0xf]
  %v79 = vld [vmem:[%s1 + $0x2c] sm:$0xf]
  %v80 = vld [vmem:[%s1 + $0x30] sm:$0xf]
  %v81 = vld [vmem:[%s1 + $0x34] sm:$0xf]
  %v82 = vld [vmem:[%s1 + $0x38] sm:$0xf]
  %v83 = vld [vmem:[%s1 + $0x3c] sm:$0xf]
  %v84 = vld [vmem:[%s1 + $0x40] sm:$0xf]
  %v85 = vld [vmem:[%s1 + $0x44] sm:$0xf]
  %v86 = vld [vmem:[%s1 + $0x48] sm:$0xf]
  %v87 = vld [vmem:[%s1 + $0x4c] sm:$0xf]
  %v88 = vld [vmem:[%s1 + $0x50] sm:$0xf]
  %v89 = vld [vmem:[%s1 + $0x54] sm:$0xf]
  %v90 = vld [vmem:[%s1 + $0x58] sm:$0xf]
  %v91 = vld [vmem:[%s1 + $0x5c] sm:$0xf]
  %v92 = vld [vmem:[%s1 + $0x60] sm:$0xf]
  %v93 = vld [vmem:[%s1 + $0x64] sm:$0xf]
  %v94 = vld [vmem:[%s1 + $0x68] sm:$0xf]
  %v95 = vld [vmem:[%s1 + $0x6c] sm:$0xf]
  %v96 = vld [vmem:[%s1 + $0x70] sm:$0xf]
  %v97 = vld [vmem:[%s1 + $0x74] sm:$0xf]
  %v98 = vld [vmem:[%s1 + $0x78] sm:$0xf]
  %v99 = vld [vmem:[%s1 + $0x7c] sm:$0xf]
  %v100 = vld [vmem:[%s1 + $0x80] sm:$0xf]
  %v101 = vld [vmem:[%s1 + $0x84] sm:$0xf]
  %v102 = vld [vmem:[%s1 + $0x88] sm:$0xf]
  %v103 = vld [vmem:[%s1 + $0x8c] sm:$0xf]
  %v104 = vld [vmem:[%s1 + $0x90] sm:$0xf]
  %v105 = vld [vmem:[%s1 + $0x94] sm:$0xf]
  %v106 = vld [vmem:[%s1 + $0x98] sm:$0xf]
  %v107 = vld [vmem:[%s1 + $0x9c] sm:$0xf]
  %v108 = vld [vmem:[%s1 + $0xa0] sm:$0xf]
  %v109 = vld [vmem:[%s1 + $0xa4] sm:$0xf]
  %v110 = vld [vmem:[%s1 + $0xa8] sm:$0xf]
  %v111 = vld [vmem:[%s1 + $0xac] sm:$0xf]
  %v112 = vld [vmem:[%s1 + $0xb0] sm:$0xf]
  %v113 = vld [vmem:[%s1 + $0xb4] sm:$0xf]
  %v114 = vld [vmem:[%s1 + $0xb8] sm:$0xf]
  %v115 = vld [vmem:[%s1 + $0xbc] sm:$0xf]
  %v116 = vld [vmem:[%s1 + $0xc0] sm:$0xf]
  %v117 = vld [vmem:[%s1 + $0xc4] sm:$0xf]
  %v118 = vld [vmem:[%s1 + $0xc8] sm:$0xf]
  %v119 = vld [vmem:[%s1 + $0xcc] sm:$0xf]
  %v120 = vld [vmem:[%s1 + $0xd0] sm:$0xf]
  %v121 = vld [vmem:[%s1 + $0xd4] sm:$0xf]
  %v122 = vld [vmem:[%s1 + $0xd8] sm:$0xf]
  %v123 = vld [vmem:[%s1 + $0xdc] sm:$0xf]
  %v124 = vld [vmem:[%s1 + $0xe0] sm:$0xf]
  %v125 = vld [vmem:[%s1 + $0xe4] sm:$0xf]
  %v126 = vld [vmem:[%s1 + $0xe8] sm:$0xf]
  %v127 = vld [vmem:[%s1 + $0xec] sm:$0xf]
  %v128 = vld [vmem:[%s1 + $0xf0] sm:$0xf]
  %v129 = vld [vmem:[%s1 + $0xf4] sm:$0xf]
  %v130 = vld [vmem:[%s1 + $0xf8] sm:$0xf]
  %v131 = vld [vmem:[%s1 + $0xfc] sm:$0xf]
  %v132 = vld [vmem:[%s1 + $0x100] sm:$0xf]
  %v133 = vld [vmem:[%s1 + $0x104] sm:$0xf]
  %v134 = vld [vmem:[%s1 + $0x108] sm:$0xf]
  %v135 = vld [vmem:[%s1 + $0x10c] sm:$0xf]
  %v136 = vld [vmem:[%s1 + $0x110] sm:$0xf]
  %v137 = vld [vmem:[%s1 + $0x114] sm:$0xf]
  %v138 = vld [vmem:[%s1 + $0x118] sm:$0xf]
  %v139 = vld [vmem:[%s1 + $0x11c] sm:$0xf]
  %v140 = vld [vmem:[%s1 + $0x120] sm:$0xf]
  %v141 = vld [vmem:[%s1 + $0x124] sm:$0xf]
  %v142 = vld [vmem:[%s1 + $0x128] sm:$0xf]
  %v143 = vld [vmem:[%s1 + $0x12c] sm:$0xf]
  %v144 = vld [vmem:[%s1 + $0x130] sm:$0xf]
  %v145 = vld [vmem:[%s1 + $0x134] sm:$0xf]
  %v146 = vld [vmem:[%s1 + $0x138] sm:$0xf]
  %v147 = vld [vmem:[%s1 + $0x13c] sm:$0xf]
  %v148 = vld [vmem:[%s1 + $0x140] sm:$0xf]
  %v149 = vld [vmem:[%s1 + $0x144] sm:$0xf]
  %v150 = vld [vmem:[%s1 + $0x148] sm:$0xf]
  %v151 = vld [vmem:[%s1 + $0x14c] sm:$0xf]
  %v152 = vld [vmem:[%s1 + $0x150] sm:$0xf]
  %v153 = vld [vmem:[%s1 + $0x154] sm:$0xf]
  %v154 = vld [vmem:[%s1 + $0x158] sm:$0xf]
  %v155 = vld [vmem:[%s1 + $0x15c] sm:$0xf]
  %v156 = vld [vmem:[%s1 + $0x160] sm:$0xf]
  %v157 = vld [vmem:[%s1 + $0x164] sm:$0xf]
  %v158 = vld [vmem:[%s1 + $0x168] sm:$0xf]
  %v159 = vld [vmem:[%s1 + $0x16c] sm:$0xf]
  %v160 = vld [vmem:[%s1 + $0x170] sm:$0xf]
  %v161 = vld [vmem:[%s1 + $0x174] sm:$0xf]
  %v162 = vld [vmem:[%s1 + $0x178] sm:$0xf]
  %v163 = vld [vmem:[%s1 + $0x17c] sm:$0xf]
  %v164 = vld [vmem:[%s1 + $0x180] sm:$0xf]
  %v165 = vld [vmem:[%s1 + $0x184] sm:$0xf]
  %v166 = vld [vmem:[%s1 + $0x188] sm:$0xf]
  %v167 = vld [vmem:[%s1 + $0x18c] sm:$0xf]
  %v168 = vld [vmem:[%s1 + $0x190] sm:$0xf]
  %v169 = vld [vmem:[%s1 + $0x194] sm:$0xf]
  %v170 = vld [vmem:[%s1 + $0x198] sm:$0xf]
  %v171 = vld [vmem:[%s1 + $0x19c] sm:$0xf]
  %v172 = vld [vmem:[%s1 + $0x1a0] sm:$0xf]
  %v173 = vld [vmem:[%s1 + $0x1a4] sm:$0xf]
  %v174 = vld [vmem:[%s1 + $0x1a8] sm:$0xf]
  %v175 = vld [vmem:[%s1 + $0x1ac] sm:$0xf]
  %v176 = vld [vmem:[%s1 + $0x1b0] sm:$0xf]
  %v177 = vld [vmem:[%s1 + $0x1b4] sm:$0xf]
  %v178 = vld [vmem:[%s1 + $0x1b8] sm:$0xf]
  %v179 = vld [vmem:[%s1 + $0x1bc] sm:$0xf]
  %v180 = vld [vmem:[%s1 + $0x1c0] sm:$0xf]
  %v181 = vld [vmem:[%s1 + $0x1c4] sm:$0xf]
  %v182 = vld [vmem:[%s1 + $0x1c8] sm:$0xf]
  %v183 = vld [vmem:[%s1 + $0x1cc] sm:$0xf]
  %v184 = vld [vmem:[%s1 + $0x1d0] sm:$0xf]
  %v185 = vld [vmem:[%s1 + $0x1d4] sm:$0xf]
  %v186 = vld [vmem:[%s1 + $0x1d8] sm:$0xf]
  %v187 = vld [vmem:[%s1 + $0x1dc] sm:$0xf]
  %v188 = vld [vmem:[%s1 + $0x1e0] sm:$0xf]
  %v189 = vld [vmem:[%s1 + $0x1e4] sm:$0xf]
  %v190 = vld [vmem:[%s1 + $0x1e8] sm:$0xf]
  %v191 = vld [vmem:[%s1 + $0x1ec] sm:$0xf]
  %v192 = vld [vmem:[%s1 + $0x1f0] sm:$0xf]
  %v193 = vld [vmem:[%s1 + $0x1f4] sm:$0xf]
  %v194 = vld [vmem:[%s1 + $0x1f8] sm:$0xf]
  %v195 = vld [vmem:[%s1 + $0x1fc] sm:$0xf]
  %v196 = vld [vmem:[%s1 + $0x200] sm:$0xf]
  %v197 = vld [vmem:[%s1 + $0x204] sm:$0xf]
  %v198 = vld [vmem:[%s1 + $0x208] sm:$0xf]
  %v199 = vld [vmem:[%s1 + $0x20c] sm:$0xf]
  %v200 = vld [vmem:[%s1 + $0x210] sm:$0xf]
  %v201 = vld [vmem:[%s1 + $0x214] sm:$0xf]
  %v202 = vld [vmem:[%s1 + $0x218] sm:$0xf]
  %v203 = vld [vmem:[%s1 + $0x21c] sm:$0xf]
  %v204 = vld [vmem:[%s1 + $0x220] sm:$0xf]
  %v205 = vld [vmem:[%s1 + $0x224] sm:$0xf]
  %v206 = vld [vmem:[%s1 + $0x228] sm:$0xf]
  %v207 = vld [vmem:[%s1 + $0x22c] sm:$0xf]
  %v208 = vld [vmem:[%s1 + $0x230] sm:$0xf]
  %v209 = vld [vmem:[%s1 + $0x234] sm:$0xf]
  %v210 = vld [vmem:[%s1 + $0x238] sm:$0xf]
  %v211 = vld [vmem:[%s1 + $0x23c] sm:$0xf]
  %v212 = vld [vmem:[%s2] sm:$0x1]
  %v214 = vlaneseq
  %v215 = vshrl.u32 %v214, 7
  %v216 = vsub.s32 0, %v215
  %v217 = vrot.slane %v212, %v216
  %v363 = vunpack.c.l.b16 %v68
  %v364 = vunpack.c.l.b16 %v69
  %v365 = vunpack.c.l.b16 %v70
  %v366 = vunpack.c.l.b16 %v71
  %v367 = vunpack.c.l.b16 %v72
  %v368 = vunpack.c.l.b16 %v73
  %v369 = vunpack.c.l.b16 %v74
  %v370 = vunpack.c.l.b16 %v75
  %v371 = vunpack.c.l.b16 %v76
  %v372 = vunpack.c.l.b16 %v77
  %v373 = vunpack.c.l.b16 %v78
  %v374 = vunpack.c.l.b16 %v79
  %v375 = vunpack.c.l.b16 %v80
  %v376 = vunpack.c.l.b16 %v81
  %v377 = vunpack.c.l.b16 %v82
  %v378 = vunpack.c.l.b16 %v83
  %v379 = vunpack.c.l.b16 %v84
  %v380 = vunpack.c.l.b16 %v85
  %v381 = vunpack.c.l.b16 %v86
  %v382 = vunpack.c.l.b16 %v87
  %v383 = vunpack.c.l.b16 %v88
  %v384 = vunpack.c.l.b16 %v89
  %v385 = vunpack.c.l.b16 %v90
  %v386 = vunpack.c.l.b16 %v91
  %v387 = vunpack.c.l.b16 %v92
  %v388 = vunpack.c.l.b16 %v93
  %v389 = vunpack.c.l.b16 %v94
  %v390 = vunpack.c.l.b16 %v95
  %v391 = vunpack.c.l.b16 %v96
  %v392 = vunpack.c.l.b16 %v97
  %v393 = vunpack.c.l.b16 %v98
  %v394 = vunpack.c.l.b16 %v99
  %v395 = vunpack.c.l.b16 %v100
  %v396 = vunpack.c.l.b16 %v101
  %v397 = vunpack.c.l.b16 %v102
  %v398 = vunpack.c.l.b16 %v103
  %v399 = vunpack.c.l.b16 %v104
  %v400 = vunpack.c.l.b16 %v105
  %v401 = vunpack.c.l.b16 %v106
  %v402 = vunpack.c.l.b16 %v107
  %v403 = vunpack.c.l.b16 %v108
  %v404 = vunpack.c.l.b16 %v109
  %v405 = vunpack.c.l.b16 %v110
  %v406 = vunpack.c.l.b16 %v111
  %v407 = vunpack.c.l.b16 %v112
  %v408 = vunpack.c.l.b16 %v113
  %v409 = vunpack.c.l.b16 %v114
  %v410 = vunpack.c.l.b16 %v115
  %v411 = vunpack.c.l.b16 %v116
  %v412 = vunpack.c.l.b16 %v117
  %v413 = vunpack.c.l.b16 %v118
  %v414 = vunpack.c.l.b16 %v119
  %v415 = vunpack.c.l.b16 %v120
  %v416 = vunpack.c.l.b16 %v121
  %v417 = vunpack.c.l.b16 %v122
  %v418 = vunpack.c.l.b16 %v123
  %v419 = vunpack.c.l.b16 %v124
  %v420 = vunpack.c.l.b16 %v125
  %v421 = vunpack.c.l.b16 %v126
  %v422 = vunpack.c.l.b16 %v127
  %v423 = vunpack.c.l.b16 %v128
  %v424 = vunpack.c.l.b16 %v129
  %v425 = vunpack.c.l.b16 %v130
  %v426 = vunpack.c.l.b16 %v131
  %v427 = vunpack.c.l.b16 %v132
  %v428 = vunpack.c.l.b16 %v133
  %v429 = vunpack.c.l.b16 %v134
  %v430 = vunpack.c.l.b16 %v135
  %v431 = vunpack.c.l.b16 %v136
  %v432 = vunpack.c.l.b16 %v137
  %v433 = vunpack.c.l.b16 %v138
  %v434 = vunpack.c.l.b16 %v139
  %v435 = vunpack.c.l.b16 %v140
  %v436 = vunpack.c.l.b16 %v141
  %v437 = vunpack.c.l.b16 %v142
  %v438 = vunpack.c.l.b16 %v143
  %v439 = vunpack.c.l.b16 %v144
  %v440 = vunpack.c.l.b16 %v145
  %v441 = vunpack.c.l.b16 %v146
  %v442 = vunpack.c.l.b16 %v147
  %v443 = vunpack.c.l.b16 %v148
  %v444 = vunpack.c.l.b16 %v149
  %v445 = vunpack.c.l.b16 %v150
  %v446 = vunpack.c.l.b16 %v151
  %v447 = vunpack.c.l.b16 %v152
  %v448 = vunpack.c.l.b16 %v153
  %v449 = vunpack.c.l.b16 %v154
  %v450 = vunpack.c.l.b16 %v155
  %v451 = vunpack.c.l.b16 %v156
  %v452 = vunpack.c.l.b16 %v157
  %v453 = vunpack.c.l.b16 %v158
  %v454 = vunpack.c.l.b16 %v159
  %v455 = vunpack.c.l.b16 %v160
  %v456 = vunpack.c.l.b16 %v161
  %v457 = vunpack.c.l.b16 %v162
  %v458 = vunpack.c.l.b16 %v163
  %v459 = vunpack.c.l.b16 %v164
  %v460 = vunpack.c.l.b16 %v165
  %v461 = vunpack.c.l.b16 %v166
  %v462 = vunpack.c.l.b16 %v167
  %v463 = vunpack.c.l.b16 %v168
  %v464 = vunpack.c.l.b16 %v169
  %v465 = vunpack.c.l.b16 %v170
  %v466 = vunpack.c.l.b16 %v171
  %v467 = vunpack.c.l.b16 %v172
  %v468 = vunpack.c.l.b16 %v173
  %v469 = vunpack.c.l.b16 %v174
  %v470 = vunpack.c.l.b16 %v175
  %v471 = vunpack.c.l.b16 %v176
  %v472 = vunpack.c.l.b16 %v177
  %v473 = vunpack.c.l.b16 %v178
  %v474 = vunpack.c.l.b16 %v179
  %v475 = vunpack.c.l.b16 %v180
  %v476 = vunpack.c.l.b16 %v181
  %v477 = vunpack.c.l.b16 %v182
  %v478 = vunpack.c.l.b16 %v183
  %v479 = vunpack.c.l.b16 %v184
  %v480 = vunpack.c.l.b16 %v185
  %v481 = vunpack.c.l.b16 %v186
  %v482 = vunpack.c.l.b16 %v187
  %v483 = vunpack.c.l.b16 %v188
  %v484 = vunpack.c.l.b16 %v189
  %v485 = vunpack.c.l.b16 %v190
  %v486 = vunpack.c.l.b16 %v191
  %v487 = vunpack.c.l.b16 %v192
  %v488 = vunpack.c.l.b16 %v193
  %v489 = vunpack.c.l.b16 %v194
  %v490 = vunpack.c.l.b16 %v195
  %v491 = vunpack.c.l.b16 %v196
  %v492 = vunpack.c.l.b16 %v197
  %v493 = vunpack.c.l.b16 %v198
  %v494 = vunpack.c.l.b16 %v199
  %v495 = vunpack.c.l.b16 %v200
  %v496 = vunpack.c.l.b16 %v201
  %v497 = vunpack.c.l.b16 %v202
  %v498 = vunpack.c.l.b16 %v203
  %v499 = vunpack.c.l.b16 %v204
  %v500 = vunpack.c.l.b16 %v205
  %v501 = vunpack.c.l.b16 %v206
  %v502 = vunpack.c.l.b16 %v207
  %v503 = vunpack.c.l.b16 %v208
  %v504 = vunpack.c.l.b16 %v209
  %v505 = vunpack.c.l.b16 %v210
  %v506 = vunpack.c.l.b16 %v211
  %v507 = vpack.c.b16 %v364, %v363
  %v508 = vpack.c.b16 %v366, %v365
  %v509 = vpack.c.b16 %v368, %v367
  %v510 = vpack.c.b16 %v370, %v369
  %v511 = vpack.c.b16 %v372, %v371
  %v512 = vpack.c.b16 %v374, %v373
  %v513 = vpack.c.b16 %v376, %v375
  %v514 = vpack.c.b16 %v378, %v377
  %v515 = vpack.c.b16 %v380, %v379
  %v516 = vpack.c.b16 %v382, %v381
  %v517 = vpack.c.b16 %v384, %v383
  %v518 = vpack.c.b16 %v386, %v385
  %v519 = vpack.c.b16 %v388, %v387
  %v520 = vpack.c.b16 %v390, %v389
  %v521 = vpack.c.b16 %v392, %v391
  %v522 = vpack.c.b16 %v394, %v393
  %v523 = vpack.c.b16 %v396, %v395
  %v524 = vpack.c.b16 %v398, %v397
  %v525 = vpack.c.b16 %v400, %v399
  %v526 = vpack.c.b16 %v402, %v401
  %v527 = vpack.c.b16 %v404, %v403
  %v528 = vpack.c.b16 %v406, %v405
  %v529 = vpack.c.b16 %v408, %v407
  %v530 = vpack.c.b16 %v410, %v409
  %v531 = vpack.c.b16 %v412, %v411
  %v532 = vpack.c.b16 %v414, %v413
  %v533 = vpack.c.b16 %v416, %v415
  %v534 = vpack.c.b16 %v418, %v417
  %v535 = vpack.c.b16 %v420, %v419
  %v536 = vpack.c.b16 %v422, %v421
  %v537 = vpack.c.b16 %v424, %v423
  %v538 = vpack.c.b16 %v426, %v425
  %v539 = vpack.c.b16 %v428, %v427
  %v540 = vpack.c.b16 %v430, %v429
  %v541 = vpack.c.b16 %v432, %v431
  %v542 = vpack.c.b16 %v434, %v433
  %v543 = vpack.c.b16 %v436, %v435
  %v544 = vpack.c.b16 %v438, %v437
  %v545 = vpack.c.b16 %v440, %v439
  %v546 = vpack.c.b16 %v442, %v441
  %v547 = vpack.c.b16 %v444, %v443
  %v548 = vpack.c.b16 %v446, %v445
  %v549 = vpack.c.b16 %v448, %v447
  %v550 = vpack.c.b16 %v450, %v449
  %v551 = vpack.c.b16 %v452, %v451
  %v552 = vpack.c.b16 %v454, %v453
  %v553 = vpack.c.b16 %v456, %v455
  %v554 = vpack.c.b16 %v458, %v457
  %v555 = vpack.c.b16 %v460, %v459
  %v556 = vpack.c.b16 %v462, %v461
  %v557 = vpack.c.b16 %v464, %v463
  %v558 = vpack.c.b16 %v466, %v465
  %v559 = vpack.c.b16 %v468, %v467
  %v560 = vpack.c.b16 %v470, %v469
  %v561 = vpack.c.b16 %v472, %v471
  %v562 = vpack.c.b16 %v474, %v473
  %v563 = vpack.c.b16 %v476, %v475
  %v564 = vpack.c.b16 %v478, %v477
  %v565 = vpack.c.b16 %v480, %v479
  %v566 = vpack.c.b16 %v482, %v481
  %v567 = vpack.c.b16 %v484, %v483
  %v568 = vpack.c.b16 %v486, %v485
  %v569 = vpack.c.b16 %v488, %v487
  %v570 = vpack.c.b16 %v490, %v489
  %v571 = vpack.c.b16 %v492, %v491
  %v572 = vpack.c.b16 %v494, %v493
  %v573 = vpack.c.b16 %v496, %v495
  %v574 = vpack.c.b16 %v498, %v497
  %v575 = vpack.c.b16 %v500, %v499
  %v576 = vpack.c.b16 %v502, %v501
  %v577 = vpack.c.b16 %v504, %v503
  %v578 = vpack.c.b16 %v506, %v505
  %651 = vmatprep.subr.bf16.mxu0 0
  %652 = vmatpush1.bf16.msra.mxu0 %v507
  %653 = vmatprep.subr.bf16.mxu0 0
  %654 = vmatpush1.bf16.msra.mxu0 %v508
  %655 = vmatprep.subr.bf16.mxu0 0
  %656 = vmatpush1.bf16.msra.mxu0 %v509
  %657 = vmatprep.subr.bf16.mxu0 0
  %658 = vmatpush1.bf16.msra.mxu0 %v510
  %659 = vmatprep.subr.bf16.mxu0 0
  %660 = vmatpush1.bf16.msra.mxu0 %v511
  %661 = vmatprep.subr.bf16.mxu0 0
  %662 = vmatpush1.bf16.msra.mxu0 %v512
  %663 = vmatprep.subr.bf16.mxu0 0
  %664 = vmatpush1.bf16.msra.mxu0 %v513
  %665 = vmatprep.subr.bf16.mxu0 0
  %666 = vmatpush1.bf16.msra.mxu0 %v514
  %667 = vmatprep.subr.bf16.mxu0 0
  %668 = vmatpush1.bf16.msra.mxu0 %v515
  %669 = vmatprep.subr.bf16.mxu0 0
  %670 = vmatpush1.bf16.msra.mxu0 %v516
  %671 = vmatprep.subr.bf16.mxu0 0
  %672 = vmatpush1.bf16.msra.mxu0 %v517
  %673 = vmatprep.subr.bf16.mxu0 0
  %674 = vmatpush1.bf16.msra.mxu0 %v518
  %675 = vmatprep.subr.bf16.mxu0 0
  %676 = vmatpush1.bf16.msra.mxu0 %v519
  %677 = vmatprep.subr.bf16.mxu0 0
  %678 = vmatpush1.bf16.msra.mxu0 %v520
  %679 = vmatprep.subr.bf16.mxu0 0
  %680 = vmatpush1.bf16.msra.mxu0 %v521
  %681 = vmatprep.subr.bf16.mxu0 0
  %682 = vmatpush1.bf16.msra.mxu0 %v522
  %683 = vmatprep.mubr.bf16.mxu0 %v60
  %684 = vmatmul.mubr.bf16.gmra.mrb[0].mxu0 %v59
  %v685 = vpop.f32.mrb[0].mxu0
  %v686 = vadd.f32 %v217, %v685
  %v687 = vpop.f32.mrb[0].mxu0
  %v688 = vpop.f32.mrb[0].mxu0
  %v689 = vpop.f32.mrb[0].mxu0
  %690 = vdwg.mxu0
  %691 = vmatprep.subr.bf16.mxu0 0
  %692 = vmatpush1.bf16.msra.mxu0 %v523
  %693 = vmatprep.subr.bf16.mxu0 0
  %694 = vmatpush1.bf16.msra.mxu0 %v524
  %695 = vmatprep.subr.bf16.mxu0 0
  %696 = vmatpush1.bf16.msra.mxu0 %v525
  %697 = vmatprep.subr.bf16.mxu0 0
  %698 = vmatpush1.bf16.msra.mxu0 %v526
  %699 = vmatprep.subr.bf16.mxu0 0
  %700 = vmatpush1.bf16.msra.mxu0 %v527
  %701 = vmatprep.subr.bf16.mxu0 0
  %702 = vmatpush1.bf16.msra.mxu0 %v528
  %703 = vmatprep.subr.bf16.mxu0 0
  %704 = vmatpush1.bf16.msra.mxu0 %v529
  %705 = vmatprep.subr.bf16.mxu0 0
  %706 = vmatpush1.bf16.msra.mxu0 %v530
  %707 = vmatprep.subr.bf16.mxu0 0
  %708 = vmatpush1.bf16.msra.mxu0 %v531
  %709 = vmatprep.subr.bf16.mxu0 0
  %710 = vmatpush1.bf16.msra.mxu0 %v532
  %711 = vmatprep.subr.bf16.mxu0 0
  %712 = vmatpush1.bf16.msra.mxu0 %v533
  %713 = vmatprep.subr.bf16.mxu0 0
  %714 = vmatpush1.bf16.msra.mxu0 %v534
  %715 = vmatprep.subr.bf16.mxu0 0
  %716 = vmatpush1.bf16.msra.mxu0 %v535
  %717 = vmatprep.subr.bf16.mxu0 0
  %718 = vmatpush1.bf16.msra.mxu0 %v536
  %719 = vmatprep.subr.bf16.mxu0 0
  %720 = vmatpush1.bf16.msra.mxu0 %v537
  %721 = vmatprep.subr.bf16.mxu0 0
  %722 = vmatpush1.bf16.msra.mxu0 %v538
  %723 = vmatprep.mubr.bf16.mxu0 %v62
  %724 = vmatmul.mubr.bf16.gmra.mrb[0].mxu0 %v61
  %v725 = vpop.f32.mrb[0].mxu0
  %v726 = vadd.f32 %v686, %v725
  %v727 = vpop.f32.mrb[0].mxu0
  %v728 = vpop.f32.mrb[0].mxu0
  %v729 = vpop.f32.mrb[0].mxu0
  %730 = vdwg.mxu0
  %731 = vmatprep.subr.bf16.mxu0 0
  %732 = vmatpush1.bf16.msra.mxu0 %v539
  %733 = vmatprep.subr.bf16.mxu0 0
  %734 = vmatpush1.bf16.msra.mxu0 %v540
  %735 = vmatprep.subr.bf16.mxu0 0
  %736 = vmatpush1.bf16.msra.mxu0 %v541
  %737 = vmatprep.subr.bf16.mxu0 0
  %738 = vmatpush1.bf16.msra.mxu0 %v542
  %739 = vmatprep.subr.bf16.mxu0 0
  %740 = vmatpush1.bf16.msra.mxu0 %v543
  %741 = vmatprep.subr.bf16.mxu0 0
  %742 = vmatpush1.bf16.msra.mxu0 %v544
  %743 = vmatprep.subr.bf16.mxu0 0
  %744 = vmatpush1.bf16.msra.mxu0 %v545
  %745 = vmatprep.subr.bf16.mxu0 0
  %746 = vmatpush1.bf16.msra.mxu0 %v546
  %747 = vmatprep.subr.bf16.mxu0 0
  %748 = vmatpush1.bf16.msra.mxu0 %v547
  %749 = vmatprep.subr.bf16.mxu0 0
  %750 = vmatpush1.bf16.msra.mxu0 %v548
  %751 = vmatprep.subr.bf16.mxu0 0
  %752 = vmatpush1.bf16.msra.mxu0 %v549
  %753 = vmatprep.subr.bf16.mxu0 0
  %754 = vmatpush1.bf16.msra.mxu0 %v550
  %755 = vmatprep.subr.bf16.mxu0 0
  %756 = vmatpush1.bf16.msra.mxu0 %v551
  %757 = vmatprep.subr.bf16.mxu0 0
  %758 = vmatpush1.bf16.msra.mxu0 %v552
  %759 = vmatprep.subr.bf16.mxu0 0
  %760 = vmatpush1.bf16.msra.mxu0 %v553
  %761 = vmatprep.subr.bf16.mxu0 0
  %762 = vmatpush1.bf16.msra.mxu0 %v554
  %763 = vmatprep.mubr.bf16.mxu0 %v64
  %764 = vmatmul.mubr.bf16.gmra.mrb[0].mxu0 %v63
  %v765 = vpop.f32.mrb[0].mxu0
  %v766 = vadd.f32 %v726, %v765
  %v767 = vpop.f32.mrb[0].mxu0
  %v768 = vpop.f32.mrb[0].mxu0
  %v769 = vpop.f32.mrb[0].mxu0
  %770 = vdwg.mxu0
  %771 = vmatprep.subr.bf16.mxu0 0
  %772 = vmatpush1.bf16.msra.mxu0 %v555
  %773 = vmatprep.subr.bf16.mxu0 0
  %774 = vmatpush1.bf16.msra.mxu0 %v556
  %775 = vmatprep.subr.bf16.mxu0 0
  %776 = vmatpush1.bf16.msra.mxu0 %v557
  %777 = vmatprep.subr.bf16.mxu0 0
  %778 = vmatpush1.bf16.msra.mxu0 %v558
  %779 = vmatprep.subr.bf16.mxu0 0
  %780 = vmatpush1.bf16.msra.mxu0 %v559
  %781 = vmatprep.subr.bf16.mxu0 0
  %782 = vmatpush1.bf16.msra.mxu0 %v560
  %783 = vmatprep.subr.bf16.mxu0 0
  %784 = vmatpush1.bf16.msra.mxu0 %v561
  %785 = vmatprep.subr.bf16.mxu0 0
  %786 = vmatpush1.bf16.msra.mxu0 %v562
  %787 = vmatprep.subr.bf16.mxu0 0
  %788 = vmatpush1.bf16.msra.mxu0 %v563
  %789 = vmatprep.subr.bf16.mxu0 0
  %790 = vmatpush1.bf16.msra.mxu0 %v564
  %791 = vmatprep.subr.bf16.mxu0 0
  %792 = vmatpush1.bf16.msra.mxu0 %v565
  %793 = vmatprep.subr.bf16.mxu0 0
  %794 = vmatpush1.bf16.msra.mxu0 %v566
  %795 = vmatprep.subr.bf16.mxu0 0
  %796 = vmatpush1.bf16.msra.mxu0 %v567
  %797 = vmatprep.subr.bf16.mxu0 0
  %798 = vmatpush1.bf16.msra.mxu0 %v568
  %799 = vmatprep.subr.bf16.mxu0 0
  %800 = vmatpush1.bf16.msra.mxu0 %v569
  %801 = vmatprep.subr.bf16.mxu0 0
  %802 = vmatpush1.bf16.msra.mxu0 %v570
  %803 = vmatprep.mubr.bf16.mxu0 %v66
  %804 = vmatmul.mubr.bf16.gmra.mrb[0].mxu0 %v65
  %v805 = vpop.f32.mrb[0].mxu0
  %v806 = vadd.f32 %v766, %v805
  %v807 = vpop.f32.mrb[0].mxu0
  %v808 = vpop.f32.mrb[0].mxu0
  %v809 = vpop.f32.mrb[0].mxu0
  %810 = vdwg.mxu0
  %811 = vmatprep.subr.bf16.mxu0 0
  %812 = vmatpush1.bf16.msra.mxu0 %v571
  %813 = vmatprep.subr.bf16.mxu0 0
  %814 = vmatpush1.bf16.msra.mxu0 %v572
  %815 = vmatprep.subr.bf16.mxu0 0
  %816 = vmatpush1.bf16.msra.mxu0 %v573
  %817 = vmatprep.subr.bf16.mxu0 0
  %818 = vmatpush1.bf16.msra.mxu0 %v574
  %819 = vmatprep.subr.bf16.mxu0 0
  %820 = vmatpush1.bf16.msra.mxu0 %v575
  %821 = vmatprep.subr.bf16.mxu0 0
  %822 = vmatpush1.bf16.msra.mxu0 %v576
  %823 = vmatprep.subr.bf16.mxu0 0
  %824 = vmatpush1.bf16.msra.mxu0 %v577
  %825 = vmatprep.subr.bf16.mxu0 0
  %826 = vmatpush1.bf16.msra.mxu0 %v578
  %827 = vmatprep.subr.bf16.mxu0 0
  %828 = vmatpush1.bf16.msra.mxu0 0
  %829 = vmatprep.subr.bf16.mxu0 0
  %830 = vmatpush1.bf16.msra.mxu0 0
  %831 = vmatprep.subr.bf16.mxu0 0
  %832 = vmatpush1.bf16.msra.mxu0 0
  %833 = vmatprep.subr.bf16.mxu0 0
  %834 = vmatpush1.bf16.msra.mxu0 0
  %835 = vmatprep.subr.bf16.mxu0 0
  %836 = vmatpush1.bf16.msra.mxu0 0
  %837 = vmatprep.subr.bf16.mxu0 0
  %838 = vmatpush1.bf16.msra.mxu0 0
  %839 = vmatprep.subr.bf16.mxu0 0
  %840 = vmatpush1.bf16.msra.mxu0 0
  %841 = vmatprep.subr.bf16.mxu0 0
  %842 = vmatpush1.bf16.msra.mxu0 0
  %843 = vmatprep.mubr.bf16.mxu0 0
  %844 = vmatmul.mubr.bf16.gmra.mrb[0].mxu0 %v67
  %v845 = vpop.f32.mrb[0].mxu0
  %v846 = vadd.f32 %v806, %v845
  %v847 = vpop.f32.mrb[0].mxu0
  %v848 = vpop.f32.mrb[0].mxu0
  %v849 = vpop.f32.mrb[0].mxu0
  %850 = vdwg.mxu0
  %851 = vst [vmem:[%s3] sm:$0xff] %v846
  %p852 = scmp.eq.s32.totalorder 0, 0
  // Predicated region
  $region14: #{unet_forward.16} parent=0 // pred_check
    %p853 = pneg %p852
  $region15: #{unet_forward.16} parent=0 // pred_check_branch
    %855 = sbr.rel (%p853) target = $region17
  $region16: #{unet_forward.16} parent=0 // pred_region
    %856 = vst [vmem:[%s4] sm:$0x1] 0.0
    %857 = vst [vmem:[%s5] sm:$0x1] 0.0
  $region17: #{unet_forward.16} parent=0 // pred_fallthru
    _
  %v858 = vld [vmem:[%s4] sm:$0x1]
  %v859 = vrot.slane %v846, 4
  %v860 = vadd.f32 %v846, %v859
  %v861 = vrot.slane %v860, 2
  %v862 = vadd.f32 %v860, %v861
  %v863 = vrot.slane %v862, 1
  %v864 = vadd.f32 %v862, %v863
  %v865 = vadd.f32 %v858, %v864
  %866 = vst [vmem:[%s4] sm:$0x1] %v865
  %v867 = vld [vmem:[%s5] sm:$0x1]
  %v868 = vmul.f32 %v846, %v846
  %v869 = vrot.slane %v868, 4
  %v870 = vadd.f32 %v868, %v869
  %v871 = vrot.slane %v870, 2
  %v872 = vadd.f32 %v870, %v871
  %v873 = vrot.slane %v872, 1
  %v874 = vadd.f32 %v872, %v873
  %v875 = vadd.f32 %v867, %v874
  %876 = vst [vmem:[%s5] sm:$0x1] %v875
  // Predicated region
  $region18: #{unet_forward.16} parent=0 // pred_check
    _
  $region19: #{unet_forward.16} parent=0 // pred_check_branch
    %878 = sbr.rel (0) target = $region21
  $region20: #{unet_forward.16} parent=0 // pred_region
    _
  $region21: #{unet_forward.16} parent=0 // pred_fallthru
    _
  // Predicated region
  $region22: #{unet_forward.16} parent=0 // pred_check
    _
  $region23: #{unet_forward.16} parent=0 // pred_check_branch
    %880 = sbr.rel (0) target = $region25
  $region24: #{unet_forward.16} parent=0 // pred_region
    _
  $region25: #{unet_forward.16} parent=0 // pred_fallthru
    _
  // Predicated region
  $region26: #{unet_forward.16} parent=0 // pred_check
    _
  $region27: #{unet_forward.16} parent=0 // pred_check_branch
    %882 = sbr.rel (0) target = $region29
  $region28: #{unet_forward.16} parent=0 // pred_region
    _
  $region29: #{unet_forward.16} parent=0 // pred_fallthru
    _
  // Predicated region
  $region30: #{unet_forward.16} parent=0 // pred_check
    _
  $region31: #{unet_forward.16} parent=0 // pred_check_branch
    %884 = sbr.rel (0) target = $region33
  $region32: #{unet_forward.16} parent=0 // pred_region
    _
  $region33: #{unet_forward.16} parent=0 // pred_fallthru
    _
  // Predicated region
  $region34: #{unet_forward.16} parent=0 // pred_check
    _
  $region35: #{unet_forward.16} parent=0 // pred_check_branch
    %886 = sbr.rel (0) target = $region37
  $region36: #{unet_forward.16} parent=0 // pred_region
    _
  $region37: #{unet_forward.16} parent=0 // pred_fallthru
    _
  // Predicated region
  $region38: #{unet_forward.16} parent=0 // pred_check
    _
  $region39: #{unet_forward.16} parent=0 // pred_check_branch
    %888 = sbr.rel (0) target = $region41
  $region40: #{unet_forward.16} parent=0 // pred_region
    _
  $region41: #{unet_forward.16} parent=0 // pred_fallthru
    _

// kernel: unet_forward.17
$region0: #{unet_forward.17}
  #allocation0 [shape = 'u32[]', space=smem, size = 0x4, offset = 0x4, fixed_abs, tag = 'smem constant byte address 0x4 - core index']
  #allocation1 [shape = 'u32[144,128]{1,0:T(1,128)}', space=vmem, size = 0x12000, scoped, tag = 'internal scratch']
  %s0 = inlined_call_operand.vmem [shape: bf16[32,576], index: 0, kind: input, shape index: {}]
  %s1 = inlined_call_operand.vmem [shape: bf16[576,64], index: 1, kind: input, shape index: {}]
  %s2 = inlined_call_operand.vmem [shape: f32[1,64], index: 2, kind: input, shape index: {}]
  %s3 = inlined_call_operand.vmem [shape: f32[32,64], index: 3, kind: output, shape index: {0}]
  %s4 = inlined_call_operand.vmem [shape: f32[1,64], index: 4, kind: output, shape index: {1}]
  %s5 = inlined_call_operand.vmem [shape: f32[1,64], index: 5, kind: output, shape index: {2}]
  %6 = xla_tuple %s3, %s4, %s5
  %s7 = sld [smem:[#allocation0]]
  $region42: #{unet_forward.17} parent=0
    _
  %s9 = ssub.s32 1, %s7
  %s10 = scalar_select 0, %s9, %s7
  // Predicated region
  $region2: #{unet_forward.17} parent=0 // pred_check
    _
  $region3: #{unet_forward.17} parent=0 // pred_check_branch
    %12 = sbr.rel (0) target = $region5
  $region4: #{unet_forward.17} parent=0 // pred_region
    _
  $region5: #{unet_forward.17} parent=0 // pred_fallthru
    _
  // Predicated region
  $region6: #{unet_forward.17} parent=0 // pred_check
    _
  $region7: #{unet_forward.17} parent=0 // pred_check_branch
    %14 = sbr.rel (0) target = $region9
  $region8: #{unet_forward.17} parent=0 // pred_region
    _
  $region9: #{unet_forward.17} parent=0 // pred_fallthru
    _
  // Predicated region
  $region10: #{unet_forward.17} parent=0 // pred_check
    _
  $region11: #{unet_forward.17} parent=0 // pred_check_branch
    %16 = sbr.rel (0) target = $region13
  $region12: #{unet_forward.17} parent=0 // pred_region
    _
  $region13: #{unet_forward.17} parent=0 // pred_fallthru
    _
  %v18 = vld [vmem:[%s0] sm:$0xff]
  %v19 = vld [vmem:[%s0 + $0x8] sm:$0xff]
  %v20 = vld [vmem:[%s0 + $0x10] sm:$0xf]
  %v21 = vld [vmem:[%s0 + $0x14] sm:$0xff]
  %v22 = vld [vmem:[%s0 + $0x1c] sm:$0xff]
  %v23 = vld [vmem:[%s0 + $0x24] sm:$0xf]
  %v24 = vld [vmem:[%s0 + $0x28] sm:$0xff]
  %v25 = vld [vmem:[%s0 + $0x30] sm:$0xff]
  %v26 = vld [vmem:[%s0 + $0x38] sm:$0xf]
  %v27 = vld [vmem:[%s0 + $0x3c] sm:$0xff]
  %v28 = vld [vmem:[%s0 + $0x44] sm:$0xff]
  %v29 = vld [vmem:[%s0 + $0x4c] sm:$0xf]
  %v30 = vunpack.c.l.bf16 %v18
  %v31 = vunpack.c.h.bf16 %v18
  %v32 = vunpack.c.l.bf16 %v19
  %v33 = vunpack.c.h.bf16 %v19
  %v34 = vunpack.c.l.bf16 %v20
  %v35 = vunpack.c.l.bf16 %v21
  %v36 = vunpack.c.h.bf16 %v21
  %v37 = vunpack.c.l.bf16 %v22
  %v38 = vunpack.c.h.bf16 %v22
  %v39 = vunpack.c.l.bf16 %v23
  %v40 = vunpack.c.l.bf16 %v24
  %v41 = vunpack.c.h.bf16 %v24
  %v42 = vunpack.c.l.bf16 %v25
  %v43 = vunpack.c.h.bf16 %v25
  %v44 = vunpack.c.l.bf16 %v26
  %v45 = vunpack.c.l.bf16 %v27
  %v46 = vunpack.c.h.bf16 %v27
  %v47 = vunpack.c.l.bf16 %v28
  %v48 = vunpack.c.h.bf16 %v28
  %v49 = vunpack.c.l.bf16 %v29
  %vm50 = vcmp.gt.f32.partialorder %v30, 0.0
  %vm51 = vcmp.gt.f32.partialorder %v31, 0.0
  %vm52 = vcmp.gt.f32.partialorder %v32, 0.0
  %vm53 = vcmp.gt.f32.partialorder %v33, 0.0
  %vm54 = vcmp.gt.f32.partialorder %v34, 0.0
  %vm55 = vcmp.gt.f32.partialorder %v35, 0.0
  %vm56 = vcmp.gt.f32.partialorder %v36, 0.0
  %vm57 = vcmp.gt.f32.partialorder %v37, 0.0
  %vm58 = vcmp.gt.f32.partialorder %v38, 0.0
  %vm59 = vcmp.gt.f32.partialorder %v39, 0.0
  %vm60 = vcmp.gt.f32.partialorder %v40, 0.0
  %vm61 = vcmp.gt.f32.partialorder %v41, 0.0
  %vm62 = vcmp.gt.f32.partialorder %v42, 0.0
  %vm63 = vcmp.gt.f32.partialorder %v43, 0.0
  %vm64 = vcmp.gt.f32.partialorder %v44, 0.0
  %vm65 = vcmp.gt.f32.partialorder %v45, 0.0
  %vm66 = vcmp.gt.f32.partialorder %v46, 0.0
  %vm67 = vcmp.gt.f32.partialorder %v47, 0.0
  %vm68 = vcmp.gt.f32.partialorder %v48, 0.0
  %vm69 = vcmp.gt.f32.partialorder %v49, 0.0
  %v70 = vmul.f32 %v30, 0.0
  %v71 = vmul.f32 %v31, 0.0
  %v72 = vmul.f32 %v32, 0.0
  %v73 = vmul.f32 %v33, 0.0
  %v74 = vmul.f32 %v34, 0.0
  %v75 = vmul.f32 %v35, 0.0
  %v76 = vmul.f32 %v36, 0.0
  %v77 = vmul.f32 %v37, 0.0
  %v78 = vmul.f32 %v38, 0.0
  %v79 = vmul.f32 %v39, 0.0
  %v80 = vmul.f32 %v40, 0.0
  %v81 = vmul.f32 %v41, 0.0
  %v82 = vmul.f32 %v42, 0.0
  %v83 = vmul.f32 %v43, 0.0
  %v84 = vmul.f32 %v44, 0.0
  %v85 = vmul.f32 %v45, 0.0
  %v86 = vmul.f32 %v46, 0.0
  %v87 = vmul.f32 %v47, 0.0
  %v88 = vmul.f32 %v48, 0.0
  %v89 = vmul.f32 %v49, 0.0
  %v90 = vsel %vm50, %v30, %v70
  %v91 = vsel %vm51, %v31, %v71
  %v92 = vsel %vm52, %v32, %v72
  %v93 = vsel %vm53, %v33, %v73
  %v94 = vsel %vm54, %v34, %v74
  %v95 = vsel %vm55, %v35, %v75
  %v96 = vsel %vm56, %v36, %v76
  %v97 = vsel %vm57, %v37, %v77
  %v98 = vsel %vm58, %v38, %v78
  %v99 = vsel %vm59, %v39, %v79
  %v100 = vsel %vm60, %v40, %v80
  %v101 = vsel %vm61, %v41, %v81
  %v102 = vsel %vm62, %v42, %v82
  %v103 = vsel %vm63, %v43, %v83
  %v104 = vsel %vm64, %v44, %v84
  %v105 = vsel %vm65, %v45, %v85
  %v106 = vsel %vm66, %v46, %v86
  %v107 = vsel %vm67, %v47, %v87
  %v108 = vsel %vm68, %v48, %v88
  %v109 = vsel %vm69, %v49, %v89
  %v110 = vpack.c.bf16 %v95, %v90
  %v111 = vpack.c.bf16 %v96, %v91
  %v112 = vpack.c.bf16 %v97, %v92
  %v113 = vpack.c.bf16 %v98, %v93
  %v114 = vpack.c.bf16 %v99, %v94
  %v115 = vpack.c.bf16 %v105, %v100
  %v116 = vpack.c.bf16 %v106, %v101
  %v117 = vpack.c.bf16 %v107, %v102
  %v118 = vpack.c.bf16 %v108, %v103
  %v119 = vpack.c.bf16 %v109, %v104
  %v120 = vld [vmem:[%s1] sm:$0xf]
  %v121 = vld [vmem:[%s1 + $0x4] sm:$0xf]
  %v122 = vld [vmem:[%s1 + $0x8] sm:$0xf]
  %v123 = vld [vmem:[%s1 + $0xc] sm:$0xf]
  %v124 = vld [vmem:[%s1 + $0x10] sm:$0xf]
  %v125 = vld [vmem:[%s1 + $0x14] sm:$0xf]
  %v126 = vld [vmem:[%s1 + $0x18] sm:$0xf]
  %v127 = vld [vmem:[%s1 + $0x1c] sm:$0xf]
  %v128 = vld [vmem:[%s1 + $0x20] sm:$0xf]
  %v129 = vld [vmem:[%s1 + $0x24] sm:$0xf]
  %v130 = vld [vmem:[%s1 + $0x28] sm:$0xf]
  %v131 = vld [vmem:[%s1 + $0x2c] sm:$0xf]
  %v132 = vld [vmem:[%s1 + $0x30] sm:$0xf]
  %v133 = vld [vmem:[%s1 + $0x34] sm:$0xf]
  %v134 = vld [vmem:[%s1 + $0x38] sm:$0xf]
  %v135 = vld [vmem:[%s1 + $0x3c] sm:$0xf]
  %v136 = vld [vmem:[%s1 + $0x40] sm:$0xf]
  %v137 = vld [vmem:[%s1 + $0x44] sm:$0xf]
  %v138 = vld [vmem:[%s1 + $0x48] sm:$0xf]
  %v139 = vld [vmem:[%s1 + $0x4c] sm:$0xf]
  %v140 = vld [vmem:[%s1 + $0x50] sm:$0xf]
  %v141 = vld [vmem:[%s1 + $0x54] sm:$0xf]
  %v142 = vld [vmem:[%s1 + $0x58] sm:$0xf]
  %v143 = vld [vmem:[%s1 + $0x5c] sm:$0xf]
  %v144 = vld [vmem:[%s1 + $0x60] sm:$0xf]
  %v145 = vld [vmem:[%s1 + $0x64] sm:$0xf]
  %v146 = vld [vmem:[%s1 + $0x68] sm:$0xf]
  %v147 = vld [vmem:[%s1 + $0x6c] sm:$0xf]
  %v148 = vld [vmem:[%s1 + $0x70] sm:$0xf]
  %v149 = vld [vmem:[%s1 + $0x74] sm:$0xf]
  %v150 = vld [vmem:[%s1 + $0x78] sm:$0xf]
  %v151 = vld [vmem:[%s1 + $0x7c] sm:$0xf]
  %v152 = vld [vmem:[%s1 + $0x80] sm:$0xf]
  %v153 = vld [vmem:[%s1 + $0x84] sm:$0xf]
  %v154 = vld [vmem:[%s1 + $0x88] sm:$0xf]
  %v155 = vld [vmem:[%s1 + $0x8c] sm:$0xf]
  %v156 = vld [vmem:[%s1 + $0x90] sm:$0xf]
  %v157 = vld [vmem:[%s1 + $0x94] sm:$0xf]
  %v158 = vld [vmem:[%s1 + $0x98] sm:$0xf]
  %v159 = vld [vmem:[%s1 + $0x9c] sm:$0xf]
  %v160 = vld [vmem:[%s1 + $0xa0] sm:$0xf]
  %v161 = vld [vmem:[%s1 + $0xa4] sm:$0xf]
  %v162 = vld [vmem:[%s1 + $0xa8] sm:$0xf]
  %v163 = vld [vmem:[%s1 + $0xac] sm:$0xf]
  %v164 = vld [vmem:[%s1 + $0xb0] sm:$0xf]
  %v165 = vld [vmem:[%s1 + $0xb4] sm:$0xf]
  %v166 = vld [vmem:[%s1 + $0xb8] sm:$0xf]
  %v167 = vld [vmem:[%s1 + $0xbc] sm:$0xf]
  %v168 = vld [vmem:[%s1 + $0xc0] sm:$0xf]
  %v169 = vld [vmem:[%s1 + $0xc4] sm:$0xf]
  %v170 = vld [vmem:[%s1 + $0xc8] sm:$0xf]
  %v171 = vld [vmem:[%s1 + $0xcc] sm:$0xf]
  %v172 = vld [vmem:[%s1 + $0xd0] sm:$0xf]
  %v173 = vld [vmem:[%s1 + $0xd4] sm:$0xf]
  %v174 = vld [vmem:[%s1 + $0xd8] sm:$0xf]
  %v175 = vld [vmem:[%s1 + $0xdc] sm:$0xf]
  %v176 = vld [vmem:[%s1 + $0xe0] sm:$0xf]
  %v177 = vld [vmem:[%s1 + $0xe4] sm:$0xf]
  %v178 = vld [vmem:[%s1 + $0xe8] sm:$0xf]
  %v179 = vld [vmem:[%s1 + $0xec] sm:$0xf]
  %v180 = vld [vmem:[%s1 + $0xf0] sm:$0xf]
  %v181 = vld [vmem:[%s1 + $0xf4] sm:$0xf]
  %v182 = vld [vmem:[%s1 + $0xf8] sm:$0xf]
  %v183 = vld [vmem:[%s1 + $0xfc] sm:$0xf]
  %v184 = vld [vmem:[%s1 + $0x100] sm:$0xf]
  %v185 = vld [vmem:[%s1 + $0x104] sm:$0xf]
  %v186 = vld [vmem:[%s1 + $0x108] sm:$0xf]
  %v187 = vld [vmem:[%s1 + $0x10c] sm:$0xf]
  %v188 = vld [vmem:[%s1 + $0x110] sm:$0xf]
  %v189 = vld [vmem:[%s1 + $0x114] sm:$0xf]
  %v190 = vld [vmem:[%s1 + $0x118] sm:$0xf]
  %v191 = vld [vmem:[%s1 + $0x11c] sm:$0xf]
  %v192 = vld [vmem:[%s2] sm:$0x1]
  %v194 = vlaneseq
  %v195 = vshrl.u32 %v194, 7
  %v196 = vsub.s32 0, %v195
  %v197 = vrot.slane %v192, %v196
  %v271 = vunpack.c.l.b16 %v120
  %v272 = vunpack.c.l.b16 %v121
  %v273 = vunpack.c.l.b16 %v122
  %v274 = vunpack.c.l.b16 %v123
  %v275 = vunpack.c.l.b16 %v124
  %v276 = vunpack.c.l.b16 %v125
  %v277 = vunpack.c.l.b16 %v126
  %v278 = vunpack.c.l.b16 %v127
  %v279 = vunpack.c.l.b16 %v128
  %v280 = vunpack.c.l.b16 %v129
  %v281 = vunpack.c.l.b16 %v130
  %v282 = vunpack.c.l.b16 %v131
  %v283 = vunpack.c.l.b16 %v132
  %v284 = vunpack.c.l.b16 %v133
  %v285 = vunpack.c.l.b16 %v134
  %v286 = vunpack.c.l.b16 %v135
  %v287 = vunpack.c.l.b16 %v136
  %v288 = vunpack.c.l.b16 %v137
  %v289 = vunpack.c.l.b16 %v138
  %v290 = vunpack.c.l.b16 %v139
  %v291 = vunpack.c.l.b16 %v140
  %v292 = vunpack.c.l.b16 %v141
  %v293 = vunpack.c.l.b16 %v142
  %v294 = vunpack.c.l.b16 %v143
  %v295 = vunpack.c.l.b16 %v144
  %v296 = vunpack.c.l.b16 %v145
  %v297 = vunpack.c.l.b16 %v146
  %v298 = vunpack.c.l.b16 %v147
  %v299 = vunpack.c.l.b16 %v148
  %v300 = vunpack.c.l.b16 %v149
  %v301 = vunpack.c.l.b16 %v150
  %v302 = vunpack.c.l.b16 %v151
  %v303 = vunpack.c.l.b16 %v152
  %v304 = vunpack.c.l.b16 %v153
  %v305 = vunpack.c.l.b16 %v154
  %v306 = vunpack.c.l.b16 %v155
  %v307 = vunpack.c.l.b16 %v156
  %v308 = vunpack.c.l.b16 %v157
  %v309 = vunpack.c.l.b16 %v158
  %v310 = vunpack.c.l.b16 %v159
  %v311 = vunpack.c.l.b16 %v160
  %v312 = vunpack.c.l.b16 %v161
  %v313 = vunpack.c.l.b16 %v162
  %v314 = vunpack.c.l.b16 %v163
  %v315 = vunpack.c.l.b16 %v164
  %v316 = vunpack.c.l.b16 %v165
  %v317 = vunpack.c.l.b16 %v166
  %v318 = vunpack.c.l.b16 %v167
  %v319 = vunpack.c.l.b16 %v168
  %v320 = vunpack.c.l.b16 %v169
  %v321 = vunpack.c.l.b16 %v170
  %v322 = vunpack.c.l.b16 %v171
  %v323 = vunpack.c.l.b16 %v172
  %v324 = vunpack.c.l.b16 %v173
  %v325 = vunpack.c.l.b16 %v174
  %v326 = vunpack.c.l.b16 %v175
  %v327 = vunpack.c.l.b16 %v176
  %v328 = vunpack.c.l.b16 %v177
  %v329 = vunpack.c.l.b16 %v178
  %v330 = vunpack.c.l.b16 %v179
  %v331 = vunpack.c.l.b16 %v180
  %v332 = vunpack.c.l.b16 %v181
  %v333 = vunpack.c.l.b16 %v182
  %v334 = vunpack.c.l.b16 %v183
  %v335 = vunpack.c.l.b16 %v184
  %v336 = vunpack.c.l.b16 %v185
  %v337 = vunpack.c.l.b16 %v186
  %v338 = vunpack.c.l.b16 %v187
  %v339 = vunpack.c.l.b16 %v188
  %v340 = vunpack.c.l.b16 %v189
  %v341 = vunpack.c.l.b16 %v190
  %v342 = vunpack.c.l.b16 %v191
  %v343 = vpack.c.b16 %v272, %v271
  %v344 = vpack.c.b16 %v274, %v273
  %v345 = vpack.c.b16 %v276, %v275
  %v346 = vpack.c.b16 %v278, %v277
  %v347 = vpack.c.b16 %v280, %v279
  %v348 = vpack.c.b16 %v282, %v281
  %v349 = vpack.c.b16 %v284, %v283
  %v350 = vpack.c.b16 %v286, %v285
  %v351 = vpack.c.b16 %v288, %v287
  %v352 = vpack.c.b16 %v290, %v289
  %v353 = vpack.c.b16 %v292, %v291
  %v354 = vpack.c.b16 %v294, %v293
  %v355 = vpack.c.b16 %v296, %v295
  %v356 = vpack.c.b16 %v298, %v297
  %v357 = vpack.c.b16 %v300, %v299
  %v358 = vpack.c.b16 %v302, %v301
  %v359 = vpack.c.b16 %v304, %v303
  %v360 = vpack.c.b16 %v306, %v305
  %v361 = vpack.c.b16 %v308, %v307
  %v362 = vpack.c.b16 %v310, %v309
  %v363 = vpack.c.b16 %v312, %v311
  %v364 = vpack.c.b16 %v314, %v313
  %v365 = vpack.c.b16 %v316, %v315
  %v366 = vpack.c.b16 %v318, %v317
  %v367 = vpack.c.b16 %v320, %v319
  %v368 = vpack.c.b16 %v322, %v321
  %v369 = vpack.c.b16 %v324, %v323
  %v370 = vpack.c.b16 %v326, %v325
  %v371 = vpack.c.b16 %v328, %v327
  %v372 = vpack.c.b16 %v330, %v329
  %v373 = vpack.c.b16 %v332, %v331
  %v374 = vpack.c.b16 %v334, %v333
  %v375 = vpack.c.b16 %v336, %v335
  %v376 = vpack.c.b16 %v338, %v337
  %v377 = vpack.c.b16 %v340, %v339
  %v378 = vpack.c.b16 %v342, %v341
  %vm415 = vcmask 523264
  %v417 = vsel %vm415, %v114, 0
  %v420 = vsel %vm415, %v119, 0
  %422 = vmatprep.subr.bf16.mxu0 0
  %423 = vmatpush1.bf16.msra.mxu0 %v343
  %424 = vmatprep.subr.bf16.mxu0 0
  %425 = vmatpush1.bf16.msra.mxu0 %v344
  %426 = vmatprep.subr.bf16.mxu0 0
  %427 = vmatpush1.bf16.msra.mxu0 %v345
  %428 = vmatprep.subr.bf16.mxu0 0
  %429 = vmatpush1.bf16.msra.mxu0 %v346
  %430 = vmatprep.subr.bf16.mxu0 0
  %431 = vmatpush1.bf16.msra.mxu0 %v347
  %432 = vmatprep.subr.bf16.mxu0 0
  %433 = vmatpush1.bf16.msra.mxu0 %v348
  %434 = vmatprep.subr.bf16.mxu0 0
  %435 = vmatpush1.bf16.msra.mxu0 %v349
  %436 = vmatprep.subr.bf16.mxu0 0
  %437 = vmatpush1.bf16.msra.mxu0 %v350
  %438 = vmatprep.subr.bf16.mxu0 0
  %439 = vmatpush1.bf16.msra.mxu0 %v351
  %440 = vmatprep.subr.bf16.mxu0 0
  %441 = vmatpush1.bf16.msra.mxu0 %v352
  %442 = vmatprep.subr.bf16.mxu0 0
  %443 = vmatpush1.bf16.msra.mxu0 %v353
  %444 = vmatprep.subr.bf16.mxu0 0
  %445 = vmatpush1.bf16.msra.mxu0 %v354
  %446 = vmatprep.subr.bf16.mxu0 0
  %447 = vmatpush1.bf16.msra.mxu0 %v355
  %448 = vmatprep.subr.bf16.mxu0 0
  %449 = vmatpush1.bf16.msra.mxu0 %v356
  %450 = vmatprep.subr.bf16.mxu0 0
  %451 = vmatpush1.bf16.msra.mxu0 %v357
  %452 = vmatprep.subr.bf16.mxu0 0
  %453 = vmatpush1.bf16.msra.mxu0 %v358
  %454 = vmatprep.mubr.bf16.mxu0 %v111
  %455 = vmatmul.mubr.bf16.gmra.mrb[0].mxu0 %v110
  %v456 = vpop.f32.mrb[0].mxu0
  %v457 = vadd.f32 %v197, %v456
  %v458 = vpop.f32.mrb[0].mxu0
  %v459 = vpop.f32.mrb[0].mxu0
  %v460 = vadd.f32 %v197, %v459
  %v461 = vpop.f32.mrb[0].mxu0
  %462 = vmatprep.mubr.bf16.mxu0 %v116
  %463 = vmatmul.mubr.bf16.gmra.mrb[0].mxu0 %v115
  %v464 = vpop.f32.mrb[0].mxu0
  %v465 = vadd.f32 %v197, %v464
  %v466 = vpop.f32.mrb[0].mxu0
  %v467 = vpop.f32.mrb[0].mxu0
  %v468 = vadd.f32 %v197, %v467
  %v469 = vpop.f32.mrb[0].mxu0
  %470 = vdwg.mxu0
  %471 = vmatprep.subr.bf16.mxu0 0
  %472 = vmatpush1.bf16.msra.mxu0 %v359
  %473 = vmatprep.subr.bf16.mxu0 0
  %474 = vmatpush1.bf16.msra.mxu0 %v360
  %475 = vmatprep.subr.bf16.mxu0 0
  %476 = vmatpush1.bf16.msra.mxu0 %v361
  %477 = vmatprep.subr.bf16.mxu0 0
  %478 = vmatpush1.bf16.msra.mxu0 %v362
  %479 = vmatprep.subr.bf16.mxu0 0
  %480 = vmatpush1.bf16.msra.mxu0 %v363
  %481 = vmatprep.subr.bf16.mxu0 0
  %482 = vmatpush1.bf16.msra.mxu0 %v364
  %483 = vmatprep.subr.bf16.mxu0 0
  %484 = vmatpush1.bf16.msra.mxu0 %v365
  %485 = vmatprep.subr.bf16.mxu0 0
  %486 = vmatpush1.bf16.msra.mxu0 %v366
  %487 = vmatprep.subr.bf16.mxu0 0
  %488 = vmatpush1.bf16.msra.mxu0 %v367
  %489 = vmatprep.subr.bf16.mxu0 0
  %490 = vmatpush1.bf16.msra.mxu0 %v368
  %491 = vmatprep.subr.bf16.mxu0 0
  %492 = vmatpush1.bf16.msra.mxu0 %v369
  %493 = vmatprep.subr.bf16.mxu0 0
  %494 = vmatpush1.bf16.msra.mxu0 %v370
  %495 = vmatprep.subr.bf16.mxu0 0
  %496 = vmatpush1.bf16.msra.mxu0 %v371
  %497 = vmatprep.subr.bf16.mxu0 0
  %498 = vmatpush1.bf16.msra.mxu0 %v372
  %499 = vmatprep.subr.bf16.mxu0 0
  %500 = vmatpush1.bf16.msra.mxu0 %v373
  %501 = vmatprep.subr.bf16.mxu0 0
  %502 = vmatpush1.bf16.msra.mxu0 %v374
  %503 = vmatprep.mubr.bf16.mxu0 %v113
  %504 = vmatmul.mubr.bf16.gmra.mrb[0].mxu0 %v112
  %v505 = vpop.f32.mrb[0].mxu0
  %v506 = vadd.f32 %v457, %v505
  %v507 = vpop.f32.mrb[0].mxu0
  %v508 = vpop.f32.mrb[0].mxu0
  %v509 = vadd.f32 %v460, %v508
  %v510 = vpop.f32.mrb[0].mxu0
  %511 = vmatprep.mubr.bf16.mxu0 %v118
  %512 = vmatmul.mubr.bf16.gmra.mrb[0].mxu0 %v117
  %v513 = vpop.f32.mrb[0].mxu0
  %v514 = vadd.f32 %v465, %v513
  %v515 = vpop.f32.mrb[0].mxu0
  %v516 = vpop.f32.mrb[0].mxu0
  %v517 = vadd.f32 %v468, %v516
  %v518 = vpop.f32.mrb[0].mxu0
  %519 = vdwg.mxu0
  %520 = vmatprep.subr.bf16.mxu0 0
  %521 = vmatpush1.bf16.msra.mxu0 %v375
  %522 = vmatprep.subr.bf16.mxu0 0
  %523 = vmatpush1.bf16.msra.mxu0 %v376
  %524 = vmatprep.subr.bf16.mxu0 0
  %525 = vmatpush1.bf16.msra.mxu0 %v377
  %526 = vmatprep.subr.bf16.mxu0 0
  %527 = vmatpush1.bf16.msra.mxu0 %v378
  %528 = vmatprep.subr.bf16.mxu0 0
  %529 = vmatpush1.bf16.msra.mxu0 0
  %530 = vmatprep.subr.bf16.mxu0 0
  %531 = vmatpush1.bf16.msra.mxu0 0
  %532 = vmatprep.subr.bf16.mxu0 0
  %533 = vmatpush1.bf16.msra.mxu0 0
  %534 = vmatprep.subr.bf16.mxu0 0
  %535 = vmatpush1.bf16.msra.mxu0 0
  %536 = vmatprep.subr.bf16.mxu0 0
  %537 = vmatpush1.bf16.msra.mxu0 0
  %538 = vmatprep.subr.bf16.mxu0 0
  %539 = vmatpush1.bf16.msra.mxu0 0
  %540 = vmatprep.subr.bf16.mxu0 0
  %541 = vmatpush1.bf16.msra.mxu0 0
  %542 = vmatprep.subr.bf16.mxu0 0
  %543 = vmatpush1.bf16.msra.mxu0 0
  %544 = vmatprep.subr.bf16.mxu0 0
  %545 = vmatpush1.bf16.msra.mxu0 0
  %546 = vmatprep.subr.bf16.mxu0 0
  %547 = vmatpush1.bf16.msra.mxu0 0
  %548 = vmatprep.subr.bf16.mxu0 0
  %549 = vmatpush1.bf16.msra.mxu0 0
  %550 = vmatprep.subr.bf16.mxu0 0
  %551 = vmatpush1.bf16.msra.mxu0 0
  %552 = vmatprep.mubr.bf16.mxu0 0
  %553 = vmatmul.mubr.bf16.gmra.mrb[0].mxu0 %v417
  %v554 = vpop.f32.mrb[0].mxu0
  %v555 = vadd.f32 %v506, %v554
  %v556 = vpop.f32.mrb[0].mxu0
  %v557 = vpop.f32.mrb[0].mxu0
  %v558 = vadd.f32 %v509, %v557
  %v559 = vpop.f32.mrb[0].mxu0
  %560 = vmatprep.mubr.bf16.mxu0 0
  %561 = vmatmul.mubr.bf16.gmra.mrb[0].mxu0 %v420
  %v562 = vpop.f32.mrb[0].mxu0
  %v563 = vadd.f32 %v514, %v562
  %v564 = vpop.f32.mrb[0].mxu0
  %v565 = vpop.f32.mrb[0].mxu0
  %v566 = vadd.f32 %v517, %v565
  %v567 = vpop.f32.mrb[0].mxu0
  %568 = vdwg.mxu0
  %569 = vst.msk [vmem:[%s3] sm:$0xff] %vm415, %v555
  %570 = vst.msk [vmem:[%s3 + $0x8] sm:$0xff] %vm415, %v558
  %571 = vst.msk [vmem:[%s3 + $0x10] sm:$0xff] %vm415, %v563
  %572 = vst.msk [vmem:[%s3 + $0x18] sm:$0xff] %vm415, %v566
  %p573 = scmp.eq.s32.totalorder 0, 0
  // Predicated region
  $region14: #{unet_forward.17} parent=0 // pred_check
    %p574 = pneg %p573
  $region15: #{unet_forward.17} parent=0 // pred_check_branch
    %576 = sbr.rel (%p574) target = $region17
  $region16: #{unet_forward.17} parent=0 // pred_region
    %vm577 = vcmask 516096
    %578 = vst.msk [vmem:[%s4] sm:$0x1] %vm577, 0.0
    %579 = vst.msk [vmem:[%s5] sm:$0x1] %vm577, 0.0
  $region17: #{unet_forward.17} parent=0 // pred_fallthru
    _
  %v580 = vld [vmem:[%s4] sm:$0x1]
  %v581 = vsel %vm415, %v555, 0.0
  %v582 = vsel %vm415, %v558, 0.0
  %v583 = vadd.f32 %v581, %v582
  %v584 = vsel %vm415, %v563, 0.0
  %v585 = vadd.f32 %v583, %v584
  %v586 = vsel %vm415, %v566, 0.0
  %v587 = vadd.f32 %v585, %v586
  %v588 = vrot.slane %v587, 4
  %v589 = vadd.f32 %v587, %v588
  %v590 = vrot.slane %v589, 2
  %v591 = vadd.f32 %v589, %v590
  %v592 = vrot.slane %v591, 1
  %v593 = vadd.f32 %v591, %v592
  %v594 = vadd.f32 %v580, %v593
  %vm595 = vcmask 516096
  %596 = vst.msk [vmem:[%s4] sm:$0x1] %vm595, %v594
  %v597 = vld [vmem:[%s5] sm:$0x1]
  %v598 = vmul.f32 %v555, %v555
  %v599 = vmul.f32 %v558, %v558
  %v600 = vmul.f32 %v563, %v563
  %v601 = vmul.f32 %v566, %v566
  %v602 = vsel %vm415, %v598, 0.0
  %v603 = vsel %vm415, %v599, 0.0
  %v604 = vadd.f32 %v602, %v603
  %v605 = vsel %vm415, %v600, 0.0
  %v606 = vadd.f32 %v604, %v605
  %v607 = vsel %vm415, %v601, 0.0
  %v608 = vadd.f32 %v606, %v607
  %v609 = vrot.slane %v608, 4
  %v610 = vadd.f32 %v608, %v609
  %v611 = vrot.slane %v610, 2
  %v612 = vadd.f32 %v610, %v611
  %v613 = vrot.slane %v612, 1
  %v614 = vadd.f32 %v612, %v613
  %v615 = vadd.f32 %v597, %v614
  %616 = vst.msk [vmem:[%s5] sm:$0x1] %vm595, %v615
  // Predicated region
  $region18: #{unet_forward.17} parent=0 // pred_check
    _
  $region19: #{unet_forward.17} parent=0 // pred_check_branch
    %618 = sbr.rel (0) target = $region21
  $region20: #{unet_forward.17} parent=0 // pred_region
    _
  $region21: #{unet_forward.17} parent=0 // pred_fallthru
    _
  // Predicated region
  $region22: #{unet_forward.17} parent=0 // pred_check
    _
  $region23: #{unet_forward.17} parent=0 // pred_check_branch
    %620 = sbr.rel (0) target = $region25
  $region24: #{unet_forward.17} parent=0 // pred_region
    _
  $region25: #{unet_forward.17} parent=0 // pred_fallthru
    _
  // Predicated region
  $region26: #{unet_forward.17} parent=0 // pred_check
    _
  $region27: #{unet_forward.17} parent=0 // pred_check_branch
    %622 = sbr.rel (0) target = $region29
  $region28: #{unet_forward.17} parent=0 // pred_region
    _
  $region29: #{unet_forward.17} parent=0 // pred_fallthru
    _
  // Predicated region
  $region30: #{unet_forward.17} parent=0 // pred_check
    _
  $region31: #{unet_forward.17} parent=0 // pred_check_branch
    %624 = sbr.rel (0) target = $region33
  $region32: #{unet_forward.17} parent=0 // pred_region
    _
  $region33: #{unet_forward.17} parent=0 // pred_fallthru
    _
  // Predicated region
  $region34: #{unet_forward.17} parent=0 // pred_check
    _
  $region35: #{unet_forward.17} parent=0 // pred_check_branch
    %626 = sbr.rel (0) target = $region37
  $region36: #{unet_forward.17} parent=0 // pred_region
    _
  $region37: #{unet_forward.17} parent=0 // pred_fallthru
    _
  // Predicated region
  $region38: #{unet_forward.17} parent=0 // pred_check
    _
  $region39: #{unet_forward.17} parent=0 // pred_check_branch
    %628 = sbr.rel (0) target = $region41
  $region40: #{unet_forward.17} parent=0 // pred_region
    _
  $region41: #{unet_forward.17} parent=0 // pred_fallthru
    _

// kernel: unet_forward.18
$region0: #{unet_forward.18}
  #allocation0 [shape = 'u32[]', space=smem, size = 0x4, offset = 0x4, fixed_abs, tag = 'smem constant byte address 0x4 - core index']
  #allocation1 [shape = 'u32[144,128]{1,0:T(1,128)}', space=vmem, size = 0x12000, scoped, tag = 'internal scratch']
  %s0 = inlined_call_operand.vmem [shape: bf16[128,288], index: 0, kind: input, shape index: {}]
  %s1 = inlined_call_operand.vmem [shape: bf16[288,32], index: 1, kind: input, shape index: {}]
  %s2 = inlined_call_operand.vmem [shape: f32[1,32], index: 2, kind: input, shape index: {}]
  %s3 = inlined_call_operand.vmem [shape: f32[128,32], index: 3, kind: output, shape index: {0}]
  %s4 = inlined_call_operand.vmem [shape: f32[1,32], index: 4, kind: output, shape index: {1}]
  %s5 = inlined_call_operand.vmem [shape: f32[1,32], index: 5, kind: output, shape index: {2}]
  %6 = xla_tuple %s3, %s4, %s5
  %s7 = sld [smem:[#allocation0]]
  $region42: #{unet_forward.18} parent=0
    _
  %s9 = ssub.s32 1, %s7
  %s10 = scalar_select 0, %s9, %s7
  // Predicated region
  $region2: #{unet_forward.18} parent=0 // pred_check
    _
  $region3: #{unet_forward.18} parent=0 // pred_check_branch
    %12 = sbr.rel (0) target = $region5
  $region4: #{unet_forward.18} parent=0 // pred_region
    _
  $region5: #{unet_forward.18} parent=0 // pred_fallthru
    _
  // Predicated region
  $region6: #{unet_forward.18} parent=0 // pred_check
    _
  $region7: #{unet_forward.18} parent=0 // pred_check_branch
    %14 = sbr.rel (0) target = $region9
  $region8: #{unet_forward.18} parent=0 // pred_region
    _
  $region9: #{unet_forward.18} parent=0 // pred_fallthru
    _
  // Predicated region
  $region10: #{unet_forward.18} parent=0 // pred_check
    _
  $region11: #{unet_forward.18} parent=0 // pred_check_branch
    %16 = sbr.rel (0) target = $region13
  $region12: #{unet_forward.18} parent=0 // pred_region
    _
  $region13: #{unet_forward.18} parent=0 // pred_fallthru
    _
  %v18 = vld [vmem:[%s0] sm:$0xff]
  %v19 = vld [vmem:[%s0 + $0x8] sm:$0xf]
  %v20 = vld [vmem:[%s0 + $0xc] sm:$0xff]
  %v21 = vld [vmem:[%s0 + $0x14] sm:$0xf]
  %v22 = vld [vmem:[%s0 + $0x18] sm:$0xff]
  %v23 = vld [vmem:[%s0 + $0x20] sm:$0xf]
  %v24 = vld [vmem:[%s0 + $0x24] sm:$0xff]
  %v25 = vld [vmem:[%s0 + $0x2c] sm:$0xf]
  %v26 = vld [vmem:[%s0 + $0x30] sm:$0xff]
  %v27 = vld [vmem:[%s0 + $0x38] sm:$0xf]
  %v28 = vld [vmem:[%s0 + $0x3c] sm:$0xff]
  %v29 = vld [vmem:[%s0 + $0x44] sm:$0xf]
  %v30 = vld [vmem:[%s0 + $0x48] sm:$0xff]
  %v31 = vld [vmem:[%s0 + $0x50] sm:$0xf]
  %v32 = vld [vmem:[%s0 + $0x54] sm:$0xff]
  %v33 = vld [vmem:[%s0 + $0x5c] sm:$0xf]
  %v34 = vld [vmem:[%s0 + $0x60] sm:$0xff]
  %v35 = vld [vmem:[%s0 + $0x68] sm:$0xf]
  %v36 = vld [vmem:[%s0 + $0x6c] sm:$0xff]
  %v37 = vld [vmem:[%s0 + $0x74] sm:$0xf]
  %v38 = vld [vmem:[%s0 + $0x78] sm:$0xff]
  %v39 = vld [vmem:[%s0 + $0x80] sm:$0xf]
  %v40 = vld [vmem:[%s0 + $0x84] sm:$0xff]
  %v41 = vld [vmem:[%s0 + $0x8c] sm:$0xf]
  %v42 = vld [vmem:[%s0 + $0x90] sm:$0xff]
  %v43 = vld [vmem:[%s0 + $0x98] sm:$0xf]
  %v44 = vld [vmem:[%s0 + $0x9c] sm:$0xff]
  %v45 = vld [vmem:[%s0 + $0xa4] sm:$0xf]
  %v46 = vld [vmem:[%s0 + $0xa8] sm:$0xff]
  %v47 = vld [vmem:[%s0 + $0xb0] sm:$0xf]
  %v48 = vld [vmem:[%s0 + $0xb4] sm:$0xff]
  %v49 = vld [vmem:[%s0 + $0xbc] sm:$0xf]
  %v50 = vunpack.c.l.bf16 %v18
  %v51 = vunpack.c.h.bf16 %v18
  %v52 = vunpack.c.l.bf16 %v19
  %v53 = vunpack.c.l.bf16 %v20
  %v54 = vunpack.c.h.bf16 %v20
  %v55 = vunpack.c.l.bf16 %v21
  %v56 = vunpack.c.l.bf16 %v22
  %v57 = vunpack.c.h.bf16 %v22
  %v58 = vunpack.c.l.bf16 %v23
  %v59 = vunpack.c.l.bf16 %v24
  %v60 = vunpack.c.h.bf16 %v24
  %v61 = vunpack.c.l.bf16 %v25
  %v62 = vunpack.c.l.bf16 %v26
  %v63 = vunpack.c.h.bf16 %v26
  %v64 = vunpack.c.l.bf16 %v27
  %v65 = vunpack.c.l.bf16 %v28
  %v66 = vunpack.c.h.bf16 %v28
  %v67 = vunpack.c.l.bf16 %v29
  %v68 = vunpack.c.l.bf16 %v30
  %v69 = vunpack.c.h.bf16 %v30
  %v70 = vunpack.c.l.bf16 %v31
  %v71 = vunpack.c.l.bf16 %v32
  %v72 = vunpack.c.h.bf16 %v32
  %v73 = vunpack.c.l.bf16 %v33
  %v74 = vunpack.c.l.bf16 %v34
  %v75 = vunpack.c.h.bf16 %v34
  %v76 = vunpack.c.l.bf16 %v35
  %v77 = vunpack.c.l.bf16 %v36
  %v78 = vunpack.c.h.bf16 %v36
  %v79 = vunpack.c.l.bf16 %v37
  %v80 = vunpack.c.l.bf16 %v38
  %v81 = vunpack.c.h.bf16 %v38
  %v82 = vunpack.c.l.bf16 %v39
  %v83 = vunpack.c.l.bf16 %v40
  %v84 = vunpack.c.h.bf16 %v40
  %v85 = vunpack.c.l.bf16 %v41
  %v86 = vunpack.c.l.bf16 %v42
  %v87 = vunpack.c.h.bf16 %v42
  %v88 = vunpack.c.l.bf16 %v43
  %v89 = vunpack.c.l.bf16 %v44
  %v90 = vunpack.c.h.bf16 %v44
  %v91 = vunpack.c.l.bf16 %v45
  %v92 = vunpack.c.l.bf16 %v46
  %v93 = vunpack.c.h.bf16 %v46
  %v94 = vunpack.c.l.bf16 %v47
  %v95 = vunpack.c.l.bf16 %v48
  %v96 = vunpack.c.h.bf16 %v48
  %v97 = vunpack.c.l.bf16 %v49
  %vm98 = vcmp.gt.f32.partialorder %v50, 0.0
  %vm99 = vcmp.gt.f32.partialorder %v51, 0.0
  %vm100 = vcmp.gt.f32.partialorder %v52, 0.0
  %vm101 = vcmp.gt.f32.partialorder %v53, 0.0
  %vm102 = vcmp.gt.f32.partialorder %v54, 0.0
  %vm103 = vcmp.gt.f32.partialorder %v55, 0.0
  %vm104 = vcmp.gt.f32.partialorder %v56, 0.0
  %vm105 = vcmp.gt.f32.partialorder %v57, 0.0
  %vm106 = vcmp.gt.f32.partialorder %v58, 0.0
  %vm107 = vcmp.gt.f32.partialorder %v59, 0.0
  %vm108 = vcmp.gt.f32.partialorder %v60, 0.0
  %vm109 = vcmp.gt.f32.partialorder %v61, 0.0
  %vm110 = vcmp.gt.f32.partialorder %v62, 0.0
  %vm111 = vcmp.gt.f32.partialorder %v63, 0.0
  %vm112 = vcmp.gt.f32.partialorder %v64, 0.0
  %vm113 = vcmp.gt.f32.partialorder %v65, 0.0
  %vm114 = vcmp.gt.f32.partialorder %v66, 0.0
  %vm115 = vcmp.gt.f32.partialorder %v67, 0.0
  %vm116 = vcmp.gt.f32.partialorder %v68, 0.0
  %vm117 = vcmp.gt.f32.partialorder %v69, 0.0
  %vm118 = vcmp.gt.f32.partialorder %v70, 0.0
  %vm119 = vcmp.gt.f32.partialorder %v71, 0.0
  %vm120 = vcmp.gt.f32.partialorder %v72, 0.0
  %vm121 = vcmp.gt.f32.partialorder %v73, 0.0
  %vm122 = vcmp.gt.f32.partialorder %v74, 0.0
  %vm123 = vcmp.gt.f32.partialorder %v75, 0.0
  %vm124 = vcmp.gt.f32.partialorder %v76, 0.0
  %vm125 = vcmp.gt.f32.partialorder %v77, 0.0
  %vm126 = vcmp.gt.f32.partialorder %v78, 0.0
  %vm127 = vcmp.gt.f32.partialorder %v79, 0.0
  %vm128 = vcmp.gt.f32.partialorder %v80, 0.0
  %vm129 = vcmp.gt.f32.partialorder %v81, 0.0
  %vm130 = vcmp.gt.f32.partialorder %v82, 0.0
  %vm131 = vcmp.gt.f32.partialorder %v83, 0.0
  %vm132 = vcmp.gt.f32.partialorder %v84, 0.0
  %vm133 = vcmp.gt.f32.partialorder %v85, 0.0
  %vm134 = vcmp.gt.f32.partialorder %v86, 0.0
  %vm135 = vcmp.gt.f32.partialorder %v87, 0.0
  %vm136 = vcmp.gt.f32.partialorder %v88, 0.0
  %vm137 = vcmp.gt.f32.partialorder %v89, 0.0
  %vm138 = vcmp.gt.f32.partialorder %v90, 0.0
  %vm139 = vcmp.gt.f32.partialorder %v91, 0.0
  %vm140 = vcmp.gt.f32.partialorder %v92, 0.0
  %vm141 = vcmp.gt.f32.partialorder %v93, 0.0
  %vm142 = vcmp.gt.f32.partialorder %v94, 0.0
  %vm143 = vcmp.gt.f32.partialorder %v95, 0.0
  %vm144 = vcmp.gt.f32.partialorder %v96, 0.0
  %vm145 = vcmp.gt.f32.partialorder %v97, 0.0
  %v146 = vmul.f32 %v50, 0.0
  %v147 = vmul.f32 %v51, 0.0
  %v148 = vmul.f32 %v52, 0.0
  %v149 = vmul.f32 %v53, 0.0
  %v150 = vmul.f32 %v54, 0.0
  %v151 = vmul.f32 %v55, 0.0
  %v152 = vmul.f32 %v56, 0.0
  %v153 = vmul.f32 %v57, 0.0
  %v154 = vmul.f32 %v58, 0.0
  %v155 = vmul.f32 %v59, 0.0
  %v156 = vmul.f32 %v60, 0.0
  %v157 = vmul.f32 %v61, 0.0
  %v158 = vmul.f32 %v62, 0.0
  %v159 = vmul.f32 %v63, 0.0
  %v160 = vmul.f32 %v64, 0.0
  %v161 = vmul.f32 %v65, 0.0
  %v162 = vmul.f32 %v66, 0.0
  %v163 = vmul.f32 %v67, 0.0
  %v164 = vmul.f32 %v68, 0.0
  %v165 = vmul.f32 %v69, 0.0
  %v166 = vmul.f32 %v70, 0.0
  %v167 = vmul.f32 %v71, 0.0
  %v168 = vmul.f32 %v72, 0.0
  %v169 = vmul.f32 %v73, 0.0
  %v170 = vmul.f32 %v74, 0.0
  %v171 = vmul.f32 %v75, 0.0
  %v172 = vmul.f32 %v76, 0.0
  %v173 = vmul.f32 %v77, 0.0
  %v174 = vmul.f32 %v78, 0.0
  %v175 = vmul.f32 %v79, 0.0
  %v176 = vmul.f32 %v80, 0.0
  %v177 = vmul.f32 %v81, 0.0
  %v178 = vmul.f32 %v82, 0.0
  %v179 = vmul.f32 %v83, 0.0
  %v180 = vmul.f32 %v84, 0.0
  %v181 = vmul.f32 %v85, 0.0
  %v182 = vmul.f32 %v86, 0.0
  %v183 = vmul.f32 %v87, 0.0
  %v184 = vmul.f32 %v88, 0.0
  %v185 = vmul.f32 %v89, 0.0
  %v186 = vmul.f32 %v90, 0.0
  %v187 = vmul.f32 %v91, 0.0
  %v188 = vmul.f32 %v92, 0.0
  %v189 = vmul.f32 %v93, 0.0
  %v190 = vmul.f32 %v94, 0.0
  %v191 = vmul.f32 %v95, 0.0
  %v192 = vmul.f32 %v96, 0.0
  %v193 = vmul.f32 %v97, 0.0
  %v194 = vsel %vm98, %v50, %v146
  %v195 = vsel %vm99, %v51, %v147
  %v196 = vsel %vm100, %v52, %v148
  %v197 = vsel %vm101, %v53, %v149
  %v198 = vsel %vm102, %v54, %v150
  %v199 = vsel %vm103, %v55, %v151
  %v200 = vsel %vm104, %v56, %v152
  %v201 = vsel %vm105, %v57, %v153
  %v202 = vsel %vm106, %v58, %v154
  %v203 = vsel %vm107, %v59, %v155
  %v204 = vsel %vm108, %v60, %v156
  %v205 = vsel %vm109, %v61, %v157
  %v206 = vsel %vm110, %v62, %v158
  %v207 = vsel %vm111, %v63, %v159
  %v208 = vsel %vm112, %v64, %v160
  %v209 = vsel %vm113, %v65, %v161
  %v210 = vsel %vm114, %v66, %v162
  %v211 = vsel %vm115, %v67, %v163
  %v212 = vsel %vm116, %v68, %v164
  %v213 = vsel %vm117, %v69, %v165
  %v214 = vsel %vm118, %v70, %v166
  %v215 = vsel %vm119, %v71, %v167
  %v216 = vsel %vm120, %v72, %v168
  %v217 = vsel %vm121, %v73, %v169
  %v218 = vsel %vm122, %v74, %v170
  %v219 = vsel %vm123, %v75, %v171
  %v220 = vsel %vm124, %v76, %v172
  %v221 = vsel %vm125, %v77, %v173
  %v222 = vsel %vm126, %v78, %v174
  %v223 = vsel %vm127, %v79, %v175
  %v224 = vsel %vm128, %v80, %v176
  %v225 = vsel %vm129, %v81, %v177
  %v226 = vsel %vm130, %v82, %v178
  %v227 = vsel %vm131, %v83, %v179
  %v228 = vsel %vm132, %v84, %v180
  %v229 = vsel %vm133, %v85, %v181
  %v230 = vsel %vm134, %v86, %v182
  %v231 = vsel %vm135, %v87, %v183
  %v232 = vsel %vm136, %v88, %v184
  %v233 = vsel %vm137, %v89, %v185
  %v234 = vsel %vm138, %v90, %v186
  %v235 = vsel %vm139, %v91, %v187
  %v236 = vsel %vm140, %v92, %v188
  %v237 = vsel %vm141, %v93, %v189
  %v238 = vsel %vm142, %v94, %v190
  %v239 = vsel %vm143, %v95, %v191
  %v240 = vsel %vm144, %v96, %v192
  %v241 = vsel %vm145, %v97, %v193
  %v242 = vpack.c.bf16 %v197, %v194
  %v243 = vpack.c.bf16 %v198, %v195
  %v244 = vpack.c.bf16 %v199, %v196
  %v245 = vpack.c.bf16 %v203, %v200
  %v246 = vpack.c.bf16 %v204, %v201
  %v247 = vpack.c.bf16 %v205, %v202
  %v248 = vpack.c.bf16 %v209, %v206
  %v249 = vpack.c.bf16 %v210, %v207
  %v250 = vpack.c.bf16 %v211, %v208
  %v251 = vpack.c.bf16 %v215, %v212
  %v252 = vpack.c.bf16 %v216, %v213
  %v253 = vpack.c.bf16 %v217, %v214
  %v254 = vpack.c.bf16 %v221, %v218
  %v255 = vpack.c.bf16 %v222, %v219
  %v256 = vpack.c.bf16 %v223, %v220
  %v257 = vpack.c.bf16 %v227, %v224
  %v258 = vpack.c.bf16 %v228, %v225
  %v259 = vpack.c.bf16 %v229, %v226
  %v260 = vpack.c.bf16 %v233, %v230
  %v261 = vpack.c.bf16 %v234, %v231
  %v262 = vpack.c.bf16 %v235, %v232
  %v263 = vpack.c.bf16 %v239, %v236
  %v264 = vpack.c.bf16 %v240, %v237
  %v265 = vpack.c.bf16 %v241, %v238
  %v266 = vld [vmem:[%s1] sm:$0xf]
  %v267 = vld [vmem:[%s1 + $0x4] sm:$0xf]
  %v268 = vld [vmem:[%s1 + $0x8] sm:$0xf]
  %v269 = vld [vmem:[%s1 + $0xc] sm:$0xf]
  %v270 = vld [vmem:[%s1 + $0x10] sm:$0xf]
  %v271 = vld [vmem:[%s1 + $0x14] sm:$0xf]
  %v272 = vld [vmem:[%s1 + $0x18] sm:$0xf]
  %v273 = vld [vmem:[%s1 + $0x1c] sm:$0xf]
  %v274 = vld [vmem:[%s1 + $0x20] sm:$0xf]
  %v275 = vld [vmem:[%s1 + $0x24] sm:$0xf]
  %v276 = vld [vmem:[%s1 + $0x28] sm:$0xf]
  %v277 = vld [vmem:[%s1 + $0x2c] sm:$0xf]
  %v278 = vld [vmem:[%s1 + $0x30] sm:$0xf]
  %v279 = vld [vmem:[%s1 + $0x34] sm:$0xf]
  %v280 = vld [vmem:[%s1 + $0x38] sm:$0xf]
  %v281 = vld [vmem:[%s1 + $0x3c] sm:$0xf]
  %v282 = vld [vmem:[%s1 + $0x40] sm:$0xf]
  %v283 = vld [vmem:[%s1 + $0x44] sm:$0xf]
  %v284 = vld [vmem:[%s1 + $0x48] sm:$0xf]
  %v285 = vld [vmem:[%s1 + $0x4c] sm:$0xf]
  %v286 = vld [vmem:[%s1 + $0x50] sm:$0xf]
  %v287 = vld [vmem:[%s1 + $0x54] sm:$0xf]
  %v288 = vld [vmem:[%s1 + $0x58] sm:$0xf]
  %v289 = vld [vmem:[%s1 + $0x5c] sm:$0xf]
  %v290 = vld [vmem:[%s1 + $0x60] sm:$0xf]
  %v291 = vld [vmem:[%s1 + $0x64] sm:$0xf]
  %v292 = vld [vmem:[%s1 + $0x68] sm:$0xf]
  %v293 = vld [vmem:[%s1 + $0x6c] sm:$0xf]
  %v294 = vld [vmem:[%s1 + $0x70] sm:$0xf]
  %v295 = vld [vmem:[%s1 + $0x74] sm:$0xf]
  %v296 = vld [vmem:[%s1 + $0x78] sm:$0xf]
  %v297 = vld [vmem:[%s1 + $0x7c] sm:$0xf]
  %v298 = vld [vmem:[%s1 + $0x80] sm:$0xf]
  %v299 = vld [vmem:[%s1 + $0x84] sm:$0xf]
  %v300 = vld [vmem:[%s1 + $0x88] sm:$0xf]
  %v301 = vld [vmem:[%s1 + $0x8c] sm:$0xf]
  %v302 = vld [vmem:[%s2] sm:$0x1]
  %v304 = vlaneseq
  %v305 = vshrl.u32 %v304, 7
  %v306 = vsub.s32 0, %v305
  %v307 = vrot.slane %v302, %v306
  %v345 = vunpack.c.l.b16 %v266
  %v346 = vunpack.c.l.b16 %v267
  %v347 = vunpack.c.l.b16 %v268
  %v348 = vunpack.c.l.b16 %v269
  %v349 = vunpack.c.l.b16 %v270
  %v350 = vunpack.c.l.b16 %v271
  %v351 = vunpack.c.l.b16 %v272
  %v352 = vunpack.c.l.b16 %v273
  %v353 = vunpack.c.l.b16 %v274
  %v354 = vunpack.c.l.b16 %v275
  %v355 = vunpack.c.l.b16 %v276
  %v356 = vunpack.c.l.b16 %v277
  %v357 = vunpack.c.l.b16 %v278
  %v358 = vunpack.c.l.b16 %v279
  %v359 = vunpack.c.l.b16 %v280
  %v360 = vunpack.c.l.b16 %v281
  %v361 = vunpack.c.l.b16 %v282
  %v362 = vunpack.c.l.b16 %v283
  %v363 = vunpack.c.l.b16 %v284
  %v364 = vunpack.c.l.b16 %v285
  %v365 = vunpack.c.l.b16 %v286
  %v366 = vunpack.c.l.b16 %v287
  %v367 = vunpack.c.l.b16 %v288
  %v368 = vunpack.c.l.b16 %v289
  %v369 = vunpack.c.l.b16 %v290
  %v370 = vunpack.c.l.b16 %v291
  %v371 = vunpack.c.l.b16 %v292
  %v372 = vunpack.c.l.b16 %v293
  %v373 = vunpack.c.l.b16 %v294
  %v374 = vunpack.c.l.b16 %v295
  %v375 = vunpack.c.l.b16 %v296
  %v376 = vunpack.c.l.b16 %v297
  %v377 = vunpack.c.l.b16 %v298
  %v378 = vunpack.c.l.b16 %v299
  %v379 = vunpack.c.l.b16 %v300
  %v380 = vunpack.c.l.b16 %v301
  %v381 = vpack.c.b16 %v346, %v345
  %v382 = vpack.c.b16 %v348, %v347
  %v383 = vpack.c.b16 %v350, %v349
  %v384 = vpack.c.b16 %v352, %v351
  %v385 = vpack.c.b16 %v354, %v353
  %v386 = vpack.c.b16 %v356, %v355
  %v387 = vpack.c.b16 %v358, %v357
  %v388 = vpack.c.b16 %v360, %v359
  %v389 = vpack.c.b16 %v362, %v361
  %v390 = vpack.c.b16 %v364, %v363
  %v391 = vpack.c.b16 %v366, %v365
  %v392 = vpack.c.b16 %v368, %v367
  %v393 = vpack.c.b16 %v370, %v369
  %v394 = vpack.c.b16 %v372, %v371
  %v395 = vpack.c.b16 %v374, %v373
  %v396 = vpack.c.b16 %v376, %v375
  %v397 = vpack.c.b16 %v378, %v377
  %v398 = vpack.c.b16 %v380, %v379
  %vm417 = vcmask 261120
  %v419 = vsel %vm417, %v244, 0
  %v422 = vsel %vm417, %v247, 0
  %v425 = vsel %vm417, %v250, 0
  %v428 = vsel %vm417, %v253, 0
  %v431 = vsel %vm417, %v256, 0
  %v434 = vsel %vm417, %v259, 0
  %v437 = vsel %vm417, %v262, 0
  %v440 = vsel %vm417, %v265, 0
  %442 = vmatprep.subr.bf16.mxu0 0
  %443 = vmatpush1.bf16.msra.mxu0 %v381
  %444 = vmatprep.subr.bf16.mxu0 0
  %445 = vmatpush1.bf16.msra.mxu0 %v382
  %446 = vmatprep.subr.bf16.mxu0 0
  %447 = vmatpush1.bf16.msra.mxu0 %v383
  %448 = vmatprep.subr.bf16.mxu0 0
  %449 = vmatpush1.bf16.msra.mxu0 %v384
  %450 = vmatprep.subr.bf16.mxu0 0
  %451 = vmatpush1.bf16.msra.mxu0 %v385
  %452 = vmatprep.subr.bf16.mxu0 0
  %453 = vmatpush1.bf16.msra.mxu0 %v386
  %454 = vmatprep.subr.bf16.mxu0 0
  %455 = vmatpush1.bf16.msra.mxu0 %v387
  %456 = vmatprep.subr.bf16.mxu0 0
  %457 = vmatpush1.bf16.msra.mxu0 %v388
  %458 = vmatprep.subr.bf16.mxu0 0
  %459 = vmatpush1.bf16.msra.mxu0 %v389
  %460 = vmatprep.subr.bf16.mxu0 0
  %461 = vmatpush1.bf16.msra.mxu0 %v390
  %462 = vmatprep.subr.bf16.mxu0 0
  %463 = vmatpush1.bf16.msra.mxu0 %v391
  %464 = vmatprep.subr.bf16.mxu0 0
  %465 = vmatpush1.bf16.msra.mxu0 %v392
  %466 = vmatprep.subr.bf16.mxu0 0
  %467 = vmatpush1.bf16.msra.mxu0 %v393
  %468 = vmatprep.subr.bf16.mxu0 0
  %469 = vmatpush1.bf16.msra.mxu0 %v394
  %470 = vmatprep.subr.bf16.mxu0 0
  %471 = vmatpush1.bf16.msra.mxu0 %v395
  %472 = vmatprep.subr.bf16.mxu0 0
  %473 = vmatpush1.bf16.msra.mxu0 %v396
  %474 = vmatprep.mubr.bf16.mxu0 %v243
  %475 = vmatmul.mubr.bf16.gmra.mrb[0].mxu0 %v242
  %v476 = vpop.f32.mrb[0].mxu0
  %v477 = vadd.f32 %v307, %v476
  %v478 = vpop.f32.mrb[0].mxu0
  %v479 = vpop.f32.mrb[0].mxu0
  %v480 = vadd.f32 %v307, %v479
  %v481 = vpop.f32.mrb[0].mxu0
  %482 = vmatprep.mubr.bf16.mxu0 %v246
  %483 = vmatmul.mubr.bf16.gmra.mrb[0].mxu0 %v245
  %v484 = vpop.f32.mrb[0].mxu0
  %v485 = vadd.f32 %v307, %v484
  %v486 = vpop.f32.mrb[0].mxu0
  %v487 = vpop.f32.mrb[0].mxu0
  %v488 = vadd.f32 %v307, %v487
  %v489 = vpop.f32.mrb[0].mxu0
  %490 = vmatprep.mubr.bf16.mxu0 %v249
  %491 = vmatmul.mubr.bf16.gmra.mrb[0].mxu0 %v248
  %v492 = vpop.f32.mrb[0].mxu0
  %v493 = vadd.f32 %v307, %v492
  %v494 = vpop.f32.mrb[0].mxu0
  %v495 = vpop.f32.mrb[0].mxu0
  %v496 = vadd.f32 %v307, %v495
  %v497 = vpop.f32.mrb[0].mxu0
  %498 = vmatprep.mubr.bf16.mxu0 %v252
  %499 = vmatmul.mubr.bf16.gmra.mrb[0].mxu0 %v251
  %v500 = vpop.f32.mrb[0].mxu0
  %v501 = vadd.f32 %v307, %v500
  %v502 = vpop.f32.mrb[0].mxu0
  %v503 = vpop.f32.mrb[0].mxu0
  %v504 = vadd.f32 %v307, %v503
  %v505 = vpop.f32.mrb[0].mxu0
  %506 = vmatprep.mubr.bf16.mxu0 %v255
  %507 = vmatmul.mubr.bf16.gmra.mrb[0].mxu0 %v254
  %v508 = vpop.f32.mrb[0].mxu0
  %v509 = vadd.f32 %v307, %v508
  %v510 = vpop.f32.mrb[0].mxu0
  %v511 = vpop.f32.mrb[0].mxu0
  %v512 = vadd.f32 %v307, %v511
  %v513 = vpop.f32.mrb[0].mxu0
  %514 = vmatprep.mubr.bf16.mxu0 %v258
  %515 = vmatmul.mubr.bf16.gmra.mrb[0].mxu0 %v257
  %v516 = vpop.f32.mrb[0].mxu0
  %v517 = vadd.f32 %v307, %v516
  %v518 = vpop.f32.mrb[0].mxu0
  %v519 = vpop.f32.mrb[0].mxu0
  %v520 = vadd.f32 %v307, %v519
  %v521 = vpop.f32.mrb[0].mxu0
  %522 = vmatprep.mubr.bf16.mxu0 %v261
  %523 = vmatmul.mubr.bf16.gmra.mrb[0].mxu0 %v260
  %v524 = vpop.f32.mrb[0].mxu0
  %v525 = vadd.f32 %v307, %v524
  %v526 = vpop.f32.mrb[0].mxu0
  %v527 = vpop.f32.mrb[0].mxu0
  %v528 = vadd.f32 %v307, %v527
  %v529 = vpop.f32.mrb[0].mxu0
  %530 = vmatprep.mubr.bf16.mxu0 %v264
  %531 = vmatmul.mubr.bf16.gmra.mrb[0].mxu0 %v263
  %v532 = vpop.f32.mrb[0].mxu0
  %v533 = vadd.f32 %v307, %v532
  %v534 = vpop.f32.mrb[0].mxu0
  %v535 = vpop.f32.mrb[0].mxu0
  %v536 = vadd.f32 %v307, %v535
  %v537 = vpop.f32.mrb[0].mxu0
  %538 = vdwg.mxu0
  %539 = vmatprep.subr.bf16.mxu0 0
  %540 = vmatpush1.bf16.msra.mxu0 %v397
  %541 = vmatprep.subr.bf16.mxu0 0
  %542 = vmatpush1.bf16.msra.mxu0 %v398
  %543 = vmatprep.subr.bf16.mxu0 0
  %544 = vmatpush1.bf16.msra.mxu0 0
  %545 = vmatprep.subr.bf16.mxu0 0
  %546 = vmatpush1.bf16.msra.mxu0 0
  %547 = vmatprep.subr.bf16.mxu0 0
  %548 = vmatpush1.bf16.msra.mxu0 0
  %549 = vmatprep.subr.bf16.mxu0 0
  %550 = vmatpush1.bf16.msra.mxu0 0
  %551 = vmatprep.subr.bf16.mxu0 0
  %552 = vmatpush1.bf16.msra.mxu0 0
  %553 = vmatprep.subr.bf16.mxu0 0
  %554 = vmatpush1.bf16.msra.mxu0 0
  %555 = vmatprep.subr.bf16.mxu0 0
  %556 = vmatpush1.bf16.msra.mxu0 0
  %557 = vmatprep.subr.bf16.mxu0 0
  %558 = vmatpush1.bf16.msra.mxu0 0
  %559 = vmatprep.subr.bf16.mxu0 0
  %560 = vmatpush1.bf16.msra.mxu0 0
  %561 = vmatprep.subr.bf16.mxu0 0
  %562 = vmatpush1.bf16.msra.mxu0 0
  %563 = vmatprep.subr.bf16.mxu0 0
  %564 = vmatpush1.bf16.msra.mxu0 0
  %565 = vmatprep.subr.bf16.mxu0 0
  %566 = vmatpush1.bf16.msra.mxu0 0
  %567 = vmatprep.subr.bf16.mxu0 0
  %568 = vmatpush1.bf16.msra.mxu0 0
  %569 = vmatprep.subr.bf16.mxu0 0
  %570 = vmatpush1.bf16.msra.mxu0 0
  %571 = vmatprep.mubr.bf16.mxu0 0
  %572 = vmatmul.mubr.bf16.gmra.mrb[0].mxu0 %v419
  %v573 = vpop.f32.mrb[0].mxu0
  %v574 = vadd.f32 %v477, %v573
  %v575 = vpop.f32.mrb[0].mxu0
  %v576 = vpop.f32.mrb[0].mxu0
  %v577 = vadd.f32 %v480, %v576
  %v578 = vpop.f32.mrb[0].mxu0
  %579 = vmatprep.mubr.bf16.mxu0 0
  %580 = vmatmul.mubr.bf16.gmra.mrb[0].mxu0 %v422
  %v581 = vpop.f32.mrb[0].mxu0
  %v582 = vadd.f32 %v485, %v581
  %v583 = vpop.f32.mrb[0].mxu0
  %v584 = vpop.f32.mrb[0].mxu0
  %v585 = vadd.f32 %v488, %v584
  %v586 = vpop.f32.mrb[0].mxu0
  %587 = vmatprep.mubr.bf16.mxu0 0
  %588 = vmatmul.mubr.bf16.gmra.mrb[0].mxu0 %v425
  %v589 = vpop.f32.mrb[0].mxu0
  %v590 = vadd.f32 %v493, %v589
  %v591 = vpop.f32.mrb[0].mxu0
  %v592 = vpop.f32.mrb[0].mxu0
  %v593 = vadd.f32 %v496, %v592
  %v594 = vpop.f32.mrb[0].mxu0
  %595 = vmatprep.mubr.bf16.mxu0 0
  %596 = vmatmul.mubr.bf16.gmra.mrb[0].mxu0 %v428
  %v597 = vpop.f32.mrb[0].mxu0
  %v598 = vadd.f32 %v501, %v597
  %v599 = vpop.f32.mrb[0].mxu0
  %v600 = vpop.f32.mrb[0].mxu0
  %v601 = vadd.f32 %v504, %v600
  %v602 = vpop.f32.mrb[0].mxu0
  %603 = vmatprep.mubr.bf16.mxu0 0
  %604 = vmatmul.mubr.bf16.gmra.mrb[0].mxu0 %v431
  %v605 = vpop.f32.mrb[0].mxu0
  %v606 = vadd.f32 %v509, %v605
  %v607 = vpop.f32.mrb[0].mxu0
  %v608 = vpop.f32.mrb[0].mxu0
  %v609 = vadd.f32 %v512, %v608
  %v610 = vpop.f32.mrb[0].mxu0
  %611 = vmatprep.mubr.bf16.mxu0 0
  %612 = vmatmul.mubr.bf16.gmra.mrb[0].mxu0 %v434
  %v613 = vpop.f32.mrb[0].mxu0
  %v614 = vadd.f32 %v517, %v613
  %v615 = vpop.f32.mrb[0].mxu0
  %v616 = vpop.f32.mrb[0].mxu0
  %v617 = vadd.f32 %v520, %v616
  %v618 = vpop.f32.mrb[0].mxu0
  %619 = vmatprep.mubr.bf16.mxu0 0
  %620 = vmatmul.mubr.bf16.gmra.mrb[0].mxu0 %v437
  %v621 = vpop.f32.mrb[0].mxu0
  %v622 = vadd.f32 %v525, %v621
  %v623 = vpop.f32.mrb[0].mxu0
  %v624 = vpop.f32.mrb[0].mxu0
  %v625 = vadd.f32 %v528, %v624
  %v626 = vpop.f32.mrb[0].mxu0
  %627 = vmatprep.mubr.bf16.mxu0 0
  %628 = vmatmul.mubr.bf16.gmra.mrb[0].mxu0 %v440
  %v629 = vpop.f32.mrb[0].mxu0
  %v630 = vadd.f32 %v533, %v629
  %v631 = vpop.f32.mrb[0].mxu0
  %v632 = vpop.f32.mrb[0].mxu0
  %v633 = vadd.f32 %v536, %v632
  %v634 = vpop.f32.mrb[0].mxu0
  %635 = vdwg.mxu0
  %636 = vst.msk [vmem:[%s3] sm:$0xff] %vm417, %v574
  %637 = vst.msk [vmem:[%s3 + $0x8] sm:$0xff] %vm417, %v577
  %638 = vst.msk [vmem:[%s3 + $0x10] sm:$0xff] %vm417, %v582
  %639 = vst.msk [vmem:[%s3 + $0x18] sm:$0xff] %vm417, %v585
  %640 = vst.msk [vmem:[%s3 + $0x20] sm:$0xff] %vm417, %v590
  %641 = vst.msk [vmem:[%s3 + $0x28] sm:$0xff] %vm417, %v593
  %642 = vst.msk [vmem:[%s3 + $0x30] sm:$0xff] %vm417, %v598
  %643 = vst.msk [vmem:[%s3 + $0x38] sm:$0xff] %vm417, %v601
  %644 = vst.msk [vmem:[%s3 + $0x40] sm:$0xff] %vm417, %v606
  %645 = vst.msk [vmem:[%s3 + $0x48] sm:$0xff] %vm417, %v609
  %646 = vst.msk [vmem:[%s3 + $0x50] sm:$0xff] %vm417, %v614
  %647 = vst.msk [vmem:[%s3 + $0x58] sm:$0xff] %vm417, %v617
  %648 = vst.msk [vmem:[%s3 + $0x60] sm:$0xff] %vm417, %v622
  %649 = vst.msk [vmem:[%s3 + $0x68] sm:$0xff] %vm417, %v625
  %650 = vst.msk [vmem:[%s3 + $0x70] sm:$0xff] %vm417, %v630
  %651 = vst.msk [vmem:[%s3 + $0x78] sm:$0xff] %vm417, %v633
  %p652 = scmp.eq.s32.totalorder 0, 0
  // Predicated region
  $region14: #{unet_forward.18} parent=0 // pred_check
    %p653 = pneg %p652
  $region15: #{unet_forward.18} parent=0 // pred_check_branch
    %655 = sbr.rel (%p653) target = $region17
  $region16: #{unet_forward.18} parent=0 // pred_region
    %vm656 = vcmask 253952
    %657 = vst.msk [vmem:[%s4] sm:$0x1] %vm656, 0.0
    %658 = vst.msk [vmem:[%s5] sm:$0x1] %vm656, 0.0
  $region17: #{unet_forward.18} parent=0 // pred_fallthru
    _
  %v659 = vld [vmem:[%s4] sm:$0x1]
  %v660 = vsel %vm417, %v574, 0.0
  %v661 = vsel %vm417, %v577, 0.0
  %v662 = vadd.f32 %v660, %v661
  %v663 = vsel %vm417, %v582, 0.0
  %v664 = vadd.f32 %v662, %v663
  %v665 = vsel %vm417, %v585, 0.0
  %v666 = vadd.f32 %v664, %v665
  %v667 = vsel %vm417, %v590, 0.0
  %v668 = vadd.f32 %v666, %v667
  %v669 = vsel %vm417, %v593, 0.0
  %v670 = vadd.f32 %v668, %v669
  %v671 = vsel %vm417, %v598, 0.0
  %v672 = vadd.f32 %v670, %v671
  %v673 = vsel %vm417, %v601, 0.0
  %v674 = vadd.f32 %v672, %v673
  %v675 = vsel %vm417, %v606, 0.0
  %v676 = vadd.f32 %v674, %v675
  %v677 = vsel %vm417, %v609, 0.0
  %v678 = vadd.f32 %v676, %v677
  %v679 = vsel %vm417, %v614, 0.0
  %v680 = vadd.f32 %v678, %v679
  %v681 = vsel %vm417, %v617, 0.0
  %v682 = vadd.f32 %v680, %v681
  %v683 = vsel %vm417, %v622, 0.0
  %v684 = vadd.f32 %v682, %v683
  %v685 = vsel %vm417, %v625, 0.0
  %v686 = vadd.f32 %v684, %v685
  %v687 = vsel %vm417, %v630, 0.0
  %v688 = vadd.f32 %v686, %v687
  %v689 = vsel %vm417, %v633, 0.0
  %v690 = vadd.f32 %v688, %v689
  %v691 = vrot.slane %v690, 4
  %v692 = vadd.f32 %v690, %v691
  %v693 = vrot.slane %v692, 2
  %v694 = vadd.f32 %v692, %v693
  %v695 = vrot.slane %v694, 1
  %v696 = vadd.f32 %v694, %v695
  %v697 = vadd.f32 %v659, %v696
  %vm698 = vcmask 253952
  %699 = vst.msk [vmem:[%s4] sm:$0x1] %vm698, %v697
  %v700 = vld [vmem:[%s5] sm:$0x1]
  %v701 = vmul.f32 %v574, %v574
  %v702 = vmul.f32 %v577, %v577
  %v703 = vmul.f32 %v582, %v582
  %v704 = vmul.f32 %v585, %v585
  %v705 = vmul.f32 %v590, %v590
  %v706 = vmul.f32 %v593, %v593
  %v707 = vmul.f32 %v598, %v598
  %v708 = vmul.f32 %v601, %v601
  %v709 = vmul.f32 %v606, %v606
  %v710 = vmul.f32 %v609, %v609
  %v711 = vmul.f32 %v614, %v614
  %v712 = vmul.f32 %v617, %v617
  %v713 = vmul.f32 %v622, %v622
  %v714 = vmul.f32 %v625, %v625
  %v715 = vmul.f32 %v630, %v630
  %v716 = vmul.f32 %v633, %v633
  %v717 = vsel %vm417, %v701, 0.0
  %v718 = vsel %vm417, %v702, 0.0
  %v719 = vadd.f32 %v717, %v718
  %v720 = vsel %vm417, %v703, 0.0
  %v721 = vadd.f32 %v719, %v720
  %v722 = vsel %vm417, %v704, 0.0
  %v723 = vadd.f32 %v721, %v722
  %v724 = vsel %vm417, %v705, 0.0
  %v725 = vadd.f32 %v723, %v724
  %v726 = vsel %vm417, %v706, 0.0
  %v727 = vadd.f32 %v725, %v726
  %v728 = vsel %vm417, %v707, 0.0
  %v729 = vadd.f32 %v727, %v728
  %v730 = vsel %vm417, %v708, 0.0
  %v731 = vadd.f32 %v729, %v730
  %v732 = vsel %vm417, %v709, 0.0
  %v733 = vadd.f32 %v731, %v732
  %v734 = vsel %vm417, %v710, 0.0
  %v735 = vadd.f32 %v733, %v734
  %v736 = vsel %vm417, %v711, 0.0
  %v737 = vadd.f32 %v735, %v736
  %v738 = vsel %vm417, %v712, 0.0
  %v739 = vadd.f32 %v737, %v738
  %v740 = vsel %vm417, %v713, 0.0
  %v741 = vadd.f32 %v739, %v740
  %v742 = vsel %vm417, %v714, 0.0
  %v743 = vadd.f32 %v741, %v742
  %v744 = vsel %vm417, %v715, 0.0
  %v745 = vadd.f32 %v743, %v744
  %v746 = vsel %vm417, %v716, 0.0
  %v747 = vadd.f32 %v745, %v746
  %v748 = vrot.slane %v747, 4
  %v749 = vadd.f32 %v747, %v748
  %v750 = vrot.slane %v749, 2
  %v751 = vadd.f32 %v749, %v750
  %v752 = vrot.slane %v751, 1
  %v753 = vadd.f32 %v751, %v752
  %v754 = vadd.f32 %v700, %v753
  %755 = vst.msk [vmem:[%s5] sm:$0x1] %vm698, %v754
  // Predicated region
  $region18: #{unet_forward.18} parent=0 // pred_check
    _
  $region19: #{unet_forward.18} parent=0 // pred_check_branch
    %757 = sbr.rel (0) target = $region21
  $region20: #{unet_forward.18} parent=0 // pred_region
    _
  $region21: #{unet_forward.18} parent=0 // pred_fallthru
    _
  // Predicated region
  $region22: #{unet_forward.18} parent=0 // pred_check
    _
  $region23: #{unet_forward.18} parent=0 // pred_check_branch
    %759 = sbr.rel (0) target = $region25
  $region24: #{unet_forward.18} parent=0 // pred_region
    _
  $region25: #{unet_forward.18} parent=0 // pred_fallthru
    _
  // Predicated region
  $region26: #{unet_forward.18} parent=0 // pred_check
    _
  $region27: #{unet_forward.18} parent=0 // pred_check_branch
    %761 = sbr.rel (0) target = $region29
  $region28: #{unet_forward.18} parent=0 // pred_region
    _
  $region29: #{unet_forward.18} parent=0 // pred_fallthru
    _
  // Predicated region
  $region30: #{unet_forward.18} parent=0 // pred_check
    _
  $region31: #{unet_forward.18} parent=0 // pred_check_branch
    %763 = sbr.rel (0) target = $region33
  $region32: #{unet_forward.18} parent=0 // pred_region
    _
  $region33: #{unet_forward.18} parent=0 // pred_fallthru
    _
  // Predicated region
  $region34: #{unet_forward.18} parent=0 // pred_check
    _
  $region35: #{unet_forward.18} parent=0 // pred_check_branch
    %765 = sbr.rel (0) target = $region37
  $region36: #{unet_forward.18} parent=0 // pred_region
    _
  $region37: #{unet_forward.18} parent=0 // pred_fallthru
    _
  // Predicated region
  $region38: #{unet_forward.18} parent=0 // pred_check
    _
  $region39: #{unet_forward.18} parent=0 // pred_check_branch
    %767 = sbr.rel (0) target = $region41
  $region40: #{unet_forward.18} parent=0 // pred_region
    _
  $region41: #{unet_forward.18} parent=0 // pred_fallthru
    _

// kernel: tile.6
$region0: #{tile.6}
  #allocation0 [shape = 's32[1]{0}', space=sflag, size = 0x4, scoped, tag = 'scoped memory for tile.6']
  %s0 = inlined_call_operand.vmem [shape: f32[3], index: 0, kind: input, shape index: {}]
  %s1 = inlined_call_operand.vmem [shape: f32[4,3], index: 1, kind: output, shape index: {}]
  // Predicated region
  $region2: #{tile.6} parent=0 // pred_check
    _
  $region3: #{tile.6} parent=0 // pred_check_branch
    %3 = sbr.rel (0) target = $region5
  $region4: #{tile.6} parent=0 // pred_region
    _
  $region5: #{tile.6} parent=0 // pred_fallthru
    _
  %v4 = vld [vmem:[%s0] ss:$0 sm:$0xff]
  %5 = vst [vmem:[%s1] sm:$0xf] %v4

// kernel: tile.7
$region0: #{tile.7}
  %s0 = inlined_call_operand.vmem [shape: f32[4,3], index: 0, kind: input, shape index: {}]
  %s1 = inlined_call_operand.vmem [shape: f32[1,12], index: 1, kind: output, shape index: {}]
  $region1: #{tile.7} parent=0
    #allocation0 [shape = 'u8[4096]{0}', space=vmem, size = 0x1000, scoped, tag = 'scoped mem for output reshape']
    #allocation1 [shape = 'u8[4096]{0}', space=vmem, size = 0x1000, scoped, tag = 'scoped mem for input reshape']
    %s3 = sshllo.u32 0, 4
    %v4 = vld [vmem:[%s0] sm:%s3]
    %5 = vst [vmem:[#allocation1] sm:%s3] %v4
    %v6 = vld [vmem:[#allocation1] sm:$0x1]
    %vm7 = vcmask 23552
    %8 = vst.msk [vmem:[#allocation0] sm:$0x1] %vm7, %v6
    %s9 = scalar_lea.vmem [#allocation1], 3
    %v10 = vld [vmem:[%s9] sm:$0x1]
    %11 = vrot.lane.b32.xlu0 %v10, 9
    %v12 = vpop.permute.xlu0 %11
    %vm13 = vcmask 97352
    %14 = vst.msk [vmem:[#allocation0] sm:$0x1] %vm13, %v12
    %s15 = scalar_lea.vmem [#allocation1], 2
    %v16 = vld [vmem:[%s15] sm:$0x1]
    %17 = vrot.lane.b32.xlu0 %v16, 6
    %v18 = vpop.permute.xlu0 %17
    %vm19 = vcmask 72752
    %20 = vst.msk [vmem:[#allocation0] sm:$0x1] %vm19, %v18
    %s21 = scalar_lea.vmem [#allocation1], 1
    %v22 = vld [vmem:[%s21] sm:$0x1]
    %23 = vrot.lane.b32.xlu0 %v22, 3
    %v24 = vpop.permute.xlu0 %23
    %vm25 = vcmask 48152
    %26 = vst.msk [vmem:[#allocation0] sm:$0x1] %vm25, %v24
    %s28 = sshllo.u32 0, 1
    %v30 = vld [vmem:[#allocation0] sm:%s28]
    %s31 = sshllo.u32 0, 1
    %32 = vst [vmem:[%s1] sm:%s31] %v30

// kernel: unet_forward.19
$region0: #{unet_forward.19}
  #allocation0 [shape = 'u32[]', space=smem, size = 0x4, offset = 0x4, fixed_abs, tag = 'smem constant byte address 0x4 - core index']
  #allocation1 [shape = 'u32[144,128]{1,0:T(1,128)}', space=vmem, size = 0x12000, scoped, tag = 'internal scratch']
  %s0 = inlined_call_operand.vmem [shape: bf16[512,144], index: 0, kind: input, shape index: {}]
  %s1 = inlined_call_operand.vmem [shape: bf16[144,12], index: 1, kind: input, shape index: {}]
  %s2 = inlined_call_operand.vmem [shape: f32[1,12], index: 2, kind: input, shape index: {}]
  %s3 = inlined_call_operand.vmem [shape: f32[512,12], index: 3, kind: output, shape index: {}]
  %s4 = sld [smem:[#allocation0]]
  $region22: #{unet_forward.19} parent=0
    _
  %s6 = ssub.s32 1, %s4
  %s7 = scalar_select 0, %s6, %s4
  // Predicated region
  $region2: #{unet_forward.19} parent=0 // pred_check
    _
  $region3: #{unet_forward.19} parent=0 // pred_check_branch
    %9 = sbr.rel (0) target = $region5
  $region4: #{unet_forward.19} parent=0 // pred_region
    _
  $region5: #{unet_forward.19} parent=0 // pred_fallthru
    _
  // Predicated region
  $region6: #{unet_forward.19} parent=0 // pred_check
    _
  $region7: #{unet_forward.19} parent=0 // pred_check_branch
    %11 = sbr.rel (0) target = $region9
  $region8: #{unet_forward.19} parent=0 // pred_region
    _
  $region9: #{unet_forward.19} parent=0 // pred_fallthru
    _
  // Predicated region
  $region10: #{unet_forward.19} parent=0 // pred_check
    _
  $region11: #{unet_forward.19} parent=0 // pred_check_branch
    %13 = sbr.rel (0) target = $region13
  $region12: #{unet_forward.19} parent=0 // pred_region
    _
  $region13: #{unet_forward.19} parent=0 // pred_fallthru
    _
  %v15 = vld [vmem:[%s0] sm:$0xff]
  %v16 = vld [vmem:[%s0 + $0x8] sm:$0xff]
  %v17 = vld [vmem:[%s0 + $0x10] sm:$0xff]
  %v18 = vld [vmem:[%s0 + $0x18] sm:$0xff]
  %v19 = vld [vmem:[%s0 + $0x20] sm:$0xff]
  %v20 = vld [vmem:[%s0 + $0x28] sm:$0xff]
  %v21 = vld [vmem:[%s0 + $0x30] sm:$0xff]
  %v22 = vld [vmem:[%s0 + $0x38] sm:$0xff]
  %v23 = vld [vmem:[%s0 + $0x40] sm:$0xff]
  %v24 = vld [vmem:[%s0 + $0x48] sm:$0xff]
  %v25 = vld [vmem:[%s0 + $0x50] sm:$0xff]
  %v26 = vld [vmem:[%s0 + $0x58] sm:$0xff]
  %v27 = vld [vmem:[%s0 + $0x60] sm:$0xff]
  %v28 = vld [vmem:[%s0 + $0x68] sm:$0xff]
  %v29 = vld [vmem:[%s0 + $0x70] sm:$0xff]
  %v30 = vld [vmem:[%s0 + $0x78] sm:$0xff]
  %v31 = vld [vmem:[%s0 + $0x80] sm:$0xff]
  %v32 = vld [vmem:[%s0 + $0x88] sm:$0xff]
  %v33 = vld [vmem:[%s0 + $0x90] sm:$0xff]
  %v34 = vld [vmem:[%s0 + $0x98] sm:$0xff]
  %v35 = vld [vmem:[%s0 + $0xa0] sm:$0xff]
  %v36 = vld [vmem:[%s0 + $0xa8] sm:$0xff]
  %v37 = vld [vmem:[%s0 + $0xb0] sm:$0xff]
  %v38 = vld [vmem:[%s0 + $0xb8] sm:$0xff]
  %v39 = vld [vmem:[%s0 + $0xc0] sm:$0xff]
  %v40 = vld [vmem:[%s0 + $0xc8] sm:$0xff]
  %v41 = vld [vmem:[%s0 + $0xd0] sm:$0xff]
  %v42 = vld [vmem:[%s0 + $0xd8] sm:$0xff]
  %v43 = vld [vmem:[%s0 + $0xe0] sm:$0xff]
  %v44 = vld [vmem:[%s0 + $0xe8] sm:$0xff]
  %v45 = vld [vmem:[%s0 + $0xf0] sm:$0xff]
  %v46 = vld [vmem:[%s0 + $0xf8] sm:$0xff]
  %v47 = vld [vmem:[%s0 + $0x100] sm:$0xff]
  %v48 = vld [vmem:[%s0 + $0x108] sm:$0xff]
  %v49 = vld [vmem:[%s0 + $0x110] sm:$0xff]
  %v50 = vld [vmem:[%s0 + $0x118] sm:$0xff]
  %v51 = vld [vmem:[%s0 + $0x120] sm:$0xff]
  %v52 = vld [vmem:[%s0 + $0x128] sm:$0xff]
  %v53 = vld [vmem:[%s0 + $0x130] sm:$0xff]
  %v54 = vld [vmem:[%s0 + $0x138] sm:$0xff]
  %v55 = vld [vmem:[%s0 + $0x140] sm:$0xff]
  %v56 = vld [vmem:[%s0 + $0x148] sm:$0xff]
  %v57 = vld [vmem:[%s0 + $0x150] sm:$0xff]
  %v58 = vld [vmem:[%s0 + $0x158] sm:$0xff]
  %v59 = vld [vmem:[%s0 + $0x160] sm:$0xff]
  %v60 = vld [vmem:[%s0 + $0x168] sm:$0xff]
  %v61 = vld [vmem:[%s0 + $0x170] sm:$0xff]
  %v62 = vld [vmem:[%s0 + $0x178] sm:$0xff]
  %v63 = vld [vmem:[%s0 + $0x180] sm:$0xff]
  %v64 = vld [vmem:[%s0 + $0x188] sm:$0xff]
  %v65 = vld [vmem:[%s0 + $0x190] sm:$0xff]
  %v66 = vld [vmem:[%s0 + $0x198] sm:$0xff]
  %v67 = vld [vmem:[%s0 + $0x1a0] sm:$0xff]
  %v68 = vld [vmem:[%s0 + $0x1a8] sm:$0xff]
  %v69 = vld [vmem:[%s0 + $0x1b0] sm:$0xff]
  %v70 = vld [vmem:[%s0 + $0x1b8] sm:$0xff]
  %v71 = vld [vmem:[%s0 + $0x1c0] sm:$0xff]
  %v72 = vld [vmem:[%s0 + $0x1c8] sm:$0xff]
  %v73 = vld [vmem:[%s0 + $0x1d0] sm:$0xff]
  %v74 = vld [vmem:[%s0 + $0x1d8] sm:$0xff]
  %v75 = vld [vmem:[%s0 + $0x1e0] sm:$0xff]
  %v76 = vld [vmem:[%s0 + $0x1e8] sm:$0xff]
  %v77 = vld [vmem:[%s0 + $0x1f0] sm:$0xff]
  %v78 = vld [vmem:[%s0 + $0x1f8] sm:$0xff]
  %v79 = vunpack.c.l.bf16 %v15
  %v80 = vunpack.c.h.bf16 %v15
  %v81 = vunpack.c.l.bf16 %v16
  %v82 = vunpack.c.h.bf16 %v16
  %v83 = vunpack.c.l.bf16 %v17
  %v84 = vunpack.c.h.bf16 %v17
  %v85 = vunpack.c.l.bf16 %v18
  %v86 = vunpack.c.h.bf16 %v18
  %v87 = vunpack.c.l.bf16 %v19
  %v88 = vunpack.c.h.bf16 %v19
  %v89 = vunpack.c.l.bf16 %v20
  %v90 = vunpack.c.h.bf16 %v20
  %v91 = vunpack.c.l.bf16 %v21
  %v92 = vunpack.c.h.bf16 %v21
  %v93 = vunpack.c.l.bf16 %v22
  %v94 = vunpack.c.h.bf16 %v22
  %v95 = vunpack.c.l.bf16 %v23
  %v96 = vunpack.c.h.bf16 %v23
  %v97 = vunpack.c.l.bf16 %v24
  %v98 = vunpack.c.h.bf16 %v24
  %v99 = vunpack.c.l.bf16 %v25
  %v100 = vunpack.c.h.bf16 %v25
  %v101 = vunpack.c.l.bf16 %v26
  %v102 = vunpack.c.h.bf16 %v26
  %v103 = vunpack.c.l.bf16 %v27
  %v104 = vunpack.c.h.bf16 %v27
  %v105 = vunpack.c.l.bf16 %v28
  %v106 = vunpack.c.h.bf16 %v28
  %v107 = vunpack.c.l.bf16 %v29
  %v108 = vunpack.c.h.bf16 %v29
  %v109 = vunpack.c.l.bf16 %v30
  %v110 = vunpack.c.h.bf16 %v30
  %v111 = vunpack.c.l.bf16 %v31
  %v112 = vunpack.c.h.bf16 %v31
  %v113 = vunpack.c.l.bf16 %v32
  %v114 = vunpack.c.h.bf16 %v32
  %v115 = vunpack.c.l.bf16 %v33
  %v116 = vunpack.c.h.bf16 %v33
  %v117 = vunpack.c.l.bf16 %v34
  %v118 = vunpack.c.h.bf16 %v34
  %v119 = vunpack.c.l.bf16 %v35
  %v120 = vunpack.c.h.bf16 %v35
  %v121 = vunpack.c.l.bf16 %v36
  %v122 = vunpack.c.h.bf16 %v36
  %v123 = vunpack.c.l.bf16 %v37
  %v124 = vunpack.c.h.bf16 %v37
  %v125 = vunpack.c.l.bf16 %v38
  %v126 = vunpack.c.h.bf16 %v38
  %v127 = vunpack.c.l.bf16 %v39
  %v128 = vunpack.c.h.bf16 %v39
  %v129 = vunpack.c.l.bf16 %v40
  %v130 = vunpack.c.h.bf16 %v40
  %v131 = vunpack.c.l.bf16 %v41
  %v132 = vunpack.c.h.bf16 %v41
  %v133 = vunpack.c.l.bf16 %v42
  %v134 = vunpack.c.h.bf16 %v42
  %v135 = vunpack.c.l.bf16 %v43
  %v136 = vunpack.c.h.bf16 %v43
  %v137 = vunpack.c.l.bf16 %v44
  %v138 = vunpack.c.h.bf16 %v44
  %v139 = vunpack.c.l.bf16 %v45
  %v140 = vunpack.c.h.bf16 %v45
  %v141 = vunpack.c.l.bf16 %v46
  %v142 = vunpack.c.h.bf16 %v46
  %v143 = vunpack.c.l.bf16 %v47
  %v144 = vunpack.c.h.bf16 %v47
  %v145 = vunpack.c.l.bf16 %v48
  %v146 = vunpack.c.h.bf16 %v48
  %v147 = vunpack.c.l.bf16 %v49
  %v148 = vunpack.c.h.bf16 %v49
  %v149 = vunpack.c.l.bf16 %v50
  %v150 = vunpack.c.h.bf16 %v50
  %v151 = vunpack.c.l.bf16 %v51
  %v152 = vunpack.c.h.bf16 %v51
  %v153 = vunpack.c.l.bf16 %v52
  %v154 = vunpack.c.h.bf16 %v52
  %v155 = vunpack.c.l.bf16 %v53
  %v156 = vunpack.c.h.bf16 %v53
  %v157 = vunpack.c.l.bf16 %v54
  %v158 = vunpack.c.h.bf16 %v54
  %v159 = vunpack.c.l.bf16 %v55
  %v160 = vunpack.c.h.bf16 %v55
  %v161 = vunpack.c.l.bf16 %v56
  %v162 = vunpack.c.h.bf16 %v56
  %v163 = vunpack.c.l.bf16 %v57
  %v164 = vunpack.c.h.bf16 %v57
  %v165 = vunpack.c.l.bf16 %v58
  %v166 = vunpack.c.h.bf16 %v58
  %v167 = vunpack.c.l.bf16 %v59
  %v168 = vunpack.c.h.bf16 %v59
  %v169 = vunpack.c.l.bf16 %v60
  %v170 = vunpack.c.h.bf16 %v60
  %v171 = vunpack.c.l.bf16 %v61
  %v172 = vunpack.c.h.bf16 %v61
  %v173 = vunpack.c.l.bf16 %v62
  %v174 = vunpack.c.h.bf16 %v62
  %v175 = vunpack.c.l.bf16 %v63
  %v176 = vunpack.c.h.bf16 %v63
  %v177 = vunpack.c.l.bf16 %v64
  %v178 = vunpack.c.h.bf16 %v64
  %v179 = vunpack.c.l.bf16 %v65
  %v180 = vunpack.c.h.bf16 %v65
  %v181 = vunpack.c.l.bf16 %v66
  %v182 = vunpack.c.h.bf16 %v66
  %v183 = vunpack.c.l.bf16 %v67
  %v184 = vunpack.c.h.bf16 %v67
  %v185 = vunpack.c.l.bf16 %v68
  %v186 = vunpack.c.h.bf16 %v68
  %v187 = vunpack.c.l.bf16 %v69
  %v188 = vunpack.c.h.bf16 %v69
  %v189 = vunpack.c.l.bf16 %v70
  %v190 = vunpack.c.h.bf16 %v70
  %v191 = vunpack.c.l.bf16 %v71
  %v192 = vunpack.c.h.bf16 %v71
  %v193 = vunpack.c.l.bf16 %v72
  %v194 = vunpack.c.h.bf16 %v72
  %v195 = vunpack.c.l.bf16 %v73
  %v196 = vunpack.c.h.bf16 %v73
  %v197 = vunpack.c.l.bf16 %v74
  %v198 = vunpack.c.h.bf16 %v74
  %v199 = vunpack.c.l.bf16 %v75
  %v200 = vunpack.c.h.bf16 %v75
  %v201 = vunpack.c.l.bf16 %v76
  %v202 = vunpack.c.h.bf16 %v76
  %v203 = vunpack.c.l.bf16 %v77
  %v204 = vunpack.c.h.bf16 %v77
  %v205 = vunpack.c.l.bf16 %v78
  %v206 = vunpack.c.h.bf16 %v78
  %vm207 = vcmp.gt.f32.partialorder %v79, 0.0
  %vm208 = vcmp.gt.f32.partialorder %v80, 0.0
  %vm209 = vcmp.gt.f32.partialorder %v81, 0.0
  %vm210 = vcmp.gt.f32.partialorder %v82, 0.0
  %vm211 = vcmp.gt.f32.partialorder %v83, 0.0
  %vm212 = vcmp.gt.f32.partialorder %v84, 0.0
  %vm213 = vcmp.gt.f32.partialorder %v85, 0.0
  %vm214 = vcmp.gt.f32.partialorder %v86, 0.0
  %vm215 = vcmp.gt.f32.partialorder %v87, 0.0
  %vm216 = vcmp.gt.f32.partialorder %v88, 0.0
  %vm217 = vcmp.gt.f32.partialorder %v89, 0.0
  %vm218 = vcmp.gt.f32.partialorder %v90, 0.0
  %vm219 = vcmp.gt.f32.partialorder %v91, 0.0
  %vm220 = vcmp.gt.f32.partialorder %v92, 0.0
  %vm221 = vcmp.gt.f32.partialorder %v93, 0.0
  %vm222 = vcmp.gt.f32.partialorder %v94, 0.0
  %vm223 = vcmp.gt.f32.partialorder %v95, 0.0
  %vm224 = vcmp.gt.f32.partialorder %v96, 0.0
  %vm225 = vcmp.gt.f32.partialorder %v97, 0.0
  %vm226 = vcmp.gt.f32.partialorder %v98, 0.0
  %vm227 = vcmp.gt.f32.partialorder %v99, 0.0
  %vm228 = vcmp.gt.f32.partialorder %v100, 0.0
  %vm229 = vcmp.gt.f32.partialorder %v101, 0.0
  %vm230 = vcmp.gt.f32.partialorder %v102, 0.0
  %vm231 = vcmp.gt.f32.partialorder %v103, 0.0
  %vm232 = vcmp.gt.f32.partialorder %v104, 0.0
  %vm233 = vcmp.gt.f32.partialorder %v105, 0.0
  %vm234 = vcmp.gt.f32.partialorder %v106, 0.0
  %vm235 = vcmp.gt.f32.partialorder %v107, 0.0
  %vm236 = vcmp.gt.f32.partialorder %v108, 0.0
  %vm237 = vcmp.gt.f32.partialorder %v109, 0.0
  %vm238 = vcmp.gt.f32.partialorder %v110, 0.0
  %vm239 = vcmp.gt.f32.partialorder %v111, 0.0
  %vm240 = vcmp.gt.f32.partialorder %v112, 0.0
  %vm241 = vcmp.gt.f32.partialorder %v113, 0.0
  %vm242 = vcmp.gt.f32.partialorder %v114, 0.0
  %vm243 = vcmp.gt.f32.partialorder %v115, 0.0
  %vm244 = vcmp.gt.f32.partialorder %v116, 0.0
  %vm245 = vcmp.gt.f32.partialorder %v117, 0.0
  %vm246 = vcmp.gt.f32.partialorder %v118, 0.0
  %vm247 = vcmp.gt.f32.partialorder %v119, 0.0
  %vm248 = vcmp.gt.f32.partialorder %v120, 0.0
  %vm249 = vcmp.gt.f32.partialorder %v121, 0.0
  %vm250 = vcmp.gt.f32.partialorder %v122, 0.0
  %vm251 = vcmp.gt.f32.partialorder %v123, 0.0
  %vm252 = vcmp.gt.f32.partialorder %v124, 0.0
  %vm253 = vcmp.gt.f32.partialorder %v125, 0.0
  %vm254 = vcmp.gt.f32.partialorder %v126, 0.0
  %vm255 = vcmp.gt.f32.partialorder %v127, 0.0
  %vm256 = vcmp.gt.f32.partialorder %v128, 0.0
  %vm257 = vcmp.gt.f32.partialorder %v129, 0.0
  %vm258 = vcmp.gt.f32.partialorder %v130, 0.0
  %vm259 = vcmp.gt.f32.partialorder %v131, 0.0
  %vm260 = vcmp.gt.f32.partialorder %v132, 0.0
  %vm261 = vcmp.gt.f32.partialorder %v133, 0.0
  %vm262 = vcmp.gt.f32.partialorder %v134, 0.0
  %vm263 = vcmp.gt.f32.partialorder %v135, 0.0
  %vm264 = vcmp.gt.f32.partialorder %v136, 0.0
  %vm265 = vcmp.gt.f32.partialorder %v137, 0.0
  %vm266 = vcmp.gt.f32.partialorder %v138, 0.0
  %vm267 = vcmp.gt.f32.partialorder %v139, 0.0
  %vm268 = vcmp.gt.f32.partialorder %v140, 0.0
  %vm269 = vcmp.gt.f32.partialorder %v141, 0.0
  %vm270 = vcmp.gt.f32.partialorder %v142, 0.0
  %vm271 = vcmp.gt.f32.partialorder %v143, 0.0
  %vm272 = vcmp.gt.f32.partialorder %v144, 0.0
  %vm273 = vcmp.gt.f32.partialorder %v145, 0.0
  %vm274 = vcmp.gt.f32.partialorder %v146, 0.0
  %vm275 = vcmp.gt.f32.partialorder %v147, 0.0
  %vm276 = vcmp.gt.f32.partialorder %v148, 0.0
  %vm277 = vcmp.gt.f32.partialorder %v149, 0.0
  %vm278 = vcmp.gt.f32.partialorder %v150, 0.0
  %vm279 = vcmp.gt.f32.partialorder %v151, 0.0
  %vm280 = vcmp.gt.f32.partialorder %v152, 0.0
  %vm281 = vcmp.gt.f32.partialorder %v153, 0.0
  %vm282 = vcmp.gt.f32.partialorder %v154, 0.0
  %vm283 = vcmp.gt.f32.partialorder %v155, 0.0
  %vm284 = vcmp.gt.f32.partialorder %v156, 0.0
  %vm285 = vcmp.gt.f32.partialorder %v157, 0.0
  %vm286 = vcmp.gt.f32.partialorder %v158, 0.0
  %vm287 = vcmp.gt.f32.partialorder %v159, 0.0
  %vm288 = vcmp.gt.f32.partialorder %v160, 0.0
  %vm289 = vcmp.gt.f32.partialorder %v161, 0.0
  %vm290 = vcmp.gt.f32.partialorder %v162, 0.0
  %vm291 = vcmp.gt.f32.partialorder %v163, 0.0
  %vm292 = vcmp.gt.f32.partialorder %v164, 0.0
  %vm293 = vcmp.gt.f32.partialorder %v165, 0.0
  %vm294 = vcmp.gt.f32.partialorder %v166, 0.0
  %vm295 = vcmp.gt.f32.partialorder %v167, 0.0
  %vm296 = vcmp.gt.f32.partialorder %v168, 0.0
  %vm297 = vcmp.gt.f32.partialorder %v169, 0.0
  %vm298 = vcmp.gt.f32.partialorder %v170, 0.0
  %vm299 = vcmp.gt.f32.partialorder %v171, 0.0
  %vm300 = vcmp.gt.f32.partialorder %v172, 0.0
  %vm301 = vcmp.gt.f32.partialorder %v173, 0.0
  %vm302 = vcmp.gt.f32.partialorder %v174, 0.0
  %vm303 = vcmp.gt.f32.partialorder %v175, 0.0
  %vm304 = vcmp.gt.f32.partialorder %v176, 0.0
  %vm305 = vcmp.gt.f32.partialorder %v177, 0.0
  %vm306 = vcmp.gt.f32.partialorder %v178, 0.0
  %vm307 = vcmp.gt.f32.partialorder %v179, 0.0
  %vm308 = vcmp.gt.f32.partialorder %v180, 0.0
  %vm309 = vcmp.gt.f32.partialorder %v181, 0.0
  %vm310 = vcmp.gt.f32.partialorder %v182, 0.0
  %vm311 = vcmp.gt.f32.partialorder %v183, 0.0
  %vm312 = vcmp.gt.f32.partialorder %v184, 0.0
  %vm313 = vcmp.gt.f32.partialorder %v185, 0.0
  %vm314 = vcmp.gt.f32.partialorder %v186, 0.0
  %vm315 = vcmp.gt.f32.partialorder %v187, 0.0
  %vm316 = vcmp.gt.f32.partialorder %v188, 0.0
  %vm317 = vcmp.gt.f32.partialorder %v189, 0.0
  %vm318 = vcmp.gt.f32.partialorder %v190, 0.0
  %vm319 = vcmp.gt.f32.partialorder %v191, 0.0
  %vm320 = vcmp.gt.f32.partialorder %v192, 0.0
  %vm321 = vcmp.gt.f32.partialorder %v193, 0.0
  %vm322 = vcmp.gt.f32.partialorder %v194, 0.0
  %vm323 = vcmp.gt.f32.partialorder %v195, 0.0
  %vm324 = vcmp.gt.f32.partialorder %v196, 0.0
  %vm325 = vcmp.gt.f32.partialorder %v197, 0.0
  %vm326 = vcmp.gt.f32.partialorder %v198, 0.0
  %vm327 = vcmp.gt.f32.partialorder %v199, 0.0
  %vm328 = vcmp.gt.f32.partialorder %v200, 0.0
  %vm329 = vcmp.gt.f32.partialorder %v201, 0.0
  %vm330 = vcmp.gt.f32.partialorder %v202, 0.0
  %vm331 = vcmp.gt.f32.partialorder %v203, 0.0
  %vm332 = vcmp.gt.f32.partialorder %v204, 0.0
  %vm333 = vcmp.gt.f32.partialorder %v205, 0.0
  %vm334 = vcmp.gt.f32.partialorder %v206, 0.0
  %v335 = vmul.f32 %v79, 0.0
  %v336 = vmul.f32 %v80, 0.0
  %v337 = vmul.f32 %v81, 0.0
  %v338 = vmul.f32 %v82, 0.0
  %v339 = vmul.f32 %v83, 0.0
  %v340 = vmul.f32 %v84, 0.0
  %v341 = vmul.f32 %v85, 0.0
  %v342 = vmul.f32 %v86, 0.0
  %v343 = vmul.f32 %v87, 0.0
  %v344 = vmul.f32 %v88, 0.0
  %v345 = vmul.f32 %v89, 0.0
  %v346 = vmul.f32 %v90, 0.0
  %v347 = vmul.f32 %v91, 0.0
  %v348 = vmul.f32 %v92, 0.0
  %v349 = vmul.f32 %v93, 0.0
  %v350 = vmul.f32 %v94, 0.0
  %v351 = vmul.f32 %v95, 0.0
  %v352 = vmul.f32 %v96, 0.0
  %v353 = vmul.f32 %v97, 0.0
  %v354 = vmul.f32 %v98, 0.0
  %v355 = vmul.f32 %v99, 0.0
  %v356 = vmul.f32 %v100, 0.0
  %v357 = vmul.f32 %v101, 0.0
  %v358 = vmul.f32 %v102, 0.0
  %v359 = vmul.f32 %v103, 0.0
  %v360 = vmul.f32 %v104, 0.0
  %v361 = vmul.f32 %v105, 0.0
  %v362 = vmul.f32 %v106, 0.0
  %v363 = vmul.f32 %v107, 0.0
  %v364 = vmul.f32 %v108, 0.0
  %v365 = vmul.f32 %v109, 0.0
  %v366 = vmul.f32 %v110, 0.0
  %v367 = vmul.f32 %v111, 0.0
  %v368 = vmul.f32 %v112, 0.0
  %v369 = vmul.f32 %v113, 0.0
  %v370 = vmul.f32 %v114, 0.0
  %v371 = vmul.f32 %v115, 0.0
  %v372 = vmul.f32 %v116, 0.0
  %v373 = vmul.f32 %v117, 0.0
  %v374 = vmul.f32 %v118, 0.0
  %v375 = vmul.f32 %v119, 0.0
  %v376 = vmul.f32 %v120, 0.0
  %v377 = vmul.f32 %v121, 0.0
  %v378 = vmul.f32 %v122, 0.0
  %v379 = vmul.f32 %v123, 0.0
  %v380 = vmul.f32 %v124, 0.0
  %v381 = vmul.f32 %v125, 0.0
  %v382 = vmul.f32 %v126, 0.0
  %v383 = vmul.f32 %v127, 0.0
  %v384 = vmul.f32 %v128, 0.0
  %v385 = vmul.f32 %v129, 0.0
  %v386 = vmul.f32 %v130, 0.0
  %v387 = vmul.f32 %v131, 0.0
  %v388 = vmul.f32 %v132, 0.0
  %v389 = vmul.f32 %v133, 0.0
  %v390 = vmul.f32 %v134, 0.0
  %v391 = vmul.f32 %v135, 0.0
  %v392 = vmul.f32 %v136, 0.0
  %v393 = vmul.f32 %v137, 0.0
  %v394 = vmul.f32 %v138, 0.0
  %v395 = vmul.f32 %v139, 0.0
  %v396 = vmul.f32 %v140, 0.0
  %v397 = vmul.f32 %v141, 0.0
  %v398 = vmul.f32 %v142, 0.0
  %v399 = vmul.f32 %v143, 0.0
  %v400 = vmul.f32 %v144, 0.0
  %v401 = vmul.f32 %v145, 0.0
  %v402 = vmul.f32 %v146, 0.0
  %v403 = vmul.f32 %v147, 0.0
  %v404 = vmul.f32 %v148, 0.0
  %v405 = vmul.f32 %v149, 0.0
  %v406 = vmul.f32 %v150, 0.0
  %v407 = vmul.f32 %v151, 0.0
  %v408 = vmul.f32 %v152, 0.0
  %v409 = vmul.f32 %v153, 0.0
  %v410 = vmul.f32 %v154, 0.0
  %v411 = vmul.f32 %v155, 0.0
  %v412 = vmul.f32 %v156, 0.0
  %v413 = vmul.f32 %v157, 0.0
  %v414 = vmul.f32 %v158, 0.0
  %v415 = vmul.f32 %v159, 0.0
  %v416 = vmul.f32 %v160, 0.0
  %v417 = vmul.f32 %v161, 0.0
  %v418 = vmul.f32 %v162, 0.0
  %v419 = vmul.f32 %v163, 0.0
  %v420 = vmul.f32 %v164, 0.0
  %v421 = vmul.f32 %v165, 0.0
  %v422 = vmul.f32 %v166, 0.0
  %v423 = vmul.f32 %v167, 0.0
  %v424 = vmul.f32 %v168, 0.0
  %v425 = vmul.f32 %v169, 0.0
  %v426 = vmul.f32 %v170, 0.0
  %v427 = vmul.f32 %v171, 0.0
  %v428 = vmul.f32 %v172, 0.0
  %v429 = vmul.f32 %v173, 0.0
  %v430 = vmul.f32 %v174, 0.0
  %v431 = vmul.f32 %v175, 0.0
  %v432 = vmul.f32 %v176, 0.0
  %v433 = vmul.f32 %v177, 0.0
  %v434 = vmul.f32 %v178, 0.0
  %v435 = vmul.f32 %v179, 0.0
  %v436 = vmul.f32 %v180, 0.0
  %v437 = vmul.f32 %v181, 0.0
  %v438 = vmul.f32 %v182, 0.0
  %v439 = vmul.f32 %v183, 0.0
  %v440 = vmul.f32 %v184, 0.0
  %v441 = vmul.f32 %v185, 0.0
  %v442 = vmul.f32 %v186, 0.0
  %v443 = vmul.f32 %v187, 0.0
  %v444 = vmul.f32 %v188, 0.0
  %v445 = vmul.f32 %v189, 0.0
  %v446 = vmul.f32 %v190, 0.0
  %v447 = vmul.f32 %v191, 0.0
  %v448 = vmul.f32 %v192, 0.0
  %v449 = vmul.f32 %v193, 0.0
  %v450 = vmul.f32 %v194, 0.0
  %v451 = vmul.f32 %v195, 0.0
  %v452 = vmul.f32 %v196, 0.0
  %v453 = vmul.f32 %v197, 0.0
  %v454 = vmul.f32 %v198, 0.0
  %v455 = vmul.f32 %v199, 0.0
  %v456 = vmul.f32 %v200, 0.0
  %v457 = vmul.f32 %v201, 0.0
  %v458 = vmul.f32 %v202, 0.0
  %v459 = vmul.f32 %v203, 0.0
  %v460 = vmul.f32 %v204, 0.0
  %v461 = vmul.f32 %v205, 0.0
  %v462 = vmul.f32 %v206, 0.0
  %v463 = vsel %vm207, %v79, %v335
  %v464 = vsel %vm208, %v80, %v336
  %v465 = vsel %vm209, %v81, %v337
  %v466 = vsel %vm210, %v82, %v338
  %v467 = vsel %vm211, %v83, %v339
  %v468 = vsel %vm212, %v84, %v340
  %v469 = vsel %vm213, %v85, %v341
  %v470 = vsel %vm214, %v86, %v342
  %v471 = vsel %vm215, %v87, %v343
  %v472 = vsel %vm216, %v88, %v344
  %v473 = vsel %vm217, %v89, %v345
  %v474 = vsel %vm218, %v90, %v346
  %v475 = vsel %vm219, %v91, %v347
  %v476 = vsel %vm220, %v92, %v348
  %v477 = vsel %vm221, %v93, %v349
  %v478 = vsel %vm222, %v94, %v350
  %v479 = vsel %vm223, %v95, %v351
  %v480 = vsel %vm224, %v96, %v352
  %v481 = vsel %vm225, %v97, %v353
  %v482 = vsel %vm226, %v98, %v354
  %v483 = vsel %vm227, %v99, %v355
  %v484 = vsel %vm228, %v100, %v356
  %v485 = vsel %vm229, %v101, %v357
  %v486 = vsel %vm230, %v102, %v358
  %v487 = vsel %vm231, %v103, %v359
  %v488 = vsel %vm232, %v104, %v360
  %v489 = vsel %vm233, %v105, %v361
  %v490 = vsel %vm234, %v106, %v362
  %v491 = vsel %vm235, %v107, %v363
  %v492 = vsel %vm236, %v108, %v364
  %v493 = vsel %vm237, %v109, %v365
  %v494 = vsel %vm238, %v110, %v366
  %v495 = vsel %vm239, %v111, %v367
  %v496 = vsel %vm240, %v112, %v368
  %v497 = vsel %vm241, %v113, %v369
  %v498 = vsel %vm242, %v114, %v370
  %v499 = vsel %vm243, %v115, %v371
  %v500 = vsel %vm244, %v116, %v372
  %v501 = vsel %vm245, %v117, %v373
  %v502 = vsel %vm246, %v118, %v374
  %v503 = vsel %vm247, %v119, %v375
  %v504 = vsel %vm248, %v120, %v376
  %v505 = vsel %vm249, %v121, %v377
  %v506 = vsel %vm250, %v122, %v378
  %v507 = vsel %vm251, %v123, %v379
  %v508 = vsel %vm252, %v124, %v380
  %v509 = vsel %vm253, %v125, %v381
  %v510 = vsel %vm254, %v126, %v382
  %v511 = vsel %vm255, %v127, %v383
  %v512 = vsel %vm256, %v128, %v384
  %v513 = vsel %vm257, %v129, %v385
  %v514 = vsel %vm258, %v130, %v386
  %v515 = vsel %vm259, %v131, %v387
  %v516 = vsel %vm260, %v132, %v388
  %v517 = vsel %vm261, %v133, %v389
  %v518 = vsel %vm262, %v134, %v390
  %v519 = vsel %vm263, %v135, %v391
  %v520 = vsel %vm264, %v136, %v392
  %v521 = vsel %vm265, %v137, %v393
  %v522 = vsel %vm266, %v138, %v394
  %v523 = vsel %vm267, %v139, %v395
  %v524 = vsel %vm268, %v140, %v396
  %v525 = vsel %vm269, %v141, %v397
  %v526 = vsel %vm270, %v142, %v398
  %v527 = vsel %vm271, %v143, %v399
  %v528 = vsel %vm272, %v144, %v400
  %v529 = vsel %vm273, %v145, %v401
  %v530 = vsel %vm274, %v146, %v402
  %v531 = vsel %vm275, %v147, %v403
  %v532 = vsel %vm276, %v148, %v404
  %v533 = vsel %vm277, %v149, %v405
  %v534 = vsel %vm278, %v150, %v406
  %v535 = vsel %vm279, %v151, %v407
  %v536 = vsel %vm280, %v152, %v408
  %v537 = vsel %vm281, %v153, %v409
  %v538 = vsel %vm282, %v154, %v410
  %v539 = vsel %vm283, %v155, %v411
  %v540 = vsel %vm284, %v156, %v412
  %v541 = vsel %vm285, %v157, %v413
  %v542 = vsel %vm286, %v158, %v414
  %v543 = vsel %vm287, %v159, %v415
  %v544 = vsel %vm288, %v160, %v416
  %v545 = vsel %vm289, %v161, %v417
  %v546 = vsel %vm290, %v162, %v418
  %v547 = vsel %vm291, %v163, %v419
  %v548 = vsel %vm292, %v164, %v420
  %v549 = vsel %vm293, %v165, %v421
  %v550 = vsel %vm294, %v166, %v422
  %v551 = vsel %vm295, %v167, %v423
  %v552 = vsel %vm296, %v168, %v424
  %v553 = vsel %vm297, %v169, %v425
  %v554 = vsel %vm298, %v170, %v426
  %v555 = vsel %vm299, %v171, %v427
  %v556 = vsel %vm300, %v172, %v428
  %v557 = vsel %vm301, %v173, %v429
  %v558 = vsel %vm302, %v174, %v430
  %v559 = vsel %vm303, %v175, %v431
  %v560 = vsel %vm304, %v176, %v432
  %v561 = vsel %vm305, %v177, %v433
  %v562 = vsel %vm306, %v178, %v434
  %v563 = vsel %vm307, %v179, %v435
  %v564 = vsel %vm308, %v180, %v436
  %v565 = vsel %vm309, %v181, %v437
  %v566 = vsel %vm310, %v182, %v438
  %v567 = vsel %vm311, %v183, %v439
  %v568 = vsel %vm312, %v184, %v440
  %v569 = vsel %vm313, %v185, %v441
  %v570 = vsel %vm314, %v186, %v442
  %v571 = vsel %vm315, %v187, %v443
  %v572 = vsel %vm316, %v188, %v444
  %v573 = vsel %vm317, %v189, %v445
  %v574 = vsel %vm318, %v190, %v446
  %v575 = vsel %vm319, %v191, %v447
  %v576 = vsel %vm320, %v192, %v448
  %v577 = vsel %vm321, %v193, %v449
  %v578 = vsel %vm322, %v194, %v450
  %v579 = vsel %vm323, %v195, %v451
  %v580 = vsel %vm324, %v196, %v452
  %v581 = vsel %vm325, %v197, %v453
  %v582 = vsel %vm326, %v198, %v454
  %v583 = vsel %vm327, %v199, %v455
  %v584 = vsel %vm328, %v200, %v456
  %v585 = vsel %vm329, %v201, %v457
  %v586 = vsel %vm330, %v202, %v458
  %v587 = vsel %vm331, %v203, %v459
  %v588 = vsel %vm332, %v204, %v460
  %v589 = vsel %vm333, %v205, %v461
  %v590 = vsel %vm334, %v206, %v462
  %v591 = vpack.c.bf16 %v465, %v463
  %v592 = vpack.c.bf16 %v466, %v464
  %v593 = vpack.c.bf16 %v469, %v467
  %v594 = vpack.c.bf16 %v470, %v468
  %v595 = vpack.c.bf16 %v473, %v471
  %v596 = vpack.c.bf16 %v474, %v472
  %v597 = vpack.c.bf16 %v477, %v475
  %v598 = vpack.c.bf16 %v478, %v476
  %v599 = vpack.c.bf16 %v481, %v479
  %v600 = vpack.c.bf16 %v482, %v480
  %v601 = vpack.c.bf16 %v485, %v483
  %v602 = vpack.c.bf16 %v486, %v484
  %v603 = vpack.c.bf16 %v489, %v487
  %v604 = vpack.c.bf16 %v490, %v488
  %v605 = vpack.c.bf16 %v493, %v491
  %v606 = vpack.c.bf16 %v494, %v492
  %v607 = vpack.c.bf16 %v497, %v495
  %v608 = vpack.c.bf16 %v498, %v496
  %v609 = vpack.c.bf16 %v501, %v499
  %v610 = vpack.c.bf16 %v502, %v500
  %v611 = vpack.c.bf16 %v505, %v503
  %v612 = vpack.c.bf16 %v506, %v504
  %v613 = vpack.c.bf16 %v509, %v507
  %v614 = vpack.c.bf16 %v510, %v508
  %v615 = vpack.c.bf16 %v513, %v511
  %v616 = vpack.c.bf16 %v514, %v512
  %v617 = vpack.c.bf16 %v517, %v515
  %v618 = vpack.c.bf16 %v518, %v516
  %v619 = vpack.c.bf16 %v521, %v519
  %v620 = vpack.c.bf16 %v522, %v520
  %v621 = vpack.c.bf16 %v525, %v523
  %v622 = vpack.c.bf16 %v526, %v524
  %v623 = vpack.c.bf16 %v529, %v527
  %v624 = vpack.c.bf16 %v530, %v528
  %v625 = vpack.c.bf16 %v533, %v531
  %v626 = vpack.c.bf16 %v534, %v532
  %v627 = vpack.c.bf16 %v537, %v535
  %v628 = vpack.c.bf16 %v538, %v536
  %v629 = vpack.c.bf16 %v541, %v539
  %v630 = vpack.c.bf16 %v542, %v540
  %v631 = vpack.c.bf16 %v545, %v543
  %v632 = vpack.c.bf16 %v546, %v544
  %v633 = vpack.c.bf16 %v549, %v547
  %v634 = vpack.c.bf16 %v550, %v548
  %v635 = vpack.c.bf16 %v553, %v551
  %v636 = vpack.c.bf16 %v554, %v552
  %v637 = vpack.c.bf16 %v557, %v555
  %v638 = vpack.c.bf16 %v558, %v556
  %v639 = vpack.c.bf16 %v561, %v559
  %v640 = vpack.c.bf16 %v562, %v560
  %v641 = vpack.c.bf16 %v565, %v563
  %v642 = vpack.c.bf16 %v566, %v564
  %v643 = vpack.c.bf16 %v569, %v567
  %v644 = vpack.c.bf16 %v570, %v568
  %v645 = vpack.c.bf16 %v573, %v571
  %v646 = vpack.c.bf16 %v574, %v572
  %v647 = vpack.c.bf16 %v577, %v575
  %v648 = vpack.c.bf16 %v578, %v576
  %v649 = vpack.c.bf16 %v581, %v579
  %v650 = vpack.c.bf16 %v582, %v580
  %v651 = vpack.c.bf16 %v585, %v583
  %v652 = vpack.c.bf16 %v586, %v584
  %v653 = vpack.c.bf16 %v589, %v587
  %v654 = vpack.c.bf16 %v590, %v588
  %v655 = vld [vmem:[%s1] sm:$0xf]
  %v656 = vld [vmem:[%s1 + $0x4] sm:$0xf]
  %v657 = vld [vmem:[%s1 + $0x8] sm:$0xf]
  %v658 = vld [vmem:[%s1 + $0xc] sm:$0xf]
  %v659 = vld [vmem:[%s1 + $0x10] sm:$0xf]
  %v660 = vld [vmem:[%s1 + $0x14] sm:$0xf]
  %v661 = vld [vmem:[%s1 + $0x18] sm:$0xf]
  %v662 = vld [vmem:[%s1 + $0x1c] sm:$0xf]
  %v663 = vld [vmem:[%s1 + $0x20] sm:$0xf]
  %v664 = vld [vmem:[%s1 + $0x24] sm:$0xf]
  %v665 = vld [vmem:[%s1 + $0x28] sm:$0xf]
  %v666 = vld [vmem:[%s1 + $0x2c] sm:$0xf]
  %v667 = vld [vmem:[%s1 + $0x30] sm:$0xf]
  %v668 = vld [vmem:[%s1 + $0x34] sm:$0xf]
  %v669 = vld [vmem:[%s1 + $0x38] sm:$0xf]
  %v670 = vld [vmem:[%s1 + $0x3c] sm:$0xf]
  %v671 = vld [vmem:[%s1 + $0x40] sm:$0xf]
  %v672 = vld [vmem:[%s1 + $0x44] sm:$0xf]
  %v673 = vld [vmem:[%s2] sm:$0x1]
  %v675 = vlaneseq
  %v676 = vshrl.u32 %v675, 7
  %v677 = vsub.s32 0, %v676
  %v678 = vrot.slane %v673, %v677
  %v698 = vunpack.c.l.b16 %v655
  %v699 = vunpack.c.l.b16 %v656
  %v700 = vunpack.c.l.b16 %v657
  %v701 = vunpack.c.l.b16 %v658
  %v702 = vunpack.c.l.b16 %v659
  %v703 = vunpack.c.l.b16 %v660
  %v704 = vunpack.c.l.b16 %v661
  %v705 = vunpack.c.l.b16 %v662
  %v706 = vunpack.c.l.b16 %v663
  %v707 = vunpack.c.l.b16 %v664
  %v708 = vunpack.c.l.b16 %v665
  %v709 = vunpack.c.l.b16 %v666
  %v710 = vunpack.c.l.b16 %v667
  %v711 = vunpack.c.l.b16 %v668
  %v712 = vunpack.c.l.b16 %v669
  %v713 = vunpack.c.l.b16 %v670
  %v714 = vunpack.c.l.b16 %v671
  %v715 = vunpack.c.l.b16 %v672
  %v716 = vpack.c.b16 %v699, %v698
  %v717 = vpack.c.b16 %v701, %v700
  %v718 = vpack.c.b16 %v703, %v702
  %v719 = vpack.c.b16 %v705, %v704
  %v720 = vpack.c.b16 %v707, %v706
  %v721 = vpack.c.b16 %v709, %v708
  %v722 = vpack.c.b16 %v711, %v710
  %v723 = vpack.c.b16 %v713, %v712
  %v724 = vpack.c.b16 %v715, %v714
  %vm734 = vcmask 130048
  %v736 = vsel %vm734, %v592, 0
  %v739 = vsel %vm734, %v594, 0
  %v742 = vsel %vm734, %v596, 0
  %v745 = vsel %vm734, %v598, 0
  %v748 = vsel %vm734, %v600, 0
  %v751 = vsel %vm734, %v602, 0
  %v754 = vsel %vm734, %v604, 0
  %v757 = vsel %vm734, %v606, 0
  %v760 = vsel %vm734, %v608, 0
  %v763 = vsel %vm734, %v610, 0
  %v766 = vsel %vm734, %v612, 0
  %v769 = vsel %vm734, %v614, 0
  %v772 = vsel %vm734, %v616, 0
  %v775 = vsel %vm734, %v618, 0
  %v778 = vsel %vm734, %v620, 0
  %v781 = vsel %vm734, %v622, 0
  %v784 = vsel %vm734, %v624, 0
  %v787 = vsel %vm734, %v626, 0
  %v790 = vsel %vm734, %v628, 0
  %v793 = vsel %vm734, %v630, 0
  %v796 = vsel %vm734, %v632, 0
  %v799 = vsel %vm734, %v634, 0
  %v802 = vsel %vm734, %v636, 0
  %v805 = vsel %vm734, %v638, 0
  %v808 = vsel %vm734, %v640, 0
  %v811 = vsel %vm734, %v642, 0
  %v814 = vsel %vm734, %v644, 0
  %v817 = vsel %vm734, %v646, 0
  %v820 = vsel %vm734, %v648, 0
  %v823 = vsel %vm734, %v650, 0
  %v826 = vsel %vm734, %v652, 0
  %v829 = vsel %vm734, %v654, 0
  %831 = vmatprep.subr.bf16.mxu0 0
  %832 = vmatpush1.bf16.msra.mxu0 %v716
  %833 = vmatprep.subr.bf16.mxu0 0
  %834 = vmatpush1.bf16.msra.mxu0 %v717
  %835 = vmatprep.subr.bf16.mxu0 0
  %836 = vmatpush1.bf16.msra.mxu0 %v718
  %837 = vmatprep.subr.bf16.mxu0 0
  %838 = vmatpush1.bf16.msra.mxu0 %v719
  %839 = vmatprep.subr.bf16.mxu0 0
  %840 = vmatpush1.bf16.msra.mxu0 %v720
  %841 = vmatprep.subr.bf16.mxu0 0
  %842 = vmatpush1.bf16.msra.mxu0 %v721
  %843 = vmatprep.subr.bf16.mxu0 0
  %844 = vmatpush1.bf16.msra.mxu0 %v722
  %845 = vmatprep.subr.bf16.mxu0 0
  %846 = vmatpush1.bf16.msra.mxu0 %v723
  %847 = vmatprep.subr.bf16.mxu0 0
  %848 = vmatpush1.bf16.msra.mxu0 %v724
  %849 = vmatprep.subr.bf16.mxu0 0
  %850 = vmatpush1.bf16.msra.mxu0 0
  %851 = vmatprep.subr.bf16.mxu0 0
  %852 = vmatpush1.bf16.msra.mxu0 0
  %853 = vmatprep.subr.bf16.mxu0 0
  %854 = vmatpush1.bf16.msra.mxu0 0
  %855 = vmatprep.subr.bf16.mxu0 0
  %856 = vmatpush1.bf16.msra.mxu0 0
  %857 = vmatprep.subr.bf16.mxu0 0
  %858 = vmatpush1.bf16.msra.mxu0 0
  %859 = vmatprep.subr.bf16.mxu0 0
  %860 = vmatpush1.bf16.msra.mxu0 0
  %861 = vmatprep.subr.bf16.mxu0 0
  %862 = vmatpush1.bf16.msra.mxu0 0
  %863 = vmatprep.mubr.bf16.mxu0 %v736
  %864 = vmatmul.mubr.bf16.gmra.mrb[0].mxu0 %v591
  %v865 = vpop.f32.mrb[0].mxu0
  %v866 = vadd.f32 %v678, %v865
  %v867 = vpop.f32.mrb[0].mxu0
  %v868 = vpop.f32.mrb[0].mxu0
  %v869 = vadd.f32 %v678, %v868
  %v870 = vpop.f32.mrb[0].mxu0
  %871 = vmatprep.mubr.bf16.mxu0 %v739
  %872 = vmatmul.mubr.bf16.gmra.mrb[0].mxu0 %v593
  %v873 = vpop.f32.mrb[0].mxu0
  %v874 = vadd.f32 %v678, %v873
  %v875 = vpop.f32.mrb[0].mxu0
  %v876 = vpop.f32.mrb[0].mxu0
  %v877 = vadd.f32 %v678, %v876
  %v878 = vpop.f32.mrb[0].mxu0
  %879 = vmatprep.mubr.bf16.mxu0 %v742
  %880 = vmatmul.mubr.bf16.gmra.mrb[0].mxu0 %v595
  %v881 = vpop.f32.mrb[0].mxu0
  %v882 = vadd.f32 %v678, %v881
  %v883 = vpop.f32.mrb[0].mxu0
  %v884 = vpop.f32.mrb[0].mxu0
  %v885 = vadd.f32 %v678, %v884
  %v886 = vpop.f32.mrb[0].mxu0
  %887 = vmatprep.mubr.bf16.mxu0 %v745
  %888 = vmatmul.mubr.bf16.gmra.mrb[0].mxu0 %v597
  %v889 = vpop.f32.mrb[0].mxu0
  %v890 = vadd.f32 %v678, %v889
  %v891 = vpop.f32.mrb[0].mxu0
  %v892 = vpop.f32.mrb[0].mxu0
  %v893 = vadd.f32 %v678, %v892
  %v894 = vpop.f32.mrb[0].mxu0
  %895 = vmatprep.mubr.bf16.mxu0 %v748
  %896 = vmatmul.mubr.bf16.gmra.mrb[0].mxu0 %v599
  %v897 = vpop.f32.mrb[0].mxu0
  %v898 = vadd.f32 %v678, %v897
  %v899 = vpop.f32.mrb[0].mxu0
  %v900 = vpop.f32.mrb[0].mxu0
  %v901 = vadd.f32 %v678, %v900
  %v902 = vpop.f32.mrb[0].mxu0
  %903 = vmatprep.mubr.bf16.mxu0 %v751
  %904 = vmatmul.mubr.bf16.gmra.mrb[0].mxu0 %v601
  %v905 = vpop.f32.mrb[0].mxu0
  %v906 = vadd.f32 %v678, %v905
  %v907 = vpop.f32.mrb[0].mxu0
  %v908 = vpop.f32.mrb[0].mxu0
  %v909 = vadd.f32 %v678, %v908
  %v910 = vpop.f32.mrb[0].mxu0
  %911 = vmatprep.mubr.bf16.mxu0 %v754
  %912 = vmatmul.mubr.bf16.gmra.mrb[0].mxu0 %v603
  %v913 = vpop.f32.mrb[0].mxu0
  %v914 = vadd.f32 %v678, %v913
  %v915 = vpop.f32.mrb[0].mxu0
  %v916 = vpop.f32.mrb[0].mxu0
  %v917 = vadd.f32 %v678, %v916
  %v918 = vpop.f32.mrb[0].mxu0
  %919 = vmatprep.mubr.bf16.mxu0 %v757
  %920 = vmatmul.mubr.bf16.gmra.mrb[0].mxu0 %v605
  %v921 = vpop.f32.mrb[0].mxu0
  %v922 = vadd.f32 %v678, %v921
  %v923 = vpop.f32.mrb[0].mxu0
  %v924 = vpop.f32.mrb[0].mxu0
  %v925 = vadd.f32 %v678, %v924
  %v926 = vpop.f32.mrb[0].mxu0
  %927 = vmatprep.mubr.bf16.mxu0 %v760
  %928 = vmatmul.mubr.bf16.gmra.mrb[0].mxu0 %v607
  %v929 = vpop.f32.mrb[0].mxu0
  %v930 = vadd.f32 %v678, %v929
  %v931 = vpop.f32.mrb[0].mxu0
  %v932 = vpop.f32.mrb[0].mxu0
  %v933 = vadd.f32 %v678, %v932
  %v934 = vpop.f32.mrb[0].mxu0
  %935 = vmatprep.mubr.bf16.mxu0 %v763
  %936 = vmatmul.mubr.bf16.gmra.mrb[0].mxu0 %v609
  %v937 = vpop.f32.mrb[0].mxu0
  %v938 = vadd.f32 %v678, %v937
  %v939 = vpop.f32.mrb[0].mxu0
  %v940 = vpop.f32.mrb[0].mxu0
  %v941 = vadd.f32 %v678, %v940
  %v942 = vpop.f32.mrb[0].mxu0
  %943 = vmatprep.mubr.bf16.mxu0 %v766
  %944 = vmatmul.mubr.bf16.gmra.mrb[0].mxu0 %v611
  %v945 = vpop.f32.mrb[0].mxu0
  %v946 = vadd.f32 %v678, %v945
  %v947 = vpop.f32.mrb[0].mxu0
  %v948 = vpop.f32.mrb[0].mxu0
  %v949 = vadd.f32 %v678, %v948
  %v950 = vpop.f32.mrb[0].mxu0
  %951 = vmatprep.mubr.bf16.mxu0 %v769
  %952 = vmatmul.mubr.bf16.gmra.mrb[0].mxu0 %v613
  %v953 = vpop.f32.mrb[0].mxu0
  %v954 = vadd.f32 %v678, %v953
  %v955 = vpop.f32.mrb[0].mxu0
  %v956 = vpop.f32.mrb[0].mxu0
  %v957 = vadd.f32 %v678, %v956
  %v958 = vpop.f32.mrb[0].mxu0
  %959 = vmatprep.mubr.bf16.mxu0 %v772
  %960 = vmatmul.mubr.bf16.gmra.mrb[0].mxu0 %v615
  %v961 = vpop.f32.mrb[0].mxu0
  %v962 = vadd.f32 %v678, %v961
  %v963 = vpop.f32.mrb[0].mxu0
  %v964 = vpop.f32.mrb[0].mxu0
  %v965 = vadd.f32 %v678, %v964
  %v966 = vpop.f32.mrb[0].mxu0
  %967 = vmatprep.mubr.bf16.mxu0 %v775
  %968 = vmatmul.mubr.bf16.gmra.mrb[0].mxu0 %v617
  %v969 = vpop.f32.mrb[0].mxu0
  %v970 = vadd.f32 %v678, %v969
  %v971 = vpop.f32.mrb[0].mxu0
  %v972 = vpop.f32.mrb[0].mxu0
  %v973 = vadd.f32 %v678, %v972
  %v974 = vpop.f32.mrb[0].mxu0
  %975 = vmatprep.mubr.bf16.mxu0 %v778
  %976 = vmatmul.mubr.bf16.gmra.mrb[0].mxu0 %v619
  %v977 = vpop.f32.mrb[0].mxu0
  %v978 = vadd.f32 %v678, %v977
  %v979 = vpop.f32.mrb[0].mxu0
  %v980 = vpop.f32.mrb[0].mxu0
  %v981 = vadd.f32 %v678, %v980
  %v982 = vpop.f32.mrb[0].mxu0
  %983 = vmatprep.mubr.bf16.mxu0 %v781
  %984 = vmatmul.mubr.bf16.gmra.mrb[0].mxu0 %v621
  %v985 = vpop.f32.mrb[0].mxu0
  %v986 = vadd.f32 %v678, %v985
  %v987 = vpop.f32.mrb[0].mxu0
  %v988 = vpop.f32.mrb[0].mxu0
  %v989 = vadd.f32 %v678, %v988
  %v990 = vpop.f32.mrb[0].mxu0
  %991 = vmatprep.mubr.bf16.mxu0 %v784
  %992 = vmatmul.mubr.bf16.gmra.mrb[0].mxu0 %v623
  %v993 = vpop.f32.mrb[0].mxu0
  %v994 = vadd.f32 %v678, %v993
  %v995 = vpop.f32.mrb[0].mxu0
  %v996 = vpop.f32.mrb[0].mxu0
  %v997 = vadd.f32 %v678, %v996
  %v998 = vpop.f32.mrb[0].mxu0
  %999 = vmatprep.mubr.bf16.mxu0 %v787
  %1000 = vmatmul.mubr.bf16.gmra.mrb[0].mxu0 %v625
  %v1001 = vpop.f32.mrb[0].mxu0
  %v1002 = vadd.f32 %v678, %v1001
  %v1003 = vpop.f32.mrb[0].mxu0
  %v1004 = vpop.f32.mrb[0].mxu0
  %v1005 = vadd.f32 %v678, %v1004
  %v1006 = vpop.f32.mrb[0].mxu0
  %1007 = vmatprep.mubr.bf16.mxu0 %v790
  %1008 = vmatmul.mubr.bf16.gmra.mrb[0].mxu0 %v627
  %v1009 = vpop.f32.mrb[0].mxu0
  %v1010 = vadd.f32 %v678, %v1009
  %v1011 = vpop.f32.mrb[0].mxu0
  %v1012 = vpop.f32.mrb[0].mxu0
  %v1013 = vadd.f32 %v678, %v1012
  %v1014 = vpop.f32.mrb[0].mxu0
  %1015 = vmatprep.mubr.bf16.mxu0 %v793
  %1016 = vmatmul.mubr.bf16.gmra.mrb[0].mxu0 %v629
  %v1017 = vpop.f32.mrb[0].mxu0
  %v1018 = vadd.f32 %v678, %v1017
  %v1019 = vpop.f32.mrb[0].mxu0
  %v1020 = vpop.f32.mrb[0].mxu0
  %v1021 = vadd.f32 %v678, %v1020
  %v1022 = vpop.f32.mrb[0].mxu0
  %1023 = vmatprep.mubr.bf16.mxu0 %v796
  %1024 = vmatmul.mubr.bf16.gmra.mrb[0].mxu0 %v631
  %v1025 = vpop.f32.mrb[0].mxu0
  %v1026 = vadd.f32 %v678, %v1025
  %v1027 = vpop.f32.mrb[0].mxu0
  %v1028 = vpop.f32.mrb[0].mxu0
  %v1029 = vadd.f32 %v678, %v1028
  %v1030 = vpop.f32.mrb[0].mxu0
  %1031 = vmatprep.mubr.bf16.mxu0 %v799
  %1032 = vmatmul.mubr.bf16.gmra.mrb[0].mxu0 %v633
  %v1033 = vpop.f32.mrb[0].mxu0
  %v1034 = vadd.f32 %v678, %v1033
  %v1035 = vpop.f32.mrb[0].mxu0
  %v1036 = vpop.f32.mrb[0].mxu0
  %v1037 = vadd.f32 %v678, %v1036
  %v1038 = vpop.f32.mrb[0].mxu0
  %1039 = vmatprep.mubr.bf16.mxu0 %v802
  %1040 = vmatmul.mubr.bf16.gmra.mrb[0].mxu0 %v635
  %v1041 = vpop.f32.mrb[0].mxu0
  %v1042 = vadd.f32 %v678, %v1041
  %v1043 = vpop.f32.mrb[0].mxu0
  %v1044 = vpop.f32.mrb[0].mxu0
  %v1045 = vadd.f32 %v678, %v1044
  %v1046 = vpop.f32.mrb[0].mxu0
  %1047 = vmatprep.mubr.bf16.mxu0 %v805
  %1048 = vmatmul.mubr.bf16.gmra.mrb[0].mxu0 %v637
  %v1049 = vpop.f32.mrb[0].mxu0
  %v1050 = vadd.f32 %v678, %v1049
  %v1051 = vpop.f32.mrb[0].mxu0
  %v1052 = vpop.f32.mrb[0].mxu0
  %v1053 = vadd.f32 %v678, %v1052
  %v1054 = vpop.f32.mrb[0].mxu0
  %1055 = vmatprep.mubr.bf16.mxu0 %v808
  %1056 = vmatmul.mubr.bf16.gmra.mrb[0].mxu0 %v639
  %v1057 = vpop.f32.mrb[0].mxu0
  %v1058 = vadd.f32 %v678, %v1057
  %v1059 = vpop.f32.mrb[0].mxu0
  %v1060 = vpop.f32.mrb[0].mxu0
  %v1061 = vadd.f32 %v678, %v1060
  %v1062 = vpop.f32.mrb[0].mxu0
  %1063 = vmatprep.mubr.bf16.mxu0 %v811
  %1064 = vmatmul.mubr.bf16.gmra.mrb[0].mxu0 %v641
  %v1065 = vpop.f32.mrb[0].mxu0
  %v1066 = vadd.f32 %v678, %v1065
  %v1067 = vpop.f32.mrb[0].mxu0
  %v1068 = vpop.f32.mrb[0].mxu0
  %v1069 = vadd.f32 %v678, %v1068
  %v1070 = vpop.f32.mrb[0].mxu0
  %1071 = vmatprep.mubr.bf16.mxu0 %v814
  %1072 = vmatmul.mubr.bf16.gmra.mrb[0].mxu0 %v643
  %v1073 = vpop.f32.mrb[0].mxu0
  %v1074 = vadd.f32 %v678, %v1073
  %v1075 = vpop.f32.mrb[0].mxu0
  %v1076 = vpop.f32.mrb[0].mxu0
  %v1077 = vadd.f32 %v678, %v1076
  %v1078 = vpop.f32.mrb[0].mxu0
  %1079 = vmatprep.mubr.bf16.mxu0 %v817
  %1080 = vmatmul.mubr.bf16.gmra.mrb[0].mxu0 %v645
  %v1081 = vpop.f32.mrb[0].mxu0
  %v1082 = vadd.f32 %v678, %v1081
  %v1083 = vpop.f32.mrb[0].mxu0
  %v1084 = vpop.f32.mrb[0].mxu0
  %v1085 = vadd.f32 %v678, %v1084
  %v1086 = vpop.f32.mrb[0].mxu0
  %1087 = vmatprep.mubr.bf16.mxu0 %v820
  %1088 = vmatmul.mubr.bf16.gmra.mrb[0].mxu0 %v647
  %v1089 = vpop.f32.mrb[0].mxu0
  %v1090 = vadd.f32 %v678, %v1089
  %v1091 = vpop.f32.mrb[0].mxu0
  %v1092 = vpop.f32.mrb[0].mxu0
  %v1093 = vadd.f32 %v678, %v1092
  %v1094 = vpop.f32.mrb[0].mxu0
  %1095 = vmatprep.mubr.bf16.mxu0 %v823
  %1096 = vmatmul.mubr.bf16.gmra.mrb[0].mxu0 %v649
  %v1097 = vpop.f32.mrb[0].mxu0
  %v1098 = vadd.f32 %v678, %v1097
  %v1099 = vpop.f32.mrb[0].mxu0
  %v1100 = vpop.f32.mrb[0].mxu0
  %v1101 = vadd.f32 %v678, %v1100
  %v1102 = vpop.f32.mrb[0].mxu0
  %1103 = vmatprep.mubr.bf16.mxu0 %v826
  %1104 = vmatmul.mubr.bf16.gmra.mrb[0].mxu0 %v651
  %v1105 = vpop.f32.mrb[0].mxu0
  %v1106 = vadd.f32 %v678, %v1105
  %v1107 = vpop.f32.mrb[0].mxu0
  %v1108 = vpop.f32.mrb[0].mxu0
  %v1109 = vadd.f32 %v678, %v1108
  %v1110 = vpop.f32.mrb[0].mxu0
  %1111 = vmatprep.mubr.bf16.mxu0 %v829
  %1112 = vmatmul.mubr.bf16.gmra.mrb[0].mxu0 %v653
  %v1113 = vpop.f32.mrb[0].mxu0
  %v1114 = vadd.f32 %v678, %v1113
  %v1115 = vpop.f32.mrb[0].mxu0
  %v1116 = vpop.f32.mrb[0].mxu0
  %v1117 = vadd.f32 %v678, %v1116
  %v1118 = vpop.f32.mrb[0].mxu0
  %1119 = vdwg.mxu0
  %vm1120 = vcmask 97280
  %1121 = vst.msk [vmem:[%s3] sm:$0xff] %vm1120, %v866
  %1122 = vst.msk [vmem:[%s3 + $0x8] sm:$0xff] %vm1120, %v869
  %1123 = vst.msk [vmem:[%s3 + $0x10] sm:$0xff] %vm1120, %v874
  %1124 = vst.msk [vmem:[%s3 + $0x18] sm:$0xff] %vm1120, %v877
  %1125 = vst.msk [vmem:[%s3 + $0x20] sm:$0xff] %vm1120, %v882
  %1126 = vst.msk [vmem:[%s3 + $0x28] sm:$0xff] %vm1120, %v885
  %1127 = vst.msk [vmem:[%s3 + $0x30] sm:$0xff] %vm1120, %v890
  %1128 = vst.msk [vmem:[%s3 + $0x38] sm:$0xff] %vm1120, %v893
  %1129 = vst.msk [vmem:[%s3 + $0x40] sm:$0xff] %vm1120, %v898
  %1130 = vst.msk [vmem:[%s3 + $0x48] sm:$0xff] %vm1120, %v901
  %1131 = vst.msk [vmem:[%s3 + $0x50] sm:$0xff] %vm1120, %v906
  %1132 = vst.msk [vmem:[%s3 + $0x58] sm:$0xff] %vm1120, %v909
  %1133 = vst.msk [vmem:[%s3 + $0x60] sm:$0xff] %vm1120, %v914
  %1134 = vst.msk [vmem:[%s3 + $0x68] sm:$0xff] %vm1120, %v917
  %1135 = vst.msk [vmem:[%s3 + $0x70] sm:$0xff] %vm1120, %v922
  %1136 = vst.msk [vmem:[%s3 + $0x78] sm:$0xff] %vm1120, %v925
  %1137 = vst.msk [vmem:[%s3 + $0x80] sm:$0xff] %vm1120, %v930
  %1138 = vst.msk [vmem:[%s3 + $0x88] sm:$0xff] %vm1120, %v933
  %1139 = vst.msk [vmem:[%s3 + $0x90] sm:$0xff] %vm1120, %v938
  %1140 = vst.msk [vmem:[%s3 + $0x98] sm:$0xff] %vm1120, %v941
  %1141 = vst.msk [vmem:[%s3 + $0xa0] sm:$0xff] %vm1120, %v946
  %1142 = vst.msk [vmem:[%s3 + $0xa8] sm:$0xff] %vm1120, %v949
  %1143 = vst.msk [vmem:[%s3 + $0xb0] sm:$0xff] %vm1120, %v954
  %1144 = vst.msk [vmem:[%s3 + $0xb8] sm:$0xff] %vm1120, %v957
  %1145 = vst.msk [vmem:[%s3 + $0xc0] sm:$0xff] %vm1120, %v962
  %1146 = vst.msk [vmem:[%s3 + $0xc8] sm:$0xff] %vm1120, %v965
  %1147 = vst.msk [vmem:[%s3 + $0xd0] sm:$0xff] %vm1120, %v970
  %1148 = vst.msk [vmem:[%s3 + $0xd8] sm:$0xff] %vm1120, %v973
  %1149 = vst.msk [vmem:[%s3 + $0xe0] sm:$0xff] %vm1120, %v978
  %1150 = vst.msk [vmem:[%s3 + $0xe8] sm:$0xff] %vm1120, %v981
  %1151 = vst.msk [vmem:[%s3 + $0xf0] sm:$0xff] %vm1120, %v986
  %1152 = vst.msk [vmem:[%s3 + $0xf8] sm:$0xff] %vm1120, %v989
  %1153 = vst.msk [vmem:[%s3 + $0x100] sm:$0xff] %vm1120, %v994
  %1154 = vst.msk [vmem:[%s3 + $0x108] sm:$0xff] %vm1120, %v997
  %1155 = vst.msk [vmem:[%s3 + $0x110] sm:$0xff] %vm1120, %v1002
  %1156 = vst.msk [vmem:[%s3 + $0x118] sm:$0xff] %vm1120, %v1005
  %1157 = vst.msk [vmem:[%s3 + $0x120] sm:$0xff] %vm1120, %v1010
  %1158 = vst.msk [vmem:[%s3 + $0x128] sm:$0xff] %vm1120, %v1013
  %1159 = vst.msk [vmem:[%s3 + $0x130] sm:$0xff] %vm1120, %v1018
  %1160 = vst.msk [vmem:[%s3 + $0x138] sm:$0xff] %vm1120, %v1021
  %1161 = vst.msk [vmem:[%s3 + $0x140] sm:$0xff] %vm1120, %v1026
  %1162 = vst.msk [vmem:[%s3 + $0x148] sm:$0xff] %vm1120, %v1029
  %1163 = vst.msk [vmem:[%s3 + $0x150] sm:$0xff] %vm1120, %v1034
  %1164 = vst.msk [vmem:[%s3 + $0x158] sm:$0xff] %vm1120, %v1037
  %1165 = vst.msk [vmem:[%s3 + $0x160] sm:$0xff] %vm1120, %v1042
  %1166 = vst.msk [vmem:[%s3 + $0x168] sm:$0xff] %vm1120, %v1045
  %1167 = vst.msk [vmem:[%s3 + $0x170] sm:$0xff] %vm1120, %v1050
  %1168 = vst.msk [vmem:[%s3 + $0x178] sm:$0xff] %vm1120, %v1053
  %1169 = vst.msk [vmem:[%s3 + $0x180] sm:$0xff] %vm1120, %v1058
  %1170 = vst.msk [vmem:[%s3 + $0x188] sm:$0xff] %vm1120, %v1061
  %1171 = vst.msk [vmem:[%s3 + $0x190] sm:$0xff] %vm1120, %v1066
  %1172 = vst.msk [vmem:[%s3 + $0x198] sm:$0xff] %vm1120, %v1069
  %1173 = vst.msk [vmem:[%s3 + $0x1a0] sm:$0xff] %vm1120, %v1074
  %1174 = vst.msk [vmem:[%s3 + $0x1a8] sm:$0xff] %vm1120, %v1077
  %1175 = vst.msk [vmem:[%s3 + $0x1b0] sm:$0xff] %vm1120, %v1082
  %1176 = vst.msk [vmem:[%s3 + $0x1b8] sm:$0xff] %vm1120, %v1085
  %1177 = vst.msk [vmem:[%s3 + $0x1c0] sm:$0xff] %vm1120, %v1090
  %1178 = vst.msk [vmem:[%s3 + $0x1c8] sm:$0xff] %vm1120, %v1093
  %1179 = vst.msk [vmem:[%s3 + $0x1d0] sm:$0xff] %vm1120, %v1098
  %1180 = vst.msk [vmem:[%s3 + $0x1d8] sm:$0xff] %vm1120, %v1101
  %1181 = vst.msk [vmem:[%s3 + $0x1e0] sm:$0xff] %vm1120, %v1106
  %1182 = vst.msk [vmem:[%s3 + $0x1e8] sm:$0xff] %vm1120, %v1109
  %1183 = vst.msk [vmem:[%s3 + $0x1f0] sm:$0xff] %vm1120, %v1114
  %1184 = vst.msk [vmem:[%s3 + $0x1f8] sm:$0xff] %vm1120, %v1117
  // Predicated region
  $region14: #{unet_forward.19} parent=0 // pred_check
    _
  $region15: #{unet_forward.19} parent=0 // pred_check_branch
    %1186 = sbr.rel (0) target = $region17
  $region16: #{unet_forward.19} parent=0 // pred_region
    _
  $region17: #{unet_forward.19} parent=0 // pred_fallthru
    _
  // Predicated region
  $region18: #{unet_forward.19} parent=0 // pred_check
    _
  $region19: #{unet_forward.19} parent=0 // pred_check_branch
    %1188 = sbr.rel (0) target = $region21
  $region20: #{unet_forward.19} parent=0 // pred_region
    _
  $region21: #{unet_forward.19} parent=0 // pred_fallthru
    _

</llo_original>
